<compile_context>
chip_gen: v7x
topology: tpu7x:2x2x1
jax: 0.10.0
libtpu: 0.0.40
codegen_flags: <defaults>
</compile_context>

<pallas_src>
import jax
import jax.numpy as jnp
from jax.experimental import pallas as pl
from jax.experimental.pallas import tpu as pltpu


# ---------------------------------------------------------------------------
# Fused Pallas kernel: whole Inception Module-B for one batch block
# ---------------------------------------------------------------------------
def _inception_b_kernel(x_ref,
                        w1_ref, s1_ref, b1_ref,        # branch1: 3x3 stride 2
                        w2a_ref, s2a_ref, b2a_ref,     # branch2: 1x1
                        w2b_ref, s2b_ref, b2b_ref,     # branch2: 3x3 pad 1
                        w2c_ref, s2c_ref, b2c_ref,     # branch2: 3x3 stride 2
                        o_ref,                         # (B, Ho*Wo, Cpad)
                        pad_ref):                      # VMEM (B, H+2, W+2, red)
    f32, bf16 = jnp.float32, jnp.bfloat16
    B, H, W, Cin = x_ref.shape
    Ho, Wo = (H - 2) // 2, (W - 2) // 2                # 3x3, stride 2, VALID
    M = B * Ho * Wo

    def bn_relu6(acc, s_ref, b_ref):
        # acc: (pixels, cout) f32; folded BN affine + ReLU6 on the VPU.
        return jnp.clip(acc * s_ref[...] + b_ref[...], 0.0, 6.0)

    def phase_split(v):
        # (B, h, w, c), h/w even -> {(row_par, col_par): (B, h//2, w//2, c)}
        _, h, w, c = v.shape
        hh, wh = h // 2, w // 2
        rows = v.reshape(B * hh, 2, w, c)              # major-dim split (free)
        planes = {}
        for pr in (0, 1):
            cols = rows[:, pr].reshape(B * hh, wh, 2, c)
            for pc in (0, 1):
                planes[(pr, pc)] = cols[:, :, pc, :].reshape(B, hh, wh, c)
        return planes

    def conv3x3_s2(planes, w_ref, s_ref, b_ref):
        # Direct stride-2 3x3 VALID conv: all 9 taps folded into ONE MXU dot.
        wins = [planes[(di % 2, dj % 2)][:, di // 2:di // 2 + Ho,
                                         dj // 2:dj // 2 + Wo, :]
                for di in range(3) for dj in range(3)]
        win = jnp.concatenate(wins, axis=-1)           # (B, Ho, Wo, 9*cin)
        win = win.reshape(M, win.shape[-1]).astype(bf16)
        acc = jnp.dot(win, w_ref[...], preferred_element_type=f32)
        return bn_relu6(acc, s_ref, b_ref)             # (M, cout)

    x = x_ref[...]                                     # (B, H, W, Cin) f32
    px = phase_split(x)

    # ---- branch 1: 3x3 stride-2 conv + BN + ReLU6 ---------------------------
    b1m = conv3x3_s2(px, w1_ref, s1_ref, b1_ref)       # (M, out_b1)

    # ---- branch 2a: 1x1 conv == one matmul over all B*H*W pixels ------------
    red = w2a_ref.shape[-1]
    y1 = bn_relu6(jnp.dot(x.reshape(B * H * W, Cin).astype(bf16), w2a_ref[...],
                          preferred_element_type=f32),
                  s2a_ref, b2a_ref)                    # (B*H*W, red) f32

    # ---- branch 2b: 3x3 pad-1 stride-1 conv ---------------------------------
    # Zero only the 1-pixel border; the interior is fully rewritten each step,
    # so the scratch carries no state between grid iterations.
    zrow = jnp.zeros((B, 1, W + 2, red), f32)
    zcol = jnp.zeros((B, H, 1, red), f32)
    pad_ref[:, 0:1, :, :] = zrow
    pad_ref[:, H + 1:H + 2, :, :] = zrow
    pad_ref[:, 1:H + 1, 0:1, :] = zcol
    pad_ref[:, 1:H + 1, W + 1:W + 2, :] = zcol
    pad_ref[:, 1:H + 1, 1:W + 1, :] = y1.reshape(B, H, W, red)

    wins = [pad_ref[:, di:di + H, dj:dj + W, :]
            for di in range(3) for dj in range(3)]
    win = jnp.concatenate(wins, axis=-1)               # (B, H, W, 9*red)
    win = win.reshape(B * H * W, 9 * red).astype(bf16)
    y2 = bn_relu6(jnp.dot(win, w2b_ref[...], preferred_element_type=f32),
                  s2b_ref, b2b_ref)                    # (B*H*W, out_b2)
    y2 = y2.reshape(B, H, W, y2.shape[-1])

    # ---- branch 2c: 3x3 stride-2 conv ---------------------------------------
    b2m = conv3x3_s2(phase_split(y2), w2c_ref, s2c_ref, b2c_ref)  # (M, out_b2)

    # ---- branch 3: 3x3 stride-2 max pool, computed directly at stride 2 -----
    pool = None
    for di in range(3):
        for dj in range(3):
            wnd = px[(di % 2, dj % 2)][:, di // 2:di // 2 + Ho,
                                       dj // 2:dj // 2 + Wo, :]
            pool = wnd if pool is None else jnp.maximum(pool, wnd)
    b3m = pool.reshape(M, Cin)                         # (M, Cin)

    # ---- channel concat + lane-dense (channel-padded) single store ----------
    c_pad = o_ref.shape[-1]
    ctot = b1m.shape[-1] + b2m.shape[-1] + Cin
    pieces = [b1m, b2m, b3m]
    if c_pad > ctot:
        pieces.append(jnp.zeros((M, c_pad - ctot), f32))
    out = jnp.concatenate(pieces, axis=-1)             # (M, c_pad)
    o_ref[...] = out.reshape(B, Ho * Wo, c_pad).astype(o_ref.dtype)


# ---------------------------------------------------------------------------
# pallas_call wrapper
# ---------------------------------------------------------------------------
def _const_spec(arr):
    shape = arr.shape
    rank = len(shape)
    return pl.BlockSpec(shape, lambda b: (0,) * rank)


def inception_module_b(x_nchw, params, *, b_blk=None):
    """Fused forward of Inception_block_ModuleB. x_nchw: (N, Cin, H, W) f32."""
    # TODO(synk): keep the surrounding graph in NHWC at realistic sizes so XLA
    # elides these two HBM-pass transposes.
    x = jnp.transpose(x_nchw, (0, 2, 3, 1))            # NCHW -> NHWC
    n, h, w, cin = x.shape
    assert h % 2 == 0 and w % 2 == 0, "spatial dims must be even"
    ho, wo = (h - 2) // 2, (w - 2) // 2
    out_b1 = params["b1"][0].shape[-1]
    red_b2 = params["b2_1"][0].shape[-1]
    out_b2 = params["b2_3"][0].shape[-1]
    ctot = out_b1 + out_b2 + cin
    c_pad = ((ctot + 127) // 128) * 128                # lane-dense output slab

    if b_blk is None:
        # Fold batch into the matmul M dim, but keep >=2 parallel grid steps
        # so both TensorCores of a v7x chip stay busy (harmless on v5e/v6e).
        b_blk = max(1, n // 2)
    assert n % b_blk == 0, "batch must be divisible by b_blk"

    def flat_w(wgt):
        # (kh, kw, ci, co) -> folded-tap (kh*kw*ci, co), bf16 MXU operand.
        kh, kw, ci, co = wgt.shape
        return wgt.reshape(kh * kw * ci, co).astype(jnp.bfloat16)

    args = [x]
    in_specs = [pl.BlockSpec((b_blk, h, w, cin), lambda b: (b, 0, 0, 0))]
    for name in ("b1", "b2_1", "b2_2", "b2_3"):
        wgt, sc, bi = params[name]
        for a in (flat_w(wgt), sc, bi):
            args.append(a)
            in_specs.append(_const_spec(a))

    out = pl.pallas_call(
        _inception_b_kernel,
        out_shape=jax.ShapeDtypeStruct((n, ho * wo, c_pad), x.dtype),
        grid=(n // b_blk,),
        in_specs=in_specs,
        out_specs=pl.BlockSpec((b_blk, ho * wo, c_pad), lambda b: (b, 0, 0)),
        scratch_shapes=[pltpu.VMEM((b_blk, h + 2, w + 2, red_b2), jnp.float32)],
        compiler_params=pltpu.CompilerParams(
            dimension_semantics=("parallel",)),
    )(*args)

    out = out.reshape(n, ho, wo, c_pad)[..., :ctot]    # strip lane padding
    return jnp.transpose(out, (0, 3, 1, 2))            # NHWC -> NCHW


# ---------------------------------------------------------------------------
# Parameter construction (deterministic, synthetic): Conv2d + folded BN
# ---------------------------------------------------------------------------
def make_conv_bn_params(key, cin, cout, kh, kw, eps=1e-5):
    k1, k2, k3, k4 = jax.random.split(key, 4)
    fan_in = cin * kh * kw
    w = jax.random.normal(k1, (kh, kw, cin, cout), jnp.float32) / jnp.sqrt(fan_in)
    conv_b = 0.1 * jax.random.normal(k2, (cout,), jnp.float32)
    gamma = 1.0 + 0.1 * jax.random.normal(k3, (cout,), jnp.float32)
    beta = 0.1 * jax.random.normal(k4, (cout,), jnp.float32)
    running_mean = jnp.zeros((cout,), jnp.float32)
    running_var = jnp.ones((cout,), jnp.float32)
    scale = gamma / jnp.sqrt(running_var + eps)
    bias = (conv_b - running_mean) * scale + beta
    return w, scale.reshape(1, cout), bias.reshape(1, cout)


# ---------------------------------------------------------------------------
# Pure-JAX reference (mirrors the kernel's bf16 MXU operands / f32 accum)
# ---------------------------------------------------------------------------
def _ref_conv_bn_relu6(x, w, scale, bias, *, stride=1, padding=(0, 0)):
    y = jax.lax.conv_general_dilated(
        x.astype(jnp.bfloat16), w.astype(jnp.bfloat16),
        window_strides=(stride, stride),
        padding=((padding[0], padding[0]), (padding[1], padding[1])),
        dimension_numbers=("NHWC", "HWIO", "NHWC"),
        preferred_element_type=jnp.float32)
    y = y * scale.reshape(1, 1, 1, -1) + bias.reshape(1, 1, 1, -1)
    return jnp.clip(y, 0.0, 6.0)


def _ref_forward(x_nchw, params):
    x = jnp.transpose(x_nchw, (0, 2, 3, 1))
    b1 = _ref_conv_bn_relu6(x, *params["b1"], stride=2)
    b2 = _ref_conv_bn_relu6(x, *params["b2_1"], stride=1)
    b2 = _ref_conv_bn_relu6(b2, *params["b2_2"], stride=1, padding=(1, 1))
    b2 = _ref_conv_bn_relu6(b2, *params["b2_3"], stride=2)
    b3 = jax.lax.reduce_window(x, -jnp.inf, jax.lax.max,
                               (1, 3, 3, 1), (1, 2, 2, 1), "VALID")
    out = jnp.concatenate([b1, b2, b3], axis=-1)
    return jnp.transpose(out, (0, 3, 1, 2))


if __name__ == "__main__":
    key = jax.random.PRNGKey(0)
    keys = jax.random.split(key, 5)

    # Inception_block_ModuleB(in_channels=4, out_b1=8, red_b2=8, out_b2=8)
    in_channels, out_b1, red_b2, out_b2 = 4, 8, 8, 8
    N, H, W = 2, 16, 16

    x = jax.random.normal(keys[0], (N, in_channels, H, W), jnp.float32)

    params = {
        "b1":   make_conv_bn_params(keys[1], in_channels, out_b1, 3, 3),
        "b2_1": make_conv_bn_params(keys[2], in_channels, red_b2, 1, 1),
        "b2_2": make_conv_bn_params(keys[3], red_b2, out_b2, 3, 3),
        "b2_3": make_conv_bn_params(keys[4], out_b2, out_b2, 3, 3),
    }

    out = jax.block_until_ready(inception_module_b(x, params))

    expected_shape = (N, out_b1 + out_b2 + in_channels, 7, 7)  # (2, 20, 7, 7)
    assert out.shape == expected_shape, (out.shape, expected_shape)

    ref = jax.block_until_ready(_ref_forward(x, params))
    max_err = float(jnp.max(jnp.abs(out - ref)))
    assert max_err < 2e-2, f"mismatch vs reference: {max_err}"

    print("KERNEL_OK")
</pallas_src>

<mosaic_0001>
module attributes {stable_mosaic.version = 11 : i64} {
  func.func @_inception_b_kernel(%arg0: i32, %arg1: memref<1x16x16x4xf32, #tpu.memory_space<vmem>>, %arg2: memref<36x8xbf16, #tpu.memory_space<vmem>>, %arg3: memref<1x8xf32, #tpu.memory_space<vmem>>, %arg4: memref<1x8xf32, #tpu.memory_space<vmem>>, %arg5: memref<4x8xbf16, #tpu.memory_space<vmem>>, %arg6: memref<1x8xf32, #tpu.memory_space<vmem>>, %arg7: memref<1x8xf32, #tpu.memory_space<vmem>>, %arg8: memref<72x8xbf16, #tpu.memory_space<vmem>>, %arg9: memref<1x8xf32, #tpu.memory_space<vmem>>, %arg10: memref<1x8xf32, #tpu.memory_space<vmem>>, %arg11: memref<72x8xbf16, #tpu.memory_space<vmem>>, %arg12: memref<1x8xf32, #tpu.memory_space<vmem>>, %arg13: memref<1x8xf32, #tpu.memory_space<vmem>>, %arg14: memref<1x49x128xf32, #tpu.memory_space<vmem>>, %arg15: memref<1x18x18x8xf32, #tpu.memory_space<vmem>>) attributes {dimension_semantics = [#tpu.dimension_semantics<parallel>], iteration_bounds = array<i64: 2>, scalar_prefetch = 0 : i64, scratch_operands = 1 : i64, tpu.core_type = #tpu.core_type<tc>, window_params = [{transform_indices = @transform_0, window_bounds = array<i64: 1, 16, 16, 4>}, {pipeline_mode = #tpu.pipeline_mode<synchronous>, transform_indices = @transform_1, window_bounds = array<i64: 36, 8>}, {pipeline_mode = #tpu.pipeline_mode<synchronous>, transform_indices = @transform_2, window_bounds = array<i64: 1, 8>}, {pipeline_mode = #tpu.pipeline_mode<synchronous>, transform_indices = @transform_3, window_bounds = array<i64: 1, 8>}, {pipeline_mode = #tpu.pipeline_mode<synchronous>, transform_indices = @transform_4, window_bounds = array<i64: 4, 8>}, {pipeline_mode = #tpu.pipeline_mode<synchronous>, transform_indices = @transform_5, window_bounds = array<i64: 1, 8>}, {pipeline_mode = #tpu.pipeline_mode<synchronous>, transform_indices = @transform_6, window_bounds = array<i64: 1, 8>}, {pipeline_mode = #tpu.pipeline_mode<synchronous>, transform_indices = @transform_7, window_bounds = array<i64: 72, 8>}, {pipeline_mode = #tpu.pipeline_mode<synchronous>, transform_indices = @transform_8, window_bounds = array<i64: 1, 8>}, {pipeline_mode = #tpu.pipeline_mode<synchronous>, transform_indices = @transform_9, window_bounds = array<i64: 1, 8>}, {pipeline_mode = #tpu.pipeline_mode<synchronous>, transform_indices = @transform_10, window_bounds = array<i64: 72, 8>}, {pipeline_mode = #tpu.pipeline_mode<synchronous>, transform_indices = @transform_11, window_bounds = array<i64: 1, 8>}, {pipeline_mode = #tpu.pipeline_mode<synchronous>, transform_indices = @transform_12, window_bounds = array<i64: 1, 8>}, {transform_indices = @transform_13, window_bounds = array<i64: 1, 49, 128>}]} {
    %c0 = arith.constant 0 : index
    %c0_0 = arith.constant 0 : index
    %c0_1 = arith.constant 0 : index
    %c0_2 = arith.constant 0 : index
    %0 = vector.load %arg1[%c0, %c0_0, %c0_1, %c0_2] : memref<1x16x16x4xf32, #tpu.memory_space<vmem>>, vector<1x16x16x4xf32>
    %1 = vector.shape_cast %0 : vector<1x16x16x4xf32> to vector<8x2x16x4xf32>
    %2 = vector.extract_strided_slice %1 {offsets = [0, 0, 0, 0], sizes = [8, 1, 16, 4], strides = [1, 1, 1, 1]} : vector<8x2x16x4xf32> to vector<8x1x16x4xf32>
    %3 = vector.shape_cast %2 : vector<8x1x16x4xf32> to vector<8x16x4xf32>
    %4 = vector.shape_cast %3 : vector<8x16x4xf32> to vector<8x8x2x4xf32>
    %5 = vector.extract_strided_slice %4 {offsets = [0, 0, 0, 0], sizes = [8, 8, 1, 4], strides = [1, 1, 1, 1]} : vector<8x8x2x4xf32> to vector<8x8x1x4xf32>
    %6 = vector.shape_cast %5 : vector<8x8x1x4xf32> to vector<8x8x4xf32>
    %7 = vector.shape_cast %6 : vector<8x8x4xf32> to vector<1x8x8x4xf32>
    %8 = vector.extract_strided_slice %4 {offsets = [0, 0, 1, 0], sizes = [8, 8, 1, 4], strides = [1, 1, 1, 1]} : vector<8x8x2x4xf32> to vector<8x8x1x4xf32>
    %9 = vector.shape_cast %8 : vector<8x8x1x4xf32> to vector<8x8x4xf32>
    %10 = vector.shape_cast %9 : vector<8x8x4xf32> to vector<1x8x8x4xf32>
    %11 = vector.extract_strided_slice %1 {offsets = [0, 1, 0, 0], sizes = [8, 1, 16, 4], strides = [1, 1, 1, 1]} : vector<8x2x16x4xf32> to vector<8x1x16x4xf32>
    %12 = vector.shape_cast %11 : vector<8x1x16x4xf32> to vector<8x16x4xf32>
    %13 = vector.shape_cast %12 : vector<8x16x4xf32> to vector<8x8x2x4xf32>
    %14 = vector.extract_strided_slice %13 {offsets = [0, 0, 0, 0], sizes = [8, 8, 1, 4], strides = [1, 1, 1, 1]} : vector<8x8x2x4xf32> to vector<8x8x1x4xf32>
    %15 = vector.shape_cast %14 : vector<8x8x1x4xf32> to vector<8x8x4xf32>
    %16 = vector.shape_cast %15 : vector<8x8x4xf32> to vector<1x8x8x4xf32>
    %17 = vector.extract_strided_slice %13 {offsets = [0, 0, 1, 0], sizes = [8, 8, 1, 4], strides = [1, 1, 1, 1]} : vector<8x8x2x4xf32> to vector<8x8x1x4xf32>
    %18 = vector.shape_cast %17 : vector<8x8x1x4xf32> to vector<8x8x4xf32>
    %19 = vector.shape_cast %18 : vector<8x8x4xf32> to vector<1x8x8x4xf32>
    %20 = vector.extract_strided_slice %7 {offsets = [0, 0, 0, 0], sizes = [1, 7, 7, 4], strides = [1, 1, 1, 1]} : vector<1x8x8x4xf32> to vector<1x7x7x4xf32>
    %21 = vector.extract_strided_slice %10 {offsets = [0, 0, 0, 0], sizes = [1, 7, 7, 4], strides = [1, 1, 1, 1]} : vector<1x8x8x4xf32> to vector<1x7x7x4xf32>
    %22 = vector.extract_strided_slice %7 {offsets = [0, 0, 1, 0], sizes = [1, 7, 7, 4], strides = [1, 1, 1, 1]} : vector<1x8x8x4xf32> to vector<1x7x7x4xf32>
    %23 = vector.extract_strided_slice %16 {offsets = [0, 0, 0, 0], sizes = [1, 7, 7, 4], strides = [1, 1, 1, 1]} : vector<1x8x8x4xf32> to vector<1x7x7x4xf32>
    %24 = vector.extract_strided_slice %19 {offsets = [0, 0, 0, 0], sizes = [1, 7, 7, 4], strides = [1, 1, 1, 1]} : vector<1x8x8x4xf32> to vector<1x7x7x4xf32>
    %25 = vector.extract_strided_slice %16 {offsets = [0, 0, 1, 0], sizes = [1, 7, 7, 4], strides = [1, 1, 1, 1]} : vector<1x8x8x4xf32> to vector<1x7x7x4xf32>
    %26 = vector.extract_strided_slice %7 {offsets = [0, 1, 0, 0], sizes = [1, 7, 7, 4], strides = [1, 1, 1, 1]} : vector<1x8x8x4xf32> to vector<1x7x7x4xf32>
    %27 = vector.extract_strided_slice %10 {offsets = [0, 1, 0, 0], sizes = [1, 7, 7, 4], strides = [1, 1, 1, 1]} : vector<1x8x8x4xf32> to vector<1x7x7x4xf32>
    %28 = vector.extract_strided_slice %7 {offsets = [0, 1, 1, 0], sizes = [1, 7, 7, 4], strides = [1, 1, 1, 1]} : vector<1x8x8x4xf32> to vector<1x7x7x4xf32>
    %29 = tpu.concatenate %20, %21, %22, %23, %24, %25, %26, %27, %28 in 3 : vector<1x7x7x4xf32>, vector<1x7x7x4xf32>, vector<1x7x7x4xf32>, vector<1x7x7x4xf32>, vector<1x7x7x4xf32>, vector<1x7x7x4xf32>, vector<1x7x7x4xf32>, vector<1x7x7x4xf32>, vector<1x7x7x4xf32> -> vector<1x7x7x36xf32>
    %30 = vector.shape_cast %29 : vector<1x7x7x36xf32> to vector<49x36xf32>
    %31 = arith.truncf %30 : vector<49x36xf32> to vector<49x36xbf16>
    %c0_3 = arith.constant 0 : index
    %c0_4 = arith.constant 0 : index
    %32 = vector.load %arg2[%c0_3, %c0_4] : memref<36x8xbf16, #tpu.memory_space<vmem>>, vector<36x8xbf16>
    %cst = arith.constant dense<0.000000e+00> : vector<49x8xf32>
    %33 = tpu.matmul %31, %32, %cst {dimension_numbers = #tpu.dot_dimension_numbers<[1], [0], [0], [1], [0, 0, 1, 1], [], []>} : vector<49x36xbf16>, vector<36x8xbf16>, vector<49x8xf32> -> vector<49x8xf32>
    %c0_5 = arith.constant 0 : index
    %c0_6 = arith.constant 0 : index
    %34 = vector.load %arg3[%c0_5, %c0_6] : memref<1x8xf32, #tpu.memory_space<vmem>>, vector<1x8xf32>
    %35 = vector.broadcast %34 : vector<1x8xf32> to vector<49x8xf32>
    %36 = arith.mulf %33, %35 : vector<49x8xf32>
    %c0_7 = arith.constant 0 : index
    %c0_8 = arith.constant 0 : index
    %37 = vector.load %arg4[%c0_7, %c0_8] : memref<1x8xf32, #tpu.memory_space<vmem>>, vector<1x8xf32>
    %38 = vector.broadcast %37 : vector<1x8xf32> to vector<49x8xf32>
    %39 = arith.addf %36, %38 : vector<49x8xf32>
    %cst_9 = arith.constant 0.000000e+00 : f32
    %cst_10 = arith.constant 6.000000e+00 : f32
    %40 = vector.broadcast %cst_9 : f32 to vector<49x8xf32>
    %41 = arith.maximumf %40, %39 : vector<49x8xf32>
    %42 = vector.broadcast %cst_10 : f32 to vector<49x8xf32>
    %43 = arith.minimumf %42, %41 : vector<49x8xf32>
    %44 = vector.shape_cast %0 : vector<1x16x16x4xf32> to vector<256x4xf32>
    %45 = arith.truncf %44 : vector<256x4xf32> to vector<256x4xbf16>
    %c0_11 = arith.constant 0 : index
    %c0_12 = arith.constant 0 : index
    %46 = vector.load %arg5[%c0_11, %c0_12] : memref<4x8xbf16, #tpu.memory_space<vmem>>, vector<4x8xbf16>
    %cst_13 = arith.constant dense<0.000000e+00> : vector<256x8xf32>
    %47 = tpu.matmul %45, %46, %cst_13 {dimension_numbers = #tpu.dot_dimension_numbers<[1], [0], [0], [1], [0, 0, 1, 1], [], []>} : vector<256x4xbf16>, vector<4x8xbf16>, vector<256x8xf32> -> vector<256x8xf32>
    %c0_14 = arith.constant 0 : index
    %c0_15 = arith.constant 0 : index
    %48 = vector.load %arg6[%c0_14, %c0_15] : memref<1x8xf32, #tpu.memory_space<vmem>>, vector<1x8xf32>
    %49 = vector.broadcast %48 : vector<1x8xf32> to vector<256x8xf32>
    %50 = arith.mulf %47, %49 : vector<256x8xf32>
    %c0_16 = arith.constant 0 : index
    %c0_17 = arith.constant 0 : index
    %51 = vector.load %arg7[%c0_16, %c0_17] : memref<1x8xf32, #tpu.memory_space<vmem>>, vector<1x8xf32>
    %52 = vector.broadcast %51 : vector<1x8xf32> to vector<256x8xf32>
    %53 = arith.addf %50, %52 : vector<256x8xf32>
    %cst_18 = arith.constant 0.000000e+00 : f32
    %cst_19 = arith.constant 6.000000e+00 : f32
    %54 = vector.broadcast %cst_18 : f32 to vector<256x8xf32>
    %55 = arith.maximumf %54, %53 : vector<256x8xf32>
    %56 = vector.broadcast %cst_19 : f32 to vector<256x8xf32>
    %57 = arith.minimumf %56, %55 : vector<256x8xf32>
    %cst_20 = arith.constant 0.000000e+00 : f32
    %58 = vector.broadcast %cst_20 : f32 to vector<1x1x18x8xf32>
    %cst_21 = arith.constant 0.000000e+00 : f32
    %59 = vector.broadcast %cst_21 : f32 to vector<1x16x1x8xf32>
    %c0_22 = arith.constant 0 : index
    %c0_23 = arith.constant 0 : index
    %c0_24 = arith.constant 0 : index
    %c0_25 = arith.constant 0 : index
    %60 = vector.load %arg15[%c0_22, %c0_23, %c0_24, %c0_25] : memref<1x18x18x8xf32, #tpu.memory_space<vmem>>, vector<1x1x18x8xf32>
    tpu.vector_store %arg15[%c0_22, %c0_23, %c0_24, %c0_25], %58 {strides = array<i32>} : memref<1x18x18x8xf32, #tpu.memory_space<vmem>>, vector<1x1x18x8xf32>,
    %c0_26 = arith.constant 0 : index
    %c17 = arith.constant 17 : index
    %c0_27 = arith.constant 0 : index
    %c0_28 = arith.constant 0 : index
    %61 = vector.load %arg15[%c0_26, %c17, %c0_27, %c0_28] : memref<1x18x18x8xf32, #tpu.memory_space<vmem>>, vector<1x1x18x8xf32>
    tpu.vector_store %arg15[%c0_26, %c17, %c0_27, %c0_28], %58 {strides = array<i32>} : memref<1x18x18x8xf32, #tpu.memory_space<vmem>>, vector<1x1x18x8xf32>,
    %c0_29 = arith.constant 0 : index
    %c1 = arith.constant 1 : index
    %c0_30 = arith.constant 0 : index
    %c0_31 = arith.constant 0 : index
    %62 = vector.load %arg15[%c0_29, %c1, %c0_30, %c0_31] : memref<1x18x18x8xf32, #tpu.memory_space<vmem>>, vector<1x16x1x8xf32>
    tpu.vector_store %arg15[%c0_29, %c1, %c0_30, %c0_31], %59 {strides = array<i32>} : memref<1x18x18x8xf32, #tpu.memory_space<vmem>>, vector<1x16x1x8xf32>,
    %c0_32 = arith.constant 0 : index
    %c1_33 = arith.constant 1 : index
    %c17_34 = arith.constant 17 : index
    %c0_35 = arith.constant 0 : index
    %63 = vector.load %arg15[%c0_32, %c1_33, %c17_34, %c0_35] : memref<1x18x18x8xf32, #tpu.memory_space<vmem>>, vector<1x16x1x8xf32>
    tpu.vector_store %arg15[%c0_32, %c1_33, %c17_34, %c0_35], %59 {strides = array<i32>} : memref<1x18x18x8xf32, #tpu.memory_space<vmem>>, vector<1x16x1x8xf32>,
    %64 = vector.shape_cast %57 : vector<256x8xf32> to vector<1x16x16x8xf32>
    %c0_36 = arith.constant 0 : index
    %c1_37 = arith.constant 1 : index
    %c1_38 = arith.constant 1 : index
    %c0_39 = arith.constant 0 : index
    %65 = vector.load %arg15[%c0_36, %c1_37, %c1_38, %c0_39] : memref<1x18x18x8xf32, #tpu.memory_space<vmem>>, vector<1x16x16x8xf32>
    tpu.vector_store %arg15[%c0_36, %c1_37, %c1_38, %c0_39], %64 {strides = array<i32>} : memref<1x18x18x8xf32, #tpu.memory_space<vmem>>, vector<1x16x16x8xf32>,
    %c0_40 = arith.constant 0 : index
    %c0_41 = arith.constant 0 : index
    %c0_42 = arith.constant 0 : index
    %c0_43 = arith.constant 0 : index
    %66 = vector.load %arg15[%c0_40, %c0_41, %c0_42, %c0_43] : memref<1x18x18x8xf32, #tpu.memory_space<vmem>>, vector<1x16x16x8xf32>
    %c0_44 = arith.constant 0 : index
    %c0_45 = arith.constant 0 : index
    %c1_46 = arith.constant 1 : index
    %c0_47 = arith.constant 0 : index
    %67 = vector.load %arg15[%c0_44, %c0_45, %c1_46, %c0_47] : memref<1x18x18x8xf32, #tpu.memory_space<vmem>>, vector<1x16x16x8xf32>
    %c0_48 = arith.constant 0 : index
    %c0_49 = arith.constant 0 : index
    %c2 = arith.constant 2 : index
    %c0_50 = arith.constant 0 : index
    %68 = vector.load %arg15[%c0_48, %c0_49, %c2, %c0_50] : memref<1x18x18x8xf32, #tpu.memory_space<vmem>>, vector<1x16x16x8xf32>
    %c0_51 = arith.constant 0 : index
    %c1_52 = arith.constant 1 : index
    %c0_53 = arith.constant 0 : index
    %c0_54 = arith.constant 0 : index
    %69 = vector.load %arg15[%c0_51, %c1_52, %c0_53, %c0_54] : memref<1x18x18x8xf32, #tpu.memory_space<vmem>>, vector<1x16x16x8xf32>
    %c0_55 = arith.constant 0 : index
    %c1_56 = arith.constant 1 : index
    %c1_57 = arith.constant 1 : index
    %c0_58 = arith.constant 0 : index
    %70 = vector.load %arg15[%c0_55, %c1_56, %c1_57, %c0_58] : memref<1x18x18x8xf32, #tpu.memory_space<vmem>>, vector<1x16x16x8xf32>
    %c0_59 = arith.constant 0 : index
    %c1_60 = arith.constant 1 : index
    %c2_61 = arith.constant 2 : index
    %c0_62 = arith.constant 0 : index
    %71 = vector.load %arg15[%c0_59, %c1_60, %c2_61, %c0_62] : memref<1x18x18x8xf32, #tpu.memory_space<vmem>>, vector<1x16x16x8xf32>
    %c0_63 = arith.constant 0 : index
    %c2_64 = arith.constant 2 : index
    %c0_65 = arith.constant 0 : index
    %c0_66 = arith.constant 0 : index
    %72 = vector.load %arg15[%c0_63, %c2_64, %c0_65, %c0_66] : memref<1x18x18x8xf32, #tpu.memory_space<vmem>>, vector<1x16x16x8xf32>
    %c0_67 = arith.constant 0 : index
    %c2_68 = arith.constant 2 : index
    %c1_69 = arith.constant 1 : index
    %c0_70 = arith.constant 0 : index
    %73 = vector.load %arg15[%c0_67, %c2_68, %c1_69, %c0_70] : memref<1x18x18x8xf32, #tpu.memory_space<vmem>>, vector<1x16x16x8xf32>
    %c0_71 = arith.constant 0 : index
    %c2_72 = arith.constant 2 : index
    %c2_73 = arith.constant 2 : index
    %c0_74 = arith.constant 0 : index
    %74 = vector.load %arg15[%c0_71, %c2_72, %c2_73, %c0_74] : memref<1x18x18x8xf32, #tpu.memory_space<vmem>>, vector<1x16x16x8xf32>
    %75 = tpu.concatenate %66, %67, %68, %69, %70, %71, %72, %73, %74 in 3 : vector<1x16x16x8xf32>, vector<1x16x16x8xf32>, vector<1x16x16x8xf32>, vector<1x16x16x8xf32>, vector<1x16x16x8xf32>, vector<1x16x16x8xf32>, vector<1x16x16x8xf32>, vector<1x16x16x8xf32>, vector<1x16x16x8xf32> -> vector<1x16x16x72xf32>
    %76 = vector.shape_cast %75 : vector<1x16x16x72xf32> to vector<256x72xf32>
    %77 = arith.truncf %76 : vector<256x72xf32> to vector<256x72xbf16>
    %c0_75 = arith.constant 0 : index
    %c0_76 = arith.constant 0 : index
    %78 = vector.load %arg8[%c0_75, %c0_76] : memref<72x8xbf16, #tpu.memory_space<vmem>>, vector<72x8xbf16>
    %cst_77 = arith.constant dense<0.000000e+00> : vector<256x8xf32>
    %79 = tpu.matmul %77, %78, %cst_77 {dimension_numbers = #tpu.dot_dimension_numbers<[1], [0], [0], [1], [0, 0, 1, 1], [], []>} : vector<256x72xbf16>, vector<72x8xbf16>, vector<256x8xf32> -> vector<256x8xf32>
    %c0_78 = arith.constant 0 : index
    %c0_79 = arith.constant 0 : index
    %80 = vector.load %arg9[%c0_78, %c0_79] : memref<1x8xf32, #tpu.memory_space<vmem>>, vector<1x8xf32>
    %81 = vector.broadcast %80 : vector<1x8xf32> to vector<256x8xf32>
    %82 = arith.mulf %79, %81 : vector<256x8xf32>
    %c0_80 = arith.constant 0 : index
    %c0_81 = arith.constant 0 : index
    %83 = vector.load %arg10[%c0_80, %c0_81] : memref<1x8xf32, #tpu.memory_space<vmem>>, vector<1x8xf32>
    %84 = vector.broadcast %83 : vector<1x8xf32> to vector<256x8xf32>
    %85 = arith.addf %82, %84 : vector<256x8xf32>
    %cst_82 = arith.constant 0.000000e+00 : f32
    %cst_83 = arith.constant 6.000000e+00 : f32
    %86 = vector.broadcast %cst_82 : f32 to vector<256x8xf32>
    %87 = arith.maximumf %86, %85 : vector<256x8xf32>
    %88 = vector.broadcast %cst_83 : f32 to vector<256x8xf32>
    %89 = arith.minimumf %88, %87 : vector<256x8xf32>
    %90 = vector.shape_cast %89 : vector<256x8xf32> to vector<1x16x16x8xf32>
    %91 = vector.shape_cast %90 : vector<1x16x16x8xf32> to vector<8x2x16x8xf32>
    %92 = vector.extract_strided_slice %91 {offsets = [0, 0, 0, 0], sizes = [8, 1, 16, 8], strides = [1, 1, 1, 1]} : vector<8x2x16x8xf32> to vector<8x1x16x8xf32>
    %93 = vector.shape_cast %92 : vector<8x1x16x8xf32> to vector<8x16x8xf32>
    %94 = vector.shape_cast %93 : vector<8x16x8xf32> to vector<8x8x2x8xf32>
    %95 = vector.extract_strided_slice %94 {offsets = [0, 0, 0, 0], sizes = [8, 8, 1, 8], strides = [1, 1, 1, 1]} : vector<8x8x2x8xf32> to vector<8x8x1x8xf32>
    %96 = vector.shape_cast %95 : vector<8x8x1x8xf32> to vector<8x8x8xf32>
    %97 = vector.shape_cast %96 : vector<8x8x8xf32> to vector<1x8x8x8xf32>
    %98 = vector.extract_strided_slice %94 {offsets = [0, 0, 1, 0], sizes = [8, 8, 1, 8], strides = [1, 1, 1, 1]} : vector<8x8x2x8xf32> to vector<8x8x1x8xf32>
    %99 = vector.shape_cast %98 : vector<8x8x1x8xf32> to vector<8x8x8xf32>
    %100 = vector.shape_cast %99 : vector<8x8x8xf32> to vector<1x8x8x8xf32>
    %101 = vector.extract_strided_slice %91 {offsets = [0, 1, 0, 0], sizes = [8, 1, 16, 8], strides = [1, 1, 1, 1]} : vector<8x2x16x8xf32> to vector<8x1x16x8xf32>
    %102 = vector.shape_cast %101 : vector<8x1x16x8xf32> to vector<8x16x8xf32>
    %103 = vector.shape_cast %102 : vector<8x16x8xf32> to vector<8x8x2x8xf32>
    %104 = vector.extract_strided_slice %103 {offsets = [0, 0, 0, 0], sizes = [8, 8, 1, 8], strides = [1, 1, 1, 1]} : vector<8x8x2x8xf32> to vector<8x8x1x8xf32>
    %105 = vector.shape_cast %104 : vector<8x8x1x8xf32> to vector<8x8x8xf32>
    %106 = vector.shape_cast %105 : vector<8x8x8xf32> to vector<1x8x8x8xf32>
    %107 = vector.extract_strided_slice %103 {offsets = [0, 0, 1, 0], sizes = [8, 8, 1, 8], strides = [1, 1, 1, 1]} : vector<8x8x2x8xf32> to vector<8x8x1x8xf32>
    %108 = vector.shape_cast %107 : vector<8x8x1x8xf32> to vector<8x8x8xf32>
    %109 = vector.shape_cast %108 : vector<8x8x8xf32> to vector<1x8x8x8xf32>
    %110 = vector.extract_strided_slice %97 {offsets = [0, 0, 0, 0], sizes = [1, 7, 7, 8], strides = [1, 1, 1, 1]} : vector<1x8x8x8xf32> to vector<1x7x7x8xf32>
    %111 = vector.extract_strided_slice %100 {offsets = [0, 0, 0, 0], sizes = [1, 7, 7, 8], strides = [1, 1, 1, 1]} : vector<1x8x8x8xf32> to vector<1x7x7x8xf32>
    %112 = vector.extract_strided_slice %97 {offsets = [0, 0, 1, 0], sizes = [1, 7, 7, 8], strides = [1, 1, 1, 1]} : vector<1x8x8x8xf32> to vector<1x7x7x8xf32>
    %113 = vector.extract_strided_slice %106 {offsets = [0, 0, 0, 0], sizes = [1, 7, 7, 8], strides = [1, 1, 1, 1]} : vector<1x8x8x8xf32> to vector<1x7x7x8xf32>
    %114 = vector.extract_strided_slice %109 {offsets = [0, 0, 0, 0], sizes = [1, 7, 7, 8], strides = [1, 1, 1, 1]} : vector<1x8x8x8xf32> to vector<1x7x7x8xf32>
    %115 = vector.extract_strided_slice %106 {offsets = [0, 0, 1, 0], sizes = [1, 7, 7, 8], strides = [1, 1, 1, 1]} : vector<1x8x8x8xf32> to vector<1x7x7x8xf32>
    %116 = vector.extract_strided_slice %97 {offsets = [0, 1, 0, 0], sizes = [1, 7, 7, 8], strides = [1, 1, 1, 1]} : vector<1x8x8x8xf32> to vector<1x7x7x8xf32>
    %117 = vector.extract_strided_slice %100 {offsets = [0, 1, 0, 0], sizes = [1, 7, 7, 8], strides = [1, 1, 1, 1]} : vector<1x8x8x8xf32> to vector<1x7x7x8xf32>
    %118 = vector.extract_strided_slice %97 {offsets = [0, 1, 1, 0], sizes = [1, 7, 7, 8], strides = [1, 1, 1, 1]} : vector<1x8x8x8xf32> to vector<1x7x7x8xf32>
    %119 = tpu.concatenate %110, %111, %112, %113, %114, %115, %116, %117, %118 in 3 : vector<1x7x7x8xf32>, vector<1x7x7x8xf32>, vector<1x7x7x8xf32>, vector<1x7x7x8xf32>, vector<1x7x7x8xf32>, vector<1x7x7x8xf32>, vector<1x7x7x8xf32>, vector<1x7x7x8xf32>, vector<1x7x7x8xf32> -> vector<1x7x7x72xf32>
    %120 = vector.shape_cast %119 : vector<1x7x7x72xf32> to vector<49x72xf32>
    %121 = arith.truncf %120 : vector<49x72xf32> to vector<49x72xbf16>
    %c0_84 = arith.constant 0 : index
    %c0_85 = arith.constant 0 : index
    %122 = vector.load %arg11[%c0_84, %c0_85] : memref<72x8xbf16, #tpu.memory_space<vmem>>, vector<72x8xbf16>
    %cst_86 = arith.constant dense<0.000000e+00> : vector<49x8xf32>
    %123 = tpu.matmul %121, %122, %cst_86 {dimension_numbers = #tpu.dot_dimension_numbers<[1], [0], [0], [1], [0, 0, 1, 1], [], []>} : vector<49x72xbf16>, vector<72x8xbf16>, vector<49x8xf32> -> vector<49x8xf32>
    %c0_87 = arith.constant 0 : index
    %c0_88 = arith.constant 0 : index
    %124 = vector.load %arg12[%c0_87, %c0_88] : memref<1x8xf32, #tpu.memory_space<vmem>>, vector<1x8xf32>
    %125 = vector.broadcast %124 : vector<1x8xf32> to vector<49x8xf32>
    %126 = arith.mulf %123, %125 : vector<49x8xf32>
    %c0_89 = arith.constant 0 : index
    %c0_90 = arith.constant 0 : index
    %127 = vector.load %arg13[%c0_89, %c0_90] : memref<1x8xf32, #tpu.memory_space<vmem>>, vector<1x8xf32>
    %128 = vector.broadcast %127 : vector<1x8xf32> to vector<49x8xf32>
    %129 = arith.addf %126, %128 : vector<49x8xf32>
    %cst_91 = arith.constant 0.000000e+00 : f32
    %cst_92 = arith.constant 6.000000e+00 : f32
    %130 = vector.broadcast %cst_91 : f32 to vector<49x8xf32>
    %131 = arith.maximumf %130, %129 : vector<49x8xf32>
    %132 = vector.broadcast %cst_92 : f32 to vector<49x8xf32>
    %133 = arith.minimumf %132, %131 : vector<49x8xf32>
    %134 = vector.extract_strided_slice %7 {offsets = [0, 0, 0, 0], sizes = [1, 7, 7, 4], strides = [1, 1, 1, 1]} : vector<1x8x8x4xf32> to vector<1x7x7x4xf32>
    %135 = vector.extract_strided_slice %10 {offsets = [0, 0, 0, 0], sizes = [1, 7, 7, 4], strides = [1, 1, 1, 1]} : vector<1x8x8x4xf32> to vector<1x7x7x4xf32>
    %136 = arith.maximumf %134, %135 : vector<1x7x7x4xf32>
    %137 = vector.extract_strided_slice %7 {offsets = [0, 0, 1, 0], sizes = [1, 7, 7, 4], strides = [1, 1, 1, 1]} : vector<1x8x8x4xf32> to vector<1x7x7x4xf32>
    %138 = arith.maximumf %136, %137 : vector<1x7x7x4xf32>
    %139 = vector.extract_strided_slice %16 {offsets = [0, 0, 0, 0], sizes = [1, 7, 7, 4], strides = [1, 1, 1, 1]} : vector<1x8x8x4xf32> to vector<1x7x7x4xf32>
    %140 = arith.maximumf %138, %139 : vector<1x7x7x4xf32>
    %141 = vector.extract_strided_slice %19 {offsets = [0, 0, 0, 0], sizes = [1, 7, 7, 4], strides = [1, 1, 1, 1]} : vector<1x8x8x4xf32> to vector<1x7x7x4xf32>
    %142 = arith.maximumf %140, %141 : vector<1x7x7x4xf32>
    %143 = vector.extract_strided_slice %16 {offsets = [0, 0, 1, 0], sizes = [1, 7, 7, 4], strides = [1, 1, 1, 1]} : vector<1x8x8x4xf32> to vector<1x7x7x4xf32>
    %144 = arith.maximumf %142, %143 : vector<1x7x7x4xf32>
    %145 = vector.extract_strided_slice %7 {offsets = [0, 1, 0, 0], sizes = [1, 7, 7, 4], strides = [1, 1, 1, 1]} : vector<1x8x8x4xf32> to vector<1x7x7x4xf32>
    %146 = arith.maximumf %144, %145 : vector<1x7x7x4xf32>
    %147 = vector.extract_strided_slice %10 {offsets = [0, 1, 0, 0], sizes = [1, 7, 7, 4], strides = [1, 1, 1, 1]} : vector<1x8x8x4xf32> to vector<1x7x7x4xf32>
    %148 = arith.maximumf %146, %147 : vector<1x7x7x4xf32>
    %149 = vector.extract_strided_slice %7 {offsets = [0, 1, 1, 0], sizes = [1, 7, 7, 4], strides = [1, 1, 1, 1]} : vector<1x8x8x4xf32> to vector<1x7x7x4xf32>
    %150 = arith.maximumf %148, %149 : vector<1x7x7x4xf32>
    %151 = vector.shape_cast %150 : vector<1x7x7x4xf32> to vector<49x4xf32>
    %cst_93 = arith.constant 0.000000e+00 : f32
    %152 = vector.broadcast %cst_93 : f32 to vector<49x108xf32>
    %153 = tpu.concatenate %43, %133, %151, %152 in 1 : vector<49x8xf32>, vector<49x8xf32>, vector<49x4xf32>, vector<49x108xf32> -> vector<49x128xf32>
    %154 = vector.shape_cast %153 : vector<49x128xf32> to vector<1x49x128xf32>
    %c0_94 = arith.constant 0 : index
    %c0_95 = arith.constant 0 : index
    %c0_96 = arith.constant 0 : index
    %155 = vector.load %arg14[%c0_94, %c0_95, %c0_96] : memref<1x49x128xf32, #tpu.memory_space<vmem>>, vector<1x49x128xf32>
    tpu.vector_store %arg14[%c0_94, %c0_95, %c0_96], %154 {strides = array<i32>} : memref<1x49x128xf32, #tpu.memory_space<vmem>>, vector<1x49x128xf32>,
    return
  }
  func.func @transform_0(%arg0: i32) -> (i32, i32, i32, i32) {
    %c0_i32 = arith.constant 0 : i32
    %c0_i32_0 = arith.constant 0 : i32
    %c0_i32_1 = arith.constant 0 : i32
    %c0_i32_2 = arith.constant 0 : i32
    return %arg0, %c0_i32, %c0_i32_0, %c0_i32_1 : i32, i32, i32, i32
  }
  func.func @transform_1(%arg0: i32) -> (i32, i32) {
    %c0_i32 = arith.constant 0 : i32
    %c0_i32_0 = arith.constant 0 : i32
    %c0_i32_1 = arith.constant 0 : i32
    return %c0_i32, %c0_i32_0 : i32, i32
  }
  func.func @transform_2(%arg0: i32) -> (i32, i32) {
    %c0_i32 = arith.constant 0 : i32
    %c0_i32_0 = arith.constant 0 : i32
    %c0_i32_1 = arith.constant 0 : i32
    return %c0_i32, %c0_i32_0 : i32, i32
  }
  func.func @transform_3(%arg0: i32) -> (i32, i32) {
    %c0_i32 = arith.constant 0 : i32
    %c0_i32_0 = arith.constant 0 : i32
    %c0_i32_1 = arith.constant 0 : i32
    return %c0_i32, %c0_i32_0 : i32, i32
  }
  func.func @transform_4(%arg0: i32) -> (i32, i32) {
    %c0_i32 = arith.constant 0 : i32
    %c0_i32_0 = arith.constant 0 : i32
    %c0_i32_1 = arith.constant 0 : i32
    return %c0_i32, %c0_i32_0 : i32, i32
  }
  func.func @transform_5(%arg0: i32) -> (i32, i32) {
    %c0_i32 = arith.constant 0 : i32
    %c0_i32_0 = arith.constant 0 : i32
    %c0_i32_1 = arith.constant 0 : i32
    return %c0_i32, %c0_i32_0 : i32, i32
  }
  func.func @transform_6(%arg0: i32) -> (i32, i32) {
    %c0_i32 = arith.constant 0 : i32
    %c0_i32_0 = arith.constant 0 : i32
    %c0_i32_1 = arith.constant 0 : i32
    return %c0_i32, %c0_i32_0 : i32, i32
  }
  func.func @transform_7(%arg0: i32) -> (i32, i32) {
    %c0_i32 = arith.constant 0 : i32
    %c0_i32_0 = arith.constant 0 : i32
    %c0_i32_1 = arith.constant 0 : i32
    return %c0_i32, %c0_i32_0 : i32, i32
  }
  func.func @transform_8(%arg0: i32) -> (i32, i32) {
    %c0_i32 = arith.constant 0 : i32
    %c0_i32_0 = arith.constant 0 : i32
    %c0_i32_1 = arith.constant 0 : i32
    return %c0_i32, %c0_i32_0 : i32, i32
  }
  func.func @transform_9(%arg0: i32) -> (i32, i32) {
    %c0_i32 = arith.constant 0 : i32
    %c0_i32_0 = arith.constant 0 : i32
    %c0_i32_1 = arith.constant 0 : i32
    return %c0_i32, %c0_i32_0 : i32, i32
  }
  func.func @transform_10(%arg0: i32) -> (i32, i32) {
    %c0_i32 = arith.constant 0 : i32
    %c0_i32_0 = arith.constant 0 : i32
    %c0_i32_1 = arith.constant 0 : i32
    return %c0_i32, %c0_i32_0 : i32, i32
  }
  func.func @transform_11(%arg0: i32) -> (i32, i32) {
    %c0_i32 = arith.constant 0 : i32
    %c0_i32_0 = arith.constant 0 : i32
    %c0_i32_1 = arith.constant 0 : i32
    return %c0_i32, %c0_i32_0 : i32, i32
  }
  func.func @transform_12(%arg0: i32) -> (i32, i32) {
    %c0_i32 = arith.constant 0 : i32
    %c0_i32_0 = arith.constant 0 : i32
    %c0_i32_1 = arith.constant 0 : i32
    return %c0_i32, %c0_i32_0 : i32, i32
  }
  func.func @transform_13(%arg0: i32) -> (i32, i32, i32) {
    %c0_i32 = arith.constant 0 : i32
    %c0_i32_0 = arith.constant 0 : i32
    %c0_i32_1 = arith.constant 0 : i32
    return %arg0, %c0_i32, %c0_i32_0 : i32, i32, i32
  }
}

</mosaic_0001>

<llo_original>
// kernel: tpu_custom_call.1
$region0: #{tpu_custom_call.1}
  #allocation0 [shape = 'u32[]', space=smem, size = 0x4, offset = 0x4, fixed_abs, tag = 'smem constant byte address 0x4 - core index']
  #allocation1 [shape = 'u32[144,128]{1,0:T(1,128)}', space=vmem, size = 0x12000, scoped, tag = 'internal scratch']
  #allocation2 [shape = 'f32[1,18,18,8]{3,2,1,0:T(8,128)}', space=vmem, size = 0x36000, scoped, tag = 'scratch operand']
  %s0 = inlined_call_operand.vmem [shape: f32[2,16,16,4], index: 0, kind: input, shape index: {}]
  %s1 = inlined_call_operand.vmem [shape: bf16[36,8], index: 1, kind: input, shape index: {}]
  %s2 = inlined_call_operand.vmem [shape: f32[1,8], index: 2, kind: input, shape index: {}]
  %s3 = inlined_call_operand.vmem [shape: f32[1,8], index: 3, kind: input, shape index: {}]
  %s4 = inlined_call_operand.vmem [shape: bf16[4,8], index: 4, kind: input, shape index: {}]
  %s5 = inlined_call_operand.vmem [shape: f32[1,8], index: 5, kind: input, shape index: {}]
  %s6 = inlined_call_operand.vmem [shape: f32[1,8], index: 6, kind: input, shape index: {}]
  %s7 = inlined_call_operand.vmem [shape: bf16[72,8], index: 7, kind: input, shape index: {}]
  %s8 = inlined_call_operand.vmem [shape: f32[1,8], index: 8, kind: input, shape index: {}]
  %s9 = inlined_call_operand.vmem [shape: f32[1,8], index: 9, kind: input, shape index: {}]
  %s10 = inlined_call_operand.vmem [shape: bf16[72,8], index: 10, kind: input, shape index: {}]
  %s11 = inlined_call_operand.vmem [shape: f32[1,8], index: 11, kind: input, shape index: {}]
  %s12 = inlined_call_operand.vmem [shape: f32[1,8], index: 12, kind: input, shape index: {}]
  %s13 = inlined_call_operand.vmem [shape: f32[2,49,128], index: 13, kind: output, shape index: {}]
  %s14 = sld [smem:[#allocation0]]
  $region85: #{tpu_custom_call.1} parent=0
    _
  %s16 = ssub.s32 1, %s14
  %s17 = scalar_select 0, %s16, %s14
  loop: start=0, step=1, limit=4
  $region2: #{tpu_custom_call.1} parent=0 // loop_pre_header
    _
  $region3: #{tpu_custom_call.1} parent=0 // loop_header
    %s19 = sphi 0, %s23
    %p20 = scmp.ge.s32.totalorder %s19, 4
    %s29 = sphi 0, %s31
    %s32 = sphi 0, %s29
    %s33 = sphi 0, %s32
    %s49 = sphi 0, %s33
    %s53 = sphi 0, %s53
    %s55 = sphi 0, %s53
    %s56 = sphi 0, %s55
    %s70 = sphi 0, %s56
    %s74 = sphi 0, %s74
    %s76 = sphi 0, %s74
    %s77 = sphi 0, %s76
    %s91 = sphi 0, %s77
    %s95 = sphi 0, %s95
    %s97 = sphi 0, %s95
    %s98 = sphi 0, %s97
    %s112 = sphi 0, %s98
    %s116 = sphi 0, %s116
    %s118 = sphi 0, %s116
    %s119 = sphi 0, %s118
    %s133 = sphi 0, %s119
    %s137 = sphi 0, %s137
    %s139 = sphi 0, %s137
    %s140 = sphi 0, %s139
    %s154 = sphi 0, %s140
    %s158 = sphi 0, %s158
    %s160 = sphi 0, %s158
    %s161 = sphi 0, %s160
    %s175 = sphi 0, %s161
    %s179 = sphi 0, %s179
    %s181 = sphi 0, %s179
    %s182 = sphi 0, %s181
    %s196 = sphi 0, %s182
    %s200 = sphi 0, %s200
    %s202 = sphi 0, %s200
    %s203 = sphi 0, %s202
    %s217 = sphi 0, %s203
    %s221 = sphi 0, %s221
    %s223 = sphi 0, %s221
    %s224 = sphi 0, %s223
    %s238 = sphi 0, %s224
    %s242 = sphi 0, %s242
    %s244 = sphi 0, %s242
    %s245 = sphi 0, %s244
    %s259 = sphi 0, %s245
    %s263 = sphi 0, %s263
    %s265 = sphi 0, %s263
    %s266 = sphi 0, %s265
    %s280 = sphi 0, %s266
    %s284 = sphi 0, %s284
    %s286 = sphi 0, %s284
    %s287 = sphi 0, %s286
    %s301 = sphi 0, %s287
    %s307 = sphi 0, %s309
    %s310 = sphi 0, %s307
    %s311 = sphi 0, %s310
    %s327 = sphi 0, %s311
  $region4: #{tpu_custom_call.1} parent=0 // loop_header_branch
    %22 = sbr.rel (%p20) target = $region8
  $region5: #{tpu_custom_call.1} parent=0 // loop_body
    %s24 = ssub.s32 %s19, 1
    %s25 = ssub.s32 %s19, 2
    %s26 = sadd.s32 %s19, 1
    %s27 = ssub.s32 %s19, %s26
    %p28 = scmp.eq.s32.totalorder %s27, 0
    %s30 = sadd.s32 %s29, 1
    %s31 = scalar_select %p28, %s29, %s30
    %p34 = pneg %p28
    %p35 = scmp.eq.s32.totalorder %s19, 1
    %p36 = por %p34, %p35
    %p37 = scmp.ne.s32.totalorder %s29, %s32
    %p38 = scmp.eq.s32.totalorder %s19, 0
    %p39 = por %p37, %p38
    %p40 = scmp.ne.s32.totalorder %s29, %s32
    %p41 = scmp.eq.s32.totalorder %s24, 1
    %p42 = por %p40, %p41
    %p43 = scmp.ne.s32.totalorder %s32, %s33
    %p44 = scmp.eq.s32.totalorder %s24, 0
    %p45 = por %p43, %p44
    %p46 = scmp.ne.s32.totalorder %s32, %s33
    %p47 = scmp.eq.s32.totalorder %s25, 1
    %p48 = por %p46, %p47
    %p50 = scmp.ne.s32.totalorder %s33, %s49
    %p51 = scmp.eq.s32.totalorder %s25, 0
    %p52 = por %p50, %p51
    %s54 = sadd.s32 %s53, 1
    %p57 = scmp.eq.s32.totalorder %s19, 1
    %p58 = scmp.ne.s32.totalorder %s53, %s55
    %p59 = scmp.eq.s32.totalorder %s19, 0
    %p60 = por %p58, %p59
    %p61 = scmp.ne.s32.totalorder %s53, %s55
    %p62 = scmp.eq.s32.totalorder %s24, 1
    %p63 = por %p61, %p62
    %p64 = scmp.ne.s32.totalorder %s55, %s56
    %p65 = scmp.eq.s32.totalorder %s24, 0
    %p66 = por %p64, %p65
    %p67 = scmp.ne.s32.totalorder %s55, %s56
    %p68 = scmp.eq.s32.totalorder %s25, 1
    %p69 = por %p67, %p68
    %p71 = scmp.ne.s32.totalorder %s56, %s70
    %p72 = scmp.eq.s32.totalorder %s25, 0
    %p73 = por %p71, %p72
    %s75 = sadd.s32 %s74, 1
    %p78 = scmp.eq.s32.totalorder %s19, 1
    %p79 = scmp.ne.s32.totalorder %s74, %s76
    %p80 = scmp.eq.s32.totalorder %s19, 0
    %p81 = por %p79, %p80
    %p82 = scmp.ne.s32.totalorder %s74, %s76
    %p83 = scmp.eq.s32.totalorder %s24, 1
    %p84 = por %p82, %p83
    %p85 = scmp.ne.s32.totalorder %s76, %s77
    %p86 = scmp.eq.s32.totalorder %s24, 0
    %p87 = por %p85, %p86
    %p88 = scmp.ne.s32.totalorder %s76, %s77
    %p89 = scmp.eq.s32.totalorder %s25, 1
    %p90 = por %p88, %p89
    %p92 = scmp.ne.s32.totalorder %s77, %s91
    %p93 = scmp.eq.s32.totalorder %s25, 0
    %p94 = por %p92, %p93
    %s96 = sadd.s32 %s95, 1
    %p99 = scmp.eq.s32.totalorder %s19, 1
    %p100 = scmp.ne.s32.totalorder %s95, %s97
    %p101 = scmp.eq.s32.totalorder %s19, 0
    %p102 = por %p100, %p101
    %p103 = scmp.ne.s32.totalorder %s95, %s97
    %p104 = scmp.eq.s32.totalorder %s24, 1
    %p105 = por %p103, %p104
    %p106 = scmp.ne.s32.totalorder %s97, %s98
    %p107 = scmp.eq.s32.totalorder %s24, 0
    %p108 = por %p106, %p107
    %p109 = scmp.ne.s32.totalorder %s97, %s98
    %p110 = scmp.eq.s32.totalorder %s25, 1
    %p111 = por %p109, %p110
    %p113 = scmp.ne.s32.totalorder %s98, %s112
    %p114 = scmp.eq.s32.totalorder %s25, 0
    %p115 = por %p113, %p114
    %s117 = sadd.s32 %s116, 1
    %p120 = scmp.eq.s32.totalorder %s19, 1
    %p121 = scmp.ne.s32.totalorder %s116, %s118
    %p122 = scmp.eq.s32.totalorder %s19, 0
    %p123 = por %p121, %p122
    %p124 = scmp.ne.s32.totalorder %s116, %s118
    %p125 = scmp.eq.s32.totalorder %s24, 1
    %p126 = por %p124, %p125
    %p127 = scmp.ne.s32.totalorder %s118, %s119
    %p128 = scmp.eq.s32.totalorder %s24, 0
    %p129 = por %p127, %p128
    %p130 = scmp.ne.s32.totalorder %s118, %s119
    %p131 = scmp.eq.s32.totalorder %s25, 1
    %p132 = por %p130, %p131
    %p134 = scmp.ne.s32.totalorder %s119, %s133
    %p135 = scmp.eq.s32.totalorder %s25, 0
    %p136 = por %p134, %p135
    %s138 = sadd.s32 %s137, 1
    %p141 = scmp.eq.s32.totalorder %s19, 1
    %p142 = scmp.ne.s32.totalorder %s137, %s139
    %p143 = scmp.eq.s32.totalorder %s19, 0
    %p144 = por %p142, %p143
    %p145 = scmp.ne.s32.totalorder %s137, %s139
    %p146 = scmp.eq.s32.totalorder %s24, 1
    %p147 = por %p145, %p146
    %p148 = scmp.ne.s32.totalorder %s139, %s140
    %p149 = scmp.eq.s32.totalorder %s24, 0
    %p150 = por %p148, %p149
    %p151 = scmp.ne.s32.totalorder %s139, %s140
    %p152 = scmp.eq.s32.totalorder %s25, 1
    %p153 = por %p151, %p152
    %p155 = scmp.ne.s32.totalorder %s140, %s154
    %p156 = scmp.eq.s32.totalorder %s25, 0
    %p157 = por %p155, %p156
    %s159 = sadd.s32 %s158, 1
    %p162 = scmp.eq.s32.totalorder %s19, 1
    %p163 = scmp.ne.s32.totalorder %s158, %s160
    %p164 = scmp.eq.s32.totalorder %s19, 0
    %p165 = por %p163, %p164
    %p166 = scmp.ne.s32.totalorder %s158, %s160
    %p167 = scmp.eq.s32.totalorder %s24, 1
    %p168 = por %p166, %p167
    %p169 = scmp.ne.s32.totalorder %s160, %s161
    %p170 = scmp.eq.s32.totalorder %s24, 0
    %p171 = por %p169, %p170
    %p172 = scmp.ne.s32.totalorder %s160, %s161
    %p173 = scmp.eq.s32.totalorder %s25, 1
    %p174 = por %p172, %p173
    %p176 = scmp.ne.s32.totalorder %s161, %s175
    %p177 = scmp.eq.s32.totalorder %s25, 0
    %p178 = por %p176, %p177
    %s180 = sadd.s32 %s179, 1
    %p183 = scmp.eq.s32.totalorder %s19, 1
    %p184 = scmp.ne.s32.totalorder %s179, %s181
    %p185 = scmp.eq.s32.totalorder %s19, 0
    %p186 = por %p184, %p185
    %p187 = scmp.ne.s32.totalorder %s179, %s181
    %p188 = scmp.eq.s32.totalorder %s24, 1
    %p189 = por %p187, %p188
    %p190 = scmp.ne.s32.totalorder %s181, %s182
    %p191 = scmp.eq.s32.totalorder %s24, 0
    %p192 = por %p190, %p191
    %p193 = scmp.ne.s32.totalorder %s181, %s182
    %p194 = scmp.eq.s32.totalorder %s25, 1
    %p195 = por %p193, %p194
    %p197 = scmp.ne.s32.totalorder %s182, %s196
    %p198 = scmp.eq.s32.totalorder %s25, 0
    %p199 = por %p197, %p198
    %s201 = sadd.s32 %s200, 1
    %p204 = scmp.eq.s32.totalorder %s19, 1
    %p205 = scmp.ne.s32.totalorder %s200, %s202
    %p206 = scmp.eq.s32.totalorder %s19, 0
    %p207 = por %p205, %p206
    %p208 = scmp.ne.s32.totalorder %s200, %s202
    %p209 = scmp.eq.s32.totalorder %s24, 1
    %p210 = por %p208, %p209
    %p211 = scmp.ne.s32.totalorder %s202, %s203
    %p212 = scmp.eq.s32.totalorder %s24, 0
    %p213 = por %p211, %p212
    %p214 = scmp.ne.s32.totalorder %s202, %s203
    %p215 = scmp.eq.s32.totalorder %s25, 1
    %p216 = por %p214, %p215
    %p218 = scmp.ne.s32.totalorder %s203, %s217
    %p219 = scmp.eq.s32.totalorder %s25, 0
    %p220 = por %p218, %p219
    %s222 = sadd.s32 %s221, 1
    %p225 = scmp.eq.s32.totalorder %s19, 1
    %p226 = scmp.ne.s32.totalorder %s221, %s223
    %p227 = scmp.eq.s32.totalorder %s19, 0
    %p228 = por %p226, %p227
    %p229 = scmp.ne.s32.totalorder %s221, %s223
    %p230 = scmp.eq.s32.totalorder %s24, 1
    %p231 = por %p229, %p230
    %p232 = scmp.ne.s32.totalorder %s223, %s224
    %p233 = scmp.eq.s32.totalorder %s24, 0
    %p234 = por %p232, %p233
    %p235 = scmp.ne.s32.totalorder %s223, %s224
    %p236 = scmp.eq.s32.totalorder %s25, 1
    %p237 = por %p235, %p236
    %p239 = scmp.ne.s32.totalorder %s224, %s238
    %p240 = scmp.eq.s32.totalorder %s25, 0
    %p241 = por %p239, %p240
    %s243 = sadd.s32 %s242, 1
    %p246 = scmp.eq.s32.totalorder %s19, 1
    %p247 = scmp.ne.s32.totalorder %s242, %s244
    %p248 = scmp.eq.s32.totalorder %s19, 0
    %p249 = por %p247, %p248
    %p250 = scmp.ne.s32.totalorder %s242, %s244
    %p251 = scmp.eq.s32.totalorder %s24, 1
    %p252 = por %p250, %p251
    %p253 = scmp.ne.s32.totalorder %s244, %s245
    %p254 = scmp.eq.s32.totalorder %s24, 0
    %p255 = por %p253, %p254
    %p256 = scmp.ne.s32.totalorder %s244, %s245
    %p257 = scmp.eq.s32.totalorder %s25, 1
    %p258 = por %p256, %p257
    %p260 = scmp.ne.s32.totalorder %s245, %s259
    %p261 = scmp.eq.s32.totalorder %s25, 0
    %p262 = por %p260, %p261
    %s264 = sadd.s32 %s263, 1
    %p267 = scmp.eq.s32.totalorder %s19, 1
    %p268 = scmp.ne.s32.totalorder %s263, %s265
    %p269 = scmp.eq.s32.totalorder %s19, 0
    %p270 = por %p268, %p269
    %p271 = scmp.ne.s32.totalorder %s263, %s265
    %p272 = scmp.eq.s32.totalorder %s24, 1
    %p273 = por %p271, %p272
    %p274 = scmp.ne.s32.totalorder %s265, %s266
    %p275 = scmp.eq.s32.totalorder %s24, 0
    %p276 = por %p274, %p275
    %p277 = scmp.ne.s32.totalorder %s265, %s266
    %p278 = scmp.eq.s32.totalorder %s25, 1
    %p279 = por %p277, %p278
    %p281 = scmp.ne.s32.totalorder %s266, %s280
    %p282 = scmp.eq.s32.totalorder %s25, 0
    %p283 = por %p281, %p282
    %s285 = sadd.s32 %s284, 1
    %p288 = scmp.eq.s32.totalorder %s19, 1
    %p289 = scmp.ne.s32.totalorder %s284, %s286
    %p290 = scmp.eq.s32.totalorder %s19, 0
    %p291 = por %p289, %p290
    %p292 = scmp.ne.s32.totalorder %s284, %s286
    %p293 = scmp.eq.s32.totalorder %s24, 1
    %p294 = por %p292, %p293
    %p295 = scmp.ne.s32.totalorder %s286, %s287
    %p296 = scmp.eq.s32.totalorder %s24, 0
    %p297 = por %p295, %p296
    %p298 = scmp.ne.s32.totalorder %s286, %s287
    %p299 = scmp.eq.s32.totalorder %s25, 1
    %p300 = por %p298, %p299
    %p302 = scmp.ne.s32.totalorder %s287, %s301
    %p303 = scmp.eq.s32.totalorder %s25, 0
    %p304 = por %p302, %p303
    %s305 = ssub.s32 %s19, %s26
    %p306 = scmp.eq.s32.totalorder %s305, 0
    %s308 = sadd.s32 %s307, 1
    %s309 = scalar_select %p306, %s307, %s308
    %p312 = pneg %p306
    %p313 = scmp.eq.s32.totalorder %s19, 1
    %p314 = por %p312, %p313
    %p315 = scmp.ne.s32.totalorder %s307, %s310
    %p316 = scmp.eq.s32.totalorder %s19, 0
    %p317 = por %p315, %p316
    %p318 = scmp.ne.s32.totalorder %s307, %s310
    %p319 = scmp.eq.s32.totalorder %s24, 1
    %p320 = por %p318, %p319
    %p321 = scmp.ne.s32.totalorder %s310, %s311
    %p322 = scmp.eq.s32.totalorder %s24, 0
    %p323 = por %p321, %p322
    %p324 = scmp.ne.s32.totalorder %s310, %s311
    %p325 = scmp.eq.s32.totalorder %s25, 1
    %p326 = por %p324, %p325
    %p328 = scmp.ne.s32.totalorder %s311, %s327
    %p329 = scmp.eq.s32.totalorder %s25, 0
    %p330 = por %p328, %p329
    %p331 = scmp.le.s32.totalorder 1, %s19
    %p332 = scmp.lt.s32.totalorder %s19, 3
    %p333 = pnand %p331, %p332
    %p334 = pneg %p333
    // Predicated region
    $region9: #{tpu_custom_call.1} parent=5 // pred_check
      _
    $region10: #{tpu_custom_call.1} parent=5 // pred_check_branch
      %336 = sbr.rel (%p333) target = $region12
    $region11: #{tpu_custom_call.1} parent=5 // pred_region
      %s337 = ssub.s32 %s19, 1
      // Predicated region
      $region13: #{tpu_custom_call.1} parent=11 // pred_check
        %p338 = pneg %p66
      $region14: #{tpu_custom_call.1} parent=11 // pred_check_branch
        %340 = sbr.rel (%p338) target = $region16
      $region15: #{tpu_custom_call.1} parent=11 // pred_region
        _
      $region16: #{tpu_custom_call.1} parent=11 // pred_fallthru
        _
      // Predicated region
      $region17: #{tpu_custom_call.1} parent=11 // pred_check
        %p341 = pneg %p87
      $region18: #{tpu_custom_call.1} parent=11 // pred_check_branch
        %343 = sbr.rel (%p341) target = $region20
      $region19: #{tpu_custom_call.1} parent=11 // pred_region
        _
      $region20: #{tpu_custom_call.1} parent=11 // pred_fallthru
        _
      // Predicated region
      $region21: #{tpu_custom_call.1} parent=11 // pred_check
        %p344 = pneg %p108
      $region22: #{tpu_custom_call.1} parent=11 // pred_check_branch
        %346 = sbr.rel (%p344) target = $region24
      $region23: #{tpu_custom_call.1} parent=11 // pred_region
        _
      $region24: #{tpu_custom_call.1} parent=11 // pred_fallthru
        _
      // Predicated region
      $region25: #{tpu_custom_call.1} parent=11 // pred_check
        %p347 = pneg %p129
      $region26: #{tpu_custom_call.1} parent=11 // pred_check_branch
        %349 = sbr.rel (%p347) target = $region28
      $region27: #{tpu_custom_call.1} parent=11 // pred_region
        _
      $region28: #{tpu_custom_call.1} parent=11 // pred_fallthru
        _
      // Predicated region
      $region29: #{tpu_custom_call.1} parent=11 // pred_check
        %p350 = pneg %p150
      $region30: #{tpu_custom_call.1} parent=11 // pred_check_branch
        %352 = sbr.rel (%p350) target = $region32
      $region31: #{tpu_custom_call.1} parent=11 // pred_region
        _
      $region32: #{tpu_custom_call.1} parent=11 // pred_fallthru
        _
      // Predicated region
      $region33: #{tpu_custom_call.1} parent=11 // pred_check
        %p353 = pneg %p171
      $region34: #{tpu_custom_call.1} parent=11 // pred_check_branch
        %355 = sbr.rel (%p353) target = $region36
      $region35: #{tpu_custom_call.1} parent=11 // pred_region
        _
      $region36: #{tpu_custom_call.1} parent=11 // pred_fallthru
        _
      // Predicated region
      $region37: #{tpu_custom_call.1} parent=11 // pred_check
        %p356 = pneg %p192
      $region38: #{tpu_custom_call.1} parent=11 // pred_check_branch
        %358 = sbr.rel (%p356) target = $region40
      $region39: #{tpu_custom_call.1} parent=11 // pred_region
        _
      $region40: #{tpu_custom_call.1} parent=11 // pred_fallthru
        _
      // Predicated region
      $region41: #{tpu_custom_call.1} parent=11 // pred_check
        %p359 = pneg %p213
      $region42: #{tpu_custom_call.1} parent=11 // pred_check_branch
        %361 = sbr.rel (%p359) target = $region44
      $region43: #{tpu_custom_call.1} parent=11 // pred_region
        _
      $region44: #{tpu_custom_call.1} parent=11 // pred_fallthru
        _
      // Predicated region
      $region45: #{tpu_custom_call.1} parent=11 // pred_check
        %p362 = pneg %p234
      $region46: #{tpu_custom_call.1} parent=11 // pred_check_branch
        %364 = sbr.rel (%p362) target = $region48
      $region47: #{tpu_custom_call.1} parent=11 // pred_region
        _
      $region48: #{tpu_custom_call.1} parent=11 // pred_fallthru
        _
      // Predicated region
      $region49: #{tpu_custom_call.1} parent=11 // pred_check
        %p365 = pneg %p255
      $region50: #{tpu_custom_call.1} parent=11 // pred_check_branch
        %367 = sbr.rel (%p365) target = $region52
      $region51: #{tpu_custom_call.1} parent=11 // pred_region
        _
      $region52: #{tpu_custom_call.1} parent=11 // pred_fallthru
        _
      // Predicated region
      $region53: #{tpu_custom_call.1} parent=11 // pred_check
        %p368 = pneg %p276
      $region54: #{tpu_custom_call.1} parent=11 // pred_check_branch
        %370 = sbr.rel (%p368) target = $region56
      $region55: #{tpu_custom_call.1} parent=11 // pred_region
        _
      $region56: #{tpu_custom_call.1} parent=11 // pred_fallthru
        _
      // Predicated region
      $region57: #{tpu_custom_call.1} parent=11 // pred_check
        %p371 = pneg %p297
      $region58: #{tpu_custom_call.1} parent=11 // pred_check_branch
        %373 = sbr.rel (%p371) target = $region60
      $region59: #{tpu_custom_call.1} parent=11 // pred_region
        _
      $region60: #{tpu_custom_call.1} parent=11 // pred_fallthru
        _
    $region12: #{tpu_custom_call.1} parent=5 // pred_fallthru
      _
    %p374 = scmp.lt.s32.totalorder %s19, 2
    // Predicated region
    $region61: #{tpu_custom_call.1} parent=5 // pred_check
      %p375 = pneg %p374
    $region62: #{tpu_custom_call.1} parent=5 // pred_check_branch
      %377 = sbr.rel (%p375) target = $region64
    $region63: #{tpu_custom_call.1} parent=5 // pred_region
      // Predicated region
      $region65: #{tpu_custom_call.1} parent=63 // pred_check
        %p378 = pneg %p39
      $region66: #{tpu_custom_call.1} parent=63 // pred_check_branch
        %380 = sbr.rel (%p378) target = $region68
      $region67: #{tpu_custom_call.1} parent=63 // pred_region
        %p381 = scmp.lt.s32.totalorder %s19, 1
        %s382 = scalar_select %p381, %s19, 1
        %s383 = smul.addr %s382, 32
        %s384 = smul.addr %s383, 8
        %s385 = scalar_lea.vmem %s0, %s384
      $region68: #{tpu_custom_call.1} parent=63 // pred_fallthru
        _
    $region64: #{tpu_custom_call.1} parent=5 // pred_fallthru
      _
    %p386 = scmp.le.s32.totalorder 1, %s19
    %p387 = scmp.lt.s32.totalorder %s19, 3
    %p388 = pnand %p386, %p387
    %p389 = pneg %p388
    // Predicated region
    $region69: #{tpu_custom_call.1} parent=5 // pred_check
      _
    $region70: #{tpu_custom_call.1} parent=5 // pred_check_branch
      %391 = sbr.rel (%p388) target = $region72
    $region71: #{tpu_custom_call.1} parent=5 // pred_region
      %s392 = ssub.s32 %s19, 1
      %p393 = scmp.lt.s32.totalorder %s24, 1
      %s394 = scalar_select %p393, %s24, 1
      %s395 = smul.addr %s394, 32
      %s396 = smul.addr %s395, 8
      %s397 = scalar_lea.vmem %s0, %s396
      %p398 = pneg %p45
      %p399 = pneg %p42
      %p400 = pneg %p66
      %p401 = pneg %p63
      %p402 = pneg %p87
      %p403 = pneg %p84
      %p404 = pneg %p108
      %p405 = pneg %p105
      %p406 = pneg %p129
      %p407 = pneg %p126
      %p408 = pneg %p150
      %p409 = pneg %p147
      %p410 = pneg %p171
      %p411 = pneg %p168
      %p412 = pneg %p192
      %p413 = pneg %p189
      %p414 = pneg %p213
      %p415 = pneg %p210
      %p416 = pneg %p234
      %p417 = pneg %p231
      %p418 = pneg %p255
      %p419 = pneg %p252
      %p420 = pneg %p276
      %p421 = pneg %p273
      %p422 = pneg %p297
      %p423 = pneg %p294
      %p424 = pneg %p323
      %p425 = pneg %p320
      %p426 = scmp.lt.s32.totalorder %s24, 1
      %s427 = scalar_select %p426, %s24, 1
      %s428 = smul.addr %s427, 7
      %s429 = smul.addr %s428, 8
      %s430 = scalar_lea.vmem %s13, %s429
      %p431 = scmp.lt.s32.totalorder %s24, 1
      %s432 = scalar_select %p431, %s24, 1
      %s433 = smul.addr %s432, 32
      %s434 = smul.addr %s433, 8
      %s435 = scalar_lea.vmem %s0, %s434
      %p436 = scmp.lt.s32.totalorder %s24, 1
      %s437 = scalar_select %p436, %s24, 1
      %s438 = smul.addr %s437, 7
      %s439 = smul.addr %s438, 8
      %s440 = scalar_lea.vmem %s13, %s439
      %v442 = vld [vmem:[%s435] sm:$0xff]
      %v443 = vld [vmem:[%s435 + $0x8] sm:$0xff]
      %v444 = vld [vmem:[%s435 + $0x10] sm:$0xff]
      %v445 = vld [vmem:[%s435 + $0x18] sm:$0xff]
      %v446 = vld [vmem:[%s435 + $0x20] sm:$0xff]
      %v447 = vld [vmem:[%s435 + $0x28] sm:$0xff]
      %v448 = vld [vmem:[%s435 + $0x30] sm:$0xff]
      %v449 = vld [vmem:[%s435 + $0x38] sm:$0xff]
      %v450 = vld [vmem:[%s435 + $0x40] sm:$0xff]
      %v451 = vld [vmem:[%s435 + $0x48] sm:$0xff]
      %v452 = vld [vmem:[%s435 + $0x50] sm:$0xff]
      %v453 = vld [vmem:[%s435 + $0x58] sm:$0xff]
      %v454 = vld [vmem:[%s435 + $0x60] sm:$0xff]
      %v455 = vld [vmem:[%s435 + $0x68] sm:$0xff]
      %v456 = vld [vmem:[%s435 + $0x70] sm:$0xff]
      %v457 = vld [vmem:[%s435 + $0x78] sm:$0xff]
      %v458 = vld [vmem:[%s435 + $0x80] sm:$0xff]
      %v459 = vld [vmem:[%s435 + $0x88] sm:$0xff]
      %v460 = vld [vmem:[%s435 + $0x90] sm:$0xff]
      %v461 = vld [vmem:[%s435 + $0x98] sm:$0xff]
      %v462 = vld [vmem:[%s435 + $0xa0] sm:$0xff]
      %v463 = vld [vmem:[%s435 + $0xa8] sm:$0xff]
      %v464 = vld [vmem:[%s435 + $0xb0] sm:$0xff]
      %v465 = vld [vmem:[%s435 + $0xb8] sm:$0xff]
      %v466 = vld [vmem:[%s435 + $0xc0] sm:$0xff]
      %v467 = vld [vmem:[%s435 + $0xc8] sm:$0xff]
      %v468 = vld [vmem:[%s435 + $0xd0] sm:$0xff]
      %v469 = vld [vmem:[%s435 + $0xd8] sm:$0xff]
      %v470 = vld [vmem:[%s435 + $0xe0] sm:$0xff]
      %v471 = vld [vmem:[%s435 + $0xe8] sm:$0xff]
      %v472 = vld [vmem:[%s435 + $0xf0] sm:$0xff]
      %v473 = vld [vmem:[%s435 + $0xf8] sm:$0xff]
      %v490 = vcombine.high %v442, %v442
      %v492 = vunpack.c.l.s4 1983009808
      %v493 = vunpack.c.0.s8 %v492
      %v494 = vlaneseq
      %v495 = vshrl.u32 %v494, 7
      %v496 = vsub.s32 %v493, %v495
      %v497 = vrot.slane %v442, %v496
      %v499 = vunpack.c.l.s4 1983009808
      %v500 = vunpack.c.0.s8 %v499
      %v501 = vlaneseq
      %v502 = vshrl.u32 %v501, 7
      %v503 = vsub.s32 %v500, %v502
      %v504 = vrot.slane %v490, %v503
      %v505 = vcombine.high %v497, %v497
      %v506 = vcombine.high %v504, %v504
      %v507 = vcombine.high %v443, %v443
      %v509 = vunpack.c.l.s4 1983009808
      %v510 = vunpack.c.0.s8 %v509
      %v511 = vlaneseq
      %v512 = vshrl.u32 %v511, 7
      %v513 = vsub.s32 %v510, %v512
      %v514 = vrot.slane %v443, %v513
      %v516 = vunpack.c.l.s4 1983009808
      %v517 = vunpack.c.0.s8 %v516
      %v518 = vlaneseq
      %v519 = vshrl.u32 %v518, 7
      %v520 = vsub.s32 %v517, %v519
      %v521 = vrot.slane %v507, %v520
      %v522 = vcombine.high %v514, %v514
      %v523 = vcombine.high %v521, %v521
      %v524 = vcombine.high %v446, %v446
      %v526 = vunpack.c.l.s4 1983009808
      %v527 = vunpack.c.0.s8 %v526
      %v528 = vlaneseq
      %v529 = vshrl.u32 %v528, 7
      %v530 = vsub.s32 %v527, %v529
      %v531 = vrot.slane %v446, %v530
      %v533 = vunpack.c.l.s4 1983009808
      %v534 = vunpack.c.0.s8 %v533
      %v535 = vlaneseq
      %v536 = vshrl.u32 %v535, 7
      %v537 = vsub.s32 %v534, %v536
      %v538 = vrot.slane %v524, %v537
      %v539 = vcombine.high %v531, %v531
      %v540 = vcombine.high %v538, %v538
      %v541 = vcombine.high %v447, %v447
      %v543 = vunpack.c.l.s4 1983009808
      %v544 = vunpack.c.0.s8 %v543
      %v545 = vlaneseq
      %v546 = vshrl.u32 %v545, 7
      %v547 = vsub.s32 %v544, %v546
      %v548 = vrot.slane %v447, %v547
      %v550 = vunpack.c.l.s4 1983009808
      %v551 = vunpack.c.0.s8 %v550
      %v552 = vlaneseq
      %v553 = vshrl.u32 %v552, 7
      %v554 = vsub.s32 %v551, %v553
      %v555 = vrot.slane %v541, %v554
      %v556 = vcombine.high %v548, %v548
      %v557 = vcombine.high %v555, %v555
      %v558 = vcombine.high %v450, %v450
      %v560 = vunpack.c.l.s4 1983009808
      %v561 = vunpack.c.0.s8 %v560
      %v562 = vlaneseq
      %v563 = vshrl.u32 %v562, 7
      %v564 = vsub.s32 %v561, %v563
      %v565 = vrot.slane %v450, %v564
      %v567 = vunpack.c.l.s4 1983009808
      %v568 = vunpack.c.0.s8 %v567
      %v569 = vlaneseq
      %v570 = vshrl.u32 %v569, 7
      %v571 = vsub.s32 %v568, %v570
      %v572 = vrot.slane %v558, %v571
      %v573 = vcombine.high %v565, %v565
      %v574 = vcombine.high %v572, %v572
      %v575 = vcombine.high %v451, %v451
      %v577 = vunpack.c.l.s4 1983009808
      %v578 = vunpack.c.0.s8 %v577
      %v579 = vlaneseq
      %v580 = vshrl.u32 %v579, 7
      %v581 = vsub.s32 %v578, %v580
      %v582 = vrot.slane %v451, %v581
      %v584 = vunpack.c.l.s4 1983009808
      %v585 = vunpack.c.0.s8 %v584
      %v586 = vlaneseq
      %v587 = vshrl.u32 %v586, 7
      %v588 = vsub.s32 %v585, %v587
      %v589 = vrot.slane %v575, %v588
      %v590 = vcombine.high %v582, %v582
      %v591 = vcombine.high %v589, %v589
      %v592 = vcombine.high %v454, %v454
      %v594 = vunpack.c.l.s4 1983009808
      %v595 = vunpack.c.0.s8 %v594
      %v596 = vlaneseq
      %v597 = vshrl.u32 %v596, 7
      %v598 = vsub.s32 %v595, %v597
      %v599 = vrot.slane %v454, %v598
      %v601 = vunpack.c.l.s4 1983009808
      %v602 = vunpack.c.0.s8 %v601
      %v603 = vlaneseq
      %v604 = vshrl.u32 %v603, 7
      %v605 = vsub.s32 %v602, %v604
      %v606 = vrot.slane %v592, %v605
      %v607 = vcombine.high %v599, %v599
      %v608 = vcombine.high %v606, %v606
      %v609 = vcombine.high %v455, %v455
      %v611 = vunpack.c.l.s4 1983009808
      %v612 = vunpack.c.0.s8 %v611
      %v613 = vlaneseq
      %v614 = vshrl.u32 %v613, 7
      %v615 = vsub.s32 %v612, %v614
      %v616 = vrot.slane %v455, %v615
      %v618 = vunpack.c.l.s4 1983009808
      %v619 = vunpack.c.0.s8 %v618
      %v620 = vlaneseq
      %v621 = vshrl.u32 %v620, 7
      %v622 = vsub.s32 %v619, %v621
      %v623 = vrot.slane %v609, %v622
      %v624 = vcombine.high %v616, %v616
      %v625 = vcombine.high %v623, %v623
      %v626 = vcombine.high %v458, %v458
      %v628 = vunpack.c.l.s4 1983009808
      %v629 = vunpack.c.0.s8 %v628
      %v630 = vlaneseq
      %v631 = vshrl.u32 %v630, 7
      %v632 = vsub.s32 %v629, %v631
      %v633 = vrot.slane %v458, %v632
      %v635 = vunpack.c.l.s4 1983009808
      %v636 = vunpack.c.0.s8 %v635
      %v637 = vlaneseq
      %v638 = vshrl.u32 %v637, 7
      %v639 = vsub.s32 %v636, %v638
      %v640 = vrot.slane %v626, %v639
      %v641 = vcombine.high %v633, %v633
      %v642 = vcombine.high %v640, %v640
      %v643 = vcombine.high %v459, %v459
      %v645 = vunpack.c.l.s4 1983009808
      %v646 = vunpack.c.0.s8 %v645
      %v647 = vlaneseq
      %v648 = vshrl.u32 %v647, 7
      %v649 = vsub.s32 %v646, %v648
      %v650 = vrot.slane %v459, %v649
      %v652 = vunpack.c.l.s4 1983009808
      %v653 = vunpack.c.0.s8 %v652
      %v654 = vlaneseq
      %v655 = vshrl.u32 %v654, 7
      %v656 = vsub.s32 %v653, %v655
      %v657 = vrot.slane %v643, %v656
      %v658 = vcombine.high %v650, %v650
      %v659 = vcombine.high %v657, %v657
      %v660 = vcombine.high %v462, %v462
      %v662 = vunpack.c.l.s4 1983009808
      %v663 = vunpack.c.0.s8 %v662
      %v664 = vlaneseq
      %v665 = vshrl.u32 %v664, 7
      %v666 = vsub.s32 %v663, %v665
      %v667 = vrot.slane %v462, %v666
      %v669 = vunpack.c.l.s4 1983009808
      %v670 = vunpack.c.0.s8 %v669
      %v671 = vlaneseq
      %v672 = vshrl.u32 %v671, 7
      %v673 = vsub.s32 %v670, %v672
      %v674 = vrot.slane %v660, %v673
      %v675 = vcombine.high %v667, %v667
      %v676 = vcombine.high %v674, %v674
      %v677 = vcombine.high %v463, %v463
      %v679 = vunpack.c.l.s4 1983009808
      %v680 = vunpack.c.0.s8 %v679
      %v681 = vlaneseq
      %v682 = vshrl.u32 %v681, 7
      %v683 = vsub.s32 %v680, %v682
      %v684 = vrot.slane %v463, %v683
      %v686 = vunpack.c.l.s4 1983009808
      %v687 = vunpack.c.0.s8 %v686
      %v688 = vlaneseq
      %v689 = vshrl.u32 %v688, 7
      %v690 = vsub.s32 %v687, %v689
      %v691 = vrot.slane %v677, %v690
      %v692 = vcombine.high %v684, %v684
      %v693 = vcombine.high %v691, %v691
      %v694 = vcombine.high %v466, %v466
      %v696 = vunpack.c.l.s4 1983009808
      %v697 = vunpack.c.0.s8 %v696
      %v698 = vlaneseq
      %v699 = vshrl.u32 %v698, 7
      %v700 = vsub.s32 %v697, %v699
      %v701 = vrot.slane %v466, %v700
      %v703 = vunpack.c.l.s4 1983009808
      %v704 = vunpack.c.0.s8 %v703
      %v705 = vlaneseq
      %v706 = vshrl.u32 %v705, 7
      %v707 = vsub.s32 %v704, %v706
      %v708 = vrot.slane %v694, %v707
      %v709 = vcombine.high %v701, %v701
      %v710 = vcombine.high %v708, %v708
      %v711 = vcombine.high %v467, %v467
      %v713 = vunpack.c.l.s4 1983009808
      %v714 = vunpack.c.0.s8 %v713
      %v715 = vlaneseq
      %v716 = vshrl.u32 %v715, 7
      %v717 = vsub.s32 %v714, %v716
      %v718 = vrot.slane %v467, %v717
      %v720 = vunpack.c.l.s4 1983009808
      %v721 = vunpack.c.0.s8 %v720
      %v722 = vlaneseq
      %v723 = vshrl.u32 %v722, 7
      %v724 = vsub.s32 %v721, %v723
      %v725 = vrot.slane %v711, %v724
      %v726 = vcombine.high %v718, %v718
      %v727 = vcombine.high %v725, %v725
      %v728 = vcombine.high %v470, %v470
      %v730 = vunpack.c.l.s4 1983009808
      %v731 = vunpack.c.0.s8 %v730
      %v732 = vlaneseq
      %v733 = vshrl.u32 %v732, 7
      %v734 = vsub.s32 %v731, %v733
      %v735 = vrot.slane %v470, %v734
      %v737 = vunpack.c.l.s4 1983009808
      %v738 = vunpack.c.0.s8 %v737
      %v739 = vlaneseq
      %v740 = vshrl.u32 %v739, 7
      %v741 = vsub.s32 %v738, %v740
      %v742 = vrot.slane %v728, %v741
      %v743 = vcombine.high %v735, %v735
      %v744 = vcombine.high %v742, %v742
      %v745 = vcombine.high %v471, %v471
      %v747 = vunpack.c.l.s4 1983009808
      %v748 = vunpack.c.0.s8 %v747
      %v749 = vlaneseq
      %v750 = vshrl.u32 %v749, 7
      %v751 = vsub.s32 %v748, %v750
      %v752 = vrot.slane %v471, %v751
      %v754 = vunpack.c.l.s4 1983009808
      %v755 = vunpack.c.0.s8 %v754
      %v756 = vlaneseq
      %v757 = vshrl.u32 %v756, 7
      %v758 = vsub.s32 %v755, %v757
      %v759 = vrot.slane %v745, %v758
      %v760 = vcombine.high %v752, %v752
      %v761 = vcombine.high %v759, %v759
      %v840 = vcombine.high %v444, %v444
      %v842 = vunpack.c.l.s4 1983009808
      %v843 = vunpack.c.0.s8 %v842
      %v844 = vlaneseq
      %v845 = vshrl.u32 %v844, 7
      %v846 = vsub.s32 %v843, %v845
      %v847 = vrot.slane %v444, %v846
      %v849 = vunpack.c.l.s4 1983009808
      %v850 = vunpack.c.0.s8 %v849
      %v851 = vlaneseq
      %v852 = vshrl.u32 %v851, 7
      %v853 = vsub.s32 %v850, %v852
      %v854 = vrot.slane %v840, %v853
      %v855 = vcombine.high %v847, %v847
      %v856 = vcombine.high %v854, %v854
      %v857 = vcombine.high %v445, %v445
      %v859 = vunpack.c.l.s4 1983009808
      %v860 = vunpack.c.0.s8 %v859
      %v861 = vlaneseq
      %v862 = vshrl.u32 %v861, 7
      %v863 = vsub.s32 %v860, %v862
      %v864 = vrot.slane %v445, %v863
      %v866 = vunpack.c.l.s4 1983009808
      %v867 = vunpack.c.0.s8 %v866
      %v868 = vlaneseq
      %v869 = vshrl.u32 %v868, 7
      %v870 = vsub.s32 %v867, %v869
      %v871 = vrot.slane %v857, %v870
      %v872 = vcombine.high %v864, %v864
      %v873 = vcombine.high %v871, %v871
      %v874 = vcombine.high %v448, %v448
      %v876 = vunpack.c.l.s4 1983009808
      %v877 = vunpack.c.0.s8 %v876
      %v878 = vlaneseq
      %v879 = vshrl.u32 %v878, 7
      %v880 = vsub.s32 %v877, %v879
      %v881 = vrot.slane %v448, %v880
      %v883 = vunpack.c.l.s4 1983009808
      %v884 = vunpack.c.0.s8 %v883
      %v885 = vlaneseq
      %v886 = vshrl.u32 %v885, 7
      %v887 = vsub.s32 %v884, %v886
      %v888 = vrot.slane %v874, %v887
      %v889 = vcombine.high %v881, %v881
      %v890 = vcombine.high %v888, %v888
      %v891 = vcombine.high %v449, %v449
      %v893 = vunpack.c.l.s4 1983009808
      %v894 = vunpack.c.0.s8 %v893
      %v895 = vlaneseq
      %v896 = vshrl.u32 %v895, 7
      %v897 = vsub.s32 %v894, %v896
      %v898 = vrot.slane %v449, %v897
      %v900 = vunpack.c.l.s4 1983009808
      %v901 = vunpack.c.0.s8 %v900
      %v902 = vlaneseq
      %v903 = vshrl.u32 %v902, 7
      %v904 = vsub.s32 %v901, %v903
      %v905 = vrot.slane %v891, %v904
      %v906 = vcombine.high %v898, %v898
      %v907 = vcombine.high %v905, %v905
      %v908 = vcombine.high %v452, %v452
      %v910 = vunpack.c.l.s4 1983009808
      %v911 = vunpack.c.0.s8 %v910
      %v912 = vlaneseq
      %v913 = vshrl.u32 %v912, 7
      %v914 = vsub.s32 %v911, %v913
      %v915 = vrot.slane %v452, %v914
      %v917 = vunpack.c.l.s4 1983009808
      %v918 = vunpack.c.0.s8 %v917
      %v919 = vlaneseq
      %v920 = vshrl.u32 %v919, 7
      %v921 = vsub.s32 %v918, %v920
      %v922 = vrot.slane %v908, %v921
      %v923 = vcombine.high %v915, %v915
      %v924 = vcombine.high %v922, %v922
      %v925 = vcombine.high %v453, %v453
      %v927 = vunpack.c.l.s4 1983009808
      %v928 = vunpack.c.0.s8 %v927
      %v929 = vlaneseq
      %v930 = vshrl.u32 %v929, 7
      %v931 = vsub.s32 %v928, %v930
      %v932 = vrot.slane %v453, %v931
      %v934 = vunpack.c.l.s4 1983009808
      %v935 = vunpack.c.0.s8 %v934
      %v936 = vlaneseq
      %v937 = vshrl.u32 %v936, 7
      %v938 = vsub.s32 %v935, %v937
      %v939 = vrot.slane %v925, %v938
      %v940 = vcombine.high %v932, %v932
      %v941 = vcombine.high %v939, %v939
      %v942 = vcombine.high %v456, %v456
      %v944 = vunpack.c.l.s4 1983009808
      %v945 = vunpack.c.0.s8 %v944
      %v946 = vlaneseq
      %v947 = vshrl.u32 %v946, 7
      %v948 = vsub.s32 %v945, %v947
      %v949 = vrot.slane %v456, %v948
      %v951 = vunpack.c.l.s4 1983009808
      %v952 = vunpack.c.0.s8 %v951
      %v953 = vlaneseq
      %v954 = vshrl.u32 %v953, 7
      %v955 = vsub.s32 %v952, %v954
      %v956 = vrot.slane %v942, %v955
      %v957 = vcombine.high %v949, %v949
      %v958 = vcombine.high %v956, %v956
      %v959 = vcombine.high %v457, %v457
      %v961 = vunpack.c.l.s4 1983009808
      %v962 = vunpack.c.0.s8 %v961
      %v963 = vlaneseq
      %v964 = vshrl.u32 %v963, 7
      %v965 = vsub.s32 %v962, %v964
      %v966 = vrot.slane %v457, %v965
      %v968 = vunpack.c.l.s4 1983009808
      %v969 = vunpack.c.0.s8 %v968
      %v970 = vlaneseq
      %v971 = vshrl.u32 %v970, 7
      %v972 = vsub.s32 %v969, %v971
      %v973 = vrot.slane %v959, %v972
      %v974 = vcombine.high %v966, %v966
      %v975 = vcombine.high %v973, %v973
      %v976 = vcombine.high %v460, %v460
      %v978 = vunpack.c.l.s4 1983009808
      %v979 = vunpack.c.0.s8 %v978
      %v980 = vlaneseq
      %v981 = vshrl.u32 %v980, 7
      %v982 = vsub.s32 %v979, %v981
      %v983 = vrot.slane %v460, %v982
      %v985 = vunpack.c.l.s4 1983009808
      %v986 = vunpack.c.0.s8 %v985
      %v987 = vlaneseq
      %v988 = vshrl.u32 %v987, 7
      %v989 = vsub.s32 %v986, %v988
      %v990 = vrot.slane %v976, %v989
      %v991 = vcombine.high %v983, %v983
      %v992 = vcombine.high %v990, %v990
      %v993 = vcombine.high %v461, %v461
      %v995 = vunpack.c.l.s4 1983009808
      %v996 = vunpack.c.0.s8 %v995
      %v997 = vlaneseq
      %v998 = vshrl.u32 %v997, 7
      %v999 = vsub.s32 %v996, %v998
      %v1000 = vrot.slane %v461, %v999
      %v1002 = vunpack.c.l.s4 1983009808
      %v1003 = vunpack.c.0.s8 %v1002
      %v1004 = vlaneseq
      %v1005 = vshrl.u32 %v1004, 7
      %v1006 = vsub.s32 %v1003, %v1005
      %v1007 = vrot.slane %v993, %v1006
      %v1008 = vcombine.high %v1000, %v1000
      %v1009 = vcombine.high %v1007, %v1007
      %v1010 = vcombine.high %v464, %v464
      %v1012 = vunpack.c.l.s4 1983009808
      %v1013 = vunpack.c.0.s8 %v1012
      %v1014 = vlaneseq
      %v1015 = vshrl.u32 %v1014, 7
      %v1016 = vsub.s32 %v1013, %v1015
      %v1017 = vrot.slane %v464, %v1016
      %v1019 = vunpack.c.l.s4 1983009808
      %v1020 = vunpack.c.0.s8 %v1019
      %v1021 = vlaneseq
      %v1022 = vshrl.u32 %v1021, 7
      %v1023 = vsub.s32 %v1020, %v1022
      %v1024 = vrot.slane %v1010, %v1023
      %v1025 = vcombine.high %v1017, %v1017
      %v1026 = vcombine.high %v1024, %v1024
      %v1027 = vcombine.high %v465, %v465
      %v1029 = vunpack.c.l.s4 1983009808
      %v1030 = vunpack.c.0.s8 %v1029
      %v1031 = vlaneseq
      %v1032 = vshrl.u32 %v1031, 7
      %v1033 = vsub.s32 %v1030, %v1032
      %v1034 = vrot.slane %v465, %v1033
      %v1036 = vunpack.c.l.s4 1983009808
      %v1037 = vunpack.c.0.s8 %v1036
      %v1038 = vlaneseq
      %v1039 = vshrl.u32 %v1038, 7
      %v1040 = vsub.s32 %v1037, %v1039
      %v1041 = vrot.slane %v1027, %v1040
      %v1042 = vcombine.high %v1034, %v1034
      %v1043 = vcombine.high %v1041, %v1041
      %v1044 = vcombine.high %v468, %v468
      %v1046 = vunpack.c.l.s4 1983009808
      %v1047 = vunpack.c.0.s8 %v1046
      %v1048 = vlaneseq
      %v1049 = vshrl.u32 %v1048, 7
      %v1050 = vsub.s32 %v1047, %v1049
      %v1051 = vrot.slane %v468, %v1050
      %v1053 = vunpack.c.l.s4 1983009808
      %v1054 = vunpack.c.0.s8 %v1053
      %v1055 = vlaneseq
      %v1056 = vshrl.u32 %v1055, 7
      %v1057 = vsub.s32 %v1054, %v1056
      %v1058 = vrot.slane %v1044, %v1057
      %v1059 = vcombine.high %v1051, %v1051
      %v1060 = vcombine.high %v1058, %v1058
      %v1061 = vcombine.high %v469, %v469
      %v1063 = vunpack.c.l.s4 1983009808
      %v1064 = vunpack.c.0.s8 %v1063
      %v1065 = vlaneseq
      %v1066 = vshrl.u32 %v1065, 7
      %v1067 = vsub.s32 %v1064, %v1066
      %v1068 = vrot.slane %v469, %v1067
      %v1070 = vunpack.c.l.s4 1983009808
      %v1071 = vunpack.c.0.s8 %v1070
      %v1072 = vlaneseq
      %v1073 = vshrl.u32 %v1072, 7
      %v1074 = vsub.s32 %v1071, %v1073
      %v1075 = vrot.slane %v1061, %v1074
      %v1076 = vcombine.high %v1068, %v1068
      %v1077 = vcombine.high %v1075, %v1075
      %v1134 = vlaneseq
      %v1135 = vshrl.u32 %v1134, 7
      %v1136 = vsub.s32 0, %v1135
      %v1137 = vrot.slane %v497, %v1136
      %v1138 = vlaneseq
      %v1139 = vshrl.u32 %v1138, 7
      %v1140 = vsub.s32 0, %v1139
      %v1141 = vrot.slane %v505, %v1140
      %v1142 = vlaneseq
      %v1143 = vshrl.u32 %v1142, 7
      %v1144 = vsub.s32 0, %v1143
      %v1145 = vrot.slane %v504, %v1144
      %v1146 = vlaneseq
      %v1147 = vshrl.u32 %v1146, 7
      %v1148 = vsub.s32 0, %v1147
      %v1149 = vrot.slane %v506, %v1148
      %v1150 = vlaneseq
      %v1151 = vshrl.u32 %v1150, 7
      %v1152 = vsub.s32 0, %v1151
      %v1153 = vrot.slane %v514, %v1152
      %v1154 = vlaneseq
      %v1155 = vshrl.u32 %v1154, 7
      %v1156 = vsub.s32 0, %v1155
      %v1157 = vrot.slane %v522, %v1156
      %v1158 = vlaneseq
      %v1159 = vshrl.u32 %v1158, 7
      %v1160 = vsub.s32 0, %v1159
      %v1161 = vrot.slane %v521, %v1160
      %v1162 = vlaneseq
      %v1163 = vshrl.u32 %v1162, 7
      %v1164 = vsub.s32 0, %v1163
      %v1165 = vrot.slane %v531, %v1164
      %v1166 = vlaneseq
      %v1167 = vshrl.u32 %v1166, 7
      %v1168 = vsub.s32 0, %v1167
      %v1169 = vrot.slane %v539, %v1168
      %v1170 = vlaneseq
      %v1171 = vshrl.u32 %v1170, 7
      %v1172 = vsub.s32 0, %v1171
      %v1173 = vrot.slane %v538, %v1172
      %v1174 = vlaneseq
      %v1175 = vshrl.u32 %v1174, 7
      %v1176 = vsub.s32 0, %v1175
      %v1177 = vrot.slane %v540, %v1176
      %v1178 = vlaneseq
      %v1179 = vshrl.u32 %v1178, 7
      %v1180 = vsub.s32 0, %v1179
      %v1181 = vrot.slane %v548, %v1180
      %v1182 = vlaneseq
      %v1183 = vshrl.u32 %v1182, 7
      %v1184 = vsub.s32 0, %v1183
      %v1185 = vrot.slane %v556, %v1184
      %v1186 = vlaneseq
      %v1187 = vshrl.u32 %v1186, 7
      %v1188 = vsub.s32 0, %v1187
      %v1189 = vrot.slane %v555, %v1188
      %v1190 = vlaneseq
      %v1191 = vshrl.u32 %v1190, 7
      %v1192 = vsub.s32 0, %v1191
      %v1193 = vrot.slane %v565, %v1192
      %v1194 = vlaneseq
      %v1195 = vshrl.u32 %v1194, 7
      %v1196 = vsub.s32 0, %v1195
      %v1197 = vrot.slane %v573, %v1196
      %v1198 = vlaneseq
      %v1199 = vshrl.u32 %v1198, 7
      %v1200 = vsub.s32 0, %v1199
      %v1201 = vrot.slane %v572, %v1200
      %v1202 = vlaneseq
      %v1203 = vshrl.u32 %v1202, 7
      %v1204 = vsub.s32 0, %v1203
      %v1205 = vrot.slane %v574, %v1204
      %v1206 = vlaneseq
      %v1207 = vshrl.u32 %v1206, 7
      %v1208 = vsub.s32 0, %v1207
      %v1209 = vrot.slane %v582, %v1208
      %v1210 = vlaneseq
      %v1211 = vshrl.u32 %v1210, 7
      %v1212 = vsub.s32 0, %v1211
      %v1213 = vrot.slane %v590, %v1212
      %v1214 = vlaneseq
      %v1215 = vshrl.u32 %v1214, 7
      %v1216 = vsub.s32 0, %v1215
      %v1217 = vrot.slane %v589, %v1216
      %v1218 = vlaneseq
      %v1219 = vshrl.u32 %v1218, 7
      %v1220 = vsub.s32 0, %v1219
      %v1221 = vrot.slane %v599, %v1220
      %v1222 = vlaneseq
      %v1223 = vshrl.u32 %v1222, 7
      %v1224 = vsub.s32 0, %v1223
      %v1225 = vrot.slane %v607, %v1224
      %v1226 = vlaneseq
      %v1227 = vshrl.u32 %v1226, 7
      %v1228 = vsub.s32 0, %v1227
      %v1229 = vrot.slane %v606, %v1228
      %v1230 = vlaneseq
      %v1231 = vshrl.u32 %v1230, 7
      %v1232 = vsub.s32 0, %v1231
      %v1233 = vrot.slane %v608, %v1232
      %v1234 = vlaneseq
      %v1235 = vshrl.u32 %v1234, 7
      %v1236 = vsub.s32 0, %v1235
      %v1237 = vrot.slane %v616, %v1236
      %v1238 = vlaneseq
      %v1239 = vshrl.u32 %v1238, 7
      %v1240 = vsub.s32 0, %v1239
      %v1241 = vrot.slane %v624, %v1240
      %v1242 = vlaneseq
      %v1243 = vshrl.u32 %v1242, 7
      %v1244 = vsub.s32 0, %v1243
      %v1245 = vrot.slane %v623, %v1244
      %v1246 = vlaneseq
      %v1247 = vshrl.u32 %v1246, 7
      %v1248 = vsub.s32 0, %v1247
      %v1249 = vrot.slane %v633, %v1248
      %v1250 = vlaneseq
      %v1251 = vshrl.u32 %v1250, 7
      %v1252 = vsub.s32 0, %v1251
      %v1253 = vrot.slane %v641, %v1252
      %v1254 = vlaneseq
      %v1255 = vshrl.u32 %v1254, 7
      %v1256 = vsub.s32 0, %v1255
      %v1257 = vrot.slane %v640, %v1256
      %v1258 = vlaneseq
      %v1259 = vshrl.u32 %v1258, 7
      %v1260 = vsub.s32 0, %v1259
      %v1261 = vrot.slane %v642, %v1260
      %v1262 = vlaneseq
      %v1263 = vshrl.u32 %v1262, 7
      %v1264 = vsub.s32 0, %v1263
      %v1265 = vrot.slane %v650, %v1264
      %v1266 = vlaneseq
      %v1267 = vshrl.u32 %v1266, 7
      %v1268 = vsub.s32 0, %v1267
      %v1269 = vrot.slane %v658, %v1268
      %v1270 = vlaneseq
      %v1271 = vshrl.u32 %v1270, 7
      %v1272 = vsub.s32 0, %v1271
      %v1273 = vrot.slane %v657, %v1272
      %v1274 = vlaneseq
      %v1275 = vshrl.u32 %v1274, 7
      %v1276 = vsub.s32 0, %v1275
      %v1277 = vrot.slane %v667, %v1276
      %v1278 = vlaneseq
      %v1279 = vshrl.u32 %v1278, 7
      %v1280 = vsub.s32 0, %v1279
      %v1281 = vrot.slane %v675, %v1280
      %v1282 = vlaneseq
      %v1283 = vshrl.u32 %v1282, 7
      %v1284 = vsub.s32 0, %v1283
      %v1285 = vrot.slane %v674, %v1284
      %v1286 = vlaneseq
      %v1287 = vshrl.u32 %v1286, 7
      %v1288 = vsub.s32 0, %v1287
      %v1289 = vrot.slane %v676, %v1288
      %v1290 = vlaneseq
      %v1291 = vshrl.u32 %v1290, 7
      %v1292 = vsub.s32 0, %v1291
      %v1293 = vrot.slane %v684, %v1292
      %v1294 = vlaneseq
      %v1295 = vshrl.u32 %v1294, 7
      %v1296 = vsub.s32 0, %v1295
      %v1297 = vrot.slane %v692, %v1296
      %v1298 = vlaneseq
      %v1299 = vshrl.u32 %v1298, 7
      %v1300 = vsub.s32 0, %v1299
      %v1301 = vrot.slane %v691, %v1300
      %v1302 = vlaneseq
      %v1303 = vshrl.u32 %v1302, 7
      %v1304 = vsub.s32 0, %v1303
      %v1305 = vrot.slane %v701, %v1304
      %v1306 = vlaneseq
      %v1307 = vshrl.u32 %v1306, 7
      %v1308 = vsub.s32 0, %v1307
      %v1309 = vrot.slane %v709, %v1308
      %v1310 = vlaneseq
      %v1311 = vshrl.u32 %v1310, 7
      %v1312 = vsub.s32 0, %v1311
      %v1313 = vrot.slane %v708, %v1312
      %v1314 = vlaneseq
      %v1315 = vshrl.u32 %v1314, 7
      %v1316 = vsub.s32 0, %v1315
      %v1317 = vrot.slane %v710, %v1316
      %v1318 = vlaneseq
      %v1319 = vshrl.u32 %v1318, 7
      %v1320 = vsub.s32 0, %v1319
      %v1321 = vrot.slane %v718, %v1320
      %v1322 = vlaneseq
      %v1323 = vshrl.u32 %v1322, 7
      %v1324 = vsub.s32 0, %v1323
      %v1325 = vrot.slane %v726, %v1324
      %v1326 = vlaneseq
      %v1327 = vshrl.u32 %v1326, 7
      %v1328 = vsub.s32 0, %v1327
      %v1329 = vrot.slane %v725, %v1328
      %vm1330 = vcmask 1041409
      %v1331 = vsel %vm1330, %v1141, %v1137
      %vm1332 = vcmask 1042434
      %v1333 = vsel %vm1332, %v1145, %v1331
      %vm1334 = vcmask 1043459
      %v1335 = vsel %vm1334, %v1149, %v1333
      %vm1336 = vcmask 1044484
      %v1337 = vsel %vm1336, %v1153, %v1335
      %vm1338 = vcmask 1045509
      %v1339 = vsel %vm1338, %v1157, %v1337
      %vm1340 = vcmask 1046534
      %v1341 = vsel %vm1340, %v1161, %v1339
      %v1342 = vsel %vm1330, %v1169, %v1165
      %v1343 = vsel %vm1332, %v1173, %v1342
      %v1344 = vsel %vm1334, %v1177, %v1343
      %v1345 = vsel %vm1336, %v1181, %v1344
      %v1346 = vsel %vm1338, %v1185, %v1345
      %v1347 = vsel %vm1340, %v1189, %v1346
      %v1348 = vsel %vm1330, %v1197, %v1193
      %v1349 = vsel %vm1332, %v1201, %v1348
      %v1350 = vsel %vm1334, %v1205, %v1349
      %v1351 = vsel %vm1336, %v1209, %v1350
      %v1352 = vsel %vm1338, %v1213, %v1351
      %v1353 = vsel %vm1340, %v1217, %v1352
      %v1354 = vsel %vm1330, %v1225, %v1221
      %v1355 = vsel %vm1332, %v1229, %v1354
      %v1356 = vsel %vm1334, %v1233, %v1355
      %v1357 = vsel %vm1336, %v1237, %v1356
      %v1358 = vsel %vm1338, %v1241, %v1357
      %v1359 = vsel %vm1340, %v1245, %v1358
      %v1360 = vsel %vm1330, %v1253, %v1249
      %v1361 = vsel %vm1332, %v1257, %v1360
      %v1362 = vsel %vm1334, %v1261, %v1361
      %v1363 = vsel %vm1336, %v1265, %v1362
      %v1364 = vsel %vm1338, %v1269, %v1363
      %v1365 = vsel %vm1340, %v1273, %v1364
      %v1366 = vsel %vm1330, %v1281, %v1277
      %v1367 = vsel %vm1332, %v1285, %v1366
      %v1368 = vsel %vm1334, %v1289, %v1367
      %v1369 = vsel %vm1336, %v1293, %v1368
      %v1370 = vsel %vm1338, %v1297, %v1369
      %v1371 = vsel %vm1340, %v1301, %v1370
      %v1372 = vsel %vm1330, %v1309, %v1305
      %v1373 = vsel %vm1332, %v1313, %v1372
      %v1374 = vsel %vm1334, %v1317, %v1373
      %v1375 = vsel %vm1336, %v1321, %v1374
      %v1376 = vsel %vm1338, %v1325, %v1375
      %v1377 = vsel %vm1340, %v1329, %v1376
      %v1385 = vlaneseq
      %v1386 = vshrl.u32 %v1385, 7
      %v1387 = vsub.s32 1, %v1386
      %v1388 = vrot.slane %v497, %v1387
      %v1389 = vlaneseq
      %v1390 = vshrl.u32 %v1389, 7
      %v1391 = vsub.s32 1, %v1390
      %v1392 = vrot.slane %v505, %v1391
      %v1393 = vlaneseq
      %v1394 = vshrl.u32 %v1393, 7
      %v1395 = vsub.s32 1, %v1394
      %v1396 = vrot.slane %v504, %v1395
      %v1397 = vlaneseq
      %v1398 = vshrl.u32 %v1397, 7
      %v1399 = vsub.s32 1, %v1398
      %v1400 = vrot.slane %v506, %v1399
      %v1401 = vlaneseq
      %v1402 = vshrl.u32 %v1401, 7
      %v1403 = vsub.s32 1, %v1402
      %v1404 = vrot.slane %v514, %v1403
      %v1405 = vlaneseq
      %v1406 = vshrl.u32 %v1405, 7
      %v1407 = vsub.s32 1, %v1406
      %v1408 = vrot.slane %v522, %v1407
      %v1409 = vlaneseq
      %v1410 = vshrl.u32 %v1409, 7
      %v1411 = vsub.s32 1, %v1410
      %v1412 = vrot.slane %v521, %v1411
      %v1413 = vlaneseq
      %v1414 = vshrl.u32 %v1413, 7
      %v1415 = vsub.s32 1, %v1414
      %v1416 = vrot.slane %v531, %v1415
      %v1417 = vlaneseq
      %v1418 = vshrl.u32 %v1417, 7
      %v1419 = vsub.s32 1, %v1418
      %v1420 = vrot.slane %v539, %v1419
      %v1421 = vlaneseq
      %v1422 = vshrl.u32 %v1421, 7
      %v1423 = vsub.s32 1, %v1422
      %v1424 = vrot.slane %v538, %v1423
      %v1425 = vlaneseq
      %v1426 = vshrl.u32 %v1425, 7
      %v1427 = vsub.s32 1, %v1426
      %v1428 = vrot.slane %v540, %v1427
      %v1429 = vlaneseq
      %v1430 = vshrl.u32 %v1429, 7
      %v1431 = vsub.s32 1, %v1430
      %v1432 = vrot.slane %v548, %v1431
      %v1433 = vlaneseq
      %v1434 = vshrl.u32 %v1433, 7
      %v1435 = vsub.s32 1, %v1434
      %v1436 = vrot.slane %v556, %v1435
      %v1437 = vlaneseq
      %v1438 = vshrl.u32 %v1437, 7
      %v1439 = vsub.s32 1, %v1438
      %v1440 = vrot.slane %v555, %v1439
      %v1441 = vlaneseq
      %v1442 = vshrl.u32 %v1441, 7
      %v1443 = vsub.s32 1, %v1442
      %v1444 = vrot.slane %v565, %v1443
      %v1445 = vlaneseq
      %v1446 = vshrl.u32 %v1445, 7
      %v1447 = vsub.s32 1, %v1446
      %v1448 = vrot.slane %v573, %v1447
      %v1449 = vlaneseq
      %v1450 = vshrl.u32 %v1449, 7
      %v1451 = vsub.s32 1, %v1450
      %v1452 = vrot.slane %v572, %v1451
      %v1453 = vlaneseq
      %v1454 = vshrl.u32 %v1453, 7
      %v1455 = vsub.s32 1, %v1454
      %v1456 = vrot.slane %v574, %v1455
      %v1457 = vlaneseq
      %v1458 = vshrl.u32 %v1457, 7
      %v1459 = vsub.s32 1, %v1458
      %v1460 = vrot.slane %v582, %v1459
      %v1461 = vlaneseq
      %v1462 = vshrl.u32 %v1461, 7
      %v1463 = vsub.s32 1, %v1462
      %v1464 = vrot.slane %v590, %v1463
      %v1465 = vlaneseq
      %v1466 = vshrl.u32 %v1465, 7
      %v1467 = vsub.s32 1, %v1466
      %v1468 = vrot.slane %v589, %v1467
      %v1469 = vlaneseq
      %v1470 = vshrl.u32 %v1469, 7
      %v1471 = vsub.s32 1, %v1470
      %v1472 = vrot.slane %v599, %v1471
      %v1473 = vlaneseq
      %v1474 = vshrl.u32 %v1473, 7
      %v1475 = vsub.s32 1, %v1474
      %v1476 = vrot.slane %v607, %v1475
      %v1477 = vlaneseq
      %v1478 = vshrl.u32 %v1477, 7
      %v1479 = vsub.s32 1, %v1478
      %v1480 = vrot.slane %v606, %v1479
      %v1481 = vlaneseq
      %v1482 = vshrl.u32 %v1481, 7
      %v1483 = vsub.s32 1, %v1482
      %v1484 = vrot.slane %v608, %v1483
      %v1485 = vlaneseq
      %v1486 = vshrl.u32 %v1485, 7
      %v1487 = vsub.s32 1, %v1486
      %v1488 = vrot.slane %v616, %v1487
      %v1489 = vlaneseq
      %v1490 = vshrl.u32 %v1489, 7
      %v1491 = vsub.s32 1, %v1490
      %v1492 = vrot.slane %v624, %v1491
      %v1493 = vlaneseq
      %v1494 = vshrl.u32 %v1493, 7
      %v1495 = vsub.s32 1, %v1494
      %v1496 = vrot.slane %v623, %v1495
      %v1497 = vlaneseq
      %v1498 = vshrl.u32 %v1497, 7
      %v1499 = vsub.s32 1, %v1498
      %v1500 = vrot.slane %v633, %v1499
      %v1501 = vlaneseq
      %v1502 = vshrl.u32 %v1501, 7
      %v1503 = vsub.s32 1, %v1502
      %v1504 = vrot.slane %v641, %v1503
      %v1505 = vlaneseq
      %v1506 = vshrl.u32 %v1505, 7
      %v1507 = vsub.s32 1, %v1506
      %v1508 = vrot.slane %v640, %v1507
      %v1509 = vlaneseq
      %v1510 = vshrl.u32 %v1509, 7
      %v1511 = vsub.s32 1, %v1510
      %v1512 = vrot.slane %v642, %v1511
      %v1513 = vlaneseq
      %v1514 = vshrl.u32 %v1513, 7
      %v1515 = vsub.s32 1, %v1514
      %v1516 = vrot.slane %v650, %v1515
      %v1517 = vlaneseq
      %v1518 = vshrl.u32 %v1517, 7
      %v1519 = vsub.s32 1, %v1518
      %v1520 = vrot.slane %v658, %v1519
      %v1521 = vlaneseq
      %v1522 = vshrl.u32 %v1521, 7
      %v1523 = vsub.s32 1, %v1522
      %v1524 = vrot.slane %v657, %v1523
      %v1525 = vlaneseq
      %v1526 = vshrl.u32 %v1525, 7
      %v1527 = vsub.s32 1, %v1526
      %v1528 = vrot.slane %v667, %v1527
      %v1529 = vlaneseq
      %v1530 = vshrl.u32 %v1529, 7
      %v1531 = vsub.s32 1, %v1530
      %v1532 = vrot.slane %v675, %v1531
      %v1533 = vlaneseq
      %v1534 = vshrl.u32 %v1533, 7
      %v1535 = vsub.s32 1, %v1534
      %v1536 = vrot.slane %v674, %v1535
      %v1537 = vlaneseq
      %v1538 = vshrl.u32 %v1537, 7
      %v1539 = vsub.s32 1, %v1538
      %v1540 = vrot.slane %v676, %v1539
      %v1541 = vlaneseq
      %v1542 = vshrl.u32 %v1541, 7
      %v1543 = vsub.s32 1, %v1542
      %v1544 = vrot.slane %v684, %v1543
      %v1545 = vlaneseq
      %v1546 = vshrl.u32 %v1545, 7
      %v1547 = vsub.s32 1, %v1546
      %v1548 = vrot.slane %v692, %v1547
      %v1549 = vlaneseq
      %v1550 = vshrl.u32 %v1549, 7
      %v1551 = vsub.s32 1, %v1550
      %v1552 = vrot.slane %v691, %v1551
      %v1553 = vlaneseq
      %v1554 = vshrl.u32 %v1553, 7
      %v1555 = vsub.s32 1, %v1554
      %v1556 = vrot.slane %v701, %v1555
      %v1557 = vlaneseq
      %v1558 = vshrl.u32 %v1557, 7
      %v1559 = vsub.s32 1, %v1558
      %v1560 = vrot.slane %v709, %v1559
      %v1561 = vlaneseq
      %v1562 = vshrl.u32 %v1561, 7
      %v1563 = vsub.s32 1, %v1562
      %v1564 = vrot.slane %v708, %v1563
      %v1565 = vlaneseq
      %v1566 = vshrl.u32 %v1565, 7
      %v1567 = vsub.s32 1, %v1566
      %v1568 = vrot.slane %v710, %v1567
      %v1569 = vlaneseq
      %v1570 = vshrl.u32 %v1569, 7
      %v1571 = vsub.s32 1, %v1570
      %v1572 = vrot.slane %v718, %v1571
      %v1573 = vlaneseq
      %v1574 = vshrl.u32 %v1573, 7
      %v1575 = vsub.s32 1, %v1574
      %v1576 = vrot.slane %v726, %v1575
      %v1577 = vlaneseq
      %v1578 = vshrl.u32 %v1577, 7
      %v1579 = vsub.s32 1, %v1578
      %v1580 = vrot.slane %v725, %v1579
      %v1581 = vsel %vm1330, %v1392, %v1388
      %v1582 = vsel %vm1332, %v1396, %v1581
      %v1583 = vsel %vm1334, %v1400, %v1582
      %v1584 = vsel %vm1336, %v1404, %v1583
      %v1585 = vsel %vm1338, %v1408, %v1584
      %v1586 = vsel %vm1340, %v1412, %v1585
      %v1587 = vsel %vm1330, %v1420, %v1416
      %v1588 = vsel %vm1332, %v1424, %v1587
      %v1589 = vsel %vm1334, %v1428, %v1588
      %v1590 = vsel %vm1336, %v1432, %v1589
      %v1591 = vsel %vm1338, %v1436, %v1590
      %v1592 = vsel %vm1340, %v1440, %v1591
      %v1593 = vsel %vm1330, %v1448, %v1444
      %v1594 = vsel %vm1332, %v1452, %v1593
      %v1595 = vsel %vm1334, %v1456, %v1594
      %v1596 = vsel %vm1336, %v1460, %v1595
      %v1597 = vsel %vm1338, %v1464, %v1596
      %v1598 = vsel %vm1340, %v1468, %v1597
      %v1599 = vsel %vm1330, %v1476, %v1472
      %v1600 = vsel %vm1332, %v1480, %v1599
      %v1601 = vsel %vm1334, %v1484, %v1600
      %v1602 = vsel %vm1336, %v1488, %v1601
      %v1603 = vsel %vm1338, %v1492, %v1602
      %v1604 = vsel %vm1340, %v1496, %v1603
      %v1605 = vsel %vm1330, %v1504, %v1500
      %v1606 = vsel %vm1332, %v1508, %v1605
      %v1607 = vsel %vm1334, %v1512, %v1606
      %v1608 = vsel %vm1336, %v1516, %v1607
      %v1609 = vsel %vm1338, %v1520, %v1608
      %v1610 = vsel %vm1340, %v1524, %v1609
      %v1611 = vsel %vm1330, %v1532, %v1528
      %v1612 = vsel %vm1332, %v1536, %v1611
      %v1613 = vsel %vm1334, %v1540, %v1612
      %v1614 = vsel %vm1336, %v1544, %v1613
      %v1615 = vsel %vm1338, %v1548, %v1614
      %v1616 = vsel %vm1340, %v1552, %v1615
      %v1617 = vsel %vm1330, %v1560, %v1556
      %v1618 = vsel %vm1332, %v1564, %v1617
      %v1619 = vsel %vm1334, %v1568, %v1618
      %v1620 = vsel %vm1336, %v1572, %v1619
      %v1621 = vsel %vm1338, %v1576, %v1620
      %v1622 = vsel %vm1340, %v1580, %v1621
      %1623 = vrot.lane.b32.xlu0 %v1586, 4
      %v1624 = vpop.permute.xlu0 %1623
      %1625 = vrot.lane.b32.xlu0 %v1592, 4
      %v1626 = vpop.permute.xlu0 %1625
      %1627 = vrot.lane.b32.xlu0 %v1598, 4
      %v1628 = vpop.permute.xlu0 %1627
      %1629 = vrot.lane.b32.xlu0 %v1604, 4
      %v1630 = vpop.permute.xlu0 %1629
      %1631 = vrot.lane.b32.xlu0 %v1610, 4
      %v1632 = vpop.permute.xlu0 %1631
      %1633 = vrot.lane.b32.xlu0 %v1616, 4
      %v1634 = vpop.permute.xlu0 %1633
      %1635 = vrot.lane.b32.xlu0 %v1622, 4
      %v1636 = vpop.permute.xlu0 %1635
      %v1644 = vlaneseq
      %v1645 = vshrl.u32 %v1644, 7
      %v1646 = vsub.s32 0, %v1645
      %v1647 = vrot.slane %v523, %v1646
      %v1648 = vlaneseq
      %v1649 = vshrl.u32 %v1648, 7
      %v1650 = vsub.s32 0, %v1649
      %v1651 = vrot.slane %v557, %v1650
      %v1652 = vlaneseq
      %v1653 = vshrl.u32 %v1652, 7
      %v1654 = vsub.s32 0, %v1653
      %v1655 = vrot.slane %v591, %v1654
      %v1656 = vlaneseq
      %v1657 = vshrl.u32 %v1656, 7
      %v1658 = vsub.s32 0, %v1657
      %v1659 = vrot.slane %v625, %v1658
      %v1660 = vlaneseq
      %v1661 = vshrl.u32 %v1660, 7
      %v1662 = vsub.s32 0, %v1661
      %v1663 = vrot.slane %v659, %v1662
      %v1664 = vlaneseq
      %v1665 = vshrl.u32 %v1664, 7
      %v1666 = vsub.s32 0, %v1665
      %v1667 = vrot.slane %v693, %v1666
      %v1668 = vlaneseq
      %v1669 = vshrl.u32 %v1668, 7
      %v1670 = vsub.s32 0, %v1669
      %v1671 = vrot.slane %v727, %v1670
      %v1672 = vsel %vm1330, %v1145, %v1141
      %v1673 = vsel %vm1332, %v1149, %v1672
      %v1674 = vsel %vm1334, %v1153, %v1673
      %v1675 = vsel %vm1336, %v1157, %v1674
      %v1676 = vsel %vm1338, %v1161, %v1675
      %v1677 = vsel %vm1340, %v1647, %v1676
      %v1678 = vsel %vm1330, %v1173, %v1169
      %v1679 = vsel %vm1332, %v1177, %v1678
      %v1680 = vsel %vm1334, %v1181, %v1679
      %v1681 = vsel %vm1336, %v1185, %v1680
      %v1682 = vsel %vm1338, %v1189, %v1681
      %v1683 = vsel %vm1340, %v1651, %v1682
      %v1684 = vsel %vm1330, %v1201, %v1197
      %v1685 = vsel %vm1332, %v1205, %v1684
      %v1686 = vsel %vm1334, %v1209, %v1685
      %v1687 = vsel %vm1336, %v1213, %v1686
      %v1688 = vsel %vm1338, %v1217, %v1687
      %v1689 = vsel %vm1340, %v1655, %v1688
      %v1690 = vsel %vm1330, %v1229, %v1225
      %v1691 = vsel %vm1332, %v1233, %v1690
      %v1692 = vsel %vm1334, %v1237, %v1691
      %v1693 = vsel %vm1336, %v1241, %v1692
      %v1694 = vsel %vm1338, %v1245, %v1693
      %v1695 = vsel %vm1340, %v1659, %v1694
      %v1696 = vsel %vm1330, %v1257, %v1253
      %v1697 = vsel %vm1332, %v1261, %v1696
      %v1698 = vsel %vm1334, %v1265, %v1697
      %v1699 = vsel %vm1336, %v1269, %v1698
      %v1700 = vsel %vm1338, %v1273, %v1699
      %v1701 = vsel %vm1340, %v1663, %v1700
      %v1702 = vsel %vm1330, %v1285, %v1281
      %v1703 = vsel %vm1332, %v1289, %v1702
      %v1704 = vsel %vm1334, %v1293, %v1703
      %v1705 = vsel %vm1336, %v1297, %v1704
      %v1706 = vsel %vm1338, %v1301, %v1705
      %v1707 = vsel %vm1340, %v1667, %v1706
      %v1708 = vsel %vm1330, %v1313, %v1309
      %v1709 = vsel %vm1332, %v1317, %v1708
      %v1710 = vsel %vm1334, %v1321, %v1709
      %v1711 = vsel %vm1336, %v1325, %v1710
      %v1712 = vsel %vm1338, %v1329, %v1711
      %v1713 = vsel %vm1340, %v1671, %v1712
      %1714 = vrot.lane.b32.xlu0 %v1677, 8
      %v1715 = vpop.permute.xlu0 %1714
      %1716 = vrot.lane.b32.xlu0 %v1683, 8
      %v1717 = vpop.permute.xlu0 %1716
      %1718 = vrot.lane.b32.xlu0 %v1689, 8
      %v1719 = vpop.permute.xlu0 %1718
      %1720 = vrot.lane.b32.xlu0 %v1695, 8
      %v1721 = vpop.permute.xlu0 %1720
      %1722 = vrot.lane.b32.xlu0 %v1701, 8
      %v1723 = vpop.permute.xlu0 %1722
      %1724 = vrot.lane.b32.xlu0 %v1707, 8
      %v1725 = vpop.permute.xlu0 %1724
      %1726 = vrot.lane.b32.xlu0 %v1713, 8
      %v1727 = vpop.permute.xlu0 %1726
      %v1735 = vlaneseq
      %v1736 = vshrl.u32 %v1735, 7
      %v1737 = vsub.s32 0, %v1736
      %v1738 = vrot.slane %v847, %v1737
      %v1739 = vlaneseq
      %v1740 = vshrl.u32 %v1739, 7
      %v1741 = vsub.s32 0, %v1740
      %v1742 = vrot.slane %v855, %v1741
      %v1743 = vlaneseq
      %v1744 = vshrl.u32 %v1743, 7
      %v1745 = vsub.s32 0, %v1744
      %v1746 = vrot.slane %v854, %v1745
      %v1747 = vlaneseq
      %v1748 = vshrl.u32 %v1747, 7
      %v1749 = vsub.s32 0, %v1748
      %v1750 = vrot.slane %v856, %v1749
      %v1751 = vlaneseq
      %v1752 = vshrl.u32 %v1751, 7
      %v1753 = vsub.s32 0, %v1752
      %v1754 = vrot.slane %v864, %v1753
      %v1755 = vlaneseq
      %v1756 = vshrl.u32 %v1755, 7
      %v1757 = vsub.s32 0, %v1756
      %v1758 = vrot.slane %v872, %v1757
      %v1759 = vlaneseq
      %v1760 = vshrl.u32 %v1759, 7
      %v1761 = vsub.s32 0, %v1760
      %v1762 = vrot.slane %v871, %v1761
      %v1763 = vlaneseq
      %v1764 = vshrl.u32 %v1763, 7
      %v1765 = vsub.s32 0, %v1764
      %v1766 = vrot.slane %v881, %v1765
      %v1767 = vlaneseq
      %v1768 = vshrl.u32 %v1767, 7
      %v1769 = vsub.s32 0, %v1768
      %v1770 = vrot.slane %v889, %v1769
      %v1771 = vlaneseq
      %v1772 = vshrl.u32 %v1771, 7
      %v1773 = vsub.s32 0, %v1772
      %v1774 = vrot.slane %v888, %v1773
      %v1775 = vlaneseq
      %v1776 = vshrl.u32 %v1775, 7
      %v1777 = vsub.s32 0, %v1776
      %v1778 = vrot.slane %v890, %v1777
      %v1779 = vlaneseq
      %v1780 = vshrl.u32 %v1779, 7
      %v1781 = vsub.s32 0, %v1780
      %v1782 = vrot.slane %v898, %v1781
      %v1783 = vlaneseq
      %v1784 = vshrl.u32 %v1783, 7
      %v1785 = vsub.s32 0, %v1784
      %v1786 = vrot.slane %v906, %v1785
      %v1787 = vlaneseq
      %v1788 = vshrl.u32 %v1787, 7
      %v1789 = vsub.s32 0, %v1788
      %v1790 = vrot.slane %v905, %v1789
      %v1791 = vlaneseq
      %v1792 = vshrl.u32 %v1791, 7
      %v1793 = vsub.s32 0, %v1792
      %v1794 = vrot.slane %v915, %v1793
      %v1795 = vlaneseq
      %v1796 = vshrl.u32 %v1795, 7
      %v1797 = vsub.s32 0, %v1796
      %v1798 = vrot.slane %v923, %v1797
      %v1799 = vlaneseq
      %v1800 = vshrl.u32 %v1799, 7
      %v1801 = vsub.s32 0, %v1800
      %v1802 = vrot.slane %v922, %v1801
      %v1803 = vlaneseq
      %v1804 = vshrl.u32 %v1803, 7
      %v1805 = vsub.s32 0, %v1804
      %v1806 = vrot.slane %v924, %v1805
      %v1807 = vlaneseq
      %v1808 = vshrl.u32 %v1807, 7
      %v1809 = vsub.s32 0, %v1808
      %v1810 = vrot.slane %v932, %v1809
      %v1811 = vlaneseq
      %v1812 = vshrl.u32 %v1811, 7
      %v1813 = vsub.s32 0, %v1812
      %v1814 = vrot.slane %v940, %v1813
      %v1815 = vlaneseq
      %v1816 = vshrl.u32 %v1815, 7
      %v1817 = vsub.s32 0, %v1816
      %v1818 = vrot.slane %v939, %v1817
      %v1819 = vlaneseq
      %v1820 = vshrl.u32 %v1819, 7
      %v1821 = vsub.s32 0, %v1820
      %v1822 = vrot.slane %v949, %v1821
      %v1823 = vlaneseq
      %v1824 = vshrl.u32 %v1823, 7
      %v1825 = vsub.s32 0, %v1824
      %v1826 = vrot.slane %v957, %v1825
      %v1827 = vlaneseq
      %v1828 = vshrl.u32 %v1827, 7
      %v1829 = vsub.s32 0, %v1828
      %v1830 = vrot.slane %v956, %v1829
      %v1831 = vlaneseq
      %v1832 = vshrl.u32 %v1831, 7
      %v1833 = vsub.s32 0, %v1832
      %v1834 = vrot.slane %v958, %v1833
      %v1835 = vlaneseq
      %v1836 = vshrl.u32 %v1835, 7
      %v1837 = vsub.s32 0, %v1836
      %v1838 = vrot.slane %v966, %v1837
      %v1839 = vlaneseq
      %v1840 = vshrl.u32 %v1839, 7
      %v1841 = vsub.s32 0, %v1840
      %v1842 = vrot.slane %v974, %v1841
      %v1843 = vlaneseq
      %v1844 = vshrl.u32 %v1843, 7
      %v1845 = vsub.s32 0, %v1844
      %v1846 = vrot.slane %v973, %v1845
      %v1847 = vlaneseq
      %v1848 = vshrl.u32 %v1847, 7
      %v1849 = vsub.s32 0, %v1848
      %v1850 = vrot.slane %v983, %v1849
      %v1851 = vlaneseq
      %v1852 = vshrl.u32 %v1851, 7
      %v1853 = vsub.s32 0, %v1852
      %v1854 = vrot.slane %v991, %v1853
      %v1855 = vlaneseq
      %v1856 = vshrl.u32 %v1855, 7
      %v1857 = vsub.s32 0, %v1856
      %v1858 = vrot.slane %v990, %v1857
      %v1859 = vlaneseq
      %v1860 = vshrl.u32 %v1859, 7
      %v1861 = vsub.s32 0, %v1860
      %v1862 = vrot.slane %v992, %v1861
      %v1863 = vlaneseq
      %v1864 = vshrl.u32 %v1863, 7
      %v1865 = vsub.s32 0, %v1864
      %v1866 = vrot.slane %v1000, %v1865
      %v1867 = vlaneseq
      %v1868 = vshrl.u32 %v1867, 7
      %v1869 = vsub.s32 0, %v1868
      %v1870 = vrot.slane %v1008, %v1869
      %v1871 = vlaneseq
      %v1872 = vshrl.u32 %v1871, 7
      %v1873 = vsub.s32 0, %v1872
      %v1874 = vrot.slane %v1007, %v1873
      %v1875 = vlaneseq
      %v1876 = vshrl.u32 %v1875, 7
      %v1877 = vsub.s32 0, %v1876
      %v1878 = vrot.slane %v1017, %v1877
      %v1879 = vlaneseq
      %v1880 = vshrl.u32 %v1879, 7
      %v1881 = vsub.s32 0, %v1880
      %v1882 = vrot.slane %v1025, %v1881
      %v1883 = vlaneseq
      %v1884 = vshrl.u32 %v1883, 7
      %v1885 = vsub.s32 0, %v1884
      %v1886 = vrot.slane %v1024, %v1885
      %v1887 = vlaneseq
      %v1888 = vshrl.u32 %v1887, 7
      %v1889 = vsub.s32 0, %v1888
      %v1890 = vrot.slane %v1026, %v1889
      %v1891 = vlaneseq
      %v1892 = vshrl.u32 %v1891, 7
      %v1893 = vsub.s32 0, %v1892
      %v1894 = vrot.slane %v1034, %v1893
      %v1895 = vlaneseq
      %v1896 = vshrl.u32 %v1895, 7
      %v1897 = vsub.s32 0, %v1896
      %v1898 = vrot.slane %v1042, %v1897
      %v1899 = vlaneseq
      %v1900 = vshrl.u32 %v1899, 7
      %v1901 = vsub.s32 0, %v1900
      %v1902 = vrot.slane %v1041, %v1901
      %v1903 = vlaneseq
      %v1904 = vshrl.u32 %v1903, 7
      %v1905 = vsub.s32 0, %v1904
      %v1906 = vrot.slane %v1051, %v1905
      %v1907 = vlaneseq
      %v1908 = vshrl.u32 %v1907, 7
      %v1909 = vsub.s32 0, %v1908
      %v1910 = vrot.slane %v1059, %v1909
      %v1911 = vlaneseq
      %v1912 = vshrl.u32 %v1911, 7
      %v1913 = vsub.s32 0, %v1912
      %v1914 = vrot.slane %v1058, %v1913
      %v1915 = vlaneseq
      %v1916 = vshrl.u32 %v1915, 7
      %v1917 = vsub.s32 0, %v1916
      %v1918 = vrot.slane %v1060, %v1917
      %v1919 = vlaneseq
      %v1920 = vshrl.u32 %v1919, 7
      %v1921 = vsub.s32 0, %v1920
      %v1922 = vrot.slane %v1068, %v1921
      %v1923 = vlaneseq
      %v1924 = vshrl.u32 %v1923, 7
      %v1925 = vsub.s32 0, %v1924
      %v1926 = vrot.slane %v1076, %v1925
      %v1927 = vlaneseq
      %v1928 = vshrl.u32 %v1927, 7
      %v1929 = vsub.s32 0, %v1928
      %v1930 = vrot.slane %v1075, %v1929
      %v1931 = vsel %vm1330, %v1742, %v1738
      %v1932 = vsel %vm1332, %v1746, %v1931
      %v1933 = vsel %vm1334, %v1750, %v1932
      %v1934 = vsel %vm1336, %v1754, %v1933
      %v1935 = vsel %vm1338, %v1758, %v1934
      %v1936 = vsel %vm1340, %v1762, %v1935
      %v1937 = vsel %vm1330, %v1770, %v1766
      %v1938 = vsel %vm1332, %v1774, %v1937
      %v1939 = vsel %vm1334, %v1778, %v1938
      %v1940 = vsel %vm1336, %v1782, %v1939
      %v1941 = vsel %vm1338, %v1786, %v1940
      %v1942 = vsel %vm1340, %v1790, %v1941
      %v1943 = vsel %vm1330, %v1798, %v1794
      %v1944 = vsel %vm1332, %v1802, %v1943
      %v1945 = vsel %vm1334, %v1806, %v1944
      %v1946 = vsel %vm1336, %v1810, %v1945
      %v1947 = vsel %vm1338, %v1814, %v1946
      %v1948 = vsel %vm1340, %v1818, %v1947
      %v1949 = vsel %vm1330, %v1826, %v1822
      %v1950 = vsel %vm1332, %v1830, %v1949
      %v1951 = vsel %vm1334, %v1834, %v1950
      %v1952 = vsel %vm1336, %v1838, %v1951
      %v1953 = vsel %vm1338, %v1842, %v1952
      %v1954 = vsel %vm1340, %v1846, %v1953
      %v1955 = vsel %vm1330, %v1854, %v1850
      %v1956 = vsel %vm1332, %v1858, %v1955
      %v1957 = vsel %vm1334, %v1862, %v1956
      %v1958 = vsel %vm1336, %v1866, %v1957
      %v1959 = vsel %vm1338, %v1870, %v1958
      %v1960 = vsel %vm1340, %v1874, %v1959
      %v1961 = vsel %vm1330, %v1882, %v1878
      %v1962 = vsel %vm1332, %v1886, %v1961
      %v1963 = vsel %vm1334, %v1890, %v1962
      %v1964 = vsel %vm1336, %v1894, %v1963
      %v1965 = vsel %vm1338, %v1898, %v1964
      %v1966 = vsel %vm1340, %v1902, %v1965
      %v1967 = vsel %vm1330, %v1910, %v1906
      %v1968 = vsel %vm1332, %v1914, %v1967
      %v1969 = vsel %vm1334, %v1918, %v1968
      %v1970 = vsel %vm1336, %v1922, %v1969
      %v1971 = vsel %vm1338, %v1926, %v1970
      %v1972 = vsel %vm1340, %v1930, %v1971
      %1973 = vrot.lane.b32.xlu0 %v1936, 12
      %v1974 = vpop.permute.xlu0 %1973
      %1975 = vrot.lane.b32.xlu0 %v1942, 12
      %v1976 = vpop.permute.xlu0 %1975
      %1977 = vrot.lane.b32.xlu0 %v1948, 12
      %v1978 = vpop.permute.xlu0 %1977
      %1979 = vrot.lane.b32.xlu0 %v1954, 12
      %v1980 = vpop.permute.xlu0 %1979
      %1981 = vrot.lane.b32.xlu0 %v1960, 12
      %v1982 = vpop.permute.xlu0 %1981
      %1983 = vrot.lane.b32.xlu0 %v1966, 12
      %v1984 = vpop.permute.xlu0 %1983
      %1985 = vrot.lane.b32.xlu0 %v1972, 12
      %v1986 = vpop.permute.xlu0 %1985
      %v1994 = vlaneseq
      %v1995 = vshrl.u32 %v1994, 7
      %v1996 = vsub.s32 1, %v1995
      %v1997 = vrot.slane %v847, %v1996
      %v1998 = vlaneseq
      %v1999 = vshrl.u32 %v1998, 7
      %v2000 = vsub.s32 1, %v1999
      %v2001 = vrot.slane %v855, %v2000
      %v2002 = vlaneseq
      %v2003 = vshrl.u32 %v2002, 7
      %v2004 = vsub.s32 1, %v2003
      %v2005 = vrot.slane %v854, %v2004
      %v2006 = vlaneseq
      %v2007 = vshrl.u32 %v2006, 7
      %v2008 = vsub.s32 1, %v2007
      %v2009 = vrot.slane %v856, %v2008
      %v2010 = vlaneseq
      %v2011 = vshrl.u32 %v2010, 7
      %v2012 = vsub.s32 1, %v2011
      %v2013 = vrot.slane %v864, %v2012
      %v2014 = vlaneseq
      %v2015 = vshrl.u32 %v2014, 7
      %v2016 = vsub.s32 1, %v2015
      %v2017 = vrot.slane %v872, %v2016
      %v2018 = vlaneseq
      %v2019 = vshrl.u32 %v2018, 7
      %v2020 = vsub.s32 1, %v2019
      %v2021 = vrot.slane %v871, %v2020
      %v2022 = vlaneseq
      %v2023 = vshrl.u32 %v2022, 7
      %v2024 = vsub.s32 1, %v2023
      %v2025 = vrot.slane %v881, %v2024
      %v2026 = vlaneseq
      %v2027 = vshrl.u32 %v2026, 7
      %v2028 = vsub.s32 1, %v2027
      %v2029 = vrot.slane %v889, %v2028
      %v2030 = vlaneseq
      %v2031 = vshrl.u32 %v2030, 7
      %v2032 = vsub.s32 1, %v2031
      %v2033 = vrot.slane %v888, %v2032
      %v2034 = vlaneseq
      %v2035 = vshrl.u32 %v2034, 7
      %v2036 = vsub.s32 1, %v2035
      %v2037 = vrot.slane %v890, %v2036
      %v2038 = vlaneseq
      %v2039 = vshrl.u32 %v2038, 7
      %v2040 = vsub.s32 1, %v2039
      %v2041 = vrot.slane %v898, %v2040
      %v2042 = vlaneseq
      %v2043 = vshrl.u32 %v2042, 7
      %v2044 = vsub.s32 1, %v2043
      %v2045 = vrot.slane %v906, %v2044
      %v2046 = vlaneseq
      %v2047 = vshrl.u32 %v2046, 7
      %v2048 = vsub.s32 1, %v2047
      %v2049 = vrot.slane %v905, %v2048
      %v2050 = vlaneseq
      %v2051 = vshrl.u32 %v2050, 7
      %v2052 = vsub.s32 1, %v2051
      %v2053 = vrot.slane %v915, %v2052
      %v2054 = vlaneseq
      %v2055 = vshrl.u32 %v2054, 7
      %v2056 = vsub.s32 1, %v2055
      %v2057 = vrot.slane %v923, %v2056
      %v2058 = vlaneseq
      %v2059 = vshrl.u32 %v2058, 7
      %v2060 = vsub.s32 1, %v2059
      %v2061 = vrot.slane %v922, %v2060
      %v2062 = vlaneseq
      %v2063 = vshrl.u32 %v2062, 7
      %v2064 = vsub.s32 1, %v2063
      %v2065 = vrot.slane %v924, %v2064
      %v2066 = vlaneseq
      %v2067 = vshrl.u32 %v2066, 7
      %v2068 = vsub.s32 1, %v2067
      %v2069 = vrot.slane %v932, %v2068
      %v2070 = vlaneseq
      %v2071 = vshrl.u32 %v2070, 7
      %v2072 = vsub.s32 1, %v2071
      %v2073 = vrot.slane %v940, %v2072
      %v2074 = vlaneseq
      %v2075 = vshrl.u32 %v2074, 7
      %v2076 = vsub.s32 1, %v2075
      %v2077 = vrot.slane %v939, %v2076
      %v2078 = vlaneseq
      %v2079 = vshrl.u32 %v2078, 7
      %v2080 = vsub.s32 1, %v2079
      %v2081 = vrot.slane %v949, %v2080
      %v2082 = vlaneseq
      %v2083 = vshrl.u32 %v2082, 7
      %v2084 = vsub.s32 1, %v2083
      %v2085 = vrot.slane %v957, %v2084
      %v2086 = vlaneseq
      %v2087 = vshrl.u32 %v2086, 7
      %v2088 = vsub.s32 1, %v2087
      %v2089 = vrot.slane %v956, %v2088
      %v2090 = vlaneseq
      %v2091 = vshrl.u32 %v2090, 7
      %v2092 = vsub.s32 1, %v2091
      %v2093 = vrot.slane %v958, %v2092
      %v2094 = vlaneseq
      %v2095 = vshrl.u32 %v2094, 7
      %v2096 = vsub.s32 1, %v2095
      %v2097 = vrot.slane %v966, %v2096
      %v2098 = vlaneseq
      %v2099 = vshrl.u32 %v2098, 7
      %v2100 = vsub.s32 1, %v2099
      %v2101 = vrot.slane %v974, %v2100
      %v2102 = vlaneseq
      %v2103 = vshrl.u32 %v2102, 7
      %v2104 = vsub.s32 1, %v2103
      %v2105 = vrot.slane %v973, %v2104
      %v2106 = vlaneseq
      %v2107 = vshrl.u32 %v2106, 7
      %v2108 = vsub.s32 1, %v2107
      %v2109 = vrot.slane %v983, %v2108
      %v2110 = vlaneseq
      %v2111 = vshrl.u32 %v2110, 7
      %v2112 = vsub.s32 1, %v2111
      %v2113 = vrot.slane %v991, %v2112
      %v2114 = vlaneseq
      %v2115 = vshrl.u32 %v2114, 7
      %v2116 = vsub.s32 1, %v2115
      %v2117 = vrot.slane %v990, %v2116
      %v2118 = vlaneseq
      %v2119 = vshrl.u32 %v2118, 7
      %v2120 = vsub.s32 1, %v2119
      %v2121 = vrot.slane %v992, %v2120
      %v2122 = vlaneseq
      %v2123 = vshrl.u32 %v2122, 7
      %v2124 = vsub.s32 1, %v2123
      %v2125 = vrot.slane %v1000, %v2124
      %v2126 = vlaneseq
      %v2127 = vshrl.u32 %v2126, 7
      %v2128 = vsub.s32 1, %v2127
      %v2129 = vrot.slane %v1008, %v2128
      %v2130 = vlaneseq
      %v2131 = vshrl.u32 %v2130, 7
      %v2132 = vsub.s32 1, %v2131
      %v2133 = vrot.slane %v1007, %v2132
      %v2134 = vlaneseq
      %v2135 = vshrl.u32 %v2134, 7
      %v2136 = vsub.s32 1, %v2135
      %v2137 = vrot.slane %v1017, %v2136
      %v2138 = vlaneseq
      %v2139 = vshrl.u32 %v2138, 7
      %v2140 = vsub.s32 1, %v2139
      %v2141 = vrot.slane %v1025, %v2140
      %v2142 = vlaneseq
      %v2143 = vshrl.u32 %v2142, 7
      %v2144 = vsub.s32 1, %v2143
      %v2145 = vrot.slane %v1024, %v2144
      %v2146 = vlaneseq
      %v2147 = vshrl.u32 %v2146, 7
      %v2148 = vsub.s32 1, %v2147
      %v2149 = vrot.slane %v1026, %v2148
      %v2150 = vlaneseq
      %v2151 = vshrl.u32 %v2150, 7
      %v2152 = vsub.s32 1, %v2151
      %v2153 = vrot.slane %v1034, %v2152
      %v2154 = vlaneseq
      %v2155 = vshrl.u32 %v2154, 7
      %v2156 = vsub.s32 1, %v2155
      %v2157 = vrot.slane %v1042, %v2156
      %v2158 = vlaneseq
      %v2159 = vshrl.u32 %v2158, 7
      %v2160 = vsub.s32 1, %v2159
      %v2161 = vrot.slane %v1041, %v2160
      %v2162 = vlaneseq
      %v2163 = vshrl.u32 %v2162, 7
      %v2164 = vsub.s32 1, %v2163
      %v2165 = vrot.slane %v1051, %v2164
      %v2166 = vlaneseq
      %v2167 = vshrl.u32 %v2166, 7
      %v2168 = vsub.s32 1, %v2167
      %v2169 = vrot.slane %v1059, %v2168
      %v2170 = vlaneseq
      %v2171 = vshrl.u32 %v2170, 7
      %v2172 = vsub.s32 1, %v2171
      %v2173 = vrot.slane %v1058, %v2172
      %v2174 = vlaneseq
      %v2175 = vshrl.u32 %v2174, 7
      %v2176 = vsub.s32 1, %v2175
      %v2177 = vrot.slane %v1060, %v2176
      %v2178 = vlaneseq
      %v2179 = vshrl.u32 %v2178, 7
      %v2180 = vsub.s32 1, %v2179
      %v2181 = vrot.slane %v1068, %v2180
      %v2182 = vlaneseq
      %v2183 = vshrl.u32 %v2182, 7
      %v2184 = vsub.s32 1, %v2183
      %v2185 = vrot.slane %v1076, %v2184
      %v2186 = vlaneseq
      %v2187 = vshrl.u32 %v2186, 7
      %v2188 = vsub.s32 1, %v2187
      %v2189 = vrot.slane %v1075, %v2188
      %v2190 = vsel %vm1330, %v2001, %v1997
      %v2191 = vsel %vm1332, %v2005, %v2190
      %v2192 = vsel %vm1334, %v2009, %v2191
      %v2193 = vsel %vm1336, %v2013, %v2192
      %v2194 = vsel %vm1338, %v2017, %v2193
      %v2195 = vsel %vm1340, %v2021, %v2194
      %v2196 = vsel %vm1330, %v2029, %v2025
      %v2197 = vsel %vm1332, %v2033, %v2196
      %v2198 = vsel %vm1334, %v2037, %v2197
      %v2199 = vsel %vm1336, %v2041, %v2198
      %v2200 = vsel %vm1338, %v2045, %v2199
      %v2201 = vsel %vm1340, %v2049, %v2200
      %v2202 = vsel %vm1330, %v2057, %v2053
      %v2203 = vsel %vm1332, %v2061, %v2202
      %v2204 = vsel %vm1334, %v2065, %v2203
      %v2205 = vsel %vm1336, %v2069, %v2204
      %v2206 = vsel %vm1338, %v2073, %v2205
      %v2207 = vsel %vm1340, %v2077, %v2206
      %v2208 = vsel %vm1330, %v2085, %v2081
      %v2209 = vsel %vm1332, %v2089, %v2208
      %v2210 = vsel %vm1334, %v2093, %v2209
      %v2211 = vsel %vm1336, %v2097, %v2210
      %v2212 = vsel %vm1338, %v2101, %v2211
      %v2213 = vsel %vm1340, %v2105, %v2212
      %v2214 = vsel %vm1330, %v2113, %v2109
      %v2215 = vsel %vm1332, %v2117, %v2214
      %v2216 = vsel %vm1334, %v2121, %v2215
      %v2217 = vsel %vm1336, %v2125, %v2216
      %v2218 = vsel %vm1338, %v2129, %v2217
      %v2219 = vsel %vm1340, %v2133, %v2218
      %v2220 = vsel %vm1330, %v2141, %v2137
      %v2221 = vsel %vm1332, %v2145, %v2220
      %v2222 = vsel %vm1334, %v2149, %v2221
      %v2223 = vsel %vm1336, %v2153, %v2222
      %v2224 = vsel %vm1338, %v2157, %v2223
      %v2225 = vsel %vm1340, %v2161, %v2224
      %v2226 = vsel %vm1330, %v2169, %v2165
      %v2227 = vsel %vm1332, %v2173, %v2226
      %v2228 = vsel %vm1334, %v2177, %v2227
      %v2229 = vsel %vm1336, %v2181, %v2228
      %v2230 = vsel %vm1338, %v2185, %v2229
      %v2231 = vsel %vm1340, %v2189, %v2230
      %2232 = vrot.lane.b32.xlu0 %v2195, 16
      %v2233 = vpop.permute.xlu0 %2232
      %2234 = vrot.lane.b32.xlu0 %v2201, 16
      %v2235 = vpop.permute.xlu0 %2234
      %2236 = vrot.lane.b32.xlu0 %v2207, 16
      %v2237 = vpop.permute.xlu0 %2236
      %2238 = vrot.lane.b32.xlu0 %v2213, 16
      %v2239 = vpop.permute.xlu0 %2238
      %2240 = vrot.lane.b32.xlu0 %v2219, 16
      %v2241 = vpop.permute.xlu0 %2240
      %2242 = vrot.lane.b32.xlu0 %v2225, 16
      %v2243 = vpop.permute.xlu0 %2242
      %2244 = vrot.lane.b32.xlu0 %v2231, 16
      %v2245 = vpop.permute.xlu0 %2244
      %v2253 = vlaneseq
      %v2254 = vshrl.u32 %v2253, 7
      %v2255 = vsub.s32 0, %v2254
      %v2256 = vrot.slane %v873, %v2255
      %v2257 = vlaneseq
      %v2258 = vshrl.u32 %v2257, 7
      %v2259 = vsub.s32 0, %v2258
      %v2260 = vrot.slane %v907, %v2259
      %v2261 = vlaneseq
      %v2262 = vshrl.u32 %v2261, 7
      %v2263 = vsub.s32 0, %v2262
      %v2264 = vrot.slane %v941, %v2263
      %v2265 = vlaneseq
      %v2266 = vshrl.u32 %v2265, 7
      %v2267 = vsub.s32 0, %v2266
      %v2268 = vrot.slane %v975, %v2267
      %v2269 = vlaneseq
      %v2270 = vshrl.u32 %v2269, 7
      %v2271 = vsub.s32 0, %v2270
      %v2272 = vrot.slane %v1009, %v2271
      %v2273 = vlaneseq
      %v2274 = vshrl.u32 %v2273, 7
      %v2275 = vsub.s32 0, %v2274
      %v2276 = vrot.slane %v1043, %v2275
      %v2277 = vlaneseq
      %v2278 = vshrl.u32 %v2277, 7
      %v2279 = vsub.s32 0, %v2278
      %v2280 = vrot.slane %v1077, %v2279
      %v2281 = vsel %vm1330, %v1746, %v1742
      %v2282 = vsel %vm1332, %v1750, %v2281
      %v2283 = vsel %vm1334, %v1754, %v2282
      %v2284 = vsel %vm1336, %v1758, %v2283
      %v2285 = vsel %vm1338, %v1762, %v2284
      %v2286 = vsel %vm1340, %v2256, %v2285
      %v2287 = vsel %vm1330, %v1774, %v1770
      %v2288 = vsel %vm1332, %v1778, %v2287
      %v2289 = vsel %vm1334, %v1782, %v2288
      %v2290 = vsel %vm1336, %v1786, %v2289
      %v2291 = vsel %vm1338, %v1790, %v2290
      %v2292 = vsel %vm1340, %v2260, %v2291
      %v2293 = vsel %vm1330, %v1802, %v1798
      %v2294 = vsel %vm1332, %v1806, %v2293
      %v2295 = vsel %vm1334, %v1810, %v2294
      %v2296 = vsel %vm1336, %v1814, %v2295
      %v2297 = vsel %vm1338, %v1818, %v2296
      %v2298 = vsel %vm1340, %v2264, %v2297
      %v2299 = vsel %vm1330, %v1830, %v1826
      %v2300 = vsel %vm1332, %v1834, %v2299
      %v2301 = vsel %vm1334, %v1838, %v2300
      %v2302 = vsel %vm1336, %v1842, %v2301
      %v2303 = vsel %vm1338, %v1846, %v2302
      %v2304 = vsel %vm1340, %v2268, %v2303
      %v2305 = vsel %vm1330, %v1858, %v1854
      %v2306 = vsel %vm1332, %v1862, %v2305
      %v2307 = vsel %vm1334, %v1866, %v2306
      %v2308 = vsel %vm1336, %v1870, %v2307
      %v2309 = vsel %vm1338, %v1874, %v2308
      %v2310 = vsel %vm1340, %v2272, %v2309
      %v2311 = vsel %vm1330, %v1886, %v1882
      %v2312 = vsel %vm1332, %v1890, %v2311
      %v2313 = vsel %vm1334, %v1894, %v2312
      %v2314 = vsel %vm1336, %v1898, %v2313
      %v2315 = vsel %vm1338, %v1902, %v2314
      %v2316 = vsel %vm1340, %v2276, %v2315
      %v2317 = vsel %vm1330, %v1914, %v1910
      %v2318 = vsel %vm1332, %v1918, %v2317
      %v2319 = vsel %vm1334, %v1922, %v2318
      %v2320 = vsel %vm1336, %v1926, %v2319
      %v2321 = vsel %vm1338, %v1930, %v2320
      %v2322 = vsel %vm1340, %v2280, %v2321
      %2323 = vrot.lane.b32.xlu0 %v2286, 20
      %v2324 = vpop.permute.xlu0 %2323
      %2325 = vrot.lane.b32.xlu0 %v2292, 20
      %v2326 = vpop.permute.xlu0 %2325
      %2327 = vrot.lane.b32.xlu0 %v2298, 20
      %v2328 = vpop.permute.xlu0 %2327
      %2329 = vrot.lane.b32.xlu0 %v2304, 20
      %v2330 = vpop.permute.xlu0 %2329
      %2331 = vrot.lane.b32.xlu0 %v2310, 20
      %v2332 = vpop.permute.xlu0 %2331
      %2333 = vrot.lane.b32.xlu0 %v2316, 20
      %v2334 = vpop.permute.xlu0 %2333
      %2335 = vrot.lane.b32.xlu0 %v2322, 20
      %v2336 = vpop.permute.xlu0 %2335
      %v2344 = vlaneseq
      %v2345 = vshrl.u32 %v2344, 7
      %v2346 = vsub.s32 0, %v2345
      %v2347 = vrot.slane %v735, %v2346
      %v2348 = vlaneseq
      %v2349 = vshrl.u32 %v2348, 7
      %v2350 = vsub.s32 0, %v2349
      %v2351 = vrot.slane %v743, %v2350
      %v2352 = vlaneseq
      %v2353 = vshrl.u32 %v2352, 7
      %v2354 = vsub.s32 0, %v2353
      %v2355 = vrot.slane %v742, %v2354
      %v2356 = vlaneseq
      %v2357 = vshrl.u32 %v2356, 7
      %v2358 = vsub.s32 0, %v2357
      %v2359 = vrot.slane %v744, %v2358
      %v2360 = vlaneseq
      %v2361 = vshrl.u32 %v2360, 7
      %v2362 = vsub.s32 0, %v2361
      %v2363 = vrot.slane %v752, %v2362
      %v2364 = vlaneseq
      %v2365 = vshrl.u32 %v2364, 7
      %v2366 = vsub.s32 0, %v2365
      %v2367 = vrot.slane %v760, %v2366
      %v2368 = vlaneseq
      %v2369 = vshrl.u32 %v2368, 7
      %v2370 = vsub.s32 0, %v2369
      %v2371 = vrot.slane %v759, %v2370
      %v2372 = vsel %vm1330, %v2351, %v2347
      %v2373 = vsel %vm1332, %v2355, %v2372
      %v2374 = vsel %vm1334, %v2359, %v2373
      %v2375 = vsel %vm1336, %v2363, %v2374
      %v2376 = vsel %vm1338, %v2367, %v2375
      %v2377 = vsel %vm1340, %v2371, %v2376
      %2378 = vrot.lane.b32.xlu0 %v1347, 24
      %v2379 = vpop.permute.xlu0 %2378
      %2380 = vrot.lane.b32.xlu0 %v1353, 24
      %v2381 = vpop.permute.xlu0 %2380
      %2382 = vrot.lane.b32.xlu0 %v1359, 24
      %v2383 = vpop.permute.xlu0 %2382
      %2384 = vrot.lane.b32.xlu0 %v1365, 24
      %v2385 = vpop.permute.xlu0 %2384
      %2386 = vrot.lane.b32.xlu0 %v1371, 24
      %v2387 = vpop.permute.xlu0 %2386
      %2388 = vrot.lane.b32.xlu0 %v1377, 24
      %v2389 = vpop.permute.xlu0 %2388
      %2390 = vrot.lane.b32.xlu0 %v2377, 24
      %v2391 = vpop.permute.xlu0 %2390
      %v2399 = vlaneseq
      %v2400 = vshrl.u32 %v2399, 7
      %v2401 = vsub.s32 1, %v2400
      %v2402 = vrot.slane %v735, %v2401
      %v2403 = vlaneseq
      %v2404 = vshrl.u32 %v2403, 7
      %v2405 = vsub.s32 1, %v2404
      %v2406 = vrot.slane %v743, %v2405
      %v2407 = vlaneseq
      %v2408 = vshrl.u32 %v2407, 7
      %v2409 = vsub.s32 1, %v2408
      %v2410 = vrot.slane %v742, %v2409
      %v2411 = vlaneseq
      %v2412 = vshrl.u32 %v2411, 7
      %v2413 = vsub.s32 1, %v2412
      %v2414 = vrot.slane %v744, %v2413
      %v2415 = vlaneseq
      %v2416 = vshrl.u32 %v2415, 7
      %v2417 = vsub.s32 1, %v2416
      %v2418 = vrot.slane %v752, %v2417
      %v2419 = vlaneseq
      %v2420 = vshrl.u32 %v2419, 7
      %v2421 = vsub.s32 1, %v2420
      %v2422 = vrot.slane %v760, %v2421
      %v2423 = vlaneseq
      %v2424 = vshrl.u32 %v2423, 7
      %v2425 = vsub.s32 1, %v2424
      %v2426 = vrot.slane %v759, %v2425
      %v2427 = vsel %vm1330, %v2406, %v2402
      %v2428 = vsel %vm1332, %v2410, %v2427
      %v2429 = vsel %vm1334, %v2414, %v2428
      %v2430 = vsel %vm1336, %v2418, %v2429
      %v2431 = vsel %vm1338, %v2422, %v2430
      %v2432 = vsel %vm1340, %v2426, %v2431
      %2433 = vrot.lane.b32.xlu0 %v1592, 28
      %v2434 = vpop.permute.xlu0 %2433
      %2435 = vrot.lane.b32.xlu0 %v1598, 28
      %v2436 = vpop.permute.xlu0 %2435
      %2437 = vrot.lane.b32.xlu0 %v1604, 28
      %v2438 = vpop.permute.xlu0 %2437
      %2439 = vrot.lane.b32.xlu0 %v1610, 28
      %v2440 = vpop.permute.xlu0 %2439
      %2441 = vrot.lane.b32.xlu0 %v1616, 28
      %v2442 = vpop.permute.xlu0 %2441
      %2443 = vrot.lane.b32.xlu0 %v1622, 28
      %v2444 = vpop.permute.xlu0 %2443
      %2445 = vrot.lane.b32.xlu0 %v2432, 28
      %v2446 = vpop.permute.xlu0 %2445
      %v2454 = vlaneseq
      %v2455 = vshrl.u32 %v2454, 7
      %v2456 = vsub.s32 0, %v2455
      %v2457 = vrot.slane %v761, %v2456
      %v2458 = vsel %vm1330, %v2355, %v2351
      %v2459 = vsel %vm1332, %v2359, %v2458
      %v2460 = vsel %vm1334, %v2363, %v2459
      %v2461 = vsel %vm1336, %v2367, %v2460
      %v2462 = vsel %vm1338, %v2371, %v2461
      %v2463 = vsel %vm1340, %v2457, %v2462
      %2464 = vrot.lane.b32.xlu0 %v1683, 32
      %v2465 = vpop.permute.xlu0 %2464
      %2466 = vrot.lane.b32.xlu0 %v1689, 32
      %v2467 = vpop.permute.xlu0 %2466
      %2468 = vrot.lane.b32.xlu0 %v1695, 32
      %v2469 = vpop.permute.xlu0 %2468
      %2470 = vrot.lane.b32.xlu0 %v1701, 32
      %v2471 = vpop.permute.xlu0 %2470
      %2472 = vrot.lane.b32.xlu0 %v1707, 32
      %v2473 = vpop.permute.xlu0 %2472
      %2474 = vrot.lane.b32.xlu0 %v1713, 32
      %v2475 = vpop.permute.xlu0 %2474
      %2476 = vrot.lane.b32.xlu0 %v2463, 32
      %v2477 = vpop.permute.xlu0 %2476
      %vm2485 = vcmask 31744
      %v2486 = vsel %vm2485, %v1341, %v1624
      %v2487 = vsel %vm2485, %v1347, %v1626
      %v2488 = vsel %vm2485, %v1353, %v1628
      %v2489 = vsel %vm2485, %v1359, %v1630
      %v2490 = vsel %vm2485, %v1365, %v1632
      %v2491 = vsel %vm2485, %v1371, %v1634
      %v2492 = vsel %vm2485, %v1377, %v1636
      %vm2493 = vcmask 64512
      %v2494 = vsel %vm2493, %v2486, %v1715
      %v2495 = vsel %vm2493, %v2487, %v1717
      %v2496 = vsel %vm2493, %v2488, %v1719
      %v2497 = vsel %vm2493, %v2489, %v1721
      %v2498 = vsel %vm2493, %v2490, %v1723
      %v2499 = vsel %vm2493, %v2491, %v1725
      %v2500 = vsel %vm2493, %v2492, %v1727
      %vm2501 = vcmask 97280
      %v2502 = vsel %vm2501, %v2494, %v1974
      %v2503 = vsel %vm2501, %v2495, %v1976
      %v2504 = vsel %vm2501, %v2496, %v1978
      %v2505 = vsel %vm2501, %v2497, %v1980
      %v2506 = vsel %vm2501, %v2498, %v1982
      %v2507 = vsel %vm2501, %v2499, %v1984
      %v2508 = vsel %vm2501, %v2500, %v1986
      %vm2509 = vcmask 130048
      %v2510 = vsel %vm2509, %v2502, %v2233
      %v2511 = vsel %vm2509, %v2503, %v2235
      %v2512 = vsel %vm2509, %v2504, %v2237
      %v2513 = vsel %vm2509, %v2505, %v2239
      %v2514 = vsel %vm2509, %v2506, %v2241
      %v2515 = vsel %vm2509, %v2507, %v2243
      %v2516 = vsel %vm2509, %v2508, %v2245
      %vm2517 = vcmask 162816
      %v2518 = vsel %vm2517, %v2510, %v2324
      %v2519 = vsel %vm2517, %v2511, %v2326
      %v2520 = vsel %vm2517, %v2512, %v2328
      %v2521 = vsel %vm2517, %v2513, %v2330
      %v2522 = vsel %vm2517, %v2514, %v2332
      %v2523 = vsel %vm2517, %v2515, %v2334
      %v2524 = vsel %vm2517, %v2516, %v2336
      %vm2525 = vcmask 195584
      %v2526 = vsel %vm2525, %v2518, %v2379
      %v2527 = vsel %vm2525, %v2519, %v2381
      %v2528 = vsel %vm2525, %v2520, %v2383
      %v2529 = vsel %vm2525, %v2521, %v2385
      %v2530 = vsel %vm2525, %v2522, %v2387
      %v2531 = vsel %vm2525, %v2523, %v2389
      %v2532 = vsel %vm2525, %v2524, %v2391
      %vm2533 = vcmask 228352
      %v2534 = vsel %vm2533, %v2526, %v2434
      %v2535 = vsel %vm2533, %v2527, %v2436
      %v2536 = vsel %vm2533, %v2528, %v2438
      %v2537 = vsel %vm2533, %v2529, %v2440
      %v2538 = vsel %vm2533, %v2530, %v2442
      %v2539 = vsel %vm2533, %v2531, %v2444
      %v2540 = vsel %vm2533, %v2532, %v2446
      %vm2541 = vcmask 261120
      %v2542 = vsel %vm2541, %v2534, %v2465
      %v2543 = vsel %vm2541, %v2535, %v2467
      %v2544 = vsel %vm2541, %v2536, %v2469
      %v2545 = vsel %vm2541, %v2537, %v2471
      %v2546 = vsel %vm2541, %v2538, %v2473
      %v2547 = vsel %vm2541, %v2539, %v2475
      %v2548 = vsel %vm2541, %v2540, %v2477
      %v2556 = vcombine.high %v2542, %v2542
      %v2558 = vunpack.c.l.s4 1966171168
      %v2559 = vunpack.c.0.s8 %v2558
      %v2560 = vlaneseq
      %v2561 = vshrl.u32 %v2560, 7
      %v2562 = vsub.s32 %v2559, %v2561
      %v2563 = vrot.slane %v2542, %v2562
      %v2565 = vunpack.c.l.s4 1966171168
      %v2566 = vunpack.c.0.s8 %v2565
      %v2567 = vlaneseq
      %v2568 = vshrl.u32 %v2567, 7
      %v2569 = vsub.s32 %v2566, %v2568
      %v2570 = vrot.slane %v2556, %v2569
      %v2571 = vcombine.high %v2563, %v2563
      %v2572 = vcombine.high %v2570, %v2570
      %v2574 = vunpack.c.l.s4 1966171168
      %v2575 = vunpack.c.0.s8 %v2574
      %v2576 = vlaneseq
      %v2577 = vshrl.u32 %v2576, 7
      %v2578 = vsub.s32 %v2575, %v2577
      %v2579 = vrot.slane %v2563, %v2578
      %v2581 = vunpack.c.l.s4 1966171168
      %v2582 = vunpack.c.0.s8 %v2581
      %v2583 = vlaneseq
      %v2584 = vshrl.u32 %v2583, 7
      %v2585 = vsub.s32 %v2582, %v2584
      %v2586 = vrot.slane %v2570, %v2585
      %v2588 = vunpack.c.l.s4 1966171168
      %v2589 = vunpack.c.0.s8 %v2588
      %v2590 = vlaneseq
      %v2591 = vshrl.u32 %v2590, 7
      %v2592 = vsub.s32 %v2589, %v2591
      %v2593 = vrot.slane %v2571, %v2592
      %v2595 = vunpack.c.l.s4 1966171168
      %v2596 = vunpack.c.0.s8 %v2595
      %v2597 = vlaneseq
      %v2598 = vshrl.u32 %v2597, 7
      %v2599 = vsub.s32 %v2596, %v2598
      %v2600 = vrot.slane %v2572, %v2599
      %v2601 = vcombine.high %v2579, %v2579
      %v2602 = vcombine.high %v2586, %v2586
      %v2603 = vcombine.high %v2593, %v2593
      %v2604 = vcombine.high %v2543, %v2543
      %v2606 = vunpack.c.l.s4 1966171168
      %v2607 = vunpack.c.0.s8 %v2606
      %v2608 = vlaneseq
      %v2609 = vshrl.u32 %v2608, 7
      %v2610 = vsub.s32 %v2607, %v2609
      %v2611 = vrot.slane %v2543, %v2610
      %v2613 = vunpack.c.l.s4 1966171168
      %v2614 = vunpack.c.0.s8 %v2613
      %v2615 = vlaneseq
      %v2616 = vshrl.u32 %v2615, 7
      %v2617 = vsub.s32 %v2614, %v2616
      %v2618 = vrot.slane %v2604, %v2617
      %v2619 = vcombine.high %v2611, %v2611
      %v2620 = vcombine.high %v2618, %v2618
      %v2622 = vunpack.c.l.s4 1966171168
      %v2623 = vunpack.c.0.s8 %v2622
      %v2624 = vlaneseq
      %v2625 = vshrl.u32 %v2624, 7
      %v2626 = vsub.s32 %v2623, %v2625
      %v2627 = vrot.slane %v2611, %v2626
      %v2629 = vunpack.c.l.s4 1966171168
      %v2630 = vunpack.c.0.s8 %v2629
      %v2631 = vlaneseq
      %v2632 = vshrl.u32 %v2631, 7
      %v2633 = vsub.s32 %v2630, %v2632
      %v2634 = vrot.slane %v2618, %v2633
      %v2636 = vunpack.c.l.s4 1966171168
      %v2637 = vunpack.c.0.s8 %v2636
      %v2638 = vlaneseq
      %v2639 = vshrl.u32 %v2638, 7
      %v2640 = vsub.s32 %v2637, %v2639
      %v2641 = vrot.slane %v2619, %v2640
      %v2643 = vunpack.c.l.s4 1966171168
      %v2644 = vunpack.c.0.s8 %v2643
      %v2645 = vlaneseq
      %v2646 = vshrl.u32 %v2645, 7
      %v2647 = vsub.s32 %v2644, %v2646
      %v2648 = vrot.slane %v2620, %v2647
      %v2649 = vcombine.high %v2627, %v2627
      %v2650 = vcombine.high %v2634, %v2634
      %v2651 = vcombine.high %v2641, %v2641
      %v2652 = vcombine.high %v2544, %v2544
      %v2654 = vunpack.c.l.s4 1966171168
      %v2655 = vunpack.c.0.s8 %v2654
      %v2656 = vlaneseq
      %v2657 = vshrl.u32 %v2656, 7
      %v2658 = vsub.s32 %v2655, %v2657
      %v2659 = vrot.slane %v2544, %v2658
      %v2661 = vunpack.c.l.s4 1966171168
      %v2662 = vunpack.c.0.s8 %v2661
      %v2663 = vlaneseq
      %v2664 = vshrl.u32 %v2663, 7
      %v2665 = vsub.s32 %v2662, %v2664
      %v2666 = vrot.slane %v2652, %v2665
      %v2667 = vcombine.high %v2659, %v2659
      %v2668 = vcombine.high %v2666, %v2666
      %v2670 = vunpack.c.l.s4 1966171168
      %v2671 = vunpack.c.0.s8 %v2670
      %v2672 = vlaneseq
      %v2673 = vshrl.u32 %v2672, 7
      %v2674 = vsub.s32 %v2671, %v2673
      %v2675 = vrot.slane %v2659, %v2674
      %v2677 = vunpack.c.l.s4 1966171168
      %v2678 = vunpack.c.0.s8 %v2677
      %v2679 = vlaneseq
      %v2680 = vshrl.u32 %v2679, 7
      %v2681 = vsub.s32 %v2678, %v2680
      %v2682 = vrot.slane %v2666, %v2681
      %v2684 = vunpack.c.l.s4 1966171168
      %v2685 = vunpack.c.0.s8 %v2684
      %v2686 = vlaneseq
      %v2687 = vshrl.u32 %v2686, 7
      %v2688 = vsub.s32 %v2685, %v2687
      %v2689 = vrot.slane %v2667, %v2688
      %v2691 = vunpack.c.l.s4 1966171168
      %v2692 = vunpack.c.0.s8 %v2691
      %v2693 = vlaneseq
      %v2694 = vshrl.u32 %v2693, 7
      %v2695 = vsub.s32 %v2692, %v2694
      %v2696 = vrot.slane %v2668, %v2695
      %v2697 = vcombine.high %v2675, %v2675
      %v2698 = vcombine.high %v2682, %v2682
      %v2699 = vcombine.high %v2689, %v2689
      %v2700 = vcombine.high %v2545, %v2545
      %v2702 = vunpack.c.l.s4 1966171168
      %v2703 = vunpack.c.0.s8 %v2702
      %v2704 = vlaneseq
      %v2705 = vshrl.u32 %v2704, 7
      %v2706 = vsub.s32 %v2703, %v2705
      %v2707 = vrot.slane %v2545, %v2706
      %v2709 = vunpack.c.l.s4 1966171168
      %v2710 = vunpack.c.0.s8 %v2709
      %v2711 = vlaneseq
      %v2712 = vshrl.u32 %v2711, 7
      %v2713 = vsub.s32 %v2710, %v2712
      %v2714 = vrot.slane %v2700, %v2713
      %v2715 = vcombine.high %v2707, %v2707
      %v2716 = vcombine.high %v2714, %v2714
      %v2718 = vunpack.c.l.s4 1966171168
      %v2719 = vunpack.c.0.s8 %v2718
      %v2720 = vlaneseq
      %v2721 = vshrl.u32 %v2720, 7
      %v2722 = vsub.s32 %v2719, %v2721
      %v2723 = vrot.slane %v2707, %v2722
      %v2725 = vunpack.c.l.s4 1966171168
      %v2726 = vunpack.c.0.s8 %v2725
      %v2727 = vlaneseq
      %v2728 = vshrl.u32 %v2727, 7
      %v2729 = vsub.s32 %v2726, %v2728
      %v2730 = vrot.slane %v2714, %v2729
      %v2732 = vunpack.c.l.s4 1966171168
      %v2733 = vunpack.c.0.s8 %v2732
      %v2734 = vlaneseq
      %v2735 = vshrl.u32 %v2734, 7
      %v2736 = vsub.s32 %v2733, %v2735
      %v2737 = vrot.slane %v2715, %v2736
      %v2739 = vunpack.c.l.s4 1966171168
      %v2740 = vunpack.c.0.s8 %v2739
      %v2741 = vlaneseq
      %v2742 = vshrl.u32 %v2741, 7
      %v2743 = vsub.s32 %v2740, %v2742
      %v2744 = vrot.slane %v2716, %v2743
      %v2745 = vcombine.high %v2723, %v2723
      %v2746 = vcombine.high %v2730, %v2730
      %v2747 = vcombine.high %v2737, %v2737
      %v2748 = vcombine.high %v2546, %v2546
      %v2750 = vunpack.c.l.s4 1966171168
      %v2751 = vunpack.c.0.s8 %v2750
      %v2752 = vlaneseq
      %v2753 = vshrl.u32 %v2752, 7
      %v2754 = vsub.s32 %v2751, %v2753
      %v2755 = vrot.slane %v2546, %v2754
      %v2757 = vunpack.c.l.s4 1966171168
      %v2758 = vunpack.c.0.s8 %v2757
      %v2759 = vlaneseq
      %v2760 = vshrl.u32 %v2759, 7
      %v2761 = vsub.s32 %v2758, %v2760
      %v2762 = vrot.slane %v2748, %v2761
      %v2763 = vcombine.high %v2755, %v2755
      %v2764 = vcombine.high %v2762, %v2762
      %v2766 = vunpack.c.l.s4 1966171168
      %v2767 = vunpack.c.0.s8 %v2766
      %v2768 = vlaneseq
      %v2769 = vshrl.u32 %v2768, 7
      %v2770 = vsub.s32 %v2767, %v2769
      %v2771 = vrot.slane %v2755, %v2770
      %v2773 = vunpack.c.l.s4 1966171168
      %v2774 = vunpack.c.0.s8 %v2773
      %v2775 = vlaneseq
      %v2776 = vshrl.u32 %v2775, 7
      %v2777 = vsub.s32 %v2774, %v2776
      %v2778 = vrot.slane %v2762, %v2777
      %v2780 = vunpack.c.l.s4 1966171168
      %v2781 = vunpack.c.0.s8 %v2780
      %v2782 = vlaneseq
      %v2783 = vshrl.u32 %v2782, 7
      %v2784 = vsub.s32 %v2781, %v2783
      %v2785 = vrot.slane %v2763, %v2784
      %v2787 = vunpack.c.l.s4 1966171168
      %v2788 = vunpack.c.0.s8 %v2787
      %v2789 = vlaneseq
      %v2790 = vshrl.u32 %v2789, 7
      %v2791 = vsub.s32 %v2788, %v2790
      %v2792 = vrot.slane %v2764, %v2791
      %v2793 = vcombine.high %v2771, %v2771
      %v2794 = vcombine.high %v2778, %v2778
      %v2795 = vcombine.high %v2785, %v2785
      %v2796 = vcombine.high %v2547, %v2547
      %v2798 = vunpack.c.l.s4 1966171168
      %v2799 = vunpack.c.0.s8 %v2798
      %v2800 = vlaneseq
      %v2801 = vshrl.u32 %v2800, 7
      %v2802 = vsub.s32 %v2799, %v2801
      %v2803 = vrot.slane %v2547, %v2802
      %v2805 = vunpack.c.l.s4 1966171168
      %v2806 = vunpack.c.0.s8 %v2805
      %v2807 = vlaneseq
      %v2808 = vshrl.u32 %v2807, 7
      %v2809 = vsub.s32 %v2806, %v2808
      %v2810 = vrot.slane %v2796, %v2809
      %v2811 = vcombine.high %v2803, %v2803
      %v2812 = vcombine.high %v2810, %v2810
      %v2814 = vunpack.c.l.s4 1966171168
      %v2815 = vunpack.c.0.s8 %v2814
      %v2816 = vlaneseq
      %v2817 = vshrl.u32 %v2816, 7
      %v2818 = vsub.s32 %v2815, %v2817
      %v2819 = vrot.slane %v2803, %v2818
      %v2821 = vunpack.c.l.s4 1966171168
      %v2822 = vunpack.c.0.s8 %v2821
      %v2823 = vlaneseq
      %v2824 = vshrl.u32 %v2823, 7
      %v2825 = vsub.s32 %v2822, %v2824
      %v2826 = vrot.slane %v2810, %v2825
      %v2828 = vunpack.c.l.s4 1966171168
      %v2829 = vunpack.c.0.s8 %v2828
      %v2830 = vlaneseq
      %v2831 = vshrl.u32 %v2830, 7
      %v2832 = vsub.s32 %v2829, %v2831
      %v2833 = vrot.slane %v2811, %v2832
      %v2835 = vunpack.c.l.s4 1966171168
      %v2836 = vunpack.c.0.s8 %v2835
      %v2837 = vlaneseq
      %v2838 = vshrl.u32 %v2837, 7
      %v2839 = vsub.s32 %v2836, %v2838
      %v2840 = vrot.slane %v2812, %v2839
      %v2841 = vcombine.high %v2819, %v2819
      %v2842 = vcombine.high %v2826, %v2826
      %v2843 = vcombine.high %v2833, %v2833
      %v2844 = vcombine.high %v2548, %v2548
      %v2846 = vunpack.c.l.s4 1966171168
      %v2847 = vunpack.c.0.s8 %v2846
      %v2848 = vlaneseq
      %v2849 = vshrl.u32 %v2848, 7
      %v2850 = vsub.s32 %v2847, %v2849
      %v2851 = vrot.slane %v2548, %v2850
      %v2853 = vunpack.c.l.s4 1966171168
      %v2854 = vunpack.c.0.s8 %v2853
      %v2855 = vlaneseq
      %v2856 = vshrl.u32 %v2855, 7
      %v2857 = vsub.s32 %v2854, %v2856
      %v2858 = vrot.slane %v2844, %v2857
      %v2859 = vcombine.high %v2851, %v2851
      %v2860 = vcombine.high %v2858, %v2858
      %v2862 = vunpack.c.l.s4 1966171168
      %v2863 = vunpack.c.0.s8 %v2862
      %v2864 = vlaneseq
      %v2865 = vshrl.u32 %v2864, 7
      %v2866 = vsub.s32 %v2863, %v2865
      %v2867 = vrot.slane %v2851, %v2866
      %v2869 = vunpack.c.l.s4 1966171168
      %v2870 = vunpack.c.0.s8 %v2869
      %v2871 = vlaneseq
      %v2872 = vshrl.u32 %v2871, 7
      %v2873 = vsub.s32 %v2870, %v2872
      %v2874 = vrot.slane %v2858, %v2873
      %v2876 = vunpack.c.l.s4 1966171168
      %v2877 = vunpack.c.0.s8 %v2876
      %v2878 = vlaneseq
      %v2879 = vshrl.u32 %v2878, 7
      %v2880 = vsub.s32 %v2877, %v2879
      %v2881 = vrot.slane %v2859, %v2880
      %v2883 = vunpack.c.l.s4 1966171168
      %v2884 = vunpack.c.0.s8 %v2883
      %v2885 = vlaneseq
      %v2886 = vshrl.u32 %v2885, 7
      %v2887 = vsub.s32 %v2884, %v2886
      %v2888 = vrot.slane %v2860, %v2887
      %v2889 = vcombine.high %v2867, %v2867
      %v2890 = vcombine.high %v2874, %v2874
      %v2891 = vcombine.high %v2881, %v2881
      %v2892 = vcombine.low %v2579, %v2593
      %v2893 = vcombine.low %v2601, %v2603
      %v2894 = vcombine.low %v2586, %v2600
      %v2895 = vcombine.low %v2602, %v2627
      %v2897 = vunpack.c.l.s4 1966171168
      %v2898 = vunpack.c.0.s8 %v2897
      %v2899 = vlaneseq
      %v2900 = vshrl.u32 %v2899, 7
      %v2901 = vsub.s32 %v2898, %v2900
      %v2902 = vrot.slane %v2892, %v2901
      %v2904 = vunpack.c.l.s4 1966171168
      %v2905 = vunpack.c.0.s8 %v2904
      %v2906 = vlaneseq
      %v2907 = vshrl.u32 %v2906, 7
      %v2908 = vsub.s32 %v2905, %v2907
      %v2909 = vrot.slane %v2893, %v2908
      %v2911 = vunpack.c.l.s4 1966171168
      %v2912 = vunpack.c.0.s8 %v2911
      %v2913 = vlaneseq
      %v2914 = vshrl.u32 %v2913, 7
      %v2915 = vsub.s32 %v2912, %v2914
      %v2916 = vrot.slane %v2894, %v2915
      %v2918 = vunpack.c.l.s4 1966171168
      %v2919 = vunpack.c.0.s8 %v2918
      %v2920 = vlaneseq
      %v2921 = vshrl.u32 %v2920, 7
      %v2922 = vsub.s32 %v2919, %v2921
      %v2923 = vrot.slane %v2895, %v2922
      %v2924 = vcombine.low %v2902, %v2909
      %v2925 = vcombine.low %v2916, %v2923
      %v2927 = vunpack.c.l.s4 1966171168
      %v2928 = vunpack.c.0.s8 %v2927
      %v2929 = vlaneseq
      %v2930 = vshrl.u32 %v2929, 7
      %v2931 = vsub.s32 %v2928, %v2930
      %v2932 = vrot.slane %v2924, %v2931
      %v2934 = vunpack.c.l.s4 1966171168
      %v2935 = vunpack.c.0.s8 %v2934
      %v2936 = vlaneseq
      %v2937 = vshrl.u32 %v2936, 7
      %v2938 = vsub.s32 %v2935, %v2937
      %v2939 = vrot.slane %v2925, %v2938
      %v2940 = vcombine.low %v2932, %v2939
      %v2941 = vcombine.low %v2641, %v2649
      %v2942 = vcombine.low %v2651, %v2634
      %v2943 = vcombine.low %v2648, %v2650
      %v2944 = vcombine.low %v2675, %v2689
      %v2946 = vunpack.c.l.s4 1966171168
      %v2947 = vunpack.c.0.s8 %v2946
      %v2948 = vlaneseq
      %v2949 = vshrl.u32 %v2948, 7
      %v2950 = vsub.s32 %v2947, %v2949
      %v2951 = vrot.slane %v2941, %v2950
      %v2953 = vunpack.c.l.s4 1966171168
      %v2954 = vunpack.c.0.s8 %v2953
      %v2955 = vlaneseq
      %v2956 = vshrl.u32 %v2955, 7
      %v2957 = vsub.s32 %v2954, %v2956
      %v2958 = vrot.slane %v2942, %v2957
      %v2960 = vunpack.c.l.s4 1966171168
      %v2961 = vunpack.c.0.s8 %v2960
      %v2962 = vlaneseq
      %v2963 = vshrl.u32 %v2962, 7
      %v2964 = vsub.s32 %v2961, %v2963
      %v2965 = vrot.slane %v2943, %v2964
      %v2967 = vunpack.c.l.s4 1966171168
      %v2968 = vunpack.c.0.s8 %v2967
      %v2969 = vlaneseq
      %v2970 = vshrl.u32 %v2969, 7
      %v2971 = vsub.s32 %v2968, %v2970
      %v2972 = vrot.slane %v2944, %v2971
      %v2973 = vcombine.low %v2951, %v2958
      %v2974 = vcombine.low %v2965, %v2972
      %v2976 = vunpack.c.l.s4 1966171168
      %v2977 = vunpack.c.0.s8 %v2976
      %v2978 = vlaneseq
      %v2979 = vshrl.u32 %v2978, 7
      %v2980 = vsub.s32 %v2977, %v2979
      %v2981 = vrot.slane %v2973, %v2980
      %v2983 = vunpack.c.l.s4 1966171168
      %v2984 = vunpack.c.0.s8 %v2983
      %v2985 = vlaneseq
      %v2986 = vshrl.u32 %v2985, 7
      %v2987 = vsub.s32 %v2984, %v2986
      %v2988 = vrot.slane %v2974, %v2987
      %v2989 = vcombine.low %v2981, %v2988
      %v2990 = vcombine.low %v2697, %v2699
      %v2991 = vcombine.low %v2682, %v2696
      %v2992 = vcombine.low %v2698, %v2723
      %v2993 = vcombine.low %v2737, %v2745
      %v2995 = vunpack.c.l.s4 1966171168
      %v2996 = vunpack.c.0.s8 %v2995
      %v2997 = vlaneseq
      %v2998 = vshrl.u32 %v2997, 7
      %v2999 = vsub.s32 %v2996, %v2998
      %v3000 = vrot.slane %v2990, %v2999
      %v3002 = vunpack.c.l.s4 1966171168
      %v3003 = vunpack.c.0.s8 %v3002
      %v3004 = vlaneseq
      %v3005 = vshrl.u32 %v3004, 7
      %v3006 = vsub.s32 %v3003, %v3005
      %v3007 = vrot.slane %v2991, %v3006
      %v3009 = vunpack.c.l.s4 1966171168
      %v3010 = vunpack.c.0.s8 %v3009
      %v3011 = vlaneseq
      %v3012 = vshrl.u32 %v3011, 7
      %v3013 = vsub.s32 %v3010, %v3012
      %v3014 = vrot.slane %v2992, %v3013
      %v3016 = vunpack.c.l.s4 1966171168
      %v3017 = vunpack.c.0.s8 %v3016
      %v3018 = vlaneseq
      %v3019 = vshrl.u32 %v3018, 7
      %v3020 = vsub.s32 %v3017, %v3019
      %v3021 = vrot.slane %v2993, %v3020
      %v3022 = vcombine.low %v3000, %v3007
      %v3023 = vcombine.low %v3014, %v3021
      %v3025 = vunpack.c.l.s4 1966171168
      %v3026 = vunpack.c.0.s8 %v3025
      %v3027 = vlaneseq
      %v3028 = vshrl.u32 %v3027, 7
      %v3029 = vsub.s32 %v3026, %v3028
      %v3030 = vrot.slane %v3022, %v3029
      %v3032 = vunpack.c.l.s4 1966171168
      %v3033 = vunpack.c.0.s8 %v3032
      %v3034 = vlaneseq
      %v3035 = vshrl.u32 %v3034, 7
      %v3036 = vsub.s32 %v3033, %v3035
      %v3037 = vrot.slane %v3023, %v3036
      %v3038 = vcombine.low %v3030, %v3037
      %v3039 = vcombine.low %v2747, %v2730
      %v3040 = vcombine.low %v2744, %v2746
      %v3041 = vcombine.low %v2771, %v2785
      %v3042 = vcombine.low %v2793, %v2795
      %v3044 = vunpack.c.l.s4 1966171168
      %v3045 = vunpack.c.0.s8 %v3044
      %v3046 = vlaneseq
      %v3047 = vshrl.u32 %v3046, 7
      %v3048 = vsub.s32 %v3045, %v3047
      %v3049 = vrot.slane %v3039, %v3048
      %v3051 = vunpack.c.l.s4 1966171168
      %v3052 = vunpack.c.0.s8 %v3051
      %v3053 = vlaneseq
      %v3054 = vshrl.u32 %v3053, 7
      %v3055 = vsub.s32 %v3052, %v3054
      %v3056 = vrot.slane %v3040, %v3055
      %v3058 = vunpack.c.l.s4 1966171168
      %v3059 = vunpack.c.0.s8 %v3058
      %v3060 = vlaneseq
      %v3061 = vshrl.u32 %v3060, 7
      %v3062 = vsub.s32 %v3059, %v3061
      %v3063 = vrot.slane %v3041, %v3062
      %v3065 = vunpack.c.l.s4 1966171168
      %v3066 = vunpack.c.0.s8 %v3065
      %v3067 = vlaneseq
      %v3068 = vshrl.u32 %v3067, 7
      %v3069 = vsub.s32 %v3066, %v3068
      %v3070 = vrot.slane %v3042, %v3069
      %v3071 = vcombine.low %v3049, %v3056
      %v3072 = vcombine.low %v3063, %v3070
      %v3074 = vunpack.c.l.s4 1966171168
      %v3075 = vunpack.c.0.s8 %v3074
      %v3076 = vlaneseq
      %v3077 = vshrl.u32 %v3076, 7
      %v3078 = vsub.s32 %v3075, %v3077
      %v3079 = vrot.slane %v3071, %v3078
      %v3081 = vunpack.c.l.s4 1966171168
      %v3082 = vunpack.c.0.s8 %v3081
      %v3083 = vlaneseq
      %v3084 = vshrl.u32 %v3083, 7
      %v3085 = vsub.s32 %v3082, %v3084
      %v3086 = vrot.slane %v3072, %v3085
      %v3087 = vcombine.low %v3079, %v3086
      %v3088 = vcombine.low %v2778, %v2792
      %v3089 = vcombine.low %v2794, %v2819
      %v3090 = vcombine.low %v2833, %v2841
      %v3091 = vcombine.low %v2843, %v2826
      %v3093 = vunpack.c.l.s4 1966171168
      %v3094 = vunpack.c.0.s8 %v3093
      %v3095 = vlaneseq
      %v3096 = vshrl.u32 %v3095, 7
      %v3097 = vsub.s32 %v3094, %v3096
      %v3098 = vrot.slane %v3088, %v3097
      %v3100 = vunpack.c.l.s4 1966171168
      %v3101 = vunpack.c.0.s8 %v3100
      %v3102 = vlaneseq
      %v3103 = vshrl.u32 %v3102, 7
      %v3104 = vsub.s32 %v3101, %v3103
      %v3105 = vrot.slane %v3089, %v3104
      %v3107 = vunpack.c.l.s4 1966171168
      %v3108 = vunpack.c.0.s8 %v3107
      %v3109 = vlaneseq
      %v3110 = vshrl.u32 %v3109, 7
      %v3111 = vsub.s32 %v3108, %v3110
      %v3112 = vrot.slane %v3090, %v3111
      %v3114 = vunpack.c.l.s4 1966171168
      %v3115 = vunpack.c.0.s8 %v3114
      %v3116 = vlaneseq
      %v3117 = vshrl.u32 %v3116, 7
      %v3118 = vsub.s32 %v3115, %v3117
      %v3119 = vrot.slane %v3091, %v3118
      %v3120 = vcombine.low %v3098, %v3105
      %v3121 = vcombine.low %v3112, %v3119
      %v3123 = vunpack.c.l.s4 1966171168
      %v3124 = vunpack.c.0.s8 %v3123
      %v3125 = vlaneseq
      %v3126 = vshrl.u32 %v3125, 7
      %v3127 = vsub.s32 %v3124, %v3126
      %v3128 = vrot.slane %v3120, %v3127
      %v3130 = vunpack.c.l.s4 1966171168
      %v3131 = vunpack.c.0.s8 %v3130
      %v3132 = vlaneseq
      %v3133 = vshrl.u32 %v3132, 7
      %v3134 = vsub.s32 %v3131, %v3133
      %v3135 = vrot.slane %v3121, %v3134
      %v3136 = vcombine.low %v3128, %v3135
      %v3137 = vcombine.low %v2840, %v2842
      %v3138 = vcombine.low %v2867, %v2881
      %v3139 = vcombine.low %v2889, %v2891
      %v3140 = vcombine.low %v2874, %v2888
      %v3142 = vunpack.c.l.s4 1966171168
      %v3143 = vunpack.c.0.s8 %v3142
      %v3144 = vlaneseq
      %v3145 = vshrl.u32 %v3144, 7
      %v3146 = vsub.s32 %v3143, %v3145
      %v3147 = vrot.slane %v3137, %v3146
      %v3149 = vunpack.c.l.s4 1966171168
      %v3150 = vunpack.c.0.s8 %v3149
      %v3151 = vlaneseq
      %v3152 = vshrl.u32 %v3151, 7
      %v3153 = vsub.s32 %v3150, %v3152
      %v3154 = vrot.slane %v3138, %v3153
      %v3156 = vunpack.c.l.s4 1966171168
      %v3157 = vunpack.c.0.s8 %v3156
      %v3158 = vlaneseq
      %v3159 = vshrl.u32 %v3158, 7
      %v3160 = vsub.s32 %v3157, %v3159
      %v3161 = vrot.slane %v3139, %v3160
      %v3163 = vunpack.c.l.s4 1966171168
      %v3164 = vunpack.c.0.s8 %v3163
      %v3165 = vlaneseq
      %v3166 = vshrl.u32 %v3165, 7
      %v3167 = vsub.s32 %v3164, %v3166
      %v3168 = vrot.slane %v3140, %v3167
      %v3169 = vcombine.low %v3147, %v3154
      %v3170 = vcombine.low %v3161, %v3168
      %v3172 = vunpack.c.l.s4 1966171168
      %v3173 = vunpack.c.0.s8 %v3172
      %v3174 = vlaneseq
      %v3175 = vshrl.u32 %v3174, 7
      %v3176 = vsub.s32 %v3173, %v3175
      %v3177 = vrot.slane %v3169, %v3176
      %v3179 = vunpack.c.l.s4 1966171168
      %v3180 = vunpack.c.0.s8 %v3179
      %v3181 = vlaneseq
      %v3182 = vshrl.u32 %v3181, 7
      %v3183 = vsub.s32 %v3180, %v3182
      %v3184 = vrot.slane %v3170, %v3183
      %v3185 = vcombine.low %v3177, %v3184
      %v3187 = vunpack.c.l.s4 1966171168
      %v3188 = vunpack.c.0.s8 %v3187
      %v3189 = vlaneseq
      %v3190 = vshrl.u32 %v3189, 7
      %v3191 = vsub.s32 %v3188, %v3190
      %v3192 = vrot.slane %v2890, %v3191
      %v3194 = vunpack.c.l.s4 1966171168
      %v3195 = vunpack.c.0.s8 %v3194
      %v3196 = vlaneseq
      %v3197 = vshrl.u32 %v3196, 7
      %v3198 = vsub.s32 %v3195, %v3197
      %v3199 = vrot.slane %v3192, %v3198
      %v3207 = vpack.c.bf16 %v2989, %v2940
      %v3208 = vpack.c.bf16 %v3087, %v3038
      %v3209 = vpack.c.bf16 %v3185, %v3136
      %v3210 = vpack.c.bf16 %v3199, %v3199
      %v3211 = vld [vmem:[%s1] sm:$0xf]
      %v3212 = vld [vmem:[%s1 + $0x4] sm:$0xf]
      %v3213 = vld [vmem:[%s1 + $0x8] sm:$0xf]
      %v3214 = vld [vmem:[%s1 + $0xc] sm:$0xf]
      %v3215 = vld [vmem:[%s1 + $0x10] sm:$0x3]
      %v3221 = vunpack.c.l.b16 %v3211
      %v3222 = vunpack.c.l.b16 %v3212
      %v3223 = vunpack.c.l.b16 %v3213
      %v3224 = vunpack.c.l.b16 %v3214
      %v3225 = vunpack.c.l.b16 %v3215
      %v3226 = vpack.c.b16 %v3222, %v3221
      %v3227 = vpack.c.b16 %v3224, %v3223
      %v3228 = vpack.c.b16 %v3225, %v3225
      %vm3231 = vcmask 293888
      %v3233 = vsel %vm3231, %v3207, 0
      %v3236 = vsel %vm3231, %v3208, 0
      %v3239 = vsel %vm3231, %v3209, 0
      %v3242 = vsel %vm3231, %v3210, 0
      %vm3244 = vcmask 1041408
      %v3246 = vsel %vm3244, %v3228, 0
      %3248 = vmatprep.subr.bf16.mxu0 0
      %3249 = vmatpush1.bf16.msra.mxu0 %v3226
      %3250 = vmatprep.subr.bf16.mxu0 0
      %3251 = vmatpush1.bf16.msra.mxu0 %v3227
      %3252 = vmatprep.subr.bf16.mxu0 0
      %3253 = vmatpush1.bf16.msra.mxu0 %v3246
      %3254 = vmatprep.subr.bf16.mxu0 0
      %3255 = vmatpush1.bf16.msra.mxu0 0
      %3256 = vmatprep.subr.bf16.mxu0 0
      %3257 = vmatpush1.bf16.msra.mxu0 0
      %3258 = vmatprep.subr.bf16.mxu0 0
      %3259 = vmatpush1.bf16.msra.mxu0 0
      %3260 = vmatprep.subr.bf16.mxu0 0
      %3261 = vmatpush1.bf16.msra.mxu0 0
      %3262 = vmatprep.subr.bf16.mxu0 0
      %3263 = vmatpush1.bf16.msra.mxu0 0
      %3264 = vmatprep.subr.bf16.mxu0 0
      %3265 = vmatpush1.bf16.msra.mxu0 0
      %3266 = vmatprep.subr.bf16.mxu0 0
      %3267 = vmatpush1.bf16.msra.mxu0 0
      %3268 = vmatprep.subr.bf16.mxu0 0
      %3269 = vmatpush1.bf16.msra.mxu0 0
      %3270 = vmatprep.subr.bf16.mxu0 0
      %3271 = vmatpush1.bf16.msra.mxu0 0
      %3272 = vmatprep.subr.bf16.mxu0 0
      %3273 = vmatpush1.bf16.msra.mxu0 0
      %3274 = vmatprep.subr.bf16.mxu0 0
      %3275 = vmatpush1.bf16.msra.mxu0 0
      %3276 = vmatprep.subr.bf16.mxu0 0
      %3277 = vmatpush1.bf16.msra.mxu0 0
      %3278 = vmatprep.subr.bf16.mxu0 0
      %3279 = vmatpush1.bf16.msra.mxu0 0
      %3280 = vmatprep.mubr.bf16.mxu0 0
      %3281 = vmatmul.mubr.bf16.gmra.mrb[0].mxu0 %v3233
      %v3282 = vpop.f32.mrb[0].mxu0
      %v3283 = vadd.f32 0.0, %v3282
      %v3284 = vpop.f32.mrb[0].mxu0
      %v3285 = vpop.f32.mrb[0].mxu0
      %v3286 = vadd.f32 0.0, %v3285
      %v3287 = vpop.f32.mrb[0].mxu0
      %3288 = vmatprep.mubr.bf16.mxu0 0
      %3289 = vmatmul.mubr.bf16.gmra.mrb[0].mxu0 %v3236
      %v3290 = vpop.f32.mrb[0].mxu0
      %v3291 = vadd.f32 0.0, %v3290
      %v3292 = vpop.f32.mrb[0].mxu0
      %v3293 = vpop.f32.mrb[0].mxu0
      %v3294 = vadd.f32 0.0, %v3293
      %v3295 = vpop.f32.mrb[0].mxu0
      %3296 = vmatprep.mubr.bf16.mxu0 0
      %3297 = vmatmul.mubr.bf16.gmra.mrb[0].mxu0 %v3239
      %v3298 = vpop.f32.mrb[0].mxu0
      %v3299 = vadd.f32 0.0, %v3298
      %v3300 = vpop.f32.mrb[0].mxu0
      %v3301 = vpop.f32.mrb[0].mxu0
      %v3302 = vadd.f32 0.0, %v3301
      %v3303 = vpop.f32.mrb[0].mxu0
      %3304 = vmatprep.mubr.bf16.mxu0 0
      %3305 = vmatmul.mubr.bf16.gmra.mrb[0].mxu0 %v3242
      %v3306 = vpop.f32.mrb[0].mxu0
      %v3307 = vadd.f32 0.0, %v3306
      %v3308 = vpop.f32.mrb[0].mxu0
      %v3309 = vpop.f32.mrb[0].mxu0
      %v3310 = vpop.f32.mrb[0].mxu0
      %3311 = vdwg.mxu0
      %v3312 = vld [vmem:[%s2] sm:$0x1]
      %v3314 = vlaneseq
      %v3315 = vshrl.u32 %v3314, 7
      %v3316 = vsub.s32 0, %v3315
      %v3317 = vrot.slane %v3312, %v3316
      %v3319 = vmul.f32 %v3283, %v3317
      %v3320 = vmul.f32 %v3286, %v3317
      %v3321 = vmul.f32 %v3291, %v3317
      %v3322 = vmul.f32 %v3294, %v3317
      %v3323 = vmul.f32 %v3299, %v3317
      %v3324 = vmul.f32 %v3302, %v3317
      %v3325 = vmul.f32 %v3307, %v3317
      %v3326 = vld [vmem:[%s3] sm:$0x1]
      %v3328 = vlaneseq
      %v3329 = vshrl.u32 %v3328, 7
      %v3330 = vsub.s32 0, %v3329
      %v3331 = vrot.slane %v3326, %v3330
      %v3333 = vadd.f32 %v3319, %v3331
      %v3334 = vadd.f32 %v3320, %v3331
      %v3335 = vadd.f32 %v3321, %v3331
      %v3336 = vadd.f32 %v3322, %v3331
      %v3337 = vadd.f32 %v3323, %v3331
      %v3338 = vadd.f32 %v3324, %v3331
      %v3339 = vadd.f32 %v3325, %v3331
      %v3340 = vmax.f32 %v3333, 0.0
      %v3341 = vmax.f32 %v3334, 0.0
      %v3342 = vmax.f32 %v3335, 0.0
      %v3343 = vmax.f32 %v3336, 0.0
      %v3344 = vmax.f32 %v3337, 0.0
      %v3345 = vmax.f32 %v3338, 0.0
      %v3346 = vmax.f32 %v3339, 0.0
      %v3347 = vmin.f32 %v3340, 6.0
      %v3348 = vmin.f32 %v3341, 6.0
      %v3349 = vmin.f32 %v3342, 6.0
      %v3350 = vmin.f32 %v3343, 6.0
      %v3351 = vmin.f32 %v3344, 6.0
      %v3352 = vmin.f32 %v3345, 6.0
      %v3353 = vmin.f32 %v3346, 6.0
      %v3354 = vpack.c.bf16 %v443, %v442
      %v3355 = vpack.c.bf16 %v445, %v444
      %v3356 = vpack.c.bf16 %v447, %v446
      %v3357 = vpack.c.bf16 %v449, %v448
      %v3358 = vpack.c.bf16 %v451, %v450
      %v3359 = vpack.c.bf16 %v453, %v452
      %v3360 = vpack.c.bf16 %v455, %v454
      %v3361 = vpack.c.bf16 %v457, %v456
      %v3362 = vpack.c.bf16 %v459, %v458
      %v3363 = vpack.c.bf16 %v461, %v460
      %v3364 = vpack.c.bf16 %v463, %v462
      %v3365 = vpack.c.bf16 %v465, %v464
      %v3366 = vpack.c.bf16 %v467, %v466
      %v3367 = vpack.c.bf16 %v469, %v468
      %v3368 = vpack.c.bf16 %v471, %v470
      %v3369 = vpack.c.bf16 %v473, %v472
      %v3370 = vld [vmem:[%s4] sm:$0x3]
      %v3372 = vsel %vm2485, %v3354, 0
      %v3375 = vsel %vm2485, %v3355, 0
      %v3378 = vsel %vm2485, %v3356, 0
      %v3381 = vsel %vm2485, %v3357, 0
      %v3384 = vsel %vm2485, %v3358, 0
      %v3387 = vsel %vm2485, %v3359, 0
      %v3390 = vsel %vm2485, %v3360, 0
      %v3393 = vsel %vm2485, %v3361, 0
      %v3396 = vsel %vm2485, %v3362, 0
      %v3399 = vsel %vm2485, %v3363, 0
      %v3402 = vsel %vm2485, %v3364, 0
      %v3405 = vsel %vm2485, %v3365, 0
      %v3408 = vsel %vm2485, %v3366, 0
      %v3411 = vsel %vm2485, %v3367, 0
      %v3414 = vsel %vm2485, %v3368, 0
      %v3417 = vsel %vm2485, %v3369, 0
      %v3420 = vsel %vm3244, %v3370, 0
      %3422 = vmatprep.subr.bf16.mxu0 0
      %3423 = vmatpush1.bf16.msra.mxu0 %v3420
      %3424 = vmatprep.subr.bf16.mxu0 0
      %3425 = vmatpush1.bf16.msra.mxu0 0
      %3426 = vmatprep.subr.bf16.mxu0 0
      %3427 = vmatpush1.bf16.msra.mxu0 0
      %3428 = vmatprep.subr.bf16.mxu0 0
      %3429 = vmatpush1.bf16.msra.mxu0 0
      %3430 = vmatprep.subr.bf16.mxu0 0
      %3431 = vmatpush1.bf16.msra.mxu0 0
      %3432 = vmatprep.subr.bf16.mxu0 0
      %3433 = vmatpush1.bf16.msra.mxu0 0
      %3434 = vmatprep.subr.bf16.mxu0 0
      %3435 = vmatpush1.bf16.msra.mxu0 0
      %3436 = vmatprep.subr.bf16.mxu0 0
      %3437 = vmatpush1.bf16.msra.mxu0 0
      %3438 = vmatprep.subr.bf16.mxu0 0
      %3439 = vmatpush1.bf16.msra.mxu0 0
      %3440 = vmatprep.subr.bf16.mxu0 0
      %3441 = vmatpush1.bf16.msra.mxu0 0
      %3442 = vmatprep.subr.bf16.mxu0 0
      %3443 = vmatpush1.bf16.msra.mxu0 0
      %3444 = vmatprep.subr.bf16.mxu0 0
      %3445 = vmatpush1.bf16.msra.mxu0 0
      %3446 = vmatprep.subr.bf16.mxu0 0
      %3447 = vmatpush1.bf16.msra.mxu0 0
      %3448 = vmatprep.subr.bf16.mxu0 0
      %3449 = vmatpush1.bf16.msra.mxu0 0
      %3450 = vmatprep.subr.bf16.mxu0 0
      %3451 = vmatpush1.bf16.msra.mxu0 0
      %3452 = vmatprep.subr.bf16.mxu0 0
      %3453 = vmatpush1.bf16.msra.mxu0 0
      %3454 = vmatprep.mubr.bf16.mxu0 0
      %3455 = vmatmul.mubr.bf16.gmra.mrb[0].mxu0 %v3372
      %v3456 = vpop.f32.mrb[0].mxu0
      %v3457 = vadd.f32 0.0, %v3456
      %v3458 = vpop.f32.mrb[0].mxu0
      %v3459 = vpop.f32.mrb[0].mxu0
      %v3460 = vadd.f32 0.0, %v3459
      %v3461 = vpop.f32.mrb[0].mxu0
      %3462 = vmatprep.mubr.bf16.mxu0 0
      %3463 = vmatmul.mubr.bf16.gmra.mrb[0].mxu0 %v3375
      %v3464 = vpop.f32.mrb[0].mxu0
      %v3465 = vadd.f32 0.0, %v3464
      %v3466 = vpop.f32.mrb[0].mxu0
      %v3467 = vpop.f32.mrb[0].mxu0
      %v3468 = vadd.f32 0.0, %v3467
      %v3469 = vpop.f32.mrb[0].mxu0
      %3470 = vmatprep.mubr.bf16.mxu0 0
      %3471 = vmatmul.mubr.bf16.gmra.mrb[0].mxu0 %v3378
      %v3472 = vpop.f32.mrb[0].mxu0
      %v3473 = vadd.f32 0.0, %v3472
      %v3474 = vpop.f32.mrb[0].mxu0
      %v3475 = vpop.f32.mrb[0].mxu0
      %v3476 = vadd.f32 0.0, %v3475
      %v3477 = vpop.f32.mrb[0].mxu0
      %3478 = vmatprep.mubr.bf16.mxu0 0
      %3479 = vmatmul.mubr.bf16.gmra.mrb[0].mxu0 %v3381
      %v3480 = vpop.f32.mrb[0].mxu0
      %v3481 = vadd.f32 0.0, %v3480
      %v3482 = vpop.f32.mrb[0].mxu0
      %v3483 = vpop.f32.mrb[0].mxu0
      %v3484 = vadd.f32 0.0, %v3483
      %v3485 = vpop.f32.mrb[0].mxu0
      %3486 = vmatprep.mubr.bf16.mxu0 0
      %3487 = vmatmul.mubr.bf16.gmra.mrb[0].mxu0 %v3384
      %v3488 = vpop.f32.mrb[0].mxu0
      %v3489 = vadd.f32 0.0, %v3488
      %v3490 = vpop.f32.mrb[0].mxu0
      %v3491 = vpop.f32.mrb[0].mxu0
      %v3492 = vadd.f32 0.0, %v3491
      %v3493 = vpop.f32.mrb[0].mxu0
      %3494 = vmatprep.mubr.bf16.mxu0 0
      %3495 = vmatmul.mubr.bf16.gmra.mrb[0].mxu0 %v3387
      %v3496 = vpop.f32.mrb[0].mxu0
      %v3497 = vadd.f32 0.0, %v3496
      %v3498 = vpop.f32.mrb[0].mxu0
      %v3499 = vpop.f32.mrb[0].mxu0
      %v3500 = vadd.f32 0.0, %v3499
      %v3501 = vpop.f32.mrb[0].mxu0
      %3502 = vmatprep.mubr.bf16.mxu0 0
      %3503 = vmatmul.mubr.bf16.gmra.mrb[0].mxu0 %v3390
      %v3504 = vpop.f32.mrb[0].mxu0
      %v3505 = vadd.f32 0.0, %v3504
      %v3506 = vpop.f32.mrb[0].mxu0
      %v3507 = vpop.f32.mrb[0].mxu0
      %v3508 = vadd.f32 0.0, %v3507
      %v3509 = vpop.f32.mrb[0].mxu0
      %3510 = vmatprep.mubr.bf16.mxu0 0
      %3511 = vmatmul.mubr.bf16.gmra.mrb[0].mxu0 %v3393
      %v3512 = vpop.f32.mrb[0].mxu0
      %v3513 = vadd.f32 0.0, %v3512
      %v3514 = vpop.f32.mrb[0].mxu0
      %v3515 = vpop.f32.mrb[0].mxu0
      %v3516 = vadd.f32 0.0, %v3515
      %v3517 = vpop.f32.mrb[0].mxu0
      %3518 = vmatprep.mubr.bf16.mxu0 0
      %3519 = vmatmul.mubr.bf16.gmra.mrb[0].mxu0 %v3396
      %v3520 = vpop.f32.mrb[0].mxu0
      %v3521 = vadd.f32 0.0, %v3520
      %v3522 = vpop.f32.mrb[0].mxu0
      %v3523 = vpop.f32.mrb[0].mxu0
      %v3524 = vadd.f32 0.0, %v3523
      %v3525 = vpop.f32.mrb[0].mxu0
      %3526 = vmatprep.mubr.bf16.mxu0 0
      %3527 = vmatmul.mubr.bf16.gmra.mrb[0].mxu0 %v3399
      %v3528 = vpop.f32.mrb[0].mxu0
      %v3529 = vadd.f32 0.0, %v3528
      %v3530 = vpop.f32.mrb[0].mxu0
      %v3531 = vpop.f32.mrb[0].mxu0
      %v3532 = vadd.f32 0.0, %v3531
      %v3533 = vpop.f32.mrb[0].mxu0
      %3534 = vmatprep.mubr.bf16.mxu0 0
      %3535 = vmatmul.mubr.bf16.gmra.mrb[0].mxu0 %v3402
      %v3536 = vpop.f32.mrb[0].mxu0
      %v3537 = vadd.f32 0.0, %v3536
      %v3538 = vpop.f32.mrb[0].mxu0
      %v3539 = vpop.f32.mrb[0].mxu0
      %v3540 = vadd.f32 0.0, %v3539
      %v3541 = vpop.f32.mrb[0].mxu0
      %3542 = vmatprep.mubr.bf16.mxu0 0
      %3543 = vmatmul.mubr.bf16.gmra.mrb[0].mxu0 %v3405
      %v3544 = vpop.f32.mrb[0].mxu0
      %v3545 = vadd.f32 0.0, %v3544
      %v3546 = vpop.f32.mrb[0].mxu0
      %v3547 = vpop.f32.mrb[0].mxu0
      %v3548 = vadd.f32 0.0, %v3547
      %v3549 = vpop.f32.mrb[0].mxu0
      %3550 = vmatprep.mubr.bf16.mxu0 0
      %3551 = vmatmul.mubr.bf16.gmra.mrb[0].mxu0 %v3408
      %v3552 = vpop.f32.mrb[0].mxu0
      %v3553 = vadd.f32 0.0, %v3552
      %v3554 = vpop.f32.mrb[0].mxu0
      %v3555 = vpop.f32.mrb[0].mxu0
      %v3556 = vadd.f32 0.0, %v3555
      %v3557 = vpop.f32.mrb[0].mxu0
      %3558 = vmatprep.mubr.bf16.mxu0 0
      %3559 = vmatmul.mubr.bf16.gmra.mrb[0].mxu0 %v3411
      %v3560 = vpop.f32.mrb[0].mxu0
      %v3561 = vadd.f32 0.0, %v3560
      %v3562 = vpop.f32.mrb[0].mxu0
      %v3563 = vpop.f32.mrb[0].mxu0
      %v3564 = vadd.f32 0.0, %v3563
      %v3565 = vpop.f32.mrb[0].mxu0
      %3566 = vmatprep.mubr.bf16.mxu0 0
      %3567 = vmatmul.mubr.bf16.gmra.mrb[0].mxu0 %v3414
      %v3568 = vpop.f32.mrb[0].mxu0
      %v3569 = vadd.f32 0.0, %v3568
      %v3570 = vpop.f32.mrb[0].mxu0
      %v3571 = vpop.f32.mrb[0].mxu0
      %v3572 = vadd.f32 0.0, %v3571
      %v3573 = vpop.f32.mrb[0].mxu0
      %3574 = vmatprep.mubr.bf16.mxu0 0
      %3575 = vmatmul.mubr.bf16.gmra.mrb[0].mxu0 %v3417
      %v3576 = vpop.f32.mrb[0].mxu0
      %v3577 = vadd.f32 0.0, %v3576
      %v3578 = vpop.f32.mrb[0].mxu0
      %v3579 = vpop.f32.mrb[0].mxu0
      %v3580 = vadd.f32 0.0, %v3579
      %v3581 = vpop.f32.mrb[0].mxu0
      %3582 = vdwg.mxu0
      %v3583 = vld [vmem:[%s5] sm:$0x1]
      %v3585 = vlaneseq
      %v3586 = vshrl.u32 %v3585, 7
      %v3587 = vsub.s32 0, %v3586
      %v3588 = vrot.slane %v3583, %v3587
      %v3590 = vmul.f32 %v3457, %v3588
      %v3591 = vmul.f32 %v3460, %v3588
      %v3592 = vmul.f32 %v3465, %v3588
      %v3593 = vmul.f32 %v3468, %v3588
      %v3594 = vmul.f32 %v3473, %v3588
      %v3595 = vmul.f32 %v3476, %v3588
      %v3596 = vmul.f32 %v3481, %v3588
      %v3597 = vmul.f32 %v3484, %v3588
      %v3598 = vmul.f32 %v3489, %v3588
      %v3599 = vmul.f32 %v3492, %v3588
      %v3600 = vmul.f32 %v3497, %v3588
      %v3601 = vmul.f32 %v3500, %v3588
      %v3602 = vmul.f32 %v3505, %v3588
      %v3603 = vmul.f32 %v3508, %v3588
      %v3604 = vmul.f32 %v3513, %v3588
      %v3605 = vmul.f32 %v3516, %v3588
      %v3606 = vmul.f32 %v3521, %v3588
      %v3607 = vmul.f32 %v3524, %v3588
      %v3608 = vmul.f32 %v3529, %v3588
      %v3609 = vmul.f32 %v3532, %v3588
      %v3610 = vmul.f32 %v3537, %v3588
      %v3611 = vmul.f32 %v3540, %v3588
      %v3612 = vmul.f32 %v3545, %v3588
      %v3613 = vmul.f32 %v3548, %v3588
      %v3614 = vmul.f32 %v3553, %v3588
      %v3615 = vmul.f32 %v3556, %v3588
      %v3616 = vmul.f32 %v3561, %v3588
      %v3617 = vmul.f32 %v3564, %v3588
      %v3618 = vmul.f32 %v3569, %v3588
      %v3619 = vmul.f32 %v3572, %v3588
      %v3620 = vmul.f32 %v3577, %v3588
      %v3621 = vmul.f32 %v3580, %v3588
      %v3622 = vld [vmem:[%s6] sm:$0x1]
      %v3624 = vlaneseq
      %v3625 = vshrl.u32 %v3624, 7
      %v3626 = vsub.s32 0, %v3625
      %v3627 = vrot.slane %v3622, %v3626
      %v3629 = vadd.f32 %v3590, %v3627
      %v3630 = vadd.f32 %v3591, %v3627
      %v3631 = vadd.f32 %v3592, %v3627
      %v3632 = vadd.f32 %v3593, %v3627
      %v3633 = vadd.f32 %v3594, %v3627
      %v3634 = vadd.f32 %v3595, %v3627
      %v3635 = vadd.f32 %v3596, %v3627
      %v3636 = vadd.f32 %v3597, %v3627
      %v3637 = vadd.f32 %v3598, %v3627
      %v3638 = vadd.f32 %v3599, %v3627
      %v3639 = vadd.f32 %v3600, %v3627
      %v3640 = vadd.f32 %v3601, %v3627
      %v3641 = vadd.f32 %v3602, %v3627
      %v3642 = vadd.f32 %v3603, %v3627
      %v3643 = vadd.f32 %v3604, %v3627
      %v3644 = vadd.f32 %v3605, %v3627
      %v3645 = vadd.f32 %v3606, %v3627
      %v3646 = vadd.f32 %v3607, %v3627
      %v3647 = vadd.f32 %v3608, %v3627
      %v3648 = vadd.f32 %v3609, %v3627
      %v3649 = vadd.f32 %v3610, %v3627
      %v3650 = vadd.f32 %v3611, %v3627
      %v3651 = vadd.f32 %v3612, %v3627
      %v3652 = vadd.f32 %v3613, %v3627
      %v3653 = vadd.f32 %v3614, %v3627
      %v3654 = vadd.f32 %v3615, %v3627
      %v3655 = vadd.f32 %v3616, %v3627
      %v3656 = vadd.f32 %v3617, %v3627
      %v3657 = vadd.f32 %v3618, %v3627
      %v3658 = vadd.f32 %v3619, %v3627
      %v3659 = vadd.f32 %v3620, %v3627
      %v3660 = vadd.f32 %v3621, %v3627
      %v3661 = vmax.f32 %v3629, 0.0
      %v3662 = vmax.f32 %v3630, 0.0
      %v3663 = vmax.f32 %v3631, 0.0
      %v3664 = vmax.f32 %v3632, 0.0
      %v3665 = vmax.f32 %v3633, 0.0
      %v3666 = vmax.f32 %v3634, 0.0
      %v3667 = vmax.f32 %v3635, 0.0
      %v3668 = vmax.f32 %v3636, 0.0
      %v3669 = vmax.f32 %v3637, 0.0
      %v3670 = vmax.f32 %v3638, 0.0
      %v3671 = vmax.f32 %v3639, 0.0
      %v3672 = vmax.f32 %v3640, 0.0
      %v3673 = vmax.f32 %v3641, 0.0
      %v3674 = vmax.f32 %v3642, 0.0
      %v3675 = vmax.f32 %v3643, 0.0
      %v3676 = vmax.f32 %v3644, 0.0
      %v3677 = vmax.f32 %v3645, 0.0
      %v3678 = vmax.f32 %v3646, 0.0
      %v3679 = vmax.f32 %v3647, 0.0
      %v3680 = vmax.f32 %v3648, 0.0
      %v3681 = vmax.f32 %v3649, 0.0
      %v3682 = vmax.f32 %v3650, 0.0
      %v3683 = vmax.f32 %v3651, 0.0
      %v3684 = vmax.f32 %v3652, 0.0
      %v3685 = vmax.f32 %v3653, 0.0
      %v3686 = vmax.f32 %v3654, 0.0
      %v3687 = vmax.f32 %v3655, 0.0
      %v3688 = vmax.f32 %v3656, 0.0
      %v3689 = vmax.f32 %v3657, 0.0
      %v3690 = vmax.f32 %v3658, 0.0
      %v3691 = vmax.f32 %v3659, 0.0
      %v3692 = vmax.f32 %v3660, 0.0
      %v3693 = vmin.f32 %v3661, 6.0
      %v3694 = vmin.f32 %v3662, 6.0
      %v3695 = vmin.f32 %v3663, 6.0
      %v3696 = vmin.f32 %v3664, 6.0
      %v3697 = vmin.f32 %v3665, 6.0
      %v3698 = vmin.f32 %v3666, 6.0
      %v3699 = vmin.f32 %v3667, 6.0
      %v3700 = vmin.f32 %v3668, 6.0
      %v3701 = vmin.f32 %v3669, 6.0
      %v3702 = vmin.f32 %v3670, 6.0
      %v3703 = vmin.f32 %v3671, 6.0
      %v3704 = vmin.f32 %v3672, 6.0
      %v3705 = vmin.f32 %v3673, 6.0
      %v3706 = vmin.f32 %v3674, 6.0
      %v3707 = vmin.f32 %v3675, 6.0
      %v3708 = vmin.f32 %v3676, 6.0
      %v3709 = vmin.f32 %v3677, 6.0
      %v3710 = vmin.f32 %v3678, 6.0
      %v3711 = vmin.f32 %v3679, 6.0
      %v3712 = vmin.f32 %v3680, 6.0
      %v3713 = vmin.f32 %v3681, 6.0
      %v3714 = vmin.f32 %v3682, 6.0
      %v3715 = vmin.f32 %v3683, 6.0
      %v3716 = vmin.f32 %v3684, 6.0
      %v3717 = vmin.f32 %v3685, 6.0
      %v3718 = vmin.f32 %v3686, 6.0
      %v3719 = vmin.f32 %v3687, 6.0
      %v3720 = vmin.f32 %v3688, 6.0
      %v3721 = vmin.f32 %v3689, 6.0
      %v3722 = vmin.f32 %v3690, 6.0
      %v3723 = vmin.f32 %v3691, 6.0
      %v3724 = vmin.f32 %v3692, 6.0
      %3725 = vst.msk [vmem:[#allocation2] sm:$0xff] %vm2493, 0.0
      %3726 = vst.msk [vmem:[#allocation2 + $0x8] sm:$0xff] %vm2493, 0.0
      %vm3727 = vcmask 58368
      %3728 = vst.msk [vmem:[#allocation2 + $0x10] sm:$0x3] %vm3727, 0.0
      %s3729 = scalar_lea.vmem [#allocation2], 408
      %3730 = vst.msk [vmem:[%s3729] sm:$0xff] %vm2493, 0.0
      %3731 = vst.msk [vmem:[%s3729 + $0x8] sm:$0xff] %vm2493, 0.0
      %3732 = vst.msk [vmem:[%s3729 + $0x10] sm:$0x3] %vm3727, 0.0
      %s3733 = scalar_lea.vmem [#allocation2], 24
      %vm3734 = vcmask 57344
      %3735 = vst.msk [vmem:[%s3733] sm:$0x1] %vm3734, 0.0
      %3736 = vst.msk [vmem:[%s3733 + $0x18] sm:$0x1] %vm3734, 0.0
      %3737 = vst.msk [vmem:[%s3733 + $0x30] sm:$0x1] %vm3734, 0.0
      %3738 = vst.msk [vmem:[%s3733 + $0x48] sm:$0x1] %vm3734, 0.0
      %3739 = vst.msk [vmem:[%s3733 + $0x60] sm:$0x1] %vm3734, 0.0
      %3740 = vst.msk [vmem:[%s3733 + $0x78] sm:$0x1] %vm3734, 0.0
      %3741 = vst.msk [vmem:[%s3733 + $0x90] sm:$0x1] %vm3734, 0.0
      %3742 = vst.msk [vmem:[%s3733 + $0xa8] sm:$0x1] %vm3734, 0.0
      %3743 = vst.msk [vmem:[%s3733 + $0xc0] sm:$0x1] %vm3734, 0.0
      %3744 = vst.msk [vmem:[%s3733 + $0xd8] sm:$0x1] %vm3734, 0.0
      %3745 = vst.msk [vmem:[%s3733 + $0xf0] sm:$0x1] %vm3734, 0.0
      %3746 = vst.msk [vmem:[%s3733 + $0x108] sm:$0x1] %vm3734, 0.0
      %3747 = vst.msk [vmem:[%s3733 + $0x120] sm:$0x1] %vm3734, 0.0
      %3748 = vst.msk [vmem:[%s3733 + $0x138] sm:$0x1] %vm3734, 0.0
      %3749 = vst.msk [vmem:[%s3733 + $0x150] sm:$0x1] %vm3734, 0.0
      %3750 = vst.msk [vmem:[%s3733 + $0x168] sm:$0x1] %vm3734, 0.0
      %3751 = vst.msk [vmem:[%s3733 + $0x11] sm:$0x1] %vm3734, 0.0
      %3752 = vst.msk [vmem:[%s3733 + $0x29] sm:$0x1] %vm3734, 0.0
      %3753 = vst.msk [vmem:[%s3733 + $0x41] sm:$0x1] %vm3734, 0.0
      %3754 = vst.msk [vmem:[%s3733 + $0x59] sm:$0x1] %vm3734, 0.0
      %3755 = vst.msk [vmem:[%s3733 + $0x71] sm:$0x1] %vm3734, 0.0
      %3756 = vst.msk [vmem:[%s3733 + $0x89] sm:$0x1] %vm3734, 0.0
      %3757 = vst.msk [vmem:[%s3733 + $0xa1] sm:$0x1] %vm3734, 0.0
      %3758 = vst.msk [vmem:[%s3733 + $0xb9] sm:$0x1] %vm3734, 0.0
      %3759 = vst.msk [vmem:[%s3733 + $0xd1] sm:$0x1] %vm3734, 0.0
      %3760 = vst.msk [vmem:[%s3733 + $0xe9] sm:$0x1] %vm3734, 0.0
      %3761 = vst.msk [vmem:[%s3733 + $0x101] sm:$0x1] %vm3734, 0.0
      %3762 = vst.msk [vmem:[%s3733 + $0x119] sm:$0x1] %vm3734, 0.0
      %3763 = vst.msk [vmem:[%s3733 + $0x131] sm:$0x1] %vm3734, 0.0
      %3764 = vst.msk [vmem:[%s3733 + $0x149] sm:$0x1] %vm3734, 0.0
      %3765 = vst.msk [vmem:[%s3733 + $0x161] sm:$0x1] %vm3734, 0.0
      %3766 = vst.msk [vmem:[%s3733 + $0x179] sm:$0x1] %vm3734, 0.0
      %3767 = vst.msk [vmem:[%s3733 + $0x1] sm:$0xff] %vm2493, %v3693
      %3768 = vst.msk [vmem:[%s3733 + $0x9] sm:$0xff] %vm2493, %v3694
      %3769 = vst.msk [vmem:[%s3733 + $0x19] sm:$0xff] %vm2493, %v3695
      %3770 = vst.msk [vmem:[%s3733 + $0x21] sm:$0xff] %vm2493, %v3696
      %3771 = vst.msk [vmem:[%s3733 + $0x31] sm:$0xff] %vm2493, %v3697
      %3772 = vst.msk [vmem:[%s3733 + $0x39] sm:$0xff] %vm2493, %v3698
      %3773 = vst.msk [vmem:[%s3733 + $0x49] sm:$0xff] %vm2493, %v3699
      %3774 = vst.msk [vmem:[%s3733 + $0x51] sm:$0xff] %vm2493, %v3700
      %3775 = vst.msk [vmem:[%s3733 + $0x61] sm:$0xff] %vm2493, %v3701
      %3776 = vst.msk [vmem:[%s3733 + $0x69] sm:$0xff] %vm2493, %v3702
      %3777 = vst.msk [vmem:[%s3733 + $0x79] sm:$0xff] %vm2493, %v3703
      %3778 = vst.msk [vmem:[%s3733 + $0x81] sm:$0xff] %vm2493, %v3704
      %3779 = vst.msk [vmem:[%s3733 + $0x91] sm:$0xff] %vm2493, %v3705
      %3780 = vst.msk [vmem:[%s3733 + $0x99] sm:$0xff] %vm2493, %v3706
      %3781 = vst.msk [vmem:[%s3733 + $0xa9] sm:$0xff] %vm2493, %v3707
      %3782 = vst.msk [vmem:[%s3733 + $0xb1] sm:$0xff] %vm2493, %v3708
      %3783 = vst.msk [vmem:[%s3733 + $0xc1] sm:$0xff] %vm2493, %v3709
      %3784 = vst.msk [vmem:[%s3733 + $0xc9] sm:$0xff] %vm2493, %v3710
      %3785 = vst.msk [vmem:[%s3733 + $0xd9] sm:$0xff] %vm2493, %v3711
      %3786 = vst.msk [vmem:[%s3733 + $0xe1] sm:$0xff] %vm2493, %v3712
      %3787 = vst.msk [vmem:[%s3733 + $0xf1] sm:$0xff] %vm2493, %v3713
      %3788 = vst.msk [vmem:[%s3733 + $0xf9] sm:$0xff] %vm2493, %v3714
      %3789 = vst.msk [vmem:[%s3733 + $0x109] sm:$0xff] %vm2493, %v3715
      %3790 = vst.msk [vmem:[%s3733 + $0x111] sm:$0xff] %vm2493, %v3716
      %3791 = vst.msk [vmem:[%s3733 + $0x121] sm:$0xff] %vm2493, %v3717
      %3792 = vst.msk [vmem:[%s3733 + $0x129] sm:$0xff] %vm2493, %v3718
      %3793 = vst.msk [vmem:[%s3733 + $0x139] sm:$0xff] %vm2493, %v3719
      %3794 = vst.msk [vmem:[%s3733 + $0x141] sm:$0xff] %vm2493, %v3720
      %3795 = vst.msk [vmem:[%s3733 + $0x151] sm:$0xff] %vm2493, %v3721
      %3796 = vst.msk [vmem:[%s3733 + $0x159] sm:$0xff] %vm2493, %v3722
      %3797 = vst.msk [vmem:[%s3733 + $0x169] sm:$0xff] %vm2493, %v3723
      %3798 = vst.msk [vmem:[%s3733 + $0x171] sm:$0xff] %vm2493, %v3724
      %v3799 = vld [vmem:[#allocation2] sm:$0xff]
      %v3800 = vld [vmem:[#allocation2 + $0x8] sm:$0xff]
      %v3801 = vld [vmem:[#allocation2 + $0x18] sm:$0xff]
      %v3802 = vld [vmem:[#allocation2 + $0x20] sm:$0xff]
      %v3803 = vld [vmem:[#allocation2 + $0x30] sm:$0xff]
      %v3804 = vld [vmem:[#allocation2 + $0x38] sm:$0xff]
      %v3805 = vld [vmem:[#allocation2 + $0x48] sm:$0xff]
      %v3806 = vld [vmem:[#allocation2 + $0x50] sm:$0xff]
      %v3807 = vld [vmem:[#allocation2 + $0x60] sm:$0xff]
      %v3808 = vld [vmem:[#allocation2 + $0x68] sm:$0xff]
      %v3809 = vld [vmem:[#allocation2 + $0x78] sm:$0xff]
      %v3810 = vld [vmem:[#allocation2 + $0x80] sm:$0xff]
      %v3811 = vld [vmem:[#allocation2 + $0x90] sm:$0xff]
      %v3812 = vld [vmem:[#allocation2 + $0x98] sm:$0xff]
      %v3813 = vld [vmem:[#allocation2 + $0xa8] sm:$0xff]
      %v3814 = vld [vmem:[#allocation2 + $0xb0] sm:$0xff]
      %v3815 = vld [vmem:[#allocation2 + $0xc0] sm:$0xff]
      %v3816 = vld [vmem:[#allocation2 + $0xc8] sm:$0xff]
      %v3817 = vld [vmem:[#allocation2 + $0xd8] sm:$0xff]
      %v3818 = vld [vmem:[#allocation2 + $0xe0] sm:$0xff]
      %v3819 = vld [vmem:[#allocation2 + $0xf0] sm:$0xff]
      %v3820 = vld [vmem:[#allocation2 + $0xf8] sm:$0xff]
      %v3821 = vld [vmem:[#allocation2 + $0x108] sm:$0xff]
      %v3822 = vld [vmem:[#allocation2 + $0x110] sm:$0xff]
      %v3823 = vld [vmem:[#allocation2 + $0x120] sm:$0xff]
      %v3824 = vld [vmem:[#allocation2 + $0x128] sm:$0xff]
      %v3825 = vld [vmem:[#allocation2 + $0x138] sm:$0xff]
      %v3826 = vld [vmem:[#allocation2 + $0x140] sm:$0xff]
      %v3827 = vld [vmem:[#allocation2 + $0x150] sm:$0xff]
      %v3828 = vld [vmem:[#allocation2 + $0x158] sm:$0xff]
      %v3829 = vld [vmem:[#allocation2 + $0x168] sm:$0xff]
      %v3830 = vld [vmem:[#allocation2 + $0x170] sm:$0xff]
      %v3831 = vld [vmem:[#allocation2 + $0x1] sm:$0xff]
      %v3832 = vld [vmem:[#allocation2 + $0x9] sm:$0xff]
      %v3833 = vld [vmem:[#allocation2 + $0x19] sm:$0xff]
      %v3834 = vld [vmem:[#allocation2 + $0x21] sm:$0xff]
      %v3835 = vld [vmem:[#allocation2 + $0x31] sm:$0xff]
      %v3836 = vld [vmem:[#allocation2 + $0x39] sm:$0xff]
      %v3837 = vld [vmem:[#allocation2 + $0x49] sm:$0xff]
      %v3838 = vld [vmem:[#allocation2 + $0x51] sm:$0xff]
      %v3839 = vld [vmem:[#allocation2 + $0x61] sm:$0xff]
      %v3840 = vld [vmem:[#allocation2 + $0x69] sm:$0xff]
      %v3841 = vld [vmem:[#allocation2 + $0x79] sm:$0xff]
      %v3842 = vld [vmem:[#allocation2 + $0x81] sm:$0xff]
      %v3843 = vld [vmem:[#allocation2 + $0x91] sm:$0xff]
      %v3844 = vld [vmem:[#allocation2 + $0x99] sm:$0xff]
      %v3845 = vld [vmem:[#allocation2 + $0xa9] sm:$0xff]
      %v3846 = vld [vmem:[#allocation2 + $0xb1] sm:$0xff]
      %v3847 = vld [vmem:[#allocation2 + $0xc1] sm:$0xff]
      %v3848 = vld [vmem:[#allocation2 + $0xc9] sm:$0xff]
      %v3849 = vld [vmem:[#allocation2 + $0xd9] sm:$0xff]
      %v3850 = vld [vmem:[#allocation2 + $0xe1] sm:$0xff]
      %v3851 = vld [vmem:[#allocation2 + $0xf1] sm:$0xff]
      %v3852 = vld [vmem:[#allocation2 + $0xf9] sm:$0xff]
      %v3853 = vld [vmem:[#allocation2 + $0x109] sm:$0xff]
      %v3854 = vld [vmem:[#allocation2 + $0x111] sm:$0xff]
      %v3855 = vld [vmem:[#allocation2 + $0x121] sm:$0xff]
      %v3856 = vld [vmem:[#allocation2 + $0x129] sm:$0xff]
      %v3857 = vld [vmem:[#allocation2 + $0x139] sm:$0xff]
      %v3858 = vld [vmem:[#allocation2 + $0x141] sm:$0xff]
      %v3859 = vld [vmem:[#allocation2 + $0x151] sm:$0xff]
      %v3860 = vld [vmem:[#allocation2 + $0x159] sm:$0xff]
      %v3861 = vld [vmem:[#allocation2 + $0x169] sm:$0xff]
      %v3862 = vld [vmem:[#allocation2 + $0x171] sm:$0xff]
      %v3863 = vld [vmem:[#allocation2 + $0x2] sm:$0xff]
      %v3864 = vld [vmem:[#allocation2 + $0xa] sm:$0xff]
      %v3865 = vld [vmem:[#allocation2 + $0x1a] sm:$0xff]
      %v3866 = vld [vmem:[#allocation2 + $0x22] sm:$0xff]
      %v3867 = vld [vmem:[#allocation2 + $0x32] sm:$0xff]
      %v3868 = vld [vmem:[#allocation2 + $0x3a] sm:$0xff]
      %v3869 = vld [vmem:[#allocation2 + $0x4a] sm:$0xff]
      %v3870 = vld [vmem:[#allocation2 + $0x52] sm:$0xff]
      %v3871 = vld [vmem:[#allocation2 + $0x62] sm:$0xff]
      %v3872 = vld [vmem:[#allocation2 + $0x6a] sm:$0xff]
      %v3873 = vld [vmem:[#allocation2 + $0x7a] sm:$0xff]
      %v3874 = vld [vmem:[#allocation2 + $0x82] sm:$0xff]
      %v3875 = vld [vmem:[#allocation2 + $0x92] sm:$0xff]
      %v3876 = vld [vmem:[#allocation2 + $0x9a] sm:$0xff]
      %v3877 = vld [vmem:[#allocation2 + $0xaa] sm:$0xff]
      %v3878 = vld [vmem:[#allocation2 + $0xb2] sm:$0xff]
      %v3879 = vld [vmem:[#allocation2 + $0xc2] sm:$0xff]
      %v3880 = vld [vmem:[#allocation2 + $0xca] sm:$0xff]
      %v3881 = vld [vmem:[#allocation2 + $0xda] sm:$0xff]
      %v3882 = vld [vmem:[#allocation2 + $0xe2] sm:$0xff]
      %v3883 = vld [vmem:[#allocation2 + $0xf2] sm:$0xff]
      %v3884 = vld [vmem:[#allocation2 + $0xfa] sm:$0xff]
      %v3885 = vld [vmem:[#allocation2 + $0x10a] sm:$0xff]
      %v3886 = vld [vmem:[#allocation2 + $0x112] sm:$0xff]
      %v3887 = vld [vmem:[#allocation2 + $0x122] sm:$0xff]
      %v3888 = vld [vmem:[#allocation2 + $0x12a] sm:$0xff]
      %v3889 = vld [vmem:[#allocation2 + $0x13a] sm:$0xff]
      %v3890 = vld [vmem:[#allocation2 + $0x142] sm:$0xff]
      %v3891 = vld [vmem:[#allocation2 + $0x152] sm:$0xff]
      %v3892 = vld [vmem:[#allocation2 + $0x15a] sm:$0xff]
      %v3893 = vld [vmem:[#allocation2 + $0x16a] sm:$0xff]
      %v3894 = vld [vmem:[#allocation2 + $0x172] sm:$0xff]
      %v3895 = vld [vmem:[%s3733] sm:$0xff]
      %v3896 = vld [vmem:[%s3733 + $0x8] sm:$0xff]
      %v3897 = vld [vmem:[%s3733 + $0x18] sm:$0xff]
      %v3898 = vld [vmem:[%s3733 + $0x20] sm:$0xff]
      %v3899 = vld [vmem:[%s3733 + $0x30] sm:$0xff]
      %v3900 = vld [vmem:[%s3733 + $0x38] sm:$0xff]
      %v3901 = vld [vmem:[%s3733 + $0x48] sm:$0xff]
      %v3902 = vld [vmem:[%s3733 + $0x50] sm:$0xff]
      %v3903 = vld [vmem:[%s3733 + $0x60] sm:$0xff]
      %v3904 = vld [vmem:[%s3733 + $0x68] sm:$0xff]
      %v3905 = vld [vmem:[%s3733 + $0x78] sm:$0xff]
      %v3906 = vld [vmem:[%s3733 + $0x80] sm:$0xff]
      %v3907 = vld [vmem:[%s3733 + $0x90] sm:$0xff]
      %v3908 = vld [vmem:[%s3733 + $0x98] sm:$0xff]
      %v3909 = vld [vmem:[%s3733 + $0xa8] sm:$0xff]
      %v3910 = vld [vmem:[%s3733 + $0xb0] sm:$0xff]
      %v3911 = vld [vmem:[%s3733 + $0xc0] sm:$0xff]
      %v3912 = vld [vmem:[%s3733 + $0xc8] sm:$0xff]
      %v3913 = vld [vmem:[%s3733 + $0xd8] sm:$0xff]
      %v3914 = vld [vmem:[%s3733 + $0xe0] sm:$0xff]
      %v3915 = vld [vmem:[%s3733 + $0xf0] sm:$0xff]
      %v3916 = vld [vmem:[%s3733 + $0xf8] sm:$0xff]
      %v3917 = vld [vmem:[%s3733 + $0x108] sm:$0xff]
      %v3918 = vld [vmem:[%s3733 + $0x110] sm:$0xff]
      %v3919 = vld [vmem:[%s3733 + $0x120] sm:$0xff]
      %v3920 = vld [vmem:[%s3733 + $0x128] sm:$0xff]
      %v3921 = vld [vmem:[%s3733 + $0x138] sm:$0xff]
      %v3922 = vld [vmem:[%s3733 + $0x140] sm:$0xff]
      %v3923 = vld [vmem:[%s3733 + $0x150] sm:$0xff]
      %v3924 = vld [vmem:[%s3733 + $0x158] sm:$0xff]
      %v3925 = vld [vmem:[%s3733 + $0x168] sm:$0xff]
      %v3926 = vld [vmem:[%s3733 + $0x170] sm:$0xff]
      %v3927 = vld [vmem:[%s3733 + $0x1] sm:$0xff]
      %v3928 = vld [vmem:[%s3733 + $0x9] sm:$0xff]
      %v3929 = vld [vmem:[%s3733 + $0x19] sm:$0xff]
      %v3930 = vld [vmem:[%s3733 + $0x21] sm:$0xff]
      %v3931 = vld [vmem:[%s3733 + $0x31] sm:$0xff]
      %v3932 = vld [vmem:[%s3733 + $0x39] sm:$0xff]
      %v3933 = vld [vmem:[%s3733 + $0x49] sm:$0xff]
      %v3934 = vld [vmem:[%s3733 + $0x51] sm:$0xff]
      %v3935 = vld [vmem:[%s3733 + $0x61] sm:$0xff]
      %v3936 = vld [vmem:[%s3733 + $0x69] sm:$0xff]
      %v3937 = vld [vmem:[%s3733 + $0x79] sm:$0xff]
      %v3938 = vld [vmem:[%s3733 + $0x81] sm:$0xff]
      %v3939 = vld [vmem:[%s3733 + $0x91] sm:$0xff]
      %v3940 = vld [vmem:[%s3733 + $0x99] sm:$0xff]
      %v3941 = vld [vmem:[%s3733 + $0xa9] sm:$0xff]
      %v3942 = vld [vmem:[%s3733 + $0xb1] sm:$0xff]
      %v3943 = vld [vmem:[%s3733 + $0xc1] sm:$0xff]
      %v3944 = vld [vmem:[%s3733 + $0xc9] sm:$0xff]
      %v3945 = vld [vmem:[%s3733 + $0xd9] sm:$0xff]
      %v3946 = vld [vmem:[%s3733 + $0xe1] sm:$0xff]
      %v3947 = vld [vmem:[%s3733 + $0xf1] sm:$0xff]
      %v3948 = vld [vmem:[%s3733 + $0xf9] sm:$0xff]
      %v3949 = vld [vmem:[%s3733 + $0x109] sm:$0xff]
      %v3950 = vld [vmem:[%s3733 + $0x111] sm:$0xff]
      %v3951 = vld [vmem:[%s3733 + $0x121] sm:$0xff]
      %v3952 = vld [vmem:[%s3733 + $0x129] sm:$0xff]
      %v3953 = vld [vmem:[%s3733 + $0x139] sm:$0xff]
      %v3954 = vld [vmem:[%s3733 + $0x141] sm:$0xff]
      %v3955 = vld [vmem:[%s3733 + $0x151] sm:$0xff]
      %v3956 = vld [vmem:[%s3733 + $0x159] sm:$0xff]
      %v3957 = vld [vmem:[%s3733 + $0x169] sm:$0xff]
      %v3958 = vld [vmem:[%s3733 + $0x171] sm:$0xff]
      %v3959 = vld [vmem:[%s3733 + $0x2] sm:$0xff]
      %v3960 = vld [vmem:[%s3733 + $0xa] sm:$0xff]
      %v3961 = vld [vmem:[%s3733 + $0x1a] sm:$0xff]
      %v3962 = vld [vmem:[%s3733 + $0x22] sm:$0xff]
      %v3963 = vld [vmem:[%s3733 + $0x32] sm:$0xff]
      %v3964 = vld [vmem:[%s3733 + $0x3a] sm:$0xff]
      %v3965 = vld [vmem:[%s3733 + $0x4a] sm:$0xff]
      %v3966 = vld [vmem:[%s3733 + $0x52] sm:$0xff]
      %v3967 = vld [vmem:[%s3733 + $0x62] sm:$0xff]
      %v3968 = vld [vmem:[%s3733 + $0x6a] sm:$0xff]
      %v3969 = vld [vmem:[%s3733 + $0x7a] sm:$0xff]
      %v3970 = vld [vmem:[%s3733 + $0x82] sm:$0xff]
      %v3971 = vld [vmem:[%s3733 + $0x92] sm:$0xff]
      %v3972 = vld [vmem:[%s3733 + $0x9a] sm:$0xff]
      %v3973 = vld [vmem:[%s3733 + $0xaa] sm:$0xff]
      %v3974 = vld [vmem:[%s3733 + $0xb2] sm:$0xff]
      %v3975 = vld [vmem:[%s3733 + $0xc2] sm:$0xff]
      %v3976 = vld [vmem:[%s3733 + $0xca] sm:$0xff]
      %v3977 = vld [vmem:[%s3733 + $0xda] sm:$0xff]
      %v3978 = vld [vmem:[%s3733 + $0xe2] sm:$0xff]
      %v3979 = vld [vmem:[%s3733 + $0xf2] sm:$0xff]
      %v3980 = vld [vmem:[%s3733 + $0xfa] sm:$0xff]
      %v3981 = vld [vmem:[%s3733 + $0x10a] sm:$0xff]
      %v3982 = vld [vmem:[%s3733 + $0x112] sm:$0xff]
      %v3983 = vld [vmem:[%s3733 + $0x122] sm:$0xff]
      %v3984 = vld [vmem:[%s3733 + $0x12a] sm:$0xff]
      %v3985 = vld [vmem:[%s3733 + $0x13a] sm:$0xff]
      %v3986 = vld [vmem:[%s3733 + $0x142] sm:$0xff]
      %v3987 = vld [vmem:[%s3733 + $0x152] sm:$0xff]
      %v3988 = vld [vmem:[%s3733 + $0x15a] sm:$0xff]
      %v3989 = vld [vmem:[%s3733 + $0x16a] sm:$0xff]
      %v3990 = vld [vmem:[%s3733 + $0x172] sm:$0xff]
      %s3991 = scalar_lea.vmem [#allocation2], 48
      %v3992 = vld [vmem:[%s3991] sm:$0xff]
      %v3993 = vld [vmem:[%s3991 + $0x8] sm:$0xff]
      %v3994 = vld [vmem:[%s3991 + $0x18] sm:$0xff]
      %v3995 = vld [vmem:[%s3991 + $0x20] sm:$0xff]
      %v3996 = vld [vmem:[%s3991 + $0x30] sm:$0xff]
      %v3997 = vld [vmem:[%s3991 + $0x38] sm:$0xff]
      %v3998 = vld [vmem:[%s3991 + $0x48] sm:$0xff]
      %v3999 = vld [vmem:[%s3991 + $0x50] sm:$0xff]
      %v4000 = vld [vmem:[%s3991 + $0x60] sm:$0xff]
      %v4001 = vld [vmem:[%s3991 + $0x68] sm:$0xff]
      %v4002 = vld [vmem:[%s3991 + $0x78] sm:$0xff]
      %v4003 = vld [vmem:[%s3991 + $0x80] sm:$0xff]
      %v4004 = vld [vmem:[%s3991 + $0x90] sm:$0xff]
      %v4005 = vld [vmem:[%s3991 + $0x98] sm:$0xff]
      %v4006 = vld [vmem:[%s3991 + $0xa8] sm:$0xff]
      %v4007 = vld [vmem:[%s3991 + $0xb0] sm:$0xff]
      %v4008 = vld [vmem:[%s3991 + $0xc0] sm:$0xff]
      %v4009 = vld [vmem:[%s3991 + $0xc8] sm:$0xff]
      %v4010 = vld [vmem:[%s3991 + $0xd8] sm:$0xff]
      %v4011 = vld [vmem:[%s3991 + $0xe0] sm:$0xff]
      %v4012 = vld [vmem:[%s3991 + $0xf0] sm:$0xff]
      %v4013 = vld [vmem:[%s3991 + $0xf8] sm:$0xff]
      %v4014 = vld [vmem:[%s3991 + $0x108] sm:$0xff]
      %v4015 = vld [vmem:[%s3991 + $0x110] sm:$0xff]
      %v4016 = vld [vmem:[%s3991 + $0x120] sm:$0xff]
      %v4017 = vld [vmem:[%s3991 + $0x128] sm:$0xff]
      %v4018 = vld [vmem:[%s3991 + $0x138] sm:$0xff]
      %v4019 = vld [vmem:[%s3991 + $0x140] sm:$0xff]
      %v4020 = vld [vmem:[%s3991 + $0x150] sm:$0xff]
      %v4021 = vld [vmem:[%s3991 + $0x158] sm:$0xff]
      %v4022 = vld [vmem:[%s3991 + $0x168] sm:$0xff]
      %v4023 = vld [vmem:[%s3991 + $0x170] sm:$0xff]
      %v4024 = vld [vmem:[%s3991 + $0x1] sm:$0xff]
      %v4025 = vld [vmem:[%s3991 + $0x9] sm:$0xff]
      %v4026 = vld [vmem:[%s3991 + $0x19] sm:$0xff]
      %v4027 = vld [vmem:[%s3991 + $0x21] sm:$0xff]
      %v4028 = vld [vmem:[%s3991 + $0x31] sm:$0xff]
      %v4029 = vld [vmem:[%s3991 + $0x39] sm:$0xff]
      %v4030 = vld [vmem:[%s3991 + $0x49] sm:$0xff]
      %v4031 = vld [vmem:[%s3991 + $0x51] sm:$0xff]
      %v4032 = vld [vmem:[%s3991 + $0x61] sm:$0xff]
      %v4033 = vld [vmem:[%s3991 + $0x69] sm:$0xff]
      %v4034 = vld [vmem:[%s3991 + $0x79] sm:$0xff]
      %v4035 = vld [vmem:[%s3991 + $0x81] sm:$0xff]
      %v4036 = vld [vmem:[%s3991 + $0x91] sm:$0xff]
      %v4037 = vld [vmem:[%s3991 + $0x99] sm:$0xff]
      %v4038 = vld [vmem:[%s3991 + $0xa9] sm:$0xff]
      %v4039 = vld [vmem:[%s3991 + $0xb1] sm:$0xff]
      %v4040 = vld [vmem:[%s3991 + $0xc1] sm:$0xff]
      %v4041 = vld [vmem:[%s3991 + $0xc9] sm:$0xff]
      %v4042 = vld [vmem:[%s3991 + $0xd9] sm:$0xff]
      %v4043 = vld [vmem:[%s3991 + $0xe1] sm:$0xff]
      %v4044 = vld [vmem:[%s3991 + $0xf1] sm:$0xff]
      %v4045 = vld [vmem:[%s3991 + $0xf9] sm:$0xff]
      %v4046 = vld [vmem:[%s3991 + $0x109] sm:$0xff]
      %v4047 = vld [vmem:[%s3991 + $0x111] sm:$0xff]
      %v4048 = vld [vmem:[%s3991 + $0x121] sm:$0xff]
      %v4049 = vld [vmem:[%s3991 + $0x129] sm:$0xff]
      %v4050 = vld [vmem:[%s3991 + $0x139] sm:$0xff]
      %v4051 = vld [vmem:[%s3991 + $0x141] sm:$0xff]
      %v4052 = vld [vmem:[%s3991 + $0x151] sm:$0xff]
      %v4053 = vld [vmem:[%s3991 + $0x159] sm:$0xff]
      %v4054 = vld [vmem:[%s3991 + $0x169] sm:$0xff]
      %v4055 = vld [vmem:[%s3991 + $0x171] sm:$0xff]
      %v4056 = vld [vmem:[%s3991 + $0x2] sm:$0xff]
      %v4057 = vld [vmem:[%s3991 + $0xa] sm:$0xff]
      %v4058 = vld [vmem:[%s3991 + $0x1a] sm:$0xff]
      %v4059 = vld [vmem:[%s3991 + $0x22] sm:$0xff]
      %v4060 = vld [vmem:[%s3991 + $0x32] sm:$0xff]
      %v4061 = vld [vmem:[%s3991 + $0x3a] sm:$0xff]
      %v4062 = vld [vmem:[%s3991 + $0x4a] sm:$0xff]
      %v4063 = vld [vmem:[%s3991 + $0x52] sm:$0xff]
      %v4064 = vld [vmem:[%s3991 + $0x62] sm:$0xff]
      %v4065 = vld [vmem:[%s3991 + $0x6a] sm:$0xff]
      %v4066 = vld [vmem:[%s3991 + $0x7a] sm:$0xff]
      %v4067 = vld [vmem:[%s3991 + $0x82] sm:$0xff]
      %v4068 = vld [vmem:[%s3991 + $0x92] sm:$0xff]
      %v4069 = vld [vmem:[%s3991 + $0x9a] sm:$0xff]
      %v4070 = vld [vmem:[%s3991 + $0xaa] sm:$0xff]
      %v4071 = vld [vmem:[%s3991 + $0xb2] sm:$0xff]
      %v4072 = vld [vmem:[%s3991 + $0xc2] sm:$0xff]
      %v4073 = vld [vmem:[%s3991 + $0xca] sm:$0xff]
      %v4074 = vld [vmem:[%s3991 + $0xda] sm:$0xff]
      %v4075 = vld [vmem:[%s3991 + $0xe2] sm:$0xff]
      %v4076 = vld [vmem:[%s3991 + $0xf2] sm:$0xff]
      %v4077 = vld [vmem:[%s3991 + $0xfa] sm:$0xff]
      %v4078 = vld [vmem:[%s3991 + $0x10a] sm:$0xff]
      %v4079 = vld [vmem:[%s3991 + $0x112] sm:$0xff]
      %v4080 = vld [vmem:[%s3991 + $0x122] sm:$0xff]
      %v4081 = vld [vmem:[%s3991 + $0x12a] sm:$0xff]
      %v4082 = vld [vmem:[%s3991 + $0x13a] sm:$0xff]
      %v4083 = vld [vmem:[%s3991 + $0x142] sm:$0xff]
      %v4084 = vld [vmem:[%s3991 + $0x152] sm:$0xff]
      %v4085 = vld [vmem:[%s3991 + $0x15a] sm:$0xff]
      %v4086 = vld [vmem:[%s3991 + $0x16a] sm:$0xff]
      %v4087 = vld [vmem:[%s3991 + $0x172] sm:$0xff]
      %4120 = vrot.lane.b32.xlu0 %v3831, 8
      %v4121 = vpop.permute.xlu0 %4120
      %4122 = vrot.lane.b32.xlu0 %v3832, 8
      %v4123 = vpop.permute.xlu0 %4122
      %4124 = vrot.lane.b32.xlu0 %v3833, 8
      %v4125 = vpop.permute.xlu0 %4124
      %4126 = vrot.lane.b32.xlu0 %v3834, 8
      %v4127 = vpop.permute.xlu0 %4126
      %4128 = vrot.lane.b32.xlu0 %v3835, 8
      %v4129 = vpop.permute.xlu0 %4128
      %4130 = vrot.lane.b32.xlu0 %v3836, 8
      %v4131 = vpop.permute.xlu0 %4130
      %4132 = vrot.lane.b32.xlu0 %v3837, 8
      %v4133 = vpop.permute.xlu0 %4132
      %4134 = vrot.lane.b32.xlu0 %v3838, 8
      %v4135 = vpop.permute.xlu0 %4134
      %4136 = vrot.lane.b32.xlu0 %v3839, 8
      %v4137 = vpop.permute.xlu0 %4136
      %4138 = vrot.lane.b32.xlu0 %v3840, 8
      %v4139 = vpop.permute.xlu0 %4138
      %4140 = vrot.lane.b32.xlu0 %v3841, 8
      %v4141 = vpop.permute.xlu0 %4140
      %4142 = vrot.lane.b32.xlu0 %v3842, 8
      %v4143 = vpop.permute.xlu0 %4142
      %4144 = vrot.lane.b32.xlu0 %v3843, 8
      %v4145 = vpop.permute.xlu0 %4144
      %4146 = vrot.lane.b32.xlu0 %v3844, 8
      %v4147 = vpop.permute.xlu0 %4146
      %4148 = vrot.lane.b32.xlu0 %v3845, 8
      %v4149 = vpop.permute.xlu0 %4148
      %4150 = vrot.lane.b32.xlu0 %v3846, 8
      %v4151 = vpop.permute.xlu0 %4150
      %4152 = vrot.lane.b32.xlu0 %v3847, 8
      %v4153 = vpop.permute.xlu0 %4152
      %4154 = vrot.lane.b32.xlu0 %v3848, 8
      %v4155 = vpop.permute.xlu0 %4154
      %4156 = vrot.lane.b32.xlu0 %v3849, 8
      %v4157 = vpop.permute.xlu0 %4156
      %4158 = vrot.lane.b32.xlu0 %v3850, 8
      %v4159 = vpop.permute.xlu0 %4158
      %4160 = vrot.lane.b32.xlu0 %v3851, 8
      %v4161 = vpop.permute.xlu0 %4160
      %4162 = vrot.lane.b32.xlu0 %v3852, 8
      %v4163 = vpop.permute.xlu0 %4162
      %4164 = vrot.lane.b32.xlu0 %v3853, 8
      %v4165 = vpop.permute.xlu0 %4164
      %4166 = vrot.lane.b32.xlu0 %v3854, 8
      %v4167 = vpop.permute.xlu0 %4166
      %4168 = vrot.lane.b32.xlu0 %v3855, 8
      %v4169 = vpop.permute.xlu0 %4168
      %4170 = vrot.lane.b32.xlu0 %v3856, 8
      %v4171 = vpop.permute.xlu0 %4170
      %4172 = vrot.lane.b32.xlu0 %v3857, 8
      %v4173 = vpop.permute.xlu0 %4172
      %4174 = vrot.lane.b32.xlu0 %v3858, 8
      %v4175 = vpop.permute.xlu0 %4174
      %4176 = vrot.lane.b32.xlu0 %v3859, 8
      %v4177 = vpop.permute.xlu0 %4176
      %4178 = vrot.lane.b32.xlu0 %v3860, 8
      %v4179 = vpop.permute.xlu0 %4178
      %4180 = vrot.lane.b32.xlu0 %v3861, 8
      %v4181 = vpop.permute.xlu0 %4180
      %4182 = vrot.lane.b32.xlu0 %v3862, 8
      %v4183 = vpop.permute.xlu0 %4182
      %4248 = vrot.lane.b32.xlu0 %v3863, 16
      %v4249 = vpop.permute.xlu0 %4248
      %4250 = vrot.lane.b32.xlu0 %v3864, 16
      %v4251 = vpop.permute.xlu0 %4250
      %4252 = vrot.lane.b32.xlu0 %v3865, 16
      %v4253 = vpop.permute.xlu0 %4252
      %4254 = vrot.lane.b32.xlu0 %v3866, 16
      %v4255 = vpop.permute.xlu0 %4254
      %4256 = vrot.lane.b32.xlu0 %v3867, 16
      %v4257 = vpop.permute.xlu0 %4256
      %4258 = vrot.lane.b32.xlu0 %v3868, 16
      %v4259 = vpop.permute.xlu0 %4258
      %4260 = vrot.lane.b32.xlu0 %v3869, 16
      %v4261 = vpop.permute.xlu0 %4260
      %4262 = vrot.lane.b32.xlu0 %v3870, 16
      %v4263 = vpop.permute.xlu0 %4262
      %4264 = vrot.lane.b32.xlu0 %v3871, 16
      %v4265 = vpop.permute.xlu0 %4264
      %4266 = vrot.lane.b32.xlu0 %v3872, 16
      %v4267 = vpop.permute.xlu0 %4266
      %4268 = vrot.lane.b32.xlu0 %v3873, 16
      %v4269 = vpop.permute.xlu0 %4268
      %4270 = vrot.lane.b32.xlu0 %v3874, 16
      %v4271 = vpop.permute.xlu0 %4270
      %4272 = vrot.lane.b32.xlu0 %v3875, 16
      %v4273 = vpop.permute.xlu0 %4272
      %4274 = vrot.lane.b32.xlu0 %v3876, 16
      %v4275 = vpop.permute.xlu0 %4274
      %4276 = vrot.lane.b32.xlu0 %v3877, 16
      %v4277 = vpop.permute.xlu0 %4276
      %4278 = vrot.lane.b32.xlu0 %v3878, 16
      %v4279 = vpop.permute.xlu0 %4278
      %4280 = vrot.lane.b32.xlu0 %v3879, 16
      %v4281 = vpop.permute.xlu0 %4280
      %4282 = vrot.lane.b32.xlu0 %v3880, 16
      %v4283 = vpop.permute.xlu0 %4282
      %4284 = vrot.lane.b32.xlu0 %v3881, 16
      %v4285 = vpop.permute.xlu0 %4284
      %4286 = vrot.lane.b32.xlu0 %v3882, 16
      %v4287 = vpop.permute.xlu0 %4286
      %4288 = vrot.lane.b32.xlu0 %v3883, 16
      %v4289 = vpop.permute.xlu0 %4288
      %4290 = vrot.lane.b32.xlu0 %v3884, 16
      %v4291 = vpop.permute.xlu0 %4290
      %4292 = vrot.lane.b32.xlu0 %v3885, 16
      %v4293 = vpop.permute.xlu0 %4292
      %4294 = vrot.lane.b32.xlu0 %v3886, 16
      %v4295 = vpop.permute.xlu0 %4294
      %4296 = vrot.lane.b32.xlu0 %v3887, 16
      %v4297 = vpop.permute.xlu0 %4296
      %4298 = vrot.lane.b32.xlu0 %v3888, 16
      %v4299 = vpop.permute.xlu0 %4298
      %4300 = vrot.lane.b32.xlu0 %v3889, 16
      %v4301 = vpop.permute.xlu0 %4300
      %4302 = vrot.lane.b32.xlu0 %v3890, 16
      %v4303 = vpop.permute.xlu0 %4302
      %4304 = vrot.lane.b32.xlu0 %v3891, 16
      %v4305 = vpop.permute.xlu0 %4304
      %4306 = vrot.lane.b32.xlu0 %v3892, 16
      %v4307 = vpop.permute.xlu0 %4306
      %4308 = vrot.lane.b32.xlu0 %v3893, 16
      %v4309 = vpop.permute.xlu0 %4308
      %4310 = vrot.lane.b32.xlu0 %v3894, 16
      %v4311 = vpop.permute.xlu0 %4310
      %4376 = vrot.lane.b32.xlu0 %v3895, 24
      %v4377 = vpop.permute.xlu0 %4376
      %4378 = vrot.lane.b32.xlu0 %v3896, 24
      %v4379 = vpop.permute.xlu0 %4378
      %4380 = vrot.lane.b32.xlu0 %v3897, 24
      %v4381 = vpop.permute.xlu0 %4380
      %4382 = vrot.lane.b32.xlu0 %v3898, 24
      %v4383 = vpop.permute.xlu0 %4382
      %4384 = vrot.lane.b32.xlu0 %v3899, 24
      %v4385 = vpop.permute.xlu0 %4384
      %4386 = vrot.lane.b32.xlu0 %v3900, 24
      %v4387 = vpop.permute.xlu0 %4386
      %4388 = vrot.lane.b32.xlu0 %v3901, 24
      %v4389 = vpop.permute.xlu0 %4388
      %4390 = vrot.lane.b32.xlu0 %v3902, 24
      %v4391 = vpop.permute.xlu0 %4390
      %4392 = vrot.lane.b32.xlu0 %v3903, 24
      %v4393 = vpop.permute.xlu0 %4392
      %4394 = vrot.lane.b32.xlu0 %v3904, 24
      %v4395 = vpop.permute.xlu0 %4394
      %4396 = vrot.lane.b32.xlu0 %v3905, 24
      %v4397 = vpop.permute.xlu0 %4396
      %4398 = vrot.lane.b32.xlu0 %v3906, 24
      %v4399 = vpop.permute.xlu0 %4398
      %4400 = vrot.lane.b32.xlu0 %v3907, 24
      %v4401 = vpop.permute.xlu0 %4400
      %4402 = vrot.lane.b32.xlu0 %v3908, 24
      %v4403 = vpop.permute.xlu0 %4402
      %4404 = vrot.lane.b32.xlu0 %v3909, 24
      %v4405 = vpop.permute.xlu0 %4404
      %4406 = vrot.lane.b32.xlu0 %v3910, 24
      %v4407 = vpop.permute.xlu0 %4406
      %4408 = vrot.lane.b32.xlu0 %v3911, 24
      %v4409 = vpop.permute.xlu0 %4408
      %4410 = vrot.lane.b32.xlu0 %v3912, 24
      %v4411 = vpop.permute.xlu0 %4410
      %4412 = vrot.lane.b32.xlu0 %v3913, 24
      %v4413 = vpop.permute.xlu0 %4412
      %4414 = vrot.lane.b32.xlu0 %v3914, 24
      %v4415 = vpop.permute.xlu0 %4414
      %4416 = vrot.lane.b32.xlu0 %v3915, 24
      %v4417 = vpop.permute.xlu0 %4416
      %4418 = vrot.lane.b32.xlu0 %v3916, 24
      %v4419 = vpop.permute.xlu0 %4418
      %4420 = vrot.lane.b32.xlu0 %v3917, 24
      %v4421 = vpop.permute.xlu0 %4420
      %4422 = vrot.lane.b32.xlu0 %v3918, 24
      %v4423 = vpop.permute.xlu0 %4422
      %4424 = vrot.lane.b32.xlu0 %v3919, 24
      %v4425 = vpop.permute.xlu0 %4424
      %4426 = vrot.lane.b32.xlu0 %v3920, 24
      %v4427 = vpop.permute.xlu0 %4426
      %4428 = vrot.lane.b32.xlu0 %v3921, 24
      %v4429 = vpop.permute.xlu0 %4428
      %4430 = vrot.lane.b32.xlu0 %v3922, 24
      %v4431 = vpop.permute.xlu0 %4430
      %4432 = vrot.lane.b32.xlu0 %v3923, 24
      %v4433 = vpop.permute.xlu0 %4432
      %4434 = vrot.lane.b32.xlu0 %v3924, 24
      %v4435 = vpop.permute.xlu0 %4434
      %4436 = vrot.lane.b32.xlu0 %v3925, 24
      %v4437 = vpop.permute.xlu0 %4436
      %4438 = vrot.lane.b32.xlu0 %v3926, 24
      %v4439 = vpop.permute.xlu0 %4438
      %4504 = vrot.lane.b32.xlu0 %v3927, 32
      %v4505 = vpop.permute.xlu0 %4504
      %4506 = vrot.lane.b32.xlu0 %v3928, 32
      %v4507 = vpop.permute.xlu0 %4506
      %4508 = vrot.lane.b32.xlu0 %v3929, 32
      %v4509 = vpop.permute.xlu0 %4508
      %4510 = vrot.lane.b32.xlu0 %v3930, 32
      %v4511 = vpop.permute.xlu0 %4510
      %4512 = vrot.lane.b32.xlu0 %v3931, 32
      %v4513 = vpop.permute.xlu0 %4512
      %4514 = vrot.lane.b32.xlu0 %v3932, 32
      %v4515 = vpop.permute.xlu0 %4514
      %4516 = vrot.lane.b32.xlu0 %v3933, 32
      %v4517 = vpop.permute.xlu0 %4516
      %4518 = vrot.lane.b32.xlu0 %v3934, 32
      %v4519 = vpop.permute.xlu0 %4518
      %4520 = vrot.lane.b32.xlu0 %v3935, 32
      %v4521 = vpop.permute.xlu0 %4520
      %4522 = vrot.lane.b32.xlu0 %v3936, 32
      %v4523 = vpop.permute.xlu0 %4522
      %4524 = vrot.lane.b32.xlu0 %v3937, 32
      %v4525 = vpop.permute.xlu0 %4524
      %4526 = vrot.lane.b32.xlu0 %v3938, 32
      %v4527 = vpop.permute.xlu0 %4526
      %4528 = vrot.lane.b32.xlu0 %v3939, 32
      %v4529 = vpop.permute.xlu0 %4528
      %4530 = vrot.lane.b32.xlu0 %v3940, 32
      %v4531 = vpop.permute.xlu0 %4530
      %4532 = vrot.lane.b32.xlu0 %v3941, 32
      %v4533 = vpop.permute.xlu0 %4532
      %4534 = vrot.lane.b32.xlu0 %v3942, 32
      %v4535 = vpop.permute.xlu0 %4534
      %4536 = vrot.lane.b32.xlu0 %v3943, 32
      %v4537 = vpop.permute.xlu0 %4536
      %4538 = vrot.lane.b32.xlu0 %v3944, 32
      %v4539 = vpop.permute.xlu0 %4538
      %4540 = vrot.lane.b32.xlu0 %v3945, 32
      %v4541 = vpop.permute.xlu0 %4540
      %4542 = vrot.lane.b32.xlu0 %v3946, 32
      %v4543 = vpop.permute.xlu0 %4542
      %4544 = vrot.lane.b32.xlu0 %v3947, 32
      %v4545 = vpop.permute.xlu0 %4544
      %4546 = vrot.lane.b32.xlu0 %v3948, 32
      %v4547 = vpop.permute.xlu0 %4546
      %4548 = vrot.lane.b32.xlu0 %v3949, 32
      %v4549 = vpop.permute.xlu0 %4548
      %4550 = vrot.lane.b32.xlu0 %v3950, 32
      %v4551 = vpop.permute.xlu0 %4550
      %4552 = vrot.lane.b32.xlu0 %v3951, 32
      %v4553 = vpop.permute.xlu0 %4552
      %4554 = vrot.lane.b32.xlu0 %v3952, 32
      %v4555 = vpop.permute.xlu0 %4554
      %4556 = vrot.lane.b32.xlu0 %v3953, 32
      %v4557 = vpop.permute.xlu0 %4556
      %4558 = vrot.lane.b32.xlu0 %v3954, 32
      %v4559 = vpop.permute.xlu0 %4558
      %4560 = vrot.lane.b32.xlu0 %v3955, 32
      %v4561 = vpop.permute.xlu0 %4560
      %4562 = vrot.lane.b32.xlu0 %v3956, 32
      %v4563 = vpop.permute.xlu0 %4562
      %4564 = vrot.lane.b32.xlu0 %v3957, 32
      %v4565 = vpop.permute.xlu0 %4564
      %4566 = vrot.lane.b32.xlu0 %v3958, 32
      %v4567 = vpop.permute.xlu0 %4566
      %4632 = vrot.lane.b32.xlu0 %v3959, 40
      %v4633 = vpop.permute.xlu0 %4632
      %4634 = vrot.lane.b32.xlu0 %v3960, 40
      %v4635 = vpop.permute.xlu0 %4634
      %4636 = vrot.lane.b32.xlu0 %v3961, 40
      %v4637 = vpop.permute.xlu0 %4636
      %4638 = vrot.lane.b32.xlu0 %v3962, 40
      %v4639 = vpop.permute.xlu0 %4638
      %4640 = vrot.lane.b32.xlu0 %v3963, 40
      %v4641 = vpop.permute.xlu0 %4640
      %4642 = vrot.lane.b32.xlu0 %v3964, 40
      %v4643 = vpop.permute.xlu0 %4642
      %4644 = vrot.lane.b32.xlu0 %v3965, 40
      %v4645 = vpop.permute.xlu0 %4644
      %4646 = vrot.lane.b32.xlu0 %v3966, 40
      %v4647 = vpop.permute.xlu0 %4646
      %4648 = vrot.lane.b32.xlu0 %v3967, 40
      %v4649 = vpop.permute.xlu0 %4648
      %4650 = vrot.lane.b32.xlu0 %v3968, 40
      %v4651 = vpop.permute.xlu0 %4650
      %4652 = vrot.lane.b32.xlu0 %v3969, 40
      %v4653 = vpop.permute.xlu0 %4652
      %4654 = vrot.lane.b32.xlu0 %v3970, 40
      %v4655 = vpop.permute.xlu0 %4654
      %4656 = vrot.lane.b32.xlu0 %v3971, 40
      %v4657 = vpop.permute.xlu0 %4656
      %4658 = vrot.lane.b32.xlu0 %v3972, 40
      %v4659 = vpop.permute.xlu0 %4658
      %4660 = vrot.lane.b32.xlu0 %v3973, 40
      %v4661 = vpop.permute.xlu0 %4660
      %4662 = vrot.lane.b32.xlu0 %v3974, 40
      %v4663 = vpop.permute.xlu0 %4662
      %4664 = vrot.lane.b32.xlu0 %v3975, 40
      %v4665 = vpop.permute.xlu0 %4664
      %4666 = vrot.lane.b32.xlu0 %v3976, 40
      %v4667 = vpop.permute.xlu0 %4666
      %4668 = vrot.lane.b32.xlu0 %v3977, 40
      %v4669 = vpop.permute.xlu0 %4668
      %4670 = vrot.lane.b32.xlu0 %v3978, 40
      %v4671 = vpop.permute.xlu0 %4670
      %4672 = vrot.lane.b32.xlu0 %v3979, 40
      %v4673 = vpop.permute.xlu0 %4672
      %4674 = vrot.lane.b32.xlu0 %v3980, 40
      %v4675 = vpop.permute.xlu0 %4674
      %4676 = vrot.lane.b32.xlu0 %v3981, 40
      %v4677 = vpop.permute.xlu0 %4676
      %4678 = vrot.lane.b32.xlu0 %v3982, 40
      %v4679 = vpop.permute.xlu0 %4678
      %4680 = vrot.lane.b32.xlu0 %v3983, 40
      %v4681 = vpop.permute.xlu0 %4680
      %4682 = vrot.lane.b32.xlu0 %v3984, 40
      %v4683 = vpop.permute.xlu0 %4682
      %4684 = vrot.lane.b32.xlu0 %v3985, 40
      %v4685 = vpop.permute.xlu0 %4684
      %4686 = vrot.lane.b32.xlu0 %v3986, 40
      %v4687 = vpop.permute.xlu0 %4686
      %4688 = vrot.lane.b32.xlu0 %v3987, 40
      %v4689 = vpop.permute.xlu0 %4688
      %4690 = vrot.lane.b32.xlu0 %v3988, 40
      %v4691 = vpop.permute.xlu0 %4690
      %4692 = vrot.lane.b32.xlu0 %v3989, 40
      %v4693 = vpop.permute.xlu0 %4692
      %4694 = vrot.lane.b32.xlu0 %v3990, 40
      %v4695 = vpop.permute.xlu0 %4694
      %4760 = vrot.lane.b32.xlu0 %v3992, 48
      %v4761 = vpop.permute.xlu0 %4760
      %4762 = vrot.lane.b32.xlu0 %v3993, 48
      %v4763 = vpop.permute.xlu0 %4762
      %4764 = vrot.lane.b32.xlu0 %v3994, 48
      %v4765 = vpop.permute.xlu0 %4764
      %4766 = vrot.lane.b32.xlu0 %v3995, 48
      %v4767 = vpop.permute.xlu0 %4766
      %4768 = vrot.lane.b32.xlu0 %v3996, 48
      %v4769 = vpop.permute.xlu0 %4768
      %4770 = vrot.lane.b32.xlu0 %v3997, 48
      %v4771 = vpop.permute.xlu0 %4770
      %4772 = vrot.lane.b32.xlu0 %v3998, 48
      %v4773 = vpop.permute.xlu0 %4772
      %4774 = vrot.lane.b32.xlu0 %v3999, 48
      %v4775 = vpop.permute.xlu0 %4774
      %4776 = vrot.lane.b32.xlu0 %v4000, 48
      %v4777 = vpop.permute.xlu0 %4776
      %4778 = vrot.lane.b32.xlu0 %v4001, 48
      %v4779 = vpop.permute.xlu0 %4778
      %4780 = vrot.lane.b32.xlu0 %v4002, 48
      %v4781 = vpop.permute.xlu0 %4780
      %4782 = vrot.lane.b32.xlu0 %v4003, 48
      %v4783 = vpop.permute.xlu0 %4782
      %4784 = vrot.lane.b32.xlu0 %v4004, 48
      %v4785 = vpop.permute.xlu0 %4784
      %4786 = vrot.lane.b32.xlu0 %v4005, 48
      %v4787 = vpop.permute.xlu0 %4786
      %4788 = vrot.lane.b32.xlu0 %v4006, 48
      %v4789 = vpop.permute.xlu0 %4788
      %4790 = vrot.lane.b32.xlu0 %v4007, 48
      %v4791 = vpop.permute.xlu0 %4790
      %4792 = vrot.lane.b32.xlu0 %v4008, 48
      %v4793 = vpop.permute.xlu0 %4792
      %4794 = vrot.lane.b32.xlu0 %v4009, 48
      %v4795 = vpop.permute.xlu0 %4794
      %4796 = vrot.lane.b32.xlu0 %v4010, 48
      %v4797 = vpop.permute.xlu0 %4796
      %4798 = vrot.lane.b32.xlu0 %v4011, 48
      %v4799 = vpop.permute.xlu0 %4798
      %4800 = vrot.lane.b32.xlu0 %v4012, 48
      %v4801 = vpop.permute.xlu0 %4800
      %4802 = vrot.lane.b32.xlu0 %v4013, 48
      %v4803 = vpop.permute.xlu0 %4802
      %4804 = vrot.lane.b32.xlu0 %v4014, 48
      %v4805 = vpop.permute.xlu0 %4804
      %4806 = vrot.lane.b32.xlu0 %v4015, 48
      %v4807 = vpop.permute.xlu0 %4806
      %4808 = vrot.lane.b32.xlu0 %v4016, 48
      %v4809 = vpop.permute.xlu0 %4808
      %4810 = vrot.lane.b32.xlu0 %v4017, 48
      %v4811 = vpop.permute.xlu0 %4810
      %4812 = vrot.lane.b32.xlu0 %v4018, 48
      %v4813 = vpop.permute.xlu0 %4812
      %4814 = vrot.lane.b32.xlu0 %v4019, 48
      %v4815 = vpop.permute.xlu0 %4814
      %4816 = vrot.lane.b32.xlu0 %v4020, 48
      %v4817 = vpop.permute.xlu0 %4816
      %4818 = vrot.lane.b32.xlu0 %v4021, 48
      %v4819 = vpop.permute.xlu0 %4818
      %4820 = vrot.lane.b32.xlu0 %v4022, 48
      %v4821 = vpop.permute.xlu0 %4820
      %4822 = vrot.lane.b32.xlu0 %v4023, 48
      %v4823 = vpop.permute.xlu0 %4822
      %4888 = vrot.lane.b32.xlu0 %v4024, 56
      %v4889 = vpop.permute.xlu0 %4888
      %4890 = vrot.lane.b32.xlu0 %v4025, 56
      %v4891 = vpop.permute.xlu0 %4890
      %4892 = vrot.lane.b32.xlu0 %v4026, 56
      %v4893 = vpop.permute.xlu0 %4892
      %4894 = vrot.lane.b32.xlu0 %v4027, 56
      %v4895 = vpop.permute.xlu0 %4894
      %4896 = vrot.lane.b32.xlu0 %v4028, 56
      %v4897 = vpop.permute.xlu0 %4896
      %4898 = vrot.lane.b32.xlu0 %v4029, 56
      %v4899 = vpop.permute.xlu0 %4898
      %4900 = vrot.lane.b32.xlu0 %v4030, 56
      %v4901 = vpop.permute.xlu0 %4900
      %4902 = vrot.lane.b32.xlu0 %v4031, 56
      %v4903 = vpop.permute.xlu0 %4902
      %4904 = vrot.lane.b32.xlu0 %v4032, 56
      %v4905 = vpop.permute.xlu0 %4904
      %4906 = vrot.lane.b32.xlu0 %v4033, 56
      %v4907 = vpop.permute.xlu0 %4906
      %4908 = vrot.lane.b32.xlu0 %v4034, 56
      %v4909 = vpop.permute.xlu0 %4908
      %4910 = vrot.lane.b32.xlu0 %v4035, 56
      %v4911 = vpop.permute.xlu0 %4910
      %4912 = vrot.lane.b32.xlu0 %v4036, 56
      %v4913 = vpop.permute.xlu0 %4912
      %4914 = vrot.lane.b32.xlu0 %v4037, 56
      %v4915 = vpop.permute.xlu0 %4914
      %4916 = vrot.lane.b32.xlu0 %v4038, 56
      %v4917 = vpop.permute.xlu0 %4916
      %4918 = vrot.lane.b32.xlu0 %v4039, 56
      %v4919 = vpop.permute.xlu0 %4918
      %4920 = vrot.lane.b32.xlu0 %v4040, 56
      %v4921 = vpop.permute.xlu0 %4920
      %4922 = vrot.lane.b32.xlu0 %v4041, 56
      %v4923 = vpop.permute.xlu0 %4922
      %4924 = vrot.lane.b32.xlu0 %v4042, 56
      %v4925 = vpop.permute.xlu0 %4924
      %4926 = vrot.lane.b32.xlu0 %v4043, 56
      %v4927 = vpop.permute.xlu0 %4926
      %4928 = vrot.lane.b32.xlu0 %v4044, 56
      %v4929 = vpop.permute.xlu0 %4928
      %4930 = vrot.lane.b32.xlu0 %v4045, 56
      %v4931 = vpop.permute.xlu0 %4930
      %4932 = vrot.lane.b32.xlu0 %v4046, 56
      %v4933 = vpop.permute.xlu0 %4932
      %4934 = vrot.lane.b32.xlu0 %v4047, 56
      %v4935 = vpop.permute.xlu0 %4934
      %4936 = vrot.lane.b32.xlu0 %v4048, 56
      %v4937 = vpop.permute.xlu0 %4936
      %4938 = vrot.lane.b32.xlu0 %v4049, 56
      %v4939 = vpop.permute.xlu0 %4938
      %4940 = vrot.lane.b32.xlu0 %v4050, 56
      %v4941 = vpop.permute.xlu0 %4940
      %4942 = vrot.lane.b32.xlu0 %v4051, 56
      %v4943 = vpop.permute.xlu0 %4942
      %4944 = vrot.lane.b32.xlu0 %v4052, 56
      %v4945 = vpop.permute.xlu0 %4944
      %4946 = vrot.lane.b32.xlu0 %v4053, 56
      %v4947 = vpop.permute.xlu0 %4946
      %4948 = vrot.lane.b32.xlu0 %v4054, 56
      %v4949 = vpop.permute.xlu0 %4948
      %4950 = vrot.lane.b32.xlu0 %v4055, 56
      %v4951 = vpop.permute.xlu0 %4950
      %5016 = vrot.lane.b32.xlu0 %v4056, 64
      %v5017 = vpop.permute.xlu0 %5016
      %5018 = vrot.lane.b32.xlu0 %v4057, 64
      %v5019 = vpop.permute.xlu0 %5018
      %5020 = vrot.lane.b32.xlu0 %v4058, 64
      %v5021 = vpop.permute.xlu0 %5020
      %5022 = vrot.lane.b32.xlu0 %v4059, 64
      %v5023 = vpop.permute.xlu0 %5022
      %5024 = vrot.lane.b32.xlu0 %v4060, 64
      %v5025 = vpop.permute.xlu0 %5024
      %5026 = vrot.lane.b32.xlu0 %v4061, 64
      %v5027 = vpop.permute.xlu0 %5026
      %5028 = vrot.lane.b32.xlu0 %v4062, 64
      %v5029 = vpop.permute.xlu0 %5028
      %5030 = vrot.lane.b32.xlu0 %v4063, 64
      %v5031 = vpop.permute.xlu0 %5030
      %5032 = vrot.lane.b32.xlu0 %v4064, 64
      %v5033 = vpop.permute.xlu0 %5032
      %5034 = vrot.lane.b32.xlu0 %v4065, 64
      %v5035 = vpop.permute.xlu0 %5034
      %5036 = vrot.lane.b32.xlu0 %v4066, 64
      %v5037 = vpop.permute.xlu0 %5036
      %5038 = vrot.lane.b32.xlu0 %v4067, 64
      %v5039 = vpop.permute.xlu0 %5038
      %5040 = vrot.lane.b32.xlu0 %v4068, 64
      %v5041 = vpop.permute.xlu0 %5040
      %5042 = vrot.lane.b32.xlu0 %v4069, 64
      %v5043 = vpop.permute.xlu0 %5042
      %5044 = vrot.lane.b32.xlu0 %v4070, 64
      %v5045 = vpop.permute.xlu0 %5044
      %5046 = vrot.lane.b32.xlu0 %v4071, 64
      %v5047 = vpop.permute.xlu0 %5046
      %5048 = vrot.lane.b32.xlu0 %v4072, 64
      %v5049 = vpop.permute.xlu0 %5048
      %5050 = vrot.lane.b32.xlu0 %v4073, 64
      %v5051 = vpop.permute.xlu0 %5050
      %5052 = vrot.lane.b32.xlu0 %v4074, 64
      %v5053 = vpop.permute.xlu0 %5052
      %5054 = vrot.lane.b32.xlu0 %v4075, 64
      %v5055 = vpop.permute.xlu0 %5054
      %5056 = vrot.lane.b32.xlu0 %v4076, 64
      %v5057 = vpop.permute.xlu0 %5056
      %5058 = vrot.lane.b32.xlu0 %v4077, 64
      %v5059 = vpop.permute.xlu0 %5058
      %5060 = vrot.lane.b32.xlu0 %v4078, 64
      %v5061 = vpop.permute.xlu0 %5060
      %5062 = vrot.lane.b32.xlu0 %v4079, 64
      %v5063 = vpop.permute.xlu0 %5062
      %5064 = vrot.lane.b32.xlu0 %v4080, 64
      %v5065 = vpop.permute.xlu0 %5064
      %5066 = vrot.lane.b32.xlu0 %v4081, 64
      %v5067 = vpop.permute.xlu0 %5066
      %5068 = vrot.lane.b32.xlu0 %v4082, 64
      %v5069 = vpop.permute.xlu0 %5068
      %5070 = vrot.lane.b32.xlu0 %v4083, 64
      %v5071 = vpop.permute.xlu0 %5070
      %5072 = vrot.lane.b32.xlu0 %v4084, 64
      %v5073 = vpop.permute.xlu0 %5072
      %5074 = vrot.lane.b32.xlu0 %v4085, 64
      %v5075 = vpop.permute.xlu0 %5074
      %5076 = vrot.lane.b32.xlu0 %v4086, 64
      %v5077 = vpop.permute.xlu0 %5076
      %5078 = vrot.lane.b32.xlu0 %v4087, 64
      %v5079 = vpop.permute.xlu0 %5078
      %v5112 = vsel %vm2493, %v3799, %v4121
      %v5113 = vsel %vm2493, %v3800, %v4123
      %v5114 = vsel %vm2493, %v3801, %v4125
      %v5115 = vsel %vm2493, %v3802, %v4127
      %v5116 = vsel %vm2493, %v3803, %v4129
      %v5117 = vsel %vm2493, %v3804, %v4131
      %v5118 = vsel %vm2493, %v3805, %v4133
      %v5119 = vsel %vm2493, %v3806, %v4135
      %v5120 = vsel %vm2493, %v3807, %v4137
      %v5121 = vsel %vm2493, %v3808, %v4139
      %v5122 = vsel %vm2493, %v3809, %v4141
      %v5123 = vsel %vm2493, %v3810, %v4143
      %v5124 = vsel %vm2493, %v3811, %v4145
      %v5125 = vsel %vm2493, %v3812, %v4147
      %v5126 = vsel %vm2493, %v3813, %v4149
      %v5127 = vsel %vm2493, %v3814, %v4151
      %v5128 = vsel %vm2493, %v3815, %v4153
      %v5129 = vsel %vm2493, %v3816, %v4155
      %v5130 = vsel %vm2493, %v3817, %v4157
      %v5131 = vsel %vm2493, %v3818, %v4159
      %v5132 = vsel %vm2493, %v3819, %v4161
      %v5133 = vsel %vm2493, %v3820, %v4163
      %v5134 = vsel %vm2493, %v3821, %v4165
      %v5135 = vsel %vm2493, %v3822, %v4167
      %v5136 = vsel %vm2493, %v3823, %v4169
      %v5137 = vsel %vm2493, %v3824, %v4171
      %v5138 = vsel %vm2493, %v3825, %v4173
      %v5139 = vsel %vm2493, %v3826, %v4175
      %v5140 = vsel %vm2493, %v3827, %v4177
      %v5141 = vsel %vm2493, %v3828, %v4179
      %v5142 = vsel %vm2493, %v3829, %v4181
      %v5143 = vsel %vm2493, %v3830, %v4183
      %v5144 = vsel %vm2509, %v5112, %v4249
      %v5145 = vsel %vm2509, %v5113, %v4251
      %v5146 = vsel %vm2509, %v5114, %v4253
      %v5147 = vsel %vm2509, %v5115, %v4255
      %v5148 = vsel %vm2509, %v5116, %v4257
      %v5149 = vsel %vm2509, %v5117, %v4259
      %v5150 = vsel %vm2509, %v5118, %v4261
      %v5151 = vsel %vm2509, %v5119, %v4263
      %v5152 = vsel %vm2509, %v5120, %v4265
      %v5153 = vsel %vm2509, %v5121, %v4267
      %v5154 = vsel %vm2509, %v5122, %v4269
      %v5155 = vsel %vm2509, %v5123, %v4271
      %v5156 = vsel %vm2509, %v5124, %v4273
      %v5157 = vsel %vm2509, %v5125, %v4275
      %v5158 = vsel %vm2509, %v5126, %v4277
      %v5159 = vsel %vm2509, %v5127, %v4279
      %v5160 = vsel %vm2509, %v5128, %v4281
      %v5161 = vsel %vm2509, %v5129, %v4283
      %v5162 = vsel %vm2509, %v5130, %v4285
      %v5163 = vsel %vm2509, %v5131, %v4287
      %v5164 = vsel %vm2509, %v5132, %v4289
      %v5165 = vsel %vm2509, %v5133, %v4291
      %v5166 = vsel %vm2509, %v5134, %v4293
      %v5167 = vsel %vm2509, %v5135, %v4295
      %v5168 = vsel %vm2509, %v5136, %v4297
      %v5169 = vsel %vm2509, %v5137, %v4299
      %v5170 = vsel %vm2509, %v5138, %v4301
      %v5171 = vsel %vm2509, %v5139, %v4303
      %v5172 = vsel %vm2509, %v5140, %v4305
      %v5173 = vsel %vm2509, %v5141, %v4307
      %v5174 = vsel %vm2509, %v5142, %v4309
      %v5175 = vsel %vm2509, %v5143, %v4311
      %v5176 = vsel %vm2525, %v5144, %v4377
      %v5177 = vsel %vm2525, %v5145, %v4379
      %v5178 = vsel %vm2525, %v5146, %v4381
      %v5179 = vsel %vm2525, %v5147, %v4383
      %v5180 = vsel %vm2525, %v5148, %v4385
      %v5181 = vsel %vm2525, %v5149, %v4387
      %v5182 = vsel %vm2525, %v5150, %v4389
      %v5183 = vsel %vm2525, %v5151, %v4391
      %v5184 = vsel %vm2525, %v5152, %v4393
      %v5185 = vsel %vm2525, %v5153, %v4395
      %v5186 = vsel %vm2525, %v5154, %v4397
      %v5187 = vsel %vm2525, %v5155, %v4399
      %v5188 = vsel %vm2525, %v5156, %v4401
      %v5189 = vsel %vm2525, %v5157, %v4403
      %v5190 = vsel %vm2525, %v5158, %v4405
      %v5191 = vsel %vm2525, %v5159, %v4407
      %v5192 = vsel %vm2525, %v5160, %v4409
      %v5193 = vsel %vm2525, %v5161, %v4411
      %v5194 = vsel %vm2525, %v5162, %v4413
      %v5195 = vsel %vm2525, %v5163, %v4415
      %v5196 = vsel %vm2525, %v5164, %v4417
      %v5197 = vsel %vm2525, %v5165, %v4419
      %v5198 = vsel %vm2525, %v5166, %v4421
      %v5199 = vsel %vm2525, %v5167, %v4423
      %v5200 = vsel %vm2525, %v5168, %v4425
      %v5201 = vsel %vm2525, %v5169, %v4427
      %v5202 = vsel %vm2525, %v5170, %v4429
      %v5203 = vsel %vm2525, %v5171, %v4431
      %v5204 = vsel %vm2525, %v5172, %v4433
      %v5205 = vsel %vm2525, %v5173, %v4435
      %v5206 = vsel %vm2525, %v5174, %v4437
      %v5207 = vsel %vm2525, %v5175, %v4439
      %v5208 = vsel %vm2541, %v5176, %v4505
      %v5209 = vsel %vm2541, %v5177, %v4507
      %v5210 = vsel %vm2541, %v5178, %v4509
      %v5211 = vsel %vm2541, %v5179, %v4511
      %v5212 = vsel %vm2541, %v5180, %v4513
      %v5213 = vsel %vm2541, %v5181, %v4515
      %v5214 = vsel %vm2541, %v5182, %v4517
      %v5215 = vsel %vm2541, %v5183, %v4519
      %v5216 = vsel %vm2541, %v5184, %v4521
      %v5217 = vsel %vm2541, %v5185, %v4523
      %v5218 = vsel %vm2541, %v5186, %v4525
      %v5219 = vsel %vm2541, %v5187, %v4527
      %v5220 = vsel %vm2541, %v5188, %v4529
      %v5221 = vsel %vm2541, %v5189, %v4531
      %v5222 = vsel %vm2541, %v5190, %v4533
      %v5223 = vsel %vm2541, %v5191, %v4535
      %v5224 = vsel %vm2541, %v5192, %v4537
      %v5225 = vsel %vm2541, %v5193, %v4539
      %v5226 = vsel %vm2541, %v5194, %v4541
      %v5227 = vsel %vm2541, %v5195, %v4543
      %v5228 = vsel %vm2541, %v5196, %v4545
      %v5229 = vsel %vm2541, %v5197, %v4547
      %v5230 = vsel %vm2541, %v5198, %v4549
      %v5231 = vsel %vm2541, %v5199, %v4551
      %v5232 = vsel %vm2541, %v5200, %v4553
      %v5233 = vsel %vm2541, %v5201, %v4555
      %v5234 = vsel %vm2541, %v5202, %v4557
      %v5235 = vsel %vm2541, %v5203, %v4559
      %v5236 = vsel %vm2541, %v5204, %v4561
      %v5237 = vsel %vm2541, %v5205, %v4563
      %v5238 = vsel %vm2541, %v5206, %v4565
      %v5239 = vsel %vm2541, %v5207, %v4567
      %vm5240 = vcmask 326656
      %v5241 = vsel %vm5240, %v5208, %v4633
      %v5242 = vsel %vm5240, %v5209, %v4635
      %v5243 = vsel %vm5240, %v5210, %v4637
      %v5244 = vsel %vm5240, %v5211, %v4639
      %v5245 = vsel %vm5240, %v5212, %v4641
      %v5246 = vsel %vm5240, %v5213, %v4643
      %v5247 = vsel %vm5240, %v5214, %v4645
      %v5248 = vsel %vm5240, %v5215, %v4647
      %v5249 = vsel %vm5240, %v5216, %v4649
      %v5250 = vsel %vm5240, %v5217, %v4651
      %v5251 = vsel %vm5240, %v5218, %v4653
      %v5252 = vsel %vm5240, %v5219, %v4655
      %v5253 = vsel %vm5240, %v5220, %v4657
      %v5254 = vsel %vm5240, %v5221, %v4659
      %v5255 = vsel %vm5240, %v5222, %v4661
      %v5256 = vsel %vm5240, %v5223, %v4663
      %v5257 = vsel %vm5240, %v5224, %v4665
      %v5258 = vsel %vm5240, %v5225, %v4667
      %v5259 = vsel %vm5240, %v5226, %v4669
      %v5260 = vsel %vm5240, %v5227, %v4671
      %v5261 = vsel %vm5240, %v5228, %v4673
      %v5262 = vsel %vm5240, %v5229, %v4675
      %v5263 = vsel %vm5240, %v5230, %v4677
      %v5264 = vsel %vm5240, %v5231, %v4679
      %v5265 = vsel %vm5240, %v5232, %v4681
      %v5266 = vsel %vm5240, %v5233, %v4683
      %v5267 = vsel %vm5240, %v5234, %v4685
      %v5268 = vsel %vm5240, %v5235, %v4687
      %v5269 = vsel %vm5240, %v5236, %v4689
      %v5270 = vsel %vm5240, %v5237, %v4691
      %v5271 = vsel %vm5240, %v5238, %v4693
      %v5272 = vsel %vm5240, %v5239, %v4695
      %vm5273 = vcmask 392192
      %v5274 = vsel %vm5273, %v5241, %v4761
      %v5275 = vsel %vm5273, %v5242, %v4763
      %v5276 = vsel %vm5273, %v5243, %v4765
      %v5277 = vsel %vm5273, %v5244, %v4767
      %v5278 = vsel %vm5273, %v5245, %v4769
      %v5279 = vsel %vm5273, %v5246, %v4771
      %v5280 = vsel %vm5273, %v5247, %v4773
      %v5281 = vsel %vm5273, %v5248, %v4775
      %v5282 = vsel %vm5273, %v5249, %v4777
      %v5283 = vsel %vm5273, %v5250, %v4779
      %v5284 = vsel %vm5273, %v5251, %v4781
      %v5285 = vsel %vm5273, %v5252, %v4783
      %v5286 = vsel %vm5273, %v5253, %v4785
      %v5287 = vsel %vm5273, %v5254, %v4787
      %v5288 = vsel %vm5273, %v5255, %v4789
      %v5289 = vsel %vm5273, %v5256, %v4791
      %v5290 = vsel %vm5273, %v5257, %v4793
      %v5291 = vsel %vm5273, %v5258, %v4795
      %v5292 = vsel %vm5273, %v5259, %v4797
      %v5293 = vsel %vm5273, %v5260, %v4799
      %v5294 = vsel %vm5273, %v5261, %v4801
      %v5295 = vsel %vm5273, %v5262, %v4803
      %v5296 = vsel %vm5273, %v5263, %v4805
      %v5297 = vsel %vm5273, %v5264, %v4807
      %v5298 = vsel %vm5273, %v5265, %v4809
      %v5299 = vsel %vm5273, %v5266, %v4811
      %v5300 = vsel %vm5273, %v5267, %v4813
      %v5301 = vsel %vm5273, %v5268, %v4815
      %v5302 = vsel %vm5273, %v5269, %v4817
      %v5303 = vsel %vm5273, %v5270, %v4819
      %v5304 = vsel %vm5273, %v5271, %v4821
      %v5305 = vsel %vm5273, %v5272, %v4823
      %vm5306 = vcmask 457728
      %v5307 = vsel %vm5306, %v5274, %v4889
      %v5308 = vsel %vm5306, %v5275, %v4891
      %v5309 = vsel %vm5306, %v5276, %v4893
      %v5310 = vsel %vm5306, %v5277, %v4895
      %v5311 = vsel %vm5306, %v5278, %v4897
      %v5312 = vsel %vm5306, %v5279, %v4899
      %v5313 = vsel %vm5306, %v5280, %v4901
      %v5314 = vsel %vm5306, %v5281, %v4903
      %v5315 = vsel %vm5306, %v5282, %v4905
      %v5316 = vsel %vm5306, %v5283, %v4907
      %v5317 = vsel %vm5306, %v5284, %v4909
      %v5318 = vsel %vm5306, %v5285, %v4911
      %v5319 = vsel %vm5306, %v5286, %v4913
      %v5320 = vsel %vm5306, %v5287, %v4915
      %v5321 = vsel %vm5306, %v5288, %v4917
      %v5322 = vsel %vm5306, %v5289, %v4919
      %v5323 = vsel %vm5306, %v5290, %v4921
      %v5324 = vsel %vm5306, %v5291, %v4923
      %v5325 = vsel %vm5306, %v5292, %v4925
      %v5326 = vsel %vm5306, %v5293, %v4927
      %v5327 = vsel %vm5306, %v5294, %v4929
      %v5328 = vsel %vm5306, %v5295, %v4931
      %v5329 = vsel %vm5306, %v5296, %v4933
      %v5330 = vsel %vm5306, %v5297, %v4935
      %v5331 = vsel %vm5306, %v5298, %v4937
      %v5332 = vsel %vm5306, %v5299, %v4939
      %v5333 = vsel %vm5306, %v5300, %v4941
      %v5334 = vsel %vm5306, %v5301, %v4943
      %v5335 = vsel %vm5306, %v5302, %v4945
      %v5336 = vsel %vm5306, %v5303, %v4947
      %v5337 = vsel %vm5306, %v5304, %v4949
      %v5338 = vsel %vm5306, %v5305, %v4951
      %vm5339 = vcmask 523264
      %v5340 = vsel %vm5339, %v5307, %v5017
      %v5341 = vsel %vm5339, %v5308, %v5019
      %v5342 = vsel %vm5339, %v5309, %v5021
      %v5343 = vsel %vm5339, %v5310, %v5023
      %v5344 = vsel %vm5339, %v5311, %v5025
      %v5345 = vsel %vm5339, %v5312, %v5027
      %v5346 = vsel %vm5339, %v5313, %v5029
      %v5347 = vsel %vm5339, %v5314, %v5031
      %v5348 = vsel %vm5339, %v5315, %v5033
      %v5349 = vsel %vm5339, %v5316, %v5035
      %v5350 = vsel %vm5339, %v5317, %v5037
      %v5351 = vsel %vm5339, %v5318, %v5039
      %v5352 = vsel %vm5339, %v5319, %v5041
      %v5353 = vsel %vm5339, %v5320, %v5043
      %v5354 = vsel %vm5339, %v5321, %v5045
      %v5355 = vsel %vm5339, %v5322, %v5047
      %v5356 = vsel %vm5339, %v5323, %v5049
      %v5357 = vsel %vm5339, %v5324, %v5051
      %v5358 = vsel %vm5339, %v5325, %v5053
      %v5359 = vsel %vm5339, %v5326, %v5055
      %v5360 = vsel %vm5339, %v5327, %v5057
      %v5361 = vsel %vm5339, %v5328, %v5059
      %v5362 = vsel %vm5339, %v5329, %v5061
      %v5363 = vsel %vm5339, %v5330, %v5063
      %v5364 = vsel %vm5339, %v5331, %v5065
      %v5365 = vsel %vm5339, %v5332, %v5067
      %v5366 = vsel %vm5339, %v5333, %v5069
      %v5367 = vsel %vm5339, %v5334, %v5071
      %v5368 = vsel %vm5339, %v5335, %v5073
      %v5369 = vsel %vm5339, %v5336, %v5075
      %v5370 = vsel %vm5339, %v5337, %v5077
      %v5371 = vsel %vm5339, %v5338, %v5079
      %v5372 = vpack.c.bf16 %v5341, %v5340
      %v5373 = vpack.c.bf16 %v5343, %v5342
      %v5374 = vpack.c.bf16 %v5345, %v5344
      %v5375 = vpack.c.bf16 %v5347, %v5346
      %v5376 = vpack.c.bf16 %v5349, %v5348
      %v5377 = vpack.c.bf16 %v5351, %v5350
      %v5378 = vpack.c.bf16 %v5353, %v5352
      %v5379 = vpack.c.bf16 %v5355, %v5354
      %v5380 = vpack.c.bf16 %v5357, %v5356
      %v5381 = vpack.c.bf16 %v5359, %v5358
      %v5382 = vpack.c.bf16 %v5361, %v5360
      %v5383 = vpack.c.bf16 %v5363, %v5362
      %v5384 = vpack.c.bf16 %v5365, %v5364
      %v5385 = vpack.c.bf16 %v5367, %v5366
      %v5386 = vpack.c.bf16 %v5369, %v5368
      %v5387 = vpack.c.bf16 %v5371, %v5370
      %v5388 = vld [vmem:[%s7] sm:$0xf]
      %v5389 = vld [vmem:[%s7 + $0x4] sm:$0xf]
      %v5390 = vld [vmem:[%s7 + $0x8] sm:$0xf]
      %v5391 = vld [vmem:[%s7 + $0xc] sm:$0xf]
      %v5392 = vld [vmem:[%s7 + $0x10] sm:$0xf]
      %v5393 = vld [vmem:[%s7 + $0x14] sm:$0xf]
      %v5394 = vld [vmem:[%s7 + $0x18] sm:$0xf]
      %v5395 = vld [vmem:[%s7 + $0x1c] sm:$0xf]
      %v5396 = vld [vmem:[%s7 + $0x20] sm:$0xf]
      %v5406 = vunpack.c.l.b16 %v5388
      %v5407 = vunpack.c.l.b16 %v5389
      %v5408 = vunpack.c.l.b16 %v5390
      %v5409 = vunpack.c.l.b16 %v5391
      %v5410 = vunpack.c.l.b16 %v5392
      %v5411 = vunpack.c.l.b16 %v5393
      %v5412 = vunpack.c.l.b16 %v5394
      %v5413 = vunpack.c.l.b16 %v5395
      %v5414 = vunpack.c.l.b16 %v5396
      %v5415 = vpack.c.b16 %v5407, %v5406
      %v5416 = vpack.c.b16 %v5409, %v5408
      %v5417 = vpack.c.b16 %v5411, %v5410
      %v5418 = vpack.c.b16 %v5413, %v5412
      %v5419 = vpack.c.b16 %v5414, %v5414
      %vm5424 = vcmask 588800
      %v5426 = vsel %vm5424, %v5372, 0
      %v5429 = vsel %vm5424, %v5373, 0
      %v5432 = vsel %vm5424, %v5374, 0
      %v5435 = vsel %vm5424, %v5375, 0
      %v5438 = vsel %vm5424, %v5376, 0
      %v5441 = vsel %vm5424, %v5377, 0
      %v5444 = vsel %vm5424, %v5378, 0
      %v5447 = vsel %vm5424, %v5379, 0
      %v5450 = vsel %vm5424, %v5380, 0
      %v5453 = vsel %vm5424, %v5381, 0
      %v5456 = vsel %vm5424, %v5382, 0
      %v5459 = vsel %vm5424, %v5383, 0
      %v5462 = vsel %vm5424, %v5384, 0
      %v5465 = vsel %vm5424, %v5385, 0
      %v5468 = vsel %vm5424, %v5386, 0
      %v5471 = vsel %vm5424, %v5387, 0
      %vm5473 = vcmask 1043456
      %v5475 = vsel %vm5473, %v5419, 0
      %5477 = vmatprep.subr.bf16.mxu0 0
      %5478 = vmatpush1.bf16.msra.mxu0 %v5415
      %5479 = vmatprep.subr.bf16.mxu0 0
      %5480 = vmatpush1.bf16.msra.mxu0 %v5416
      %5481 = vmatprep.subr.bf16.mxu0 0
      %5482 = vmatpush1.bf16.msra.mxu0 %v5417
      %5483 = vmatprep.subr.bf16.mxu0 0
      %5484 = vmatpush1.bf16.msra.mxu0 %v5418
      %5485 = vmatprep.subr.bf16.mxu0 0
      %5486 = vmatpush1.bf16.msra.mxu0 %v5475
      %5487 = vmatprep.subr.bf16.mxu0 0
      %5488 = vmatpush1.bf16.msra.mxu0 0
      %5489 = vmatprep.subr.bf16.mxu0 0
      %5490 = vmatpush1.bf16.msra.mxu0 0
      %5491 = vmatprep.subr.bf16.mxu0 0
      %5492 = vmatpush1.bf16.msra.mxu0 0
      %5493 = vmatprep.subr.bf16.mxu0 0
      %5494 = vmatpush1.bf16.msra.mxu0 0
      %5495 = vmatprep.subr.bf16.mxu0 0
      %5496 = vmatpush1.bf16.msra.mxu0 0
      %5497 = vmatprep.subr.bf16.mxu0 0
      %5498 = vmatpush1.bf16.msra.mxu0 0
      %5499 = vmatprep.subr.bf16.mxu0 0
      %5500 = vmatpush1.bf16.msra.mxu0 0
      %5501 = vmatprep.subr.bf16.mxu0 0
      %5502 = vmatpush1.bf16.msra.mxu0 0
      %5503 = vmatprep.subr.bf16.mxu0 0
      %5504 = vmatpush1.bf16.msra.mxu0 0
      %5505 = vmatprep.subr.bf16.mxu0 0
      %5506 = vmatpush1.bf16.msra.mxu0 0
      %5507 = vmatprep.subr.bf16.mxu0 0
      %5508 = vmatpush1.bf16.msra.mxu0 0
      %5509 = vmatprep.mubr.bf16.mxu0 0
      %5510 = vmatmul.mubr.bf16.gmra.mrb[0].mxu0 %v5426
      %v5511 = vpop.f32.mrb[0].mxu0
      %v5512 = vadd.f32 0.0, %v5511
      %v5513 = vpop.f32.mrb[0].mxu0
      %v5514 = vpop.f32.mrb[0].mxu0
      %v5515 = vadd.f32 0.0, %v5514
      %v5516 = vpop.f32.mrb[0].mxu0
      %5517 = vmatprep.mubr.bf16.mxu0 0
      %5518 = vmatmul.mubr.bf16.gmra.mrb[0].mxu0 %v5429
      %v5519 = vpop.f32.mrb[0].mxu0
      %v5520 = vadd.f32 0.0, %v5519
      %v5521 = vpop.f32.mrb[0].mxu0
      %v5522 = vpop.f32.mrb[0].mxu0
      %v5523 = vadd.f32 0.0, %v5522
      %v5524 = vpop.f32.mrb[0].mxu0
      %5525 = vmatprep.mubr.bf16.mxu0 0
      %5526 = vmatmul.mubr.bf16.gmra.mrb[0].mxu0 %v5432
      %v5527 = vpop.f32.mrb[0].mxu0
      %v5528 = vadd.f32 0.0, %v5527
      %v5529 = vpop.f32.mrb[0].mxu0
      %v5530 = vpop.f32.mrb[0].mxu0
      %v5531 = vadd.f32 0.0, %v5530
      %v5532 = vpop.f32.mrb[0].mxu0
      %5533 = vmatprep.mubr.bf16.mxu0 0
      %5534 = vmatmul.mubr.bf16.gmra.mrb[0].mxu0 %v5435
      %v5535 = vpop.f32.mrb[0].mxu0
      %v5536 = vadd.f32 0.0, %v5535
      %v5537 = vpop.f32.mrb[0].mxu0
      %v5538 = vpop.f32.mrb[0].mxu0
      %v5539 = vadd.f32 0.0, %v5538
      %v5540 = vpop.f32.mrb[0].mxu0
      %5541 = vmatprep.mubr.bf16.mxu0 0
      %5542 = vmatmul.mubr.bf16.gmra.mrb[0].mxu0 %v5438
      %v5543 = vpop.f32.mrb[0].mxu0
      %v5544 = vadd.f32 0.0, %v5543
      %v5545 = vpop.f32.mrb[0].mxu0
      %v5546 = vpop.f32.mrb[0].mxu0
      %v5547 = vadd.f32 0.0, %v5546
      %v5548 = vpop.f32.mrb[0].mxu0
      %5549 = vmatprep.mubr.bf16.mxu0 0
      %5550 = vmatmul.mubr.bf16.gmra.mrb[0].mxu0 %v5441
      %v5551 = vpop.f32.mrb[0].mxu0
      %v5552 = vadd.f32 0.0, %v5551
      %v5553 = vpop.f32.mrb[0].mxu0
      %v5554 = vpop.f32.mrb[0].mxu0
      %v5555 = vadd.f32 0.0, %v5554
      %v5556 = vpop.f32.mrb[0].mxu0
      %5557 = vmatprep.mubr.bf16.mxu0 0
      %5558 = vmatmul.mubr.bf16.gmra.mrb[0].mxu0 %v5444
      %v5559 = vpop.f32.mrb[0].mxu0
      %v5560 = vadd.f32 0.0, %v5559
      %v5561 = vpop.f32.mrb[0].mxu0
      %v5562 = vpop.f32.mrb[0].mxu0
      %v5563 = vadd.f32 0.0, %v5562
      %v5564 = vpop.f32.mrb[0].mxu0
      %5565 = vmatprep.mubr.bf16.mxu0 0
      %5566 = vmatmul.mubr.bf16.gmra.mrb[0].mxu0 %v5447
      %v5567 = vpop.f32.mrb[0].mxu0
      %v5568 = vadd.f32 0.0, %v5567
      %v5569 = vpop.f32.mrb[0].mxu0
      %v5570 = vpop.f32.mrb[0].mxu0
      %v5571 = vadd.f32 0.0, %v5570
      %v5572 = vpop.f32.mrb[0].mxu0
      %5573 = vmatprep.mubr.bf16.mxu0 0
      %5574 = vmatmul.mubr.bf16.gmra.mrb[0].mxu0 %v5450
      %v5575 = vpop.f32.mrb[0].mxu0
      %v5576 = vadd.f32 0.0, %v5575
      %v5577 = vpop.f32.mrb[0].mxu0
      %v5578 = vpop.f32.mrb[0].mxu0
      %v5579 = vadd.f32 0.0, %v5578
      %v5580 = vpop.f32.mrb[0].mxu0
      %5581 = vmatprep.mubr.bf16.mxu0 0
      %5582 = vmatmul.mubr.bf16.gmra.mrb[0].mxu0 %v5453
      %v5583 = vpop.f32.mrb[0].mxu0
      %v5584 = vadd.f32 0.0, %v5583
      %v5585 = vpop.f32.mrb[0].mxu0
      %v5586 = vpop.f32.mrb[0].mxu0
      %v5587 = vadd.f32 0.0, %v5586
      %v5588 = vpop.f32.mrb[0].mxu0
      %5589 = vmatprep.mubr.bf16.mxu0 0
      %5590 = vmatmul.mubr.bf16.gmra.mrb[0].mxu0 %v5456
      %v5591 = vpop.f32.mrb[0].mxu0
      %v5592 = vadd.f32 0.0, %v5591
      %v5593 = vpop.f32.mrb[0].mxu0
      %v5594 = vpop.f32.mrb[0].mxu0
      %v5595 = vadd.f32 0.0, %v5594
      %v5596 = vpop.f32.mrb[0].mxu0
      %5597 = vmatprep.mubr.bf16.mxu0 0
      %5598 = vmatmul.mubr.bf16.gmra.mrb[0].mxu0 %v5459
      %v5599 = vpop.f32.mrb[0].mxu0
      %v5600 = vadd.f32 0.0, %v5599
      %v5601 = vpop.f32.mrb[0].mxu0
      %v5602 = vpop.f32.mrb[0].mxu0
      %v5603 = vadd.f32 0.0, %v5602
      %v5604 = vpop.f32.mrb[0].mxu0
      %5605 = vmatprep.mubr.bf16.mxu0 0
      %5606 = vmatmul.mubr.bf16.gmra.mrb[0].mxu0 %v5462
      %v5607 = vpop.f32.mrb[0].mxu0
      %v5608 = vadd.f32 0.0, %v5607
      %v5609 = vpop.f32.mrb[0].mxu0
      %v5610 = vpop.f32.mrb[0].mxu0
      %v5611 = vadd.f32 0.0, %v5610
      %v5612 = vpop.f32.mrb[0].mxu0
      %5613 = vmatprep.mubr.bf16.mxu0 0
      %5614 = vmatmul.mubr.bf16.gmra.mrb[0].mxu0 %v5465
      %v5615 = vpop.f32.mrb[0].mxu0
      %v5616 = vadd.f32 0.0, %v5615
      %v5617 = vpop.f32.mrb[0].mxu0
      %v5618 = vpop.f32.mrb[0].mxu0
      %v5619 = vadd.f32 0.0, %v5618
      %v5620 = vpop.f32.mrb[0].mxu0
      %5621 = vmatprep.mubr.bf16.mxu0 0
      %5622 = vmatmul.mubr.bf16.gmra.mrb[0].mxu0 %v5468
      %v5623 = vpop.f32.mrb[0].mxu0
      %v5624 = vadd.f32 0.0, %v5623
      %v5625 = vpop.f32.mrb[0].mxu0
      %v5626 = vpop.f32.mrb[0].mxu0
      %v5627 = vadd.f32 0.0, %v5626
      %v5628 = vpop.f32.mrb[0].mxu0
      %5629 = vmatprep.mubr.bf16.mxu0 0
      %5630 = vmatmul.mubr.bf16.gmra.mrb[0].mxu0 %v5471
      %v5631 = vpop.f32.mrb[0].mxu0
      %v5632 = vpop.f32.mrb[0].mxu0
      %v5633 = vpop.f32.mrb[0].mxu0
      %v5634 = vpop.f32.mrb[0].mxu0
      %5635 = vdwg.mxu0
      %v5636 = vld [vmem:[%s8] sm:$0x1]
      %v5638 = vlaneseq
      %v5639 = vshrl.u32 %v5638, 7
      %v5640 = vsub.s32 0, %v5639
      %v5641 = vrot.slane %v5636, %v5640
      %v5643 = vmul.f32 %v5512, %v5641
      %v5644 = vmul.f32 %v5515, %v5641
      %v5645 = vmul.f32 %v5520, %v5641
      %v5646 = vmul.f32 %v5523, %v5641
      %v5647 = vmul.f32 %v5528, %v5641
      %v5648 = vmul.f32 %v5531, %v5641
      %v5649 = vmul.f32 %v5536, %v5641
      %v5650 = vmul.f32 %v5539, %v5641
      %v5651 = vmul.f32 %v5544, %v5641
      %v5652 = vmul.f32 %v5547, %v5641
      %v5653 = vmul.f32 %v5552, %v5641
      %v5654 = vmul.f32 %v5555, %v5641
      %v5655 = vmul.f32 %v5560, %v5641
      %v5656 = vmul.f32 %v5563, %v5641
      %v5657 = vmul.f32 %v5568, %v5641
      %v5658 = vmul.f32 %v5571, %v5641
      %v5659 = vmul.f32 %v5576, %v5641
      %v5660 = vmul.f32 %v5579, %v5641
      %v5661 = vmul.f32 %v5584, %v5641
      %v5662 = vmul.f32 %v5587, %v5641
      %v5663 = vmul.f32 %v5592, %v5641
      %v5664 = vmul.f32 %v5595, %v5641
      %v5665 = vmul.f32 %v5600, %v5641
      %v5666 = vmul.f32 %v5603, %v5641
      %v5667 = vmul.f32 %v5608, %v5641
      %v5668 = vmul.f32 %v5611, %v5641
      %v5669 = vmul.f32 %v5616, %v5641
      %v5670 = vmul.f32 %v5619, %v5641
      %v5671 = vmul.f32 %v5624, %v5641
      %v5672 = vmul.f32 %v5627, %v5641
      %v5673 = vld [vmem:[%s9] sm:$0x1]
      %v5675 = vlaneseq
      %v5676 = vshrl.u32 %v5675, 7
      %v5677 = vsub.s32 0, %v5676
      %v5678 = vrot.slane %v5673, %v5677
      %v5680 = vadd.f32 %v5643, %v5678
      %v5681 = vadd.f32 %v5644, %v5678
      %v5682 = vadd.f32 %v5645, %v5678
      %v5683 = vadd.f32 %v5646, %v5678
      %v5684 = vadd.f32 %v5647, %v5678
      %v5685 = vadd.f32 %v5648, %v5678
      %v5686 = vadd.f32 %v5649, %v5678
      %v5687 = vadd.f32 %v5650, %v5678
      %v5688 = vadd.f32 %v5651, %v5678
      %v5689 = vadd.f32 %v5652, %v5678
      %v5690 = vadd.f32 %v5653, %v5678
      %v5691 = vadd.f32 %v5654, %v5678
      %v5692 = vadd.f32 %v5655, %v5678
      %v5693 = vadd.f32 %v5656, %v5678
      %v5694 = vadd.f32 %v5657, %v5678
      %v5695 = vadd.f32 %v5658, %v5678
      %v5696 = vadd.f32 %v5659, %v5678
      %v5697 = vadd.f32 %v5660, %v5678
      %v5698 = vadd.f32 %v5661, %v5678
      %v5699 = vadd.f32 %v5662, %v5678
      %v5700 = vadd.f32 %v5663, %v5678
      %v5701 = vadd.f32 %v5664, %v5678
      %v5702 = vadd.f32 %v5665, %v5678
      %v5703 = vadd.f32 %v5666, %v5678
      %v5704 = vadd.f32 %v5667, %v5678
      %v5705 = vadd.f32 %v5668, %v5678
      %v5706 = vadd.f32 %v5669, %v5678
      %v5707 = vadd.f32 %v5670, %v5678
      %v5708 = vadd.f32 %v5671, %v5678
      %v5709 = vadd.f32 %v5672, %v5678
      %v5710 = vmax.f32 %v5680, 0.0
      %v5711 = vmax.f32 %v5681, 0.0
      %v5712 = vmax.f32 %v5682, 0.0
      %v5713 = vmax.f32 %v5683, 0.0
      %v5714 = vmax.f32 %v5684, 0.0
      %v5715 = vmax.f32 %v5685, 0.0
      %v5716 = vmax.f32 %v5686, 0.0
      %v5717 = vmax.f32 %v5687, 0.0
      %v5718 = vmax.f32 %v5688, 0.0
      %v5719 = vmax.f32 %v5689, 0.0
      %v5720 = vmax.f32 %v5690, 0.0
      %v5721 = vmax.f32 %v5691, 0.0
      %v5722 = vmax.f32 %v5692, 0.0
      %v5723 = vmax.f32 %v5693, 0.0
      %v5724 = vmax.f32 %v5694, 0.0
      %v5725 = vmax.f32 %v5695, 0.0
      %v5726 = vmax.f32 %v5696, 0.0
      %v5727 = vmax.f32 %v5697, 0.0
      %v5728 = vmax.f32 %v5698, 0.0
      %v5729 = vmax.f32 %v5699, 0.0
      %v5730 = vmax.f32 %v5700, 0.0
      %v5731 = vmax.f32 %v5701, 0.0
      %v5732 = vmax.f32 %v5702, 0.0
      %v5733 = vmax.f32 %v5703, 0.0
      %v5734 = vmax.f32 %v5704, 0.0
      %v5735 = vmax.f32 %v5705, 0.0
      %v5736 = vmax.f32 %v5706, 0.0
      %v5737 = vmax.f32 %v5707, 0.0
      %v5738 = vmax.f32 %v5708, 0.0
      %v5739 = vmax.f32 %v5709, 0.0
      %v5740 = vmin.f32 %v5710, 6.0
      %v5741 = vmin.f32 %v5711, 6.0
      %v5742 = vmin.f32 %v5712, 6.0
      %v5743 = vmin.f32 %v5713, 6.0
      %v5744 = vmin.f32 %v5714, 6.0
      %v5745 = vmin.f32 %v5715, 6.0
      %v5746 = vmin.f32 %v5716, 6.0
      %v5747 = vmin.f32 %v5717, 6.0
      %v5748 = vmin.f32 %v5718, 6.0
      %v5749 = vmin.f32 %v5719, 6.0
      %v5750 = vmin.f32 %v5720, 6.0
      %v5751 = vmin.f32 %v5721, 6.0
      %v5752 = vmin.f32 %v5722, 6.0
      %v5753 = vmin.f32 %v5723, 6.0
      %v5754 = vmin.f32 %v5724, 6.0
      %v5755 = vmin.f32 %v5725, 6.0
      %v5756 = vmin.f32 %v5726, 6.0
      %v5757 = vmin.f32 %v5727, 6.0
      %v5758 = vmin.f32 %v5728, 6.0
      %v5759 = vmin.f32 %v5729, 6.0
      %v5760 = vmin.f32 %v5730, 6.0
      %v5761 = vmin.f32 %v5731, 6.0
      %v5762 = vmin.f32 %v5732, 6.0
      %v5763 = vmin.f32 %v5733, 6.0
      %v5764 = vmin.f32 %v5734, 6.0
      %v5765 = vmin.f32 %v5735, 6.0
      %v5766 = vmin.f32 %v5736, 6.0
      %v5767 = vmin.f32 %v5737, 6.0
      %v5768 = vmin.f32 %v5738, 6.0
      %v5769 = vmin.f32 %v5739, 6.0
      %v5786 = vcombine.high %v5740, %v5740
      %v5788 = vunpack.c.l.s4 1983009808
      %v5789 = vunpack.c.0.s8 %v5788
      %v5790 = vlaneseq
      %v5791 = vshrl.u32 %v5790, 7
      %v5792 = vsub.s32 %v5789, %v5791
      %v5793 = vrot.slane %v5740, %v5792
      %v5795 = vunpack.c.l.s4 1983009808
      %v5796 = vunpack.c.0.s8 %v5795
      %v5797 = vlaneseq
      %v5798 = vshrl.u32 %v5797, 7
      %v5799 = vsub.s32 %v5796, %v5798
      %v5800 = vrot.slane %v5786, %v5799
      %v5801 = vcombine.high %v5793, %v5793
      %v5802 = vcombine.high %v5800, %v5800
      %v5803 = vcombine.high %v5741, %v5741
      %v5805 = vunpack.c.l.s4 1983009808
      %v5806 = vunpack.c.0.s8 %v5805
      %v5807 = vlaneseq
      %v5808 = vshrl.u32 %v5807, 7
      %v5809 = vsub.s32 %v5806, %v5808
      %v5810 = vrot.slane %v5741, %v5809
      %v5812 = vunpack.c.l.s4 1983009808
      %v5813 = vunpack.c.0.s8 %v5812
      %v5814 = vlaneseq
      %v5815 = vshrl.u32 %v5814, 7
      %v5816 = vsub.s32 %v5813, %v5815
      %v5817 = vrot.slane %v5803, %v5816
      %v5818 = vcombine.high %v5810, %v5810
      %v5819 = vcombine.high %v5817, %v5817
      %v5820 = vcombine.high %v5744, %v5744
      %v5822 = vunpack.c.l.s4 1983009808
      %v5823 = vunpack.c.0.s8 %v5822
      %v5824 = vlaneseq
      %v5825 = vshrl.u32 %v5824, 7
      %v5826 = vsub.s32 %v5823, %v5825
      %v5827 = vrot.slane %v5744, %v5826
      %v5829 = vunpack.c.l.s4 1983009808
      %v5830 = vunpack.c.0.s8 %v5829
      %v5831 = vlaneseq
      %v5832 = vshrl.u32 %v5831, 7
      %v5833 = vsub.s32 %v5830, %v5832
      %v5834 = vrot.slane %v5820, %v5833
      %v5835 = vcombine.high %v5827, %v5827
      %v5836 = vcombine.high %v5834, %v5834
      %v5837 = vcombine.high %v5745, %v5745
      %v5839 = vunpack.c.l.s4 1983009808
      %v5840 = vunpack.c.0.s8 %v5839
      %v5841 = vlaneseq
      %v5842 = vshrl.u32 %v5841, 7
      %v5843 = vsub.s32 %v5840, %v5842
      %v5844 = vrot.slane %v5745, %v5843
      %v5846 = vunpack.c.l.s4 1983009808
      %v5847 = vunpack.c.0.s8 %v5846
      %v5848 = vlaneseq
      %v5849 = vshrl.u32 %v5848, 7
      %v5850 = vsub.s32 %v5847, %v5849
      %v5851 = vrot.slane %v5837, %v5850
      %v5852 = vcombine.high %v5844, %v5844
      %v5853 = vcombine.high %v5851, %v5851
      %v5854 = vcombine.high %v5748, %v5748
      %v5856 = vunpack.c.l.s4 1983009808
      %v5857 = vunpack.c.0.s8 %v5856
      %v5858 = vlaneseq
      %v5859 = vshrl.u32 %v5858, 7
      %v5860 = vsub.s32 %v5857, %v5859
      %v5861 = vrot.slane %v5748, %v5860
      %v5863 = vunpack.c.l.s4 1983009808
      %v5864 = vunpack.c.0.s8 %v5863
      %v5865 = vlaneseq
      %v5866 = vshrl.u32 %v5865, 7
      %v5867 = vsub.s32 %v5864, %v5866
      %v5868 = vrot.slane %v5854, %v5867
      %v5869 = vcombine.high %v5861, %v5861
      %v5870 = vcombine.high %v5868, %v5868
      %v5871 = vcombine.high %v5749, %v5749
      %v5873 = vunpack.c.l.s4 1983009808
      %v5874 = vunpack.c.0.s8 %v5873
      %v5875 = vlaneseq
      %v5876 = vshrl.u32 %v5875, 7
      %v5877 = vsub.s32 %v5874, %v5876
      %v5878 = vrot.slane %v5749, %v5877
      %v5880 = vunpack.c.l.s4 1983009808
      %v5881 = vunpack.c.0.s8 %v5880
      %v5882 = vlaneseq
      %v5883 = vshrl.u32 %v5882, 7
      %v5884 = vsub.s32 %v5881, %v5883
      %v5885 = vrot.slane %v5871, %v5884
      %v5886 = vcombine.high %v5878, %v5878
      %v5887 = vcombine.high %v5885, %v5885
      %v5888 = vcombine.high %v5752, %v5752
      %v5890 = vunpack.c.l.s4 1983009808
      %v5891 = vunpack.c.0.s8 %v5890
      %v5892 = vlaneseq
      %v5893 = vshrl.u32 %v5892, 7
      %v5894 = vsub.s32 %v5891, %v5893
      %v5895 = vrot.slane %v5752, %v5894
      %v5897 = vunpack.c.l.s4 1983009808
      %v5898 = vunpack.c.0.s8 %v5897
      %v5899 = vlaneseq
      %v5900 = vshrl.u32 %v5899, 7
      %v5901 = vsub.s32 %v5898, %v5900
      %v5902 = vrot.slane %v5888, %v5901
      %v5903 = vcombine.high %v5895, %v5895
      %v5904 = vcombine.high %v5902, %v5902
      %v5905 = vcombine.high %v5753, %v5753
      %v5907 = vunpack.c.l.s4 1983009808
      %v5908 = vunpack.c.0.s8 %v5907
      %v5909 = vlaneseq
      %v5910 = vshrl.u32 %v5909, 7
      %v5911 = vsub.s32 %v5908, %v5910
      %v5912 = vrot.slane %v5753, %v5911
      %v5914 = vunpack.c.l.s4 1983009808
      %v5915 = vunpack.c.0.s8 %v5914
      %v5916 = vlaneseq
      %v5917 = vshrl.u32 %v5916, 7
      %v5918 = vsub.s32 %v5915, %v5917
      %v5919 = vrot.slane %v5905, %v5918
      %v5920 = vcombine.high %v5912, %v5912
      %v5921 = vcombine.high %v5919, %v5919
      %v5922 = vcombine.high %v5756, %v5756
      %v5924 = vunpack.c.l.s4 1983009808
      %v5925 = vunpack.c.0.s8 %v5924
      %v5926 = vlaneseq
      %v5927 = vshrl.u32 %v5926, 7
      %v5928 = vsub.s32 %v5925, %v5927
      %v5929 = vrot.slane %v5756, %v5928
      %v5931 = vunpack.c.l.s4 1983009808
      %v5932 = vunpack.c.0.s8 %v5931
      %v5933 = vlaneseq
      %v5934 = vshrl.u32 %v5933, 7
      %v5935 = vsub.s32 %v5932, %v5934
      %v5936 = vrot.slane %v5922, %v5935
      %v5937 = vcombine.high %v5929, %v5929
      %v5938 = vcombine.high %v5936, %v5936
      %v5939 = vcombine.high %v5757, %v5757
      %v5941 = vunpack.c.l.s4 1983009808
      %v5942 = vunpack.c.0.s8 %v5941
      %v5943 = vlaneseq
      %v5944 = vshrl.u32 %v5943, 7
      %v5945 = vsub.s32 %v5942, %v5944
      %v5946 = vrot.slane %v5757, %v5945
      %v5948 = vunpack.c.l.s4 1983009808
      %v5949 = vunpack.c.0.s8 %v5948
      %v5950 = vlaneseq
      %v5951 = vshrl.u32 %v5950, 7
      %v5952 = vsub.s32 %v5949, %v5951
      %v5953 = vrot.slane %v5939, %v5952
      %v5954 = vcombine.high %v5946, %v5946
      %v5955 = vcombine.high %v5953, %v5953
      %v5956 = vcombine.high %v5760, %v5760
      %v5958 = vunpack.c.l.s4 1983009808
      %v5959 = vunpack.c.0.s8 %v5958
      %v5960 = vlaneseq
      %v5961 = vshrl.u32 %v5960, 7
      %v5962 = vsub.s32 %v5959, %v5961
      %v5963 = vrot.slane %v5760, %v5962
      %v5965 = vunpack.c.l.s4 1983009808
      %v5966 = vunpack.c.0.s8 %v5965
      %v5967 = vlaneseq
      %v5968 = vshrl.u32 %v5967, 7
      %v5969 = vsub.s32 %v5966, %v5968
      %v5970 = vrot.slane %v5956, %v5969
      %v5971 = vcombine.high %v5963, %v5963
      %v5972 = vcombine.high %v5970, %v5970
      %v5973 = vcombine.high %v5761, %v5761
      %v5975 = vunpack.c.l.s4 1983009808
      %v5976 = vunpack.c.0.s8 %v5975
      %v5977 = vlaneseq
      %v5978 = vshrl.u32 %v5977, 7
      %v5979 = vsub.s32 %v5976, %v5978
      %v5980 = vrot.slane %v5761, %v5979
      %v5982 = vunpack.c.l.s4 1983009808
      %v5983 = vunpack.c.0.s8 %v5982
      %v5984 = vlaneseq
      %v5985 = vshrl.u32 %v5984, 7
      %v5986 = vsub.s32 %v5983, %v5985
      %v5987 = vrot.slane %v5973, %v5986
      %v5988 = vcombine.high %v5980, %v5980
      %v5989 = vcombine.high %v5987, %v5987
      %v5990 = vcombine.high %v5764, %v5764
      %v5992 = vunpack.c.l.s4 1983009808
      %v5993 = vunpack.c.0.s8 %v5992
      %v5994 = vlaneseq
      %v5995 = vshrl.u32 %v5994, 7
      %v5996 = vsub.s32 %v5993, %v5995
      %v5997 = vrot.slane %v5764, %v5996
      %v5999 = vunpack.c.l.s4 1983009808
      %v6000 = vunpack.c.0.s8 %v5999
      %v6001 = vlaneseq
      %v6002 = vshrl.u32 %v6001, 7
      %v6003 = vsub.s32 %v6000, %v6002
      %v6004 = vrot.slane %v5990, %v6003
      %v6005 = vcombine.high %v5997, %v5997
      %v6006 = vcombine.high %v6004, %v6004
      %v6007 = vcombine.high %v5765, %v5765
      %v6009 = vunpack.c.l.s4 1983009808
      %v6010 = vunpack.c.0.s8 %v6009
      %v6011 = vlaneseq
      %v6012 = vshrl.u32 %v6011, 7
      %v6013 = vsub.s32 %v6010, %v6012
      %v6014 = vrot.slane %v5765, %v6013
      %v6016 = vunpack.c.l.s4 1983009808
      %v6017 = vunpack.c.0.s8 %v6016
      %v6018 = vlaneseq
      %v6019 = vshrl.u32 %v6018, 7
      %v6020 = vsub.s32 %v6017, %v6019
      %v6021 = vrot.slane %v6007, %v6020
      %v6022 = vcombine.high %v6014, %v6014
      %v6023 = vcombine.high %v6021, %v6021
      %v6024 = vcombine.high %v5768, %v5768
      %v6026 = vunpack.c.l.s4 1983009808
      %v6027 = vunpack.c.0.s8 %v6026
      %v6028 = vlaneseq
      %v6029 = vshrl.u32 %v6028, 7
      %v6030 = vsub.s32 %v6027, %v6029
      %v6031 = vrot.slane %v5768, %v6030
      %v6033 = vunpack.c.l.s4 1983009808
      %v6034 = vunpack.c.0.s8 %v6033
      %v6035 = vlaneseq
      %v6036 = vshrl.u32 %v6035, 7
      %v6037 = vsub.s32 %v6034, %v6036
      %v6038 = vrot.slane %v6024, %v6037
      %v6039 = vcombine.high %v6031, %v6031
      %v6040 = vcombine.high %v6038, %v6038
      %v6041 = vcombine.high %v5769, %v5769
      %v6043 = vunpack.c.l.s4 1983009808
      %v6044 = vunpack.c.0.s8 %v6043
      %v6045 = vlaneseq
      %v6046 = vshrl.u32 %v6045, 7
      %v6047 = vsub.s32 %v6044, %v6046
      %v6048 = vrot.slane %v5769, %v6047
      %v6050 = vunpack.c.l.s4 1983009808
      %v6051 = vunpack.c.0.s8 %v6050
      %v6052 = vlaneseq
      %v6053 = vshrl.u32 %v6052, 7
      %v6054 = vsub.s32 %v6051, %v6053
      %v6055 = vrot.slane %v6041, %v6054
      %v6056 = vcombine.high %v6048, %v6048
      %v6057 = vcombine.high %v6055, %v6055
      %v6072 = vcombine.high %v5742, %v5742
      %v6074 = vunpack.c.l.s4 1983009808
      %v6075 = vunpack.c.0.s8 %v6074
      %v6076 = vlaneseq
      %v6077 = vshrl.u32 %v6076, 7
      %v6078 = vsub.s32 %v6075, %v6077
      %v6079 = vrot.slane %v5742, %v6078
      %v6081 = vunpack.c.l.s4 1983009808
      %v6082 = vunpack.c.0.s8 %v6081
      %v6083 = vlaneseq
      %v6084 = vshrl.u32 %v6083, 7
      %v6085 = vsub.s32 %v6082, %v6084
      %v6086 = vrot.slane %v6072, %v6085
      %v6087 = vcombine.high %v6079, %v6079
      %v6088 = vcombine.high %v6086, %v6086
      %v6089 = vcombine.high %v5743, %v5743
      %v6091 = vunpack.c.l.s4 1983009808
      %v6092 = vunpack.c.0.s8 %v6091
      %v6093 = vlaneseq
      %v6094 = vshrl.u32 %v6093, 7
      %v6095 = vsub.s32 %v6092, %v6094
      %v6096 = vrot.slane %v5743, %v6095
      %v6098 = vunpack.c.l.s4 1983009808
      %v6099 = vunpack.c.0.s8 %v6098
      %v6100 = vlaneseq
      %v6101 = vshrl.u32 %v6100, 7
      %v6102 = vsub.s32 %v6099, %v6101
      %v6103 = vrot.slane %v6089, %v6102
      %v6104 = vcombine.high %v6096, %v6096
      %v6105 = vcombine.high %v6103, %v6103
      %v6106 = vcombine.high %v5746, %v5746
      %v6108 = vunpack.c.l.s4 1983009808
      %v6109 = vunpack.c.0.s8 %v6108
      %v6110 = vlaneseq
      %v6111 = vshrl.u32 %v6110, 7
      %v6112 = vsub.s32 %v6109, %v6111
      %v6113 = vrot.slane %v5746, %v6112
      %v6115 = vunpack.c.l.s4 1983009808
      %v6116 = vunpack.c.0.s8 %v6115
      %v6117 = vlaneseq
      %v6118 = vshrl.u32 %v6117, 7
      %v6119 = vsub.s32 %v6116, %v6118
      %v6120 = vrot.slane %v6106, %v6119
      %v6121 = vcombine.high %v6113, %v6113
      %v6122 = vcombine.high %v6120, %v6120
      %v6123 = vcombine.high %v5747, %v5747
      %v6125 = vunpack.c.l.s4 1983009808
      %v6126 = vunpack.c.0.s8 %v6125
      %v6127 = vlaneseq
      %v6128 = vshrl.u32 %v6127, 7
      %v6129 = vsub.s32 %v6126, %v6128
      %v6130 = vrot.slane %v5747, %v6129
      %v6132 = vunpack.c.l.s4 1983009808
      %v6133 = vunpack.c.0.s8 %v6132
      %v6134 = vlaneseq
      %v6135 = vshrl.u32 %v6134, 7
      %v6136 = vsub.s32 %v6133, %v6135
      %v6137 = vrot.slane %v6123, %v6136
      %v6138 = vcombine.high %v6130, %v6130
      %v6139 = vcombine.high %v6137, %v6137
      %v6140 = vcombine.high %v5750, %v5750
      %v6142 = vunpack.c.l.s4 1983009808
      %v6143 = vunpack.c.0.s8 %v6142
      %v6144 = vlaneseq
      %v6145 = vshrl.u32 %v6144, 7
      %v6146 = vsub.s32 %v6143, %v6145
      %v6147 = vrot.slane %v5750, %v6146
      %v6149 = vunpack.c.l.s4 1983009808
      %v6150 = vunpack.c.0.s8 %v6149
      %v6151 = vlaneseq
      %v6152 = vshrl.u32 %v6151, 7
      %v6153 = vsub.s32 %v6150, %v6152
      %v6154 = vrot.slane %v6140, %v6153
      %v6155 = vcombine.high %v6147, %v6147
      %v6156 = vcombine.high %v6154, %v6154
      %v6157 = vcombine.high %v5751, %v5751
      %v6159 = vunpack.c.l.s4 1983009808
      %v6160 = vunpack.c.0.s8 %v6159
      %v6161 = vlaneseq
      %v6162 = vshrl.u32 %v6161, 7
      %v6163 = vsub.s32 %v6160, %v6162
      %v6164 = vrot.slane %v5751, %v6163
      %v6166 = vunpack.c.l.s4 1983009808
      %v6167 = vunpack.c.0.s8 %v6166
      %v6168 = vlaneseq
      %v6169 = vshrl.u32 %v6168, 7
      %v6170 = vsub.s32 %v6167, %v6169
      %v6171 = vrot.slane %v6157, %v6170
      %v6172 = vcombine.high %v6164, %v6164
      %v6173 = vcombine.high %v6171, %v6171
      %v6174 = vcombine.high %v5754, %v5754
      %v6176 = vunpack.c.l.s4 1983009808
      %v6177 = vunpack.c.0.s8 %v6176
      %v6178 = vlaneseq
      %v6179 = vshrl.u32 %v6178, 7
      %v6180 = vsub.s32 %v6177, %v6179
      %v6181 = vrot.slane %v5754, %v6180
      %v6183 = vunpack.c.l.s4 1983009808
      %v6184 = vunpack.c.0.s8 %v6183
      %v6185 = vlaneseq
      %v6186 = vshrl.u32 %v6185, 7
      %v6187 = vsub.s32 %v6184, %v6186
      %v6188 = vrot.slane %v6174, %v6187
      %v6189 = vcombine.high %v6181, %v6181
      %v6190 = vcombine.high %v6188, %v6188
      %v6191 = vcombine.high %v5755, %v5755
      %v6193 = vunpack.c.l.s4 1983009808
      %v6194 = vunpack.c.0.s8 %v6193
      %v6195 = vlaneseq
      %v6196 = vshrl.u32 %v6195, 7
      %v6197 = vsub.s32 %v6194, %v6196
      %v6198 = vrot.slane %v5755, %v6197
      %v6200 = vunpack.c.l.s4 1983009808
      %v6201 = vunpack.c.0.s8 %v6200
      %v6202 = vlaneseq
      %v6203 = vshrl.u32 %v6202, 7
      %v6204 = vsub.s32 %v6201, %v6203
      %v6205 = vrot.slane %v6191, %v6204
      %v6206 = vcombine.high %v6198, %v6198
      %v6207 = vcombine.high %v6205, %v6205
      %v6208 = vcombine.high %v5758, %v5758
      %v6210 = vunpack.c.l.s4 1983009808
      %v6211 = vunpack.c.0.s8 %v6210
      %v6212 = vlaneseq
      %v6213 = vshrl.u32 %v6212, 7
      %v6214 = vsub.s32 %v6211, %v6213
      %v6215 = vrot.slane %v5758, %v6214
      %v6217 = vunpack.c.l.s4 1983009808
      %v6218 = vunpack.c.0.s8 %v6217
      %v6219 = vlaneseq
      %v6220 = vshrl.u32 %v6219, 7
      %v6221 = vsub.s32 %v6218, %v6220
      %v6222 = vrot.slane %v6208, %v6221
      %v6223 = vcombine.high %v6215, %v6215
      %v6224 = vcombine.high %v6222, %v6222
      %v6225 = vcombine.high %v5759, %v5759
      %v6227 = vunpack.c.l.s4 1983009808
      %v6228 = vunpack.c.0.s8 %v6227
      %v6229 = vlaneseq
      %v6230 = vshrl.u32 %v6229, 7
      %v6231 = vsub.s32 %v6228, %v6230
      %v6232 = vrot.slane %v5759, %v6231
      %v6234 = vunpack.c.l.s4 1983009808
      %v6235 = vunpack.c.0.s8 %v6234
      %v6236 = vlaneseq
      %v6237 = vshrl.u32 %v6236, 7
      %v6238 = vsub.s32 %v6235, %v6237
      %v6239 = vrot.slane %v6225, %v6238
      %v6240 = vcombine.high %v6232, %v6232
      %v6241 = vcombine.high %v6239, %v6239
      %v6242 = vcombine.high %v5762, %v5762
      %v6244 = vunpack.c.l.s4 1983009808
      %v6245 = vunpack.c.0.s8 %v6244
      %v6246 = vlaneseq
      %v6247 = vshrl.u32 %v6246, 7
      %v6248 = vsub.s32 %v6245, %v6247
      %v6249 = vrot.slane %v5762, %v6248
      %v6251 = vunpack.c.l.s4 1983009808
      %v6252 = vunpack.c.0.s8 %v6251
      %v6253 = vlaneseq
      %v6254 = vshrl.u32 %v6253, 7
      %v6255 = vsub.s32 %v6252, %v6254
      %v6256 = vrot.slane %v6242, %v6255
      %v6257 = vcombine.high %v6249, %v6249
      %v6258 = vcombine.high %v6256, %v6256
      %v6259 = vcombine.high %v5763, %v5763
      %v6261 = vunpack.c.l.s4 1983009808
      %v6262 = vunpack.c.0.s8 %v6261
      %v6263 = vlaneseq
      %v6264 = vshrl.u32 %v6263, 7
      %v6265 = vsub.s32 %v6262, %v6264
      %v6266 = vrot.slane %v5763, %v6265
      %v6268 = vunpack.c.l.s4 1983009808
      %v6269 = vunpack.c.0.s8 %v6268
      %v6270 = vlaneseq
      %v6271 = vshrl.u32 %v6270, 7
      %v6272 = vsub.s32 %v6269, %v6271
      %v6273 = vrot.slane %v6259, %v6272
      %v6274 = vcombine.high %v6266, %v6266
      %v6275 = vcombine.high %v6273, %v6273
      %v6276 = vcombine.high %v5766, %v5766
      %v6278 = vunpack.c.l.s4 1983009808
      %v6279 = vunpack.c.0.s8 %v6278
      %v6280 = vlaneseq
      %v6281 = vshrl.u32 %v6280, 7
      %v6282 = vsub.s32 %v6279, %v6281
      %v6283 = vrot.slane %v5766, %v6282
      %v6285 = vunpack.c.l.s4 1983009808
      %v6286 = vunpack.c.0.s8 %v6285
      %v6287 = vlaneseq
      %v6288 = vshrl.u32 %v6287, 7
      %v6289 = vsub.s32 %v6286, %v6288
      %v6290 = vrot.slane %v6276, %v6289
      %v6291 = vcombine.high %v6283, %v6283
      %v6292 = vcombine.high %v6290, %v6290
      %v6293 = vcombine.high %v5767, %v5767
      %v6295 = vunpack.c.l.s4 1983009808
      %v6296 = vunpack.c.0.s8 %v6295
      %v6297 = vlaneseq
      %v6298 = vshrl.u32 %v6297, 7
      %v6299 = vsub.s32 %v6296, %v6298
      %v6300 = vrot.slane %v5767, %v6299
      %v6302 = vunpack.c.l.s4 1983009808
      %v6303 = vunpack.c.0.s8 %v6302
      %v6304 = vlaneseq
      %v6305 = vshrl.u32 %v6304, 7
      %v6306 = vsub.s32 %v6303, %v6305
      %v6307 = vrot.slane %v6293, %v6306
      %v6308 = vcombine.high %v6300, %v6300
      %v6309 = vcombine.high %v6307, %v6307
      %v6310 = vlaneseq
      %v6311 = vshrl.u32 %v6310, 7
      %v6312 = vsub.s32 0, %v6311
      %v6313 = vrot.slane %v5793, %v6312
      %v6314 = vlaneseq
      %v6315 = vshrl.u32 %v6314, 7
      %v6316 = vsub.s32 0, %v6315
      %v6317 = vrot.slane %v5801, %v6316
      %v6318 = vlaneseq
      %v6319 = vshrl.u32 %v6318, 7
      %v6320 = vsub.s32 0, %v6319
      %v6321 = vrot.slane %v5800, %v6320
      %v6322 = vlaneseq
      %v6323 = vshrl.u32 %v6322, 7
      %v6324 = vsub.s32 0, %v6323
      %v6325 = vrot.slane %v5802, %v6324
      %v6326 = vlaneseq
      %v6327 = vshrl.u32 %v6326, 7
      %v6328 = vsub.s32 0, %v6327
      %v6329 = vrot.slane %v5810, %v6328
      %v6330 = vlaneseq
      %v6331 = vshrl.u32 %v6330, 7
      %v6332 = vsub.s32 0, %v6331
      %v6333 = vrot.slane %v5818, %v6332
      %v6334 = vlaneseq
      %v6335 = vshrl.u32 %v6334, 7
      %v6336 = vsub.s32 0, %v6335
      %v6337 = vrot.slane %v5817, %v6336
      %v6338 = vlaneseq
      %v6339 = vshrl.u32 %v6338, 7
      %v6340 = vsub.s32 0, %v6339
      %v6341 = vrot.slane %v5827, %v6340
      %v6342 = vlaneseq
      %v6343 = vshrl.u32 %v6342, 7
      %v6344 = vsub.s32 0, %v6343
      %v6345 = vrot.slane %v5835, %v6344
      %v6346 = vlaneseq
      %v6347 = vshrl.u32 %v6346, 7
      %v6348 = vsub.s32 0, %v6347
      %v6349 = vrot.slane %v5834, %v6348
      %v6350 = vlaneseq
      %v6351 = vshrl.u32 %v6350, 7
      %v6352 = vsub.s32 0, %v6351
      %v6353 = vrot.slane %v5836, %v6352
      %v6354 = vlaneseq
      %v6355 = vshrl.u32 %v6354, 7
      %v6356 = vsub.s32 0, %v6355
      %v6357 = vrot.slane %v5844, %v6356
      %v6358 = vlaneseq
      %v6359 = vshrl.u32 %v6358, 7
      %v6360 = vsub.s32 0, %v6359
      %v6361 = vrot.slane %v5852, %v6360
      %v6362 = vlaneseq
      %v6363 = vshrl.u32 %v6362, 7
      %v6364 = vsub.s32 0, %v6363
      %v6365 = vrot.slane %v5851, %v6364
      %v6366 = vlaneseq
      %v6367 = vshrl.u32 %v6366, 7
      %v6368 = vsub.s32 0, %v6367
      %v6369 = vrot.slane %v5861, %v6368
      %v6370 = vlaneseq
      %v6371 = vshrl.u32 %v6370, 7
      %v6372 = vsub.s32 0, %v6371
      %v6373 = vrot.slane %v5869, %v6372
      %v6374 = vlaneseq
      %v6375 = vshrl.u32 %v6374, 7
      %v6376 = vsub.s32 0, %v6375
      %v6377 = vrot.slane %v5868, %v6376
      %v6378 = vlaneseq
      %v6379 = vshrl.u32 %v6378, 7
      %v6380 = vsub.s32 0, %v6379
      %v6381 = vrot.slane %v5870, %v6380
      %v6382 = vlaneseq
      %v6383 = vshrl.u32 %v6382, 7
      %v6384 = vsub.s32 0, %v6383
      %v6385 = vrot.slane %v5878, %v6384
      %v6386 = vlaneseq
      %v6387 = vshrl.u32 %v6386, 7
      %v6388 = vsub.s32 0, %v6387
      %v6389 = vrot.slane %v5886, %v6388
      %v6390 = vlaneseq
      %v6391 = vshrl.u32 %v6390, 7
      %v6392 = vsub.s32 0, %v6391
      %v6393 = vrot.slane %v5885, %v6392
      %v6394 = vlaneseq
      %v6395 = vshrl.u32 %v6394, 7
      %v6396 = vsub.s32 0, %v6395
      %v6397 = vrot.slane %v5895, %v6396
      %v6398 = vlaneseq
      %v6399 = vshrl.u32 %v6398, 7
      %v6400 = vsub.s32 0, %v6399
      %v6401 = vrot.slane %v5903, %v6400
      %v6402 = vlaneseq
      %v6403 = vshrl.u32 %v6402, 7
      %v6404 = vsub.s32 0, %v6403
      %v6405 = vrot.slane %v5902, %v6404
      %v6406 = vlaneseq
      %v6407 = vshrl.u32 %v6406, 7
      %v6408 = vsub.s32 0, %v6407
      %v6409 = vrot.slane %v5904, %v6408
      %v6410 = vlaneseq
      %v6411 = vshrl.u32 %v6410, 7
      %v6412 = vsub.s32 0, %v6411
      %v6413 = vrot.slane %v5912, %v6412
      %v6414 = vlaneseq
      %v6415 = vshrl.u32 %v6414, 7
      %v6416 = vsub.s32 0, %v6415
      %v6417 = vrot.slane %v5920, %v6416
      %v6418 = vlaneseq
      %v6419 = vshrl.u32 %v6418, 7
      %v6420 = vsub.s32 0, %v6419
      %v6421 = vrot.slane %v5919, %v6420
      %v6422 = vlaneseq
      %v6423 = vshrl.u32 %v6422, 7
      %v6424 = vsub.s32 0, %v6423
      %v6425 = vrot.slane %v5929, %v6424
      %v6426 = vlaneseq
      %v6427 = vshrl.u32 %v6426, 7
      %v6428 = vsub.s32 0, %v6427
      %v6429 = vrot.slane %v5937, %v6428
      %v6430 = vlaneseq
      %v6431 = vshrl.u32 %v6430, 7
      %v6432 = vsub.s32 0, %v6431
      %v6433 = vrot.slane %v5936, %v6432
      %v6434 = vlaneseq
      %v6435 = vshrl.u32 %v6434, 7
      %v6436 = vsub.s32 0, %v6435
      %v6437 = vrot.slane %v5938, %v6436
      %v6438 = vlaneseq
      %v6439 = vshrl.u32 %v6438, 7
      %v6440 = vsub.s32 0, %v6439
      %v6441 = vrot.slane %v5946, %v6440
      %v6442 = vlaneseq
      %v6443 = vshrl.u32 %v6442, 7
      %v6444 = vsub.s32 0, %v6443
      %v6445 = vrot.slane %v5954, %v6444
      %v6446 = vlaneseq
      %v6447 = vshrl.u32 %v6446, 7
      %v6448 = vsub.s32 0, %v6447
      %v6449 = vrot.slane %v5953, %v6448
      %v6450 = vlaneseq
      %v6451 = vshrl.u32 %v6450, 7
      %v6452 = vsub.s32 0, %v6451
      %v6453 = vrot.slane %v5963, %v6452
      %v6454 = vlaneseq
      %v6455 = vshrl.u32 %v6454, 7
      %v6456 = vsub.s32 0, %v6455
      %v6457 = vrot.slane %v5971, %v6456
      %v6458 = vlaneseq
      %v6459 = vshrl.u32 %v6458, 7
      %v6460 = vsub.s32 0, %v6459
      %v6461 = vrot.slane %v5970, %v6460
      %v6462 = vlaneseq
      %v6463 = vshrl.u32 %v6462, 7
      %v6464 = vsub.s32 0, %v6463
      %v6465 = vrot.slane %v5972, %v6464
      %v6466 = vlaneseq
      %v6467 = vshrl.u32 %v6466, 7
      %v6468 = vsub.s32 0, %v6467
      %v6469 = vrot.slane %v5980, %v6468
      %v6470 = vlaneseq
      %v6471 = vshrl.u32 %v6470, 7
      %v6472 = vsub.s32 0, %v6471
      %v6473 = vrot.slane %v5988, %v6472
      %v6474 = vlaneseq
      %v6475 = vshrl.u32 %v6474, 7
      %v6476 = vsub.s32 0, %v6475
      %v6477 = vrot.slane %v5987, %v6476
      %v6478 = vlaneseq
      %v6479 = vshrl.u32 %v6478, 7
      %v6480 = vsub.s32 0, %v6479
      %v6481 = vrot.slane %v5997, %v6480
      %v6482 = vlaneseq
      %v6483 = vshrl.u32 %v6482, 7
      %v6484 = vsub.s32 0, %v6483
      %v6485 = vrot.slane %v6005, %v6484
      %v6486 = vlaneseq
      %v6487 = vshrl.u32 %v6486, 7
      %v6488 = vsub.s32 0, %v6487
      %v6489 = vrot.slane %v6004, %v6488
      %v6490 = vlaneseq
      %v6491 = vshrl.u32 %v6490, 7
      %v6492 = vsub.s32 0, %v6491
      %v6493 = vrot.slane %v6006, %v6492
      %v6494 = vlaneseq
      %v6495 = vshrl.u32 %v6494, 7
      %v6496 = vsub.s32 0, %v6495
      %v6497 = vrot.slane %v6014, %v6496
      %v6498 = vlaneseq
      %v6499 = vshrl.u32 %v6498, 7
      %v6500 = vsub.s32 0, %v6499
      %v6501 = vrot.slane %v6022, %v6500
      %v6502 = vlaneseq
      %v6503 = vshrl.u32 %v6502, 7
      %v6504 = vsub.s32 0, %v6503
      %v6505 = vrot.slane %v6021, %v6504
      %v6506 = vsel %vm1330, %v6317, %v6313
      %v6507 = vsel %vm1332, %v6321, %v6506
      %v6508 = vsel %vm1334, %v6325, %v6507
      %v6509 = vsel %vm1336, %v6329, %v6508
      %v6510 = vsel %vm1338, %v6333, %v6509
      %v6511 = vsel %vm1340, %v6337, %v6510
      %v6512 = vsel %vm1330, %v6345, %v6341
      %v6513 = vsel %vm1332, %v6349, %v6512
      %v6514 = vsel %vm1334, %v6353, %v6513
      %v6515 = vsel %vm1336, %v6357, %v6514
      %v6516 = vsel %vm1338, %v6361, %v6515
      %v6517 = vsel %vm1340, %v6365, %v6516
      %v6518 = vsel %vm1330, %v6373, %v6369
      %v6519 = vsel %vm1332, %v6377, %v6518
      %v6520 = vsel %vm1334, %v6381, %v6519
      %v6521 = vsel %vm1336, %v6385, %v6520
      %v6522 = vsel %vm1338, %v6389, %v6521
      %v6523 = vsel %vm1340, %v6393, %v6522
      %v6524 = vsel %vm1330, %v6401, %v6397
      %v6525 = vsel %vm1332, %v6405, %v6524
      %v6526 = vsel %vm1334, %v6409, %v6525
      %v6527 = vsel %vm1336, %v6413, %v6526
      %v6528 = vsel %vm1338, %v6417, %v6527
      %v6529 = vsel %vm1340, %v6421, %v6528
      %v6530 = vsel %vm1330, %v6429, %v6425
      %v6531 = vsel %vm1332, %v6433, %v6530
      %v6532 = vsel %vm1334, %v6437, %v6531
      %v6533 = vsel %vm1336, %v6441, %v6532
      %v6534 = vsel %vm1338, %v6445, %v6533
      %v6535 = vsel %vm1340, %v6449, %v6534
      %v6536 = vsel %vm1330, %v6457, %v6453
      %v6537 = vsel %vm1332, %v6461, %v6536
      %v6538 = vsel %vm1334, %v6465, %v6537
      %v6539 = vsel %vm1336, %v6469, %v6538
      %v6540 = vsel %vm1338, %v6473, %v6539
      %v6541 = vsel %vm1340, %v6477, %v6540
      %v6542 = vsel %vm1330, %v6485, %v6481
      %v6543 = vsel %vm1332, %v6489, %v6542
      %v6544 = vsel %vm1334, %v6493, %v6543
      %v6545 = vsel %vm1336, %v6497, %v6544
      %v6546 = vsel %vm1338, %v6501, %v6545
      %v6547 = vsel %vm1340, %v6505, %v6546
      %v6555 = vlaneseq
      %v6556 = vshrl.u32 %v6555, 7
      %v6557 = vsub.s32 1, %v6556
      %v6558 = vrot.slane %v5793, %v6557
      %v6559 = vlaneseq
      %v6560 = vshrl.u32 %v6559, 7
      %v6561 = vsub.s32 1, %v6560
      %v6562 = vrot.slane %v5801, %v6561
      %v6563 = vlaneseq
      %v6564 = vshrl.u32 %v6563, 7
      %v6565 = vsub.s32 1, %v6564
      %v6566 = vrot.slane %v5800, %v6565
      %v6567 = vlaneseq
      %v6568 = vshrl.u32 %v6567, 7
      %v6569 = vsub.s32 1, %v6568
      %v6570 = vrot.slane %v5802, %v6569
      %v6571 = vlaneseq
      %v6572 = vshrl.u32 %v6571, 7
      %v6573 = vsub.s32 1, %v6572
      %v6574 = vrot.slane %v5810, %v6573
      %v6575 = vlaneseq
      %v6576 = vshrl.u32 %v6575, 7
      %v6577 = vsub.s32 1, %v6576
      %v6578 = vrot.slane %v5818, %v6577
      %v6579 = vlaneseq
      %v6580 = vshrl.u32 %v6579, 7
      %v6581 = vsub.s32 1, %v6580
      %v6582 = vrot.slane %v5817, %v6581
      %v6583 = vlaneseq
      %v6584 = vshrl.u32 %v6583, 7
      %v6585 = vsub.s32 1, %v6584
      %v6586 = vrot.slane %v5827, %v6585
      %v6587 = vlaneseq
      %v6588 = vshrl.u32 %v6587, 7
      %v6589 = vsub.s32 1, %v6588
      %v6590 = vrot.slane %v5835, %v6589
      %v6591 = vlaneseq
      %v6592 = vshrl.u32 %v6591, 7
      %v6593 = vsub.s32 1, %v6592
      %v6594 = vrot.slane %v5834, %v6593
      %v6595 = vlaneseq
      %v6596 = vshrl.u32 %v6595, 7
      %v6597 = vsub.s32 1, %v6596
      %v6598 = vrot.slane %v5836, %v6597
      %v6599 = vlaneseq
      %v6600 = vshrl.u32 %v6599, 7
      %v6601 = vsub.s32 1, %v6600
      %v6602 = vrot.slane %v5844, %v6601
      %v6603 = vlaneseq
      %v6604 = vshrl.u32 %v6603, 7
      %v6605 = vsub.s32 1, %v6604
      %v6606 = vrot.slane %v5852, %v6605
      %v6607 = vlaneseq
      %v6608 = vshrl.u32 %v6607, 7
      %v6609 = vsub.s32 1, %v6608
      %v6610 = vrot.slane %v5851, %v6609
      %v6611 = vlaneseq
      %v6612 = vshrl.u32 %v6611, 7
      %v6613 = vsub.s32 1, %v6612
      %v6614 = vrot.slane %v5861, %v6613
      %v6615 = vlaneseq
      %v6616 = vshrl.u32 %v6615, 7
      %v6617 = vsub.s32 1, %v6616
      %v6618 = vrot.slane %v5869, %v6617
      %v6619 = vlaneseq
      %v6620 = vshrl.u32 %v6619, 7
      %v6621 = vsub.s32 1, %v6620
      %v6622 = vrot.slane %v5868, %v6621
      %v6623 = vlaneseq
      %v6624 = vshrl.u32 %v6623, 7
      %v6625 = vsub.s32 1, %v6624
      %v6626 = vrot.slane %v5870, %v6625
      %v6627 = vlaneseq
      %v6628 = vshrl.u32 %v6627, 7
      %v6629 = vsub.s32 1, %v6628
      %v6630 = vrot.slane %v5878, %v6629
      %v6631 = vlaneseq
      %v6632 = vshrl.u32 %v6631, 7
      %v6633 = vsub.s32 1, %v6632
      %v6634 = vrot.slane %v5886, %v6633
      %v6635 = vlaneseq
      %v6636 = vshrl.u32 %v6635, 7
      %v6637 = vsub.s32 1, %v6636
      %v6638 = vrot.slane %v5885, %v6637
      %v6639 = vlaneseq
      %v6640 = vshrl.u32 %v6639, 7
      %v6641 = vsub.s32 1, %v6640
      %v6642 = vrot.slane %v5895, %v6641
      %v6643 = vlaneseq
      %v6644 = vshrl.u32 %v6643, 7
      %v6645 = vsub.s32 1, %v6644
      %v6646 = vrot.slane %v5903, %v6645
      %v6647 = vlaneseq
      %v6648 = vshrl.u32 %v6647, 7
      %v6649 = vsub.s32 1, %v6648
      %v6650 = vrot.slane %v5902, %v6649
      %v6651 = vlaneseq
      %v6652 = vshrl.u32 %v6651, 7
      %v6653 = vsub.s32 1, %v6652
      %v6654 = vrot.slane %v5904, %v6653
      %v6655 = vlaneseq
      %v6656 = vshrl.u32 %v6655, 7
      %v6657 = vsub.s32 1, %v6656
      %v6658 = vrot.slane %v5912, %v6657
      %v6659 = vlaneseq
      %v6660 = vshrl.u32 %v6659, 7
      %v6661 = vsub.s32 1, %v6660
      %v6662 = vrot.slane %v5920, %v6661
      %v6663 = vlaneseq
      %v6664 = vshrl.u32 %v6663, 7
      %v6665 = vsub.s32 1, %v6664
      %v6666 = vrot.slane %v5919, %v6665
      %v6667 = vlaneseq
      %v6668 = vshrl.u32 %v6667, 7
      %v6669 = vsub.s32 1, %v6668
      %v6670 = vrot.slane %v5929, %v6669
      %v6671 = vlaneseq
      %v6672 = vshrl.u32 %v6671, 7
      %v6673 = vsub.s32 1, %v6672
      %v6674 = vrot.slane %v5937, %v6673
      %v6675 = vlaneseq
      %v6676 = vshrl.u32 %v6675, 7
      %v6677 = vsub.s32 1, %v6676
      %v6678 = vrot.slane %v5936, %v6677
      %v6679 = vlaneseq
      %v6680 = vshrl.u32 %v6679, 7
      %v6681 = vsub.s32 1, %v6680
      %v6682 = vrot.slane %v5938, %v6681
      %v6683 = vlaneseq
      %v6684 = vshrl.u32 %v6683, 7
      %v6685 = vsub.s32 1, %v6684
      %v6686 = vrot.slane %v5946, %v6685
      %v6687 = vlaneseq
      %v6688 = vshrl.u32 %v6687, 7
      %v6689 = vsub.s32 1, %v6688
      %v6690 = vrot.slane %v5954, %v6689
      %v6691 = vlaneseq
      %v6692 = vshrl.u32 %v6691, 7
      %v6693 = vsub.s32 1, %v6692
      %v6694 = vrot.slane %v5953, %v6693
      %v6695 = vlaneseq
      %v6696 = vshrl.u32 %v6695, 7
      %v6697 = vsub.s32 1, %v6696
      %v6698 = vrot.slane %v5963, %v6697
      %v6699 = vlaneseq
      %v6700 = vshrl.u32 %v6699, 7
      %v6701 = vsub.s32 1, %v6700
      %v6702 = vrot.slane %v5971, %v6701
      %v6703 = vlaneseq
      %v6704 = vshrl.u32 %v6703, 7
      %v6705 = vsub.s32 1, %v6704
      %v6706 = vrot.slane %v5970, %v6705
      %v6707 = vlaneseq
      %v6708 = vshrl.u32 %v6707, 7
      %v6709 = vsub.s32 1, %v6708
      %v6710 = vrot.slane %v5972, %v6709
      %v6711 = vlaneseq
      %v6712 = vshrl.u32 %v6711, 7
      %v6713 = vsub.s32 1, %v6712
      %v6714 = vrot.slane %v5980, %v6713
      %v6715 = vlaneseq
      %v6716 = vshrl.u32 %v6715, 7
      %v6717 = vsub.s32 1, %v6716
      %v6718 = vrot.slane %v5988, %v6717
      %v6719 = vlaneseq
      %v6720 = vshrl.u32 %v6719, 7
      %v6721 = vsub.s32 1, %v6720
      %v6722 = vrot.slane %v5987, %v6721
      %v6723 = vlaneseq
      %v6724 = vshrl.u32 %v6723, 7
      %v6725 = vsub.s32 1, %v6724
      %v6726 = vrot.slane %v5997, %v6725
      %v6727 = vlaneseq
      %v6728 = vshrl.u32 %v6727, 7
      %v6729 = vsub.s32 1, %v6728
      %v6730 = vrot.slane %v6005, %v6729
      %v6731 = vlaneseq
      %v6732 = vshrl.u32 %v6731, 7
      %v6733 = vsub.s32 1, %v6732
      %v6734 = vrot.slane %v6004, %v6733
      %v6735 = vlaneseq
      %v6736 = vshrl.u32 %v6735, 7
      %v6737 = vsub.s32 1, %v6736
      %v6738 = vrot.slane %v6006, %v6737
      %v6739 = vlaneseq
      %v6740 = vshrl.u32 %v6739, 7
      %v6741 = vsub.s32 1, %v6740
      %v6742 = vrot.slane %v6014, %v6741
      %v6743 = vlaneseq
      %v6744 = vshrl.u32 %v6743, 7
      %v6745 = vsub.s32 1, %v6744
      %v6746 = vrot.slane %v6022, %v6745
      %v6747 = vlaneseq
      %v6748 = vshrl.u32 %v6747, 7
      %v6749 = vsub.s32 1, %v6748
      %v6750 = vrot.slane %v6021, %v6749
      %v6751 = vsel %vm1330, %v6562, %v6558
      %v6752 = vsel %vm1332, %v6566, %v6751
      %v6753 = vsel %vm1334, %v6570, %v6752
      %v6754 = vsel %vm1336, %v6574, %v6753
      %v6755 = vsel %vm1338, %v6578, %v6754
      %v6756 = vsel %vm1340, %v6582, %v6755
      %v6757 = vsel %vm1330, %v6590, %v6586
      %v6758 = vsel %vm1332, %v6594, %v6757
      %v6759 = vsel %vm1334, %v6598, %v6758
      %v6760 = vsel %vm1336, %v6602, %v6759
      %v6761 = vsel %vm1338, %v6606, %v6760
      %v6762 = vsel %vm1340, %v6610, %v6761
      %v6763 = vsel %vm1330, %v6618, %v6614
      %v6764 = vsel %vm1332, %v6622, %v6763
      %v6765 = vsel %vm1334, %v6626, %v6764
      %v6766 = vsel %vm1336, %v6630, %v6765
      %v6767 = vsel %vm1338, %v6634, %v6766
      %v6768 = vsel %vm1340, %v6638, %v6767
      %v6769 = vsel %vm1330, %v6646, %v6642
      %v6770 = vsel %vm1332, %v6650, %v6769
      %v6771 = vsel %vm1334, %v6654, %v6770
      %v6772 = vsel %vm1336, %v6658, %v6771
      %v6773 = vsel %vm1338, %v6662, %v6772
      %v6774 = vsel %vm1340, %v6666, %v6773
      %v6775 = vsel %vm1330, %v6674, %v6670
      %v6776 = vsel %vm1332, %v6678, %v6775
      %v6777 = vsel %vm1334, %v6682, %v6776
      %v6778 = vsel %vm1336, %v6686, %v6777
      %v6779 = vsel %vm1338, %v6690, %v6778
      %v6780 = vsel %vm1340, %v6694, %v6779
      %v6781 = vsel %vm1330, %v6702, %v6698
      %v6782 = vsel %vm1332, %v6706, %v6781
      %v6783 = vsel %vm1334, %v6710, %v6782
      %v6784 = vsel %vm1336, %v6714, %v6783
      %v6785 = vsel %vm1338, %v6718, %v6784
      %v6786 = vsel %vm1340, %v6722, %v6785
      %v6787 = vsel %vm1330, %v6730, %v6726
      %v6788 = vsel %vm1332, %v6734, %v6787
      %v6789 = vsel %vm1334, %v6738, %v6788
      %v6790 = vsel %vm1336, %v6742, %v6789
      %v6791 = vsel %vm1338, %v6746, %v6790
      %v6792 = vsel %vm1340, %v6750, %v6791
      %6793 = vrot.lane.b32.xlu0 %v6756, 8
      %v6794 = vpop.permute.xlu0 %6793
      %6795 = vrot.lane.b32.xlu0 %v6762, 8
      %v6796 = vpop.permute.xlu0 %6795
      %6797 = vrot.lane.b32.xlu0 %v6768, 8
      %v6798 = vpop.permute.xlu0 %6797
      %6799 = vrot.lane.b32.xlu0 %v6774, 8
      %v6800 = vpop.permute.xlu0 %6799
      %6801 = vrot.lane.b32.xlu0 %v6780, 8
      %v6802 = vpop.permute.xlu0 %6801
      %6803 = vrot.lane.b32.xlu0 %v6786, 8
      %v6804 = vpop.permute.xlu0 %6803
      %6805 = vrot.lane.b32.xlu0 %v6792, 8
      %v6806 = vpop.permute.xlu0 %6805
      %v6814 = vlaneseq
      %v6815 = vshrl.u32 %v6814, 7
      %v6816 = vsub.s32 0, %v6815
      %v6817 = vrot.slane %v5819, %v6816
      %v6818 = vlaneseq
      %v6819 = vshrl.u32 %v6818, 7
      %v6820 = vsub.s32 0, %v6819
      %v6821 = vrot.slane %v5853, %v6820
      %v6822 = vlaneseq
      %v6823 = vshrl.u32 %v6822, 7
      %v6824 = vsub.s32 0, %v6823
      %v6825 = vrot.slane %v5887, %v6824
      %v6826 = vlaneseq
      %v6827 = vshrl.u32 %v6826, 7
      %v6828 = vsub.s32 0, %v6827
      %v6829 = vrot.slane %v5921, %v6828
      %v6830 = vlaneseq
      %v6831 = vshrl.u32 %v6830, 7
      %v6832 = vsub.s32 0, %v6831
      %v6833 = vrot.slane %v5955, %v6832
      %v6834 = vlaneseq
      %v6835 = vshrl.u32 %v6834, 7
      %v6836 = vsub.s32 0, %v6835
      %v6837 = vrot.slane %v5989, %v6836
      %v6838 = vlaneseq
      %v6839 = vshrl.u32 %v6838, 7
      %v6840 = vsub.s32 0, %v6839
      %v6841 = vrot.slane %v6023, %v6840
      %v6842 = vsel %vm1330, %v6321, %v6317
      %v6843 = vsel %vm1332, %v6325, %v6842
      %v6844 = vsel %vm1334, %v6329, %v6843
      %v6845 = vsel %vm1336, %v6333, %v6844
      %v6846 = vsel %vm1338, %v6337, %v6845
      %v6847 = vsel %vm1340, %v6817, %v6846
      %v6848 = vsel %vm1330, %v6349, %v6345
      %v6849 = vsel %vm1332, %v6353, %v6848
      %v6850 = vsel %vm1334, %v6357, %v6849
      %v6851 = vsel %vm1336, %v6361, %v6850
      %v6852 = vsel %vm1338, %v6365, %v6851
      %v6853 = vsel %vm1340, %v6821, %v6852
      %v6854 = vsel %vm1330, %v6377, %v6373
      %v6855 = vsel %vm1332, %v6381, %v6854
      %v6856 = vsel %vm1334, %v6385, %v6855
      %v6857 = vsel %vm1336, %v6389, %v6856
      %v6858 = vsel %vm1338, %v6393, %v6857
      %v6859 = vsel %vm1340, %v6825, %v6858
      %v6860 = vsel %vm1330, %v6405, %v6401
      %v6861 = vsel %vm1332, %v6409, %v6860
      %v6862 = vsel %vm1334, %v6413, %v6861
      %v6863 = vsel %vm1336, %v6417, %v6862
      %v6864 = vsel %vm1338, %v6421, %v6863
      %v6865 = vsel %vm1340, %v6829, %v6864
      %v6866 = vsel %vm1330, %v6433, %v6429
      %v6867 = vsel %vm1332, %v6437, %v6866
      %v6868 = vsel %vm1334, %v6441, %v6867
      %v6869 = vsel %vm1336, %v6445, %v6868
      %v6870 = vsel %vm1338, %v6449, %v6869
      %v6871 = vsel %vm1340, %v6833, %v6870
      %v6872 = vsel %vm1330, %v6461, %v6457
      %v6873 = vsel %vm1332, %v6465, %v6872
      %v6874 = vsel %vm1334, %v6469, %v6873
      %v6875 = vsel %vm1336, %v6473, %v6874
      %v6876 = vsel %vm1338, %v6477, %v6875
      %v6877 = vsel %vm1340, %v6837, %v6876
      %v6878 = vsel %vm1330, %v6489, %v6485
      %v6879 = vsel %vm1332, %v6493, %v6878
      %v6880 = vsel %vm1334, %v6497, %v6879
      %v6881 = vsel %vm1336, %v6501, %v6880
      %v6882 = vsel %vm1338, %v6505, %v6881
      %v6883 = vsel %vm1340, %v6841, %v6882
      %6884 = vrot.lane.b32.xlu0 %v6847, 16
      %v6885 = vpop.permute.xlu0 %6884
      %6886 = vrot.lane.b32.xlu0 %v6853, 16
      %v6887 = vpop.permute.xlu0 %6886
      %6888 = vrot.lane.b32.xlu0 %v6859, 16
      %v6889 = vpop.permute.xlu0 %6888
      %6890 = vrot.lane.b32.xlu0 %v6865, 16
      %v6891 = vpop.permute.xlu0 %6890
      %6892 = vrot.lane.b32.xlu0 %v6871, 16
      %v6893 = vpop.permute.xlu0 %6892
      %6894 = vrot.lane.b32.xlu0 %v6877, 16
      %v6895 = vpop.permute.xlu0 %6894
      %6896 = vrot.lane.b32.xlu0 %v6883, 16
      %v6897 = vpop.permute.xlu0 %6896
      %v6905 = vlaneseq
      %v6906 = vshrl.u32 %v6905, 7
      %v6907 = vsub.s32 0, %v6906
      %v6908 = vrot.slane %v6079, %v6907
      %v6909 = vlaneseq
      %v6910 = vshrl.u32 %v6909, 7
      %v6911 = vsub.s32 0, %v6910
      %v6912 = vrot.slane %v6087, %v6911
      %v6913 = vlaneseq
      %v6914 = vshrl.u32 %v6913, 7
      %v6915 = vsub.s32 0, %v6914
      %v6916 = vrot.slane %v6086, %v6915
      %v6917 = vlaneseq
      %v6918 = vshrl.u32 %v6917, 7
      %v6919 = vsub.s32 0, %v6918
      %v6920 = vrot.slane %v6088, %v6919
      %v6921 = vlaneseq
      %v6922 = vshrl.u32 %v6921, 7
      %v6923 = vsub.s32 0, %v6922
      %v6924 = vrot.slane %v6096, %v6923
      %v6925 = vlaneseq
      %v6926 = vshrl.u32 %v6925, 7
      %v6927 = vsub.s32 0, %v6926
      %v6928 = vrot.slane %v6104, %v6927
      %v6929 = vlaneseq
      %v6930 = vshrl.u32 %v6929, 7
      %v6931 = vsub.s32 0, %v6930
      %v6932 = vrot.slane %v6103, %v6931
      %v6933 = vlaneseq
      %v6934 = vshrl.u32 %v6933, 7
      %v6935 = vsub.s32 0, %v6934
      %v6936 = vrot.slane %v6113, %v6935
      %v6937 = vlaneseq
      %v6938 = vshrl.u32 %v6937, 7
      %v6939 = vsub.s32 0, %v6938
      %v6940 = vrot.slane %v6121, %v6939
      %v6941 = vlaneseq
      %v6942 = vshrl.u32 %v6941, 7
      %v6943 = vsub.s32 0, %v6942
      %v6944 = vrot.slane %v6120, %v6943
      %v6945 = vlaneseq
      %v6946 = vshrl.u32 %v6945, 7
      %v6947 = vsub.s32 0, %v6946
      %v6948 = vrot.slane %v6122, %v6947
      %v6949 = vlaneseq
      %v6950 = vshrl.u32 %v6949, 7
      %v6951 = vsub.s32 0, %v6950
      %v6952 = vrot.slane %v6130, %v6951
      %v6953 = vlaneseq
      %v6954 = vshrl.u32 %v6953, 7
      %v6955 = vsub.s32 0, %v6954
      %v6956 = vrot.slane %v6138, %v6955
      %v6957 = vlaneseq
      %v6958 = vshrl.u32 %v6957, 7
      %v6959 = vsub.s32 0, %v6958
      %v6960 = vrot.slane %v6137, %v6959
      %v6961 = vlaneseq
      %v6962 = vshrl.u32 %v6961, 7
      %v6963 = vsub.s32 0, %v6962
      %v6964 = vrot.slane %v6147, %v6963
      %v6965 = vlaneseq
      %v6966 = vshrl.u32 %v6965, 7
      %v6967 = vsub.s32 0, %v6966
      %v6968 = vrot.slane %v6155, %v6967
      %v6969 = vlaneseq
      %v6970 = vshrl.u32 %v6969, 7
      %v6971 = vsub.s32 0, %v6970
      %v6972 = vrot.slane %v6154, %v6971
      %v6973 = vlaneseq
      %v6974 = vshrl.u32 %v6973, 7
      %v6975 = vsub.s32 0, %v6974
      %v6976 = vrot.slane %v6156, %v6975
      %v6977 = vlaneseq
      %v6978 = vshrl.u32 %v6977, 7
      %v6979 = vsub.s32 0, %v6978
      %v6980 = vrot.slane %v6164, %v6979
      %v6981 = vlaneseq
      %v6982 = vshrl.u32 %v6981, 7
      %v6983 = vsub.s32 0, %v6982
      %v6984 = vrot.slane %v6172, %v6983
      %v6985 = vlaneseq
      %v6986 = vshrl.u32 %v6985, 7
      %v6987 = vsub.s32 0, %v6986
      %v6988 = vrot.slane %v6171, %v6987
      %v6989 = vlaneseq
      %v6990 = vshrl.u32 %v6989, 7
      %v6991 = vsub.s32 0, %v6990
      %v6992 = vrot.slane %v6181, %v6991
      %v6993 = vlaneseq
      %v6994 = vshrl.u32 %v6993, 7
      %v6995 = vsub.s32 0, %v6994
      %v6996 = vrot.slane %v6189, %v6995
      %v6997 = vlaneseq
      %v6998 = vshrl.u32 %v6997, 7
      %v6999 = vsub.s32 0, %v6998
      %v7000 = vrot.slane %v6188, %v6999
      %v7001 = vlaneseq
      %v7002 = vshrl.u32 %v7001, 7
      %v7003 = vsub.s32 0, %v7002
      %v7004 = vrot.slane %v6190, %v7003
      %v7005 = vlaneseq
      %v7006 = vshrl.u32 %v7005, 7
      %v7007 = vsub.s32 0, %v7006
      %v7008 = vrot.slane %v6198, %v7007
      %v7009 = vlaneseq
      %v7010 = vshrl.u32 %v7009, 7
      %v7011 = vsub.s32 0, %v7010
      %v7012 = vrot.slane %v6206, %v7011
      %v7013 = vlaneseq
      %v7014 = vshrl.u32 %v7013, 7
      %v7015 = vsub.s32 0, %v7014
      %v7016 = vrot.slane %v6205, %v7015
      %v7017 = vlaneseq
      %v7018 = vshrl.u32 %v7017, 7
      %v7019 = vsub.s32 0, %v7018
      %v7020 = vrot.slane %v6215, %v7019
      %v7021 = vlaneseq
      %v7022 = vshrl.u32 %v7021, 7
      %v7023 = vsub.s32 0, %v7022
      %v7024 = vrot.slane %v6223, %v7023
      %v7025 = vlaneseq
      %v7026 = vshrl.u32 %v7025, 7
      %v7027 = vsub.s32 0, %v7026
      %v7028 = vrot.slane %v6222, %v7027
      %v7029 = vlaneseq
      %v7030 = vshrl.u32 %v7029, 7
      %v7031 = vsub.s32 0, %v7030
      %v7032 = vrot.slane %v6224, %v7031
      %v7033 = vlaneseq
      %v7034 = vshrl.u32 %v7033, 7
      %v7035 = vsub.s32 0, %v7034
      %v7036 = vrot.slane %v6232, %v7035
      %v7037 = vlaneseq
      %v7038 = vshrl.u32 %v7037, 7
      %v7039 = vsub.s32 0, %v7038
      %v7040 = vrot.slane %v6240, %v7039
      %v7041 = vlaneseq
      %v7042 = vshrl.u32 %v7041, 7
      %v7043 = vsub.s32 0, %v7042
      %v7044 = vrot.slane %v6239, %v7043
      %v7045 = vlaneseq
      %v7046 = vshrl.u32 %v7045, 7
      %v7047 = vsub.s32 0, %v7046
      %v7048 = vrot.slane %v6249, %v7047
      %v7049 = vlaneseq
      %v7050 = vshrl.u32 %v7049, 7
      %v7051 = vsub.s32 0, %v7050
      %v7052 = vrot.slane %v6257, %v7051
      %v7053 = vlaneseq
      %v7054 = vshrl.u32 %v7053, 7
      %v7055 = vsub.s32 0, %v7054
      %v7056 = vrot.slane %v6256, %v7055
      %v7057 = vlaneseq
      %v7058 = vshrl.u32 %v7057, 7
      %v7059 = vsub.s32 0, %v7058
      %v7060 = vrot.slane %v6258, %v7059
      %v7061 = vlaneseq
      %v7062 = vshrl.u32 %v7061, 7
      %v7063 = vsub.s32 0, %v7062
      %v7064 = vrot.slane %v6266, %v7063
      %v7065 = vlaneseq
      %v7066 = vshrl.u32 %v7065, 7
      %v7067 = vsub.s32 0, %v7066
      %v7068 = vrot.slane %v6274, %v7067
      %v7069 = vlaneseq
      %v7070 = vshrl.u32 %v7069, 7
      %v7071 = vsub.s32 0, %v7070
      %v7072 = vrot.slane %v6273, %v7071
      %v7073 = vlaneseq
      %v7074 = vshrl.u32 %v7073, 7
      %v7075 = vsub.s32 0, %v7074
      %v7076 = vrot.slane %v6283, %v7075
      %v7077 = vlaneseq
      %v7078 = vshrl.u32 %v7077, 7
      %v7079 = vsub.s32 0, %v7078
      %v7080 = vrot.slane %v6291, %v7079
      %v7081 = vlaneseq
      %v7082 = vshrl.u32 %v7081, 7
      %v7083 = vsub.s32 0, %v7082
      %v7084 = vrot.slane %v6290, %v7083
      %v7085 = vlaneseq
      %v7086 = vshrl.u32 %v7085, 7
      %v7087 = vsub.s32 0, %v7086
      %v7088 = vrot.slane %v6292, %v7087
      %v7089 = vlaneseq
      %v7090 = vshrl.u32 %v7089, 7
      %v7091 = vsub.s32 0, %v7090
      %v7092 = vrot.slane %v6300, %v7091
      %v7093 = vlaneseq
      %v7094 = vshrl.u32 %v7093, 7
      %v7095 = vsub.s32 0, %v7094
      %v7096 = vrot.slane %v6308, %v7095
      %v7097 = vlaneseq
      %v7098 = vshrl.u32 %v7097, 7
      %v7099 = vsub.s32 0, %v7098
      %v7100 = vrot.slane %v6307, %v7099
      %v7101 = vsel %vm1330, %v6912, %v6908
      %v7102 = vsel %vm1332, %v6916, %v7101
      %v7103 = vsel %vm1334, %v6920, %v7102
      %v7104 = vsel %vm1336, %v6924, %v7103
      %v7105 = vsel %vm1338, %v6928, %v7104
      %v7106 = vsel %vm1340, %v6932, %v7105
      %v7107 = vsel %vm1330, %v6940, %v6936
      %v7108 = vsel %vm1332, %v6944, %v7107
      %v7109 = vsel %vm1334, %v6948, %v7108
      %v7110 = vsel %vm1336, %v6952, %v7109
      %v7111 = vsel %vm1338, %v6956, %v7110
      %v7112 = vsel %vm1340, %v6960, %v7111
      %v7113 = vsel %vm1330, %v6968, %v6964
      %v7114 = vsel %vm1332, %v6972, %v7113
      %v7115 = vsel %vm1334, %v6976, %v7114
      %v7116 = vsel %vm1336, %v6980, %v7115
      %v7117 = vsel %vm1338, %v6984, %v7116
      %v7118 = vsel %vm1340, %v6988, %v7117
      %v7119 = vsel %vm1330, %v6996, %v6992
      %v7120 = vsel %vm1332, %v7000, %v7119
      %v7121 = vsel %vm1334, %v7004, %v7120
      %v7122 = vsel %vm1336, %v7008, %v7121
      %v7123 = vsel %vm1338, %v7012, %v7122
      %v7124 = vsel %vm1340, %v7016, %v7123
      %v7125 = vsel %vm1330, %v7024, %v7020
      %v7126 = vsel %vm1332, %v7028, %v7125
      %v7127 = vsel %vm1334, %v7032, %v7126
      %v7128 = vsel %vm1336, %v7036, %v7127
      %v7129 = vsel %vm1338, %v7040, %v7128
      %v7130 = vsel %vm1340, %v7044, %v7129
      %v7131 = vsel %vm1330, %v7052, %v7048
      %v7132 = vsel %vm1332, %v7056, %v7131
      %v7133 = vsel %vm1334, %v7060, %v7132
      %v7134 = vsel %vm1336, %v7064, %v7133
      %v7135 = vsel %vm1338, %v7068, %v7134
      %v7136 = vsel %vm1340, %v7072, %v7135
      %v7137 = vsel %vm1330, %v7080, %v7076
      %v7138 = vsel %vm1332, %v7084, %v7137
      %v7139 = vsel %vm1334, %v7088, %v7138
      %v7140 = vsel %vm1336, %v7092, %v7139
      %v7141 = vsel %vm1338, %v7096, %v7140
      %v7142 = vsel %vm1340, %v7100, %v7141
      %7143 = vrot.lane.b32.xlu0 %v7106, 24
      %v7144 = vpop.permute.xlu0 %7143
      %7145 = vrot.lane.b32.xlu0 %v7112, 24
      %v7146 = vpop.permute.xlu0 %7145
      %7147 = vrot.lane.b32.xlu0 %v7118, 24
      %v7148 = vpop.permute.xlu0 %7147
      %7149 = vrot.lane.b32.xlu0 %v7124, 24
      %v7150 = vpop.permute.xlu0 %7149
      %7151 = vrot.lane.b32.xlu0 %v7130, 24
      %v7152 = vpop.permute.xlu0 %7151
      %7153 = vrot.lane.b32.xlu0 %v7136, 24
      %v7154 = vpop.permute.xlu0 %7153
      %7155 = vrot.lane.b32.xlu0 %v7142, 24
      %v7156 = vpop.permute.xlu0 %7155
      %v7164 = vlaneseq
      %v7165 = vshrl.u32 %v7164, 7
      %v7166 = vsub.s32 1, %v7165
      %v7167 = vrot.slane %v6079, %v7166
      %v7168 = vlaneseq
      %v7169 = vshrl.u32 %v7168, 7
      %v7170 = vsub.s32 1, %v7169
      %v7171 = vrot.slane %v6087, %v7170
      %v7172 = vlaneseq
      %v7173 = vshrl.u32 %v7172, 7
      %v7174 = vsub.s32 1, %v7173
      %v7175 = vrot.slane %v6086, %v7174
      %v7176 = vlaneseq
      %v7177 = vshrl.u32 %v7176, 7
      %v7178 = vsub.s32 1, %v7177
      %v7179 = vrot.slane %v6088, %v7178
      %v7180 = vlaneseq
      %v7181 = vshrl.u32 %v7180, 7
      %v7182 = vsub.s32 1, %v7181
      %v7183 = vrot.slane %v6096, %v7182
      %v7184 = vlaneseq
      %v7185 = vshrl.u32 %v7184, 7
      %v7186 = vsub.s32 1, %v7185
      %v7187 = vrot.slane %v6104, %v7186
      %v7188 = vlaneseq
      %v7189 = vshrl.u32 %v7188, 7
      %v7190 = vsub.s32 1, %v7189
      %v7191 = vrot.slane %v6103, %v7190
      %v7192 = vlaneseq
      %v7193 = vshrl.u32 %v7192, 7
      %v7194 = vsub.s32 1, %v7193
      %v7195 = vrot.slane %v6113, %v7194
      %v7196 = vlaneseq
      %v7197 = vshrl.u32 %v7196, 7
      %v7198 = vsub.s32 1, %v7197
      %v7199 = vrot.slane %v6121, %v7198
      %v7200 = vlaneseq
      %v7201 = vshrl.u32 %v7200, 7
      %v7202 = vsub.s32 1, %v7201
      %v7203 = vrot.slane %v6120, %v7202
      %v7204 = vlaneseq
      %v7205 = vshrl.u32 %v7204, 7
      %v7206 = vsub.s32 1, %v7205
      %v7207 = vrot.slane %v6122, %v7206
      %v7208 = vlaneseq
      %v7209 = vshrl.u32 %v7208, 7
      %v7210 = vsub.s32 1, %v7209
      %v7211 = vrot.slane %v6130, %v7210
      %v7212 = vlaneseq
      %v7213 = vshrl.u32 %v7212, 7
      %v7214 = vsub.s32 1, %v7213
      %v7215 = vrot.slane %v6138, %v7214
      %v7216 = vlaneseq
      %v7217 = vshrl.u32 %v7216, 7
      %v7218 = vsub.s32 1, %v7217
      %v7219 = vrot.slane %v6137, %v7218
      %v7220 = vlaneseq
      %v7221 = vshrl.u32 %v7220, 7
      %v7222 = vsub.s32 1, %v7221
      %v7223 = vrot.slane %v6147, %v7222
      %v7224 = vlaneseq
      %v7225 = vshrl.u32 %v7224, 7
      %v7226 = vsub.s32 1, %v7225
      %v7227 = vrot.slane %v6155, %v7226
      %v7228 = vlaneseq
      %v7229 = vshrl.u32 %v7228, 7
      %v7230 = vsub.s32 1, %v7229
      %v7231 = vrot.slane %v6154, %v7230
      %v7232 = vlaneseq
      %v7233 = vshrl.u32 %v7232, 7
      %v7234 = vsub.s32 1, %v7233
      %v7235 = vrot.slane %v6156, %v7234
      %v7236 = vlaneseq
      %v7237 = vshrl.u32 %v7236, 7
      %v7238 = vsub.s32 1, %v7237
      %v7239 = vrot.slane %v6164, %v7238
      %v7240 = vlaneseq
      %v7241 = vshrl.u32 %v7240, 7
      %v7242 = vsub.s32 1, %v7241
      %v7243 = vrot.slane %v6172, %v7242
      %v7244 = vlaneseq
      %v7245 = vshrl.u32 %v7244, 7
      %v7246 = vsub.s32 1, %v7245
      %v7247 = vrot.slane %v6171, %v7246
      %v7248 = vlaneseq
      %v7249 = vshrl.u32 %v7248, 7
      %v7250 = vsub.s32 1, %v7249
      %v7251 = vrot.slane %v6181, %v7250
      %v7252 = vlaneseq
      %v7253 = vshrl.u32 %v7252, 7
      %v7254 = vsub.s32 1, %v7253
      %v7255 = vrot.slane %v6189, %v7254
      %v7256 = vlaneseq
      %v7257 = vshrl.u32 %v7256, 7
      %v7258 = vsub.s32 1, %v7257
      %v7259 = vrot.slane %v6188, %v7258
      %v7260 = vlaneseq
      %v7261 = vshrl.u32 %v7260, 7
      %v7262 = vsub.s32 1, %v7261
      %v7263 = vrot.slane %v6190, %v7262
      %v7264 = vlaneseq
      %v7265 = vshrl.u32 %v7264, 7
      %v7266 = vsub.s32 1, %v7265
      %v7267 = vrot.slane %v6198, %v7266
      %v7268 = vlaneseq
      %v7269 = vshrl.u32 %v7268, 7
      %v7270 = vsub.s32 1, %v7269
      %v7271 = vrot.slane %v6206, %v7270
      %v7272 = vlaneseq
      %v7273 = vshrl.u32 %v7272, 7
      %v7274 = vsub.s32 1, %v7273
      %v7275 = vrot.slane %v6205, %v7274
      %v7276 = vlaneseq
      %v7277 = vshrl.u32 %v7276, 7
      %v7278 = vsub.s32 1, %v7277
      %v7279 = vrot.slane %v6215, %v7278
      %v7280 = vlaneseq
      %v7281 = vshrl.u32 %v7280, 7
      %v7282 = vsub.s32 1, %v7281
      %v7283 = vrot.slane %v6223, %v7282
      %v7284 = vlaneseq
      %v7285 = vshrl.u32 %v7284, 7
      %v7286 = vsub.s32 1, %v7285
      %v7287 = vrot.slane %v6222, %v7286
      %v7288 = vlaneseq
      %v7289 = vshrl.u32 %v7288, 7
      %v7290 = vsub.s32 1, %v7289
      %v7291 = vrot.slane %v6224, %v7290
      %v7292 = vlaneseq
      %v7293 = vshrl.u32 %v7292, 7
      %v7294 = vsub.s32 1, %v7293
      %v7295 = vrot.slane %v6232, %v7294
      %v7296 = vlaneseq
      %v7297 = vshrl.u32 %v7296, 7
      %v7298 = vsub.s32 1, %v7297
      %v7299 = vrot.slane %v6240, %v7298
      %v7300 = vlaneseq
      %v7301 = vshrl.u32 %v7300, 7
      %v7302 = vsub.s32 1, %v7301
      %v7303 = vrot.slane %v6239, %v7302
      %v7304 = vlaneseq
      %v7305 = vshrl.u32 %v7304, 7
      %v7306 = vsub.s32 1, %v7305
      %v7307 = vrot.slane %v6249, %v7306
      %v7308 = vlaneseq
      %v7309 = vshrl.u32 %v7308, 7
      %v7310 = vsub.s32 1, %v7309
      %v7311 = vrot.slane %v6257, %v7310
      %v7312 = vlaneseq
      %v7313 = vshrl.u32 %v7312, 7
      %v7314 = vsub.s32 1, %v7313
      %v7315 = vrot.slane %v6256, %v7314
      %v7316 = vlaneseq
      %v7317 = vshrl.u32 %v7316, 7
      %v7318 = vsub.s32 1, %v7317
      %v7319 = vrot.slane %v6258, %v7318
      %v7320 = vlaneseq
      %v7321 = vshrl.u32 %v7320, 7
      %v7322 = vsub.s32 1, %v7321
      %v7323 = vrot.slane %v6266, %v7322
      %v7324 = vlaneseq
      %v7325 = vshrl.u32 %v7324, 7
      %v7326 = vsub.s32 1, %v7325
      %v7327 = vrot.slane %v6274, %v7326
      %v7328 = vlaneseq
      %v7329 = vshrl.u32 %v7328, 7
      %v7330 = vsub.s32 1, %v7329
      %v7331 = vrot.slane %v6273, %v7330
      %v7332 = vlaneseq
      %v7333 = vshrl.u32 %v7332, 7
      %v7334 = vsub.s32 1, %v7333
      %v7335 = vrot.slane %v6283, %v7334
      %v7336 = vlaneseq
      %v7337 = vshrl.u32 %v7336, 7
      %v7338 = vsub.s32 1, %v7337
      %v7339 = vrot.slane %v6291, %v7338
      %v7340 = vlaneseq
      %v7341 = vshrl.u32 %v7340, 7
      %v7342 = vsub.s32 1, %v7341
      %v7343 = vrot.slane %v6290, %v7342
      %v7344 = vlaneseq
      %v7345 = vshrl.u32 %v7344, 7
      %v7346 = vsub.s32 1, %v7345
      %v7347 = vrot.slane %v6292, %v7346
      %v7348 = vlaneseq
      %v7349 = vshrl.u32 %v7348, 7
      %v7350 = vsub.s32 1, %v7349
      %v7351 = vrot.slane %v6300, %v7350
      %v7352 = vlaneseq
      %v7353 = vshrl.u32 %v7352, 7
      %v7354 = vsub.s32 1, %v7353
      %v7355 = vrot.slane %v6308, %v7354
      %v7356 = vlaneseq
      %v7357 = vshrl.u32 %v7356, 7
      %v7358 = vsub.s32 1, %v7357
      %v7359 = vrot.slane %v6307, %v7358
      %v7360 = vsel %vm1330, %v7171, %v7167
      %v7361 = vsel %vm1332, %v7175, %v7360
      %v7362 = vsel %vm1334, %v7179, %v7361
      %v7363 = vsel %vm1336, %v7183, %v7362
      %v7364 = vsel %vm1338, %v7187, %v7363
      %v7365 = vsel %vm1340, %v7191, %v7364
      %v7366 = vsel %vm1330, %v7199, %v7195
      %v7367 = vsel %vm1332, %v7203, %v7366
      %v7368 = vsel %vm1334, %v7207, %v7367
      %v7369 = vsel %vm1336, %v7211, %v7368
      %v7370 = vsel %vm1338, %v7215, %v7369
      %v7371 = vsel %vm1340, %v7219, %v7370
      %v7372 = vsel %vm1330, %v7227, %v7223
      %v7373 = vsel %vm1332, %v7231, %v7372
      %v7374 = vsel %vm1334, %v7235, %v7373
      %v7375 = vsel %vm1336, %v7239, %v7374
      %v7376 = vsel %vm1338, %v7243, %v7375
      %v7377 = vsel %vm1340, %v7247, %v7376
      %v7378 = vsel %vm1330, %v7255, %v7251
      %v7379 = vsel %vm1332, %v7259, %v7378
      %v7380 = vsel %vm1334, %v7263, %v7379
      %v7381 = vsel %vm1336, %v7267, %v7380
      %v7382 = vsel %vm1338, %v7271, %v7381
      %v7383 = vsel %vm1340, %v7275, %v7382
      %v7384 = vsel %vm1330, %v7283, %v7279
      %v7385 = vsel %vm1332, %v7287, %v7384
      %v7386 = vsel %vm1334, %v7291, %v7385
      %v7387 = vsel %vm1336, %v7295, %v7386
      %v7388 = vsel %vm1338, %v7299, %v7387
      %v7389 = vsel %vm1340, %v7303, %v7388
      %v7390 = vsel %vm1330, %v7311, %v7307
      %v7391 = vsel %vm1332, %v7315, %v7390
      %v7392 = vsel %vm1334, %v7319, %v7391
      %v7393 = vsel %vm1336, %v7323, %v7392
      %v7394 = vsel %vm1338, %v7327, %v7393
      %v7395 = vsel %vm1340, %v7331, %v7394
      %v7396 = vsel %vm1330, %v7339, %v7335
      %v7397 = vsel %vm1332, %v7343, %v7396
      %v7398 = vsel %vm1334, %v7347, %v7397
      %v7399 = vsel %vm1336, %v7351, %v7398
      %v7400 = vsel %vm1338, %v7355, %v7399
      %v7401 = vsel %vm1340, %v7359, %v7400
      %7402 = vrot.lane.b32.xlu0 %v7365, 32
      %v7403 = vpop.permute.xlu0 %7402
      %7404 = vrot.lane.b32.xlu0 %v7371, 32
      %v7405 = vpop.permute.xlu0 %7404
      %7406 = vrot.lane.b32.xlu0 %v7377, 32
      %v7407 = vpop.permute.xlu0 %7406
      %7408 = vrot.lane.b32.xlu0 %v7383, 32
      %v7409 = vpop.permute.xlu0 %7408
      %7410 = vrot.lane.b32.xlu0 %v7389, 32
      %v7411 = vpop.permute.xlu0 %7410
      %7412 = vrot.lane.b32.xlu0 %v7395, 32
      %v7413 = vpop.permute.xlu0 %7412
      %7414 = vrot.lane.b32.xlu0 %v7401, 32
      %v7415 = vpop.permute.xlu0 %7414
      %v7423 = vlaneseq
      %v7424 = vshrl.u32 %v7423, 7
      %v7425 = vsub.s32 0, %v7424
      %v7426 = vrot.slane %v6105, %v7425
      %v7427 = vlaneseq
      %v7428 = vshrl.u32 %v7427, 7
      %v7429 = vsub.s32 0, %v7428
      %v7430 = vrot.slane %v6139, %v7429
      %v7431 = vlaneseq
      %v7432 = vshrl.u32 %v7431, 7
      %v7433 = vsub.s32 0, %v7432
      %v7434 = vrot.slane %v6173, %v7433
      %v7435 = vlaneseq
      %v7436 = vshrl.u32 %v7435, 7
      %v7437 = vsub.s32 0, %v7436
      %v7438 = vrot.slane %v6207, %v7437
      %v7439 = vlaneseq
      %v7440 = vshrl.u32 %v7439, 7
      %v7441 = vsub.s32 0, %v7440
      %v7442 = vrot.slane %v6241, %v7441
      %v7443 = vlaneseq
      %v7444 = vshrl.u32 %v7443, 7
      %v7445 = vsub.s32 0, %v7444
      %v7446 = vrot.slane %v6275, %v7445
      %v7447 = vlaneseq
      %v7448 = vshrl.u32 %v7447, 7
      %v7449 = vsub.s32 0, %v7448
      %v7450 = vrot.slane %v6309, %v7449
      %v7451 = vsel %vm1330, %v6916, %v6912
      %v7452 = vsel %vm1332, %v6920, %v7451
      %v7453 = vsel %vm1334, %v6924, %v7452
      %v7454 = vsel %vm1336, %v6928, %v7453
      %v7455 = vsel %vm1338, %v6932, %v7454
      %v7456 = vsel %vm1340, %v7426, %v7455
      %v7457 = vsel %vm1330, %v6944, %v6940
      %v7458 = vsel %vm1332, %v6948, %v7457
      %v7459 = vsel %vm1334, %v6952, %v7458
      %v7460 = vsel %vm1336, %v6956, %v7459
      %v7461 = vsel %vm1338, %v6960, %v7460
      %v7462 = vsel %vm1340, %v7430, %v7461
      %v7463 = vsel %vm1330, %v6972, %v6968
      %v7464 = vsel %vm1332, %v6976, %v7463
      %v7465 = vsel %vm1334, %v6980, %v7464
      %v7466 = vsel %vm1336, %v6984, %v7465
      %v7467 = vsel %vm1338, %v6988, %v7466
      %v7468 = vsel %vm1340, %v7434, %v7467
      %v7469 = vsel %vm1330, %v7000, %v6996
      %v7470 = vsel %vm1332, %v7004, %v7469
      %v7471 = vsel %vm1334, %v7008, %v7470
      %v7472 = vsel %vm1336, %v7012, %v7471
      %v7473 = vsel %vm1338, %v7016, %v7472
      %v7474 = vsel %vm1340, %v7438, %v7473
      %v7475 = vsel %vm1330, %v7028, %v7024
      %v7476 = vsel %vm1332, %v7032, %v7475
      %v7477 = vsel %vm1334, %v7036, %v7476
      %v7478 = vsel %vm1336, %v7040, %v7477
      %v7479 = vsel %vm1338, %v7044, %v7478
      %v7480 = vsel %vm1340, %v7442, %v7479
      %v7481 = vsel %vm1330, %v7056, %v7052
      %v7482 = vsel %vm1332, %v7060, %v7481
      %v7483 = vsel %vm1334, %v7064, %v7482
      %v7484 = vsel %vm1336, %v7068, %v7483
      %v7485 = vsel %vm1338, %v7072, %v7484
      %v7486 = vsel %vm1340, %v7446, %v7485
      %v7487 = vsel %vm1330, %v7084, %v7080
      %v7488 = vsel %vm1332, %v7088, %v7487
      %v7489 = vsel %vm1334, %v7092, %v7488
      %v7490 = vsel %vm1336, %v7096, %v7489
      %v7491 = vsel %vm1338, %v7100, %v7490
      %v7492 = vsel %vm1340, %v7450, %v7491
      %7493 = vrot.lane.b32.xlu0 %v7456, 40
      %v7494 = vpop.permute.xlu0 %7493
      %7495 = vrot.lane.b32.xlu0 %v7462, 40
      %v7496 = vpop.permute.xlu0 %7495
      %7497 = vrot.lane.b32.xlu0 %v7468, 40
      %v7498 = vpop.permute.xlu0 %7497
      %7499 = vrot.lane.b32.xlu0 %v7474, 40
      %v7500 = vpop.permute.xlu0 %7499
      %7501 = vrot.lane.b32.xlu0 %v7480, 40
      %v7502 = vpop.permute.xlu0 %7501
      %7503 = vrot.lane.b32.xlu0 %v7486, 40
      %v7504 = vpop.permute.xlu0 %7503
      %7505 = vrot.lane.b32.xlu0 %v7492, 40
      %v7506 = vpop.permute.xlu0 %7505
      %v7514 = vlaneseq
      %v7515 = vshrl.u32 %v7514, 7
      %v7516 = vsub.s32 0, %v7515
      %v7517 = vrot.slane %v6031, %v7516
      %v7518 = vlaneseq
      %v7519 = vshrl.u32 %v7518, 7
      %v7520 = vsub.s32 0, %v7519
      %v7521 = vrot.slane %v6039, %v7520
      %v7522 = vlaneseq
      %v7523 = vshrl.u32 %v7522, 7
      %v7524 = vsub.s32 0, %v7523
      %v7525 = vrot.slane %v6038, %v7524
      %v7526 = vlaneseq
      %v7527 = vshrl.u32 %v7526, 7
      %v7528 = vsub.s32 0, %v7527
      %v7529 = vrot.slane %v6040, %v7528
      %v7530 = vlaneseq
      %v7531 = vshrl.u32 %v7530, 7
      %v7532 = vsub.s32 0, %v7531
      %v7533 = vrot.slane %v6048, %v7532
      %v7534 = vlaneseq
      %v7535 = vshrl.u32 %v7534, 7
      %v7536 = vsub.s32 0, %v7535
      %v7537 = vrot.slane %v6056, %v7536
      %v7538 = vlaneseq
      %v7539 = vshrl.u32 %v7538, 7
      %v7540 = vsub.s32 0, %v7539
      %v7541 = vrot.slane %v6055, %v7540
      %v7542 = vsel %vm1330, %v7521, %v7517
      %v7543 = vsel %vm1332, %v7525, %v7542
      %v7544 = vsel %vm1334, %v7529, %v7543
      %v7545 = vsel %vm1336, %v7533, %v7544
      %v7546 = vsel %vm1338, %v7537, %v7545
      %v7547 = vsel %vm1340, %v7541, %v7546
      %7548 = vrot.lane.b32.xlu0 %v6517, 48
      %v7549 = vpop.permute.xlu0 %7548
      %7550 = vrot.lane.b32.xlu0 %v6523, 48
      %v7551 = vpop.permute.xlu0 %7550
      %7552 = vrot.lane.b32.xlu0 %v6529, 48
      %v7553 = vpop.permute.xlu0 %7552
      %7554 = vrot.lane.b32.xlu0 %v6535, 48
      %v7555 = vpop.permute.xlu0 %7554
      %7556 = vrot.lane.b32.xlu0 %v6541, 48
      %v7557 = vpop.permute.xlu0 %7556
      %7558 = vrot.lane.b32.xlu0 %v6547, 48
      %v7559 = vpop.permute.xlu0 %7558
      %7560 = vrot.lane.b32.xlu0 %v7547, 48
      %v7561 = vpop.permute.xlu0 %7560
      %v7569 = vlaneseq
      %v7570 = vshrl.u32 %v7569, 7
      %v7571 = vsub.s32 1, %v7570
      %v7572 = vrot.slane %v6031, %v7571
      %v7573 = vlaneseq
      %v7574 = vshrl.u32 %v7573, 7
      %v7575 = vsub.s32 1, %v7574
      %v7576 = vrot.slane %v6039, %v7575
      %v7577 = vlaneseq
      %v7578 = vshrl.u32 %v7577, 7
      %v7579 = vsub.s32 1, %v7578
      %v7580 = vrot.slane %v6038, %v7579
      %v7581 = vlaneseq
      %v7582 = vshrl.u32 %v7581, 7
      %v7583 = vsub.s32 1, %v7582
      %v7584 = vrot.slane %v6040, %v7583
      %v7585 = vlaneseq
      %v7586 = vshrl.u32 %v7585, 7
      %v7587 = vsub.s32 1, %v7586
      %v7588 = vrot.slane %v6048, %v7587
      %v7589 = vlaneseq
      %v7590 = vshrl.u32 %v7589, 7
      %v7591 = vsub.s32 1, %v7590
      %v7592 = vrot.slane %v6056, %v7591
      %v7593 = vlaneseq
      %v7594 = vshrl.u32 %v7593, 7
      %v7595 = vsub.s32 1, %v7594
      %v7596 = vrot.slane %v6055, %v7595
      %v7597 = vsel %vm1330, %v7576, %v7572
      %v7598 = vsel %vm1332, %v7580, %v7597
      %v7599 = vsel %vm1334, %v7584, %v7598
      %v7600 = vsel %vm1336, %v7588, %v7599
      %v7601 = vsel %vm1338, %v7592, %v7600
      %v7602 = vsel %vm1340, %v7596, %v7601
      %7603 = vrot.lane.b32.xlu0 %v6762, 56
      %v7604 = vpop.permute.xlu0 %7603
      %7605 = vrot.lane.b32.xlu0 %v6768, 56
      %v7606 = vpop.permute.xlu0 %7605
      %7607 = vrot.lane.b32.xlu0 %v6774, 56
      %v7608 = vpop.permute.xlu0 %7607
      %7609 = vrot.lane.b32.xlu0 %v6780, 56
      %v7610 = vpop.permute.xlu0 %7609
      %7611 = vrot.lane.b32.xlu0 %v6786, 56
      %v7612 = vpop.permute.xlu0 %7611
      %7613 = vrot.lane.b32.xlu0 %v6792, 56
      %v7614 = vpop.permute.xlu0 %7613
      %7615 = vrot.lane.b32.xlu0 %v7602, 56
      %v7616 = vpop.permute.xlu0 %7615
      %v7624 = vlaneseq
      %v7625 = vshrl.u32 %v7624, 7
      %v7626 = vsub.s32 0, %v7625
      %v7627 = vrot.slane %v6057, %v7626
      %v7628 = vsel %vm1330, %v7525, %v7521
      %v7629 = vsel %vm1332, %v7529, %v7628
      %v7630 = vsel %vm1334, %v7533, %v7629
      %v7631 = vsel %vm1336, %v7537, %v7630
      %v7632 = vsel %vm1338, %v7541, %v7631
      %v7633 = vsel %vm1340, %v7627, %v7632
      %7634 = vrot.lane.b32.xlu0 %v6853, 64
      %v7635 = vpop.permute.xlu0 %7634
      %7636 = vrot.lane.b32.xlu0 %v6859, 64
      %v7637 = vpop.permute.xlu0 %7636
      %7638 = vrot.lane.b32.xlu0 %v6865, 64
      %v7639 = vpop.permute.xlu0 %7638
      %7640 = vrot.lane.b32.xlu0 %v6871, 64
      %v7641 = vpop.permute.xlu0 %7640
      %7642 = vrot.lane.b32.xlu0 %v6877, 64
      %v7643 = vpop.permute.xlu0 %7642
      %7644 = vrot.lane.b32.xlu0 %v6883, 64
      %v7645 = vpop.permute.xlu0 %7644
      %7646 = vrot.lane.b32.xlu0 %v7633, 64
      %v7647 = vpop.permute.xlu0 %7646
      %v7655 = vsel %vm2493, %v6511, %v6794
      %v7656 = vsel %vm2493, %v6517, %v6796
      %v7657 = vsel %vm2493, %v6523, %v6798
      %v7658 = vsel %vm2493, %v6529, %v6800
      %v7659 = vsel %vm2493, %v6535, %v6802
      %v7660 = vsel %vm2493, %v6541, %v6804
      %v7661 = vsel %vm2493, %v6547, %v6806
      %v7662 = vsel %vm2509, %v7655, %v6885
      %v7663 = vsel %vm2509, %v7656, %v6887
      %v7664 = vsel %vm2509, %v7657, %v6889
      %v7665 = vsel %vm2509, %v7658, %v6891
      %v7666 = vsel %vm2509, %v7659, %v6893
      %v7667 = vsel %vm2509, %v7660, %v6895
      %v7668 = vsel %vm2509, %v7661, %v6897
      %v7669 = vsel %vm2525, %v7662, %v7144
      %v7670 = vsel %vm2525, %v7663, %v7146
      %v7671 = vsel %vm2525, %v7664, %v7148
      %v7672 = vsel %vm2525, %v7665, %v7150
      %v7673 = vsel %vm2525, %v7666, %v7152
      %v7674 = vsel %vm2525, %v7667, %v7154
      %v7675 = vsel %vm2525, %v7668, %v7156
      %v7676 = vsel %vm2541, %v7669, %v7403
      %v7677 = vsel %vm2541, %v7670, %v7405
      %v7678 = vsel %vm2541, %v7671, %v7407
      %v7679 = vsel %vm2541, %v7672, %v7409
      %v7680 = vsel %vm2541, %v7673, %v7411
      %v7681 = vsel %vm2541, %v7674, %v7413
      %v7682 = vsel %vm2541, %v7675, %v7415
      %v7683 = vsel %vm5240, %v7676, %v7494
      %v7684 = vsel %vm5240, %v7677, %v7496
      %v7685 = vsel %vm5240, %v7678, %v7498
      %v7686 = vsel %vm5240, %v7679, %v7500
      %v7687 = vsel %vm5240, %v7680, %v7502
      %v7688 = vsel %vm5240, %v7681, %v7504
      %v7689 = vsel %vm5240, %v7682, %v7506
      %v7690 = vsel %vm5273, %v7683, %v7549
      %v7691 = vsel %vm5273, %v7684, %v7551
      %v7692 = vsel %vm5273, %v7685, %v7553
      %v7693 = vsel %vm5273, %v7686, %v7555
      %v7694 = vsel %vm5273, %v7687, %v7557
      %v7695 = vsel %vm5273, %v7688, %v7559
      %v7696 = vsel %vm5273, %v7689, %v7561
      %v7697 = vsel %vm5306, %v7690, %v7604
      %v7698 = vsel %vm5306, %v7691, %v7606
      %v7699 = vsel %vm5306, %v7692, %v7608
      %v7700 = vsel %vm5306, %v7693, %v7610
      %v7701 = vsel %vm5306, %v7694, %v7612
      %v7702 = vsel %vm5306, %v7695, %v7614
      %v7703 = vsel %vm5306, %v7696, %v7616
      %v7704 = vsel %vm5339, %v7697, %v7635
      %v7705 = vsel %vm5339, %v7698, %v7637
      %v7706 = vsel %vm5339, %v7699, %v7639
      %v7707 = vsel %vm5339, %v7700, %v7641
      %v7708 = vsel %vm5339, %v7701, %v7643
      %v7709 = vsel %vm5339, %v7702, %v7645
      %v7710 = vsel %vm5339, %v7703, %v7647
      %v7718 = vcombine.high %v7704, %v7704
      %v7720 = vunpack.c.l.s4 1966171168
      %v7721 = vunpack.c.0.s8 %v7720
      %v7722 = vlaneseq
      %v7723 = vshrl.u32 %v7722, 7
      %v7724 = vsub.s32 %v7721, %v7723
      %v7725 = vrot.slane %v7704, %v7724
      %v7727 = vunpack.c.l.s4 1966171168
      %v7728 = vunpack.c.0.s8 %v7727
      %v7729 = vlaneseq
      %v7730 = vshrl.u32 %v7729, 7
      %v7731 = vsub.s32 %v7728, %v7730
      %v7732 = vrot.slane %v7718, %v7731
      %v7733 = vcombine.high %v7725, %v7725
      %v7734 = vcombine.high %v7732, %v7732
      %v7736 = vunpack.c.l.s4 1966171168
      %v7737 = vunpack.c.0.s8 %v7736
      %v7738 = vlaneseq
      %v7739 = vshrl.u32 %v7738, 7
      %v7740 = vsub.s32 %v7737, %v7739
      %v7741 = vrot.slane %v7725, %v7740
      %v7743 = vunpack.c.l.s4 1966171168
      %v7744 = vunpack.c.0.s8 %v7743
      %v7745 = vlaneseq
      %v7746 = vshrl.u32 %v7745, 7
      %v7747 = vsub.s32 %v7744, %v7746
      %v7748 = vrot.slane %v7732, %v7747
      %v7750 = vunpack.c.l.s4 1966171168
      %v7751 = vunpack.c.0.s8 %v7750
      %v7752 = vlaneseq
      %v7753 = vshrl.u32 %v7752, 7
      %v7754 = vsub.s32 %v7751, %v7753
      %v7755 = vrot.slane %v7733, %v7754
      %v7757 = vunpack.c.l.s4 1966171168
      %v7758 = vunpack.c.0.s8 %v7757
      %v7759 = vlaneseq
      %v7760 = vshrl.u32 %v7759, 7
      %v7761 = vsub.s32 %v7758, %v7760
      %v7762 = vrot.slane %v7734, %v7761
      %v7763 = vcombine.high %v7741, %v7741
      %v7764 = vcombine.high %v7748, %v7748
      %v7765 = vcombine.high %v7755, %v7755
      %v7766 = vcombine.high %v7705, %v7705
      %v7768 = vunpack.c.l.s4 1966171168
      %v7769 = vunpack.c.0.s8 %v7768
      %v7770 = vlaneseq
      %v7771 = vshrl.u32 %v7770, 7
      %v7772 = vsub.s32 %v7769, %v7771
      %v7773 = vrot.slane %v7705, %v7772
      %v7775 = vunpack.c.l.s4 1966171168
      %v7776 = vunpack.c.0.s8 %v7775
      %v7777 = vlaneseq
      %v7778 = vshrl.u32 %v7777, 7
      %v7779 = vsub.s32 %v7776, %v7778
      %v7780 = vrot.slane %v7766, %v7779
      %v7781 = vcombine.high %v7773, %v7773
      %v7782 = vcombine.high %v7780, %v7780
      %v7784 = vunpack.c.l.s4 1966171168
      %v7785 = vunpack.c.0.s8 %v7784
      %v7786 = vlaneseq
      %v7787 = vshrl.u32 %v7786, 7
      %v7788 = vsub.s32 %v7785, %v7787
      %v7789 = vrot.slane %v7773, %v7788
      %v7791 = vunpack.c.l.s4 1966171168
      %v7792 = vunpack.c.0.s8 %v7791
      %v7793 = vlaneseq
      %v7794 = vshrl.u32 %v7793, 7
      %v7795 = vsub.s32 %v7792, %v7794
      %v7796 = vrot.slane %v7780, %v7795
      %v7798 = vunpack.c.l.s4 1966171168
      %v7799 = vunpack.c.0.s8 %v7798
      %v7800 = vlaneseq
      %v7801 = vshrl.u32 %v7800, 7
      %v7802 = vsub.s32 %v7799, %v7801
      %v7803 = vrot.slane %v7781, %v7802
      %v7805 = vunpack.c.l.s4 1966171168
      %v7806 = vunpack.c.0.s8 %v7805
      %v7807 = vlaneseq
      %v7808 = vshrl.u32 %v7807, 7
      %v7809 = vsub.s32 %v7806, %v7808
      %v7810 = vrot.slane %v7782, %v7809
      %v7811 = vcombine.high %v7789, %v7789
      %v7812 = vcombine.high %v7796, %v7796
      %v7813 = vcombine.high %v7803, %v7803
      %v7814 = vcombine.high %v7706, %v7706
      %v7816 = vunpack.c.l.s4 1966171168
      %v7817 = vunpack.c.0.s8 %v7816
      %v7818 = vlaneseq
      %v7819 = vshrl.u32 %v7818, 7
      %v7820 = vsub.s32 %v7817, %v7819
      %v7821 = vrot.slane %v7706, %v7820
      %v7823 = vunpack.c.l.s4 1966171168
      %v7824 = vunpack.c.0.s8 %v7823
      %v7825 = vlaneseq
      %v7826 = vshrl.u32 %v7825, 7
      %v7827 = vsub.s32 %v7824, %v7826
      %v7828 = vrot.slane %v7814, %v7827
      %v7829 = vcombine.high %v7821, %v7821
      %v7830 = vcombine.high %v7828, %v7828
      %v7832 = vunpack.c.l.s4 1966171168
      %v7833 = vunpack.c.0.s8 %v7832
      %v7834 = vlaneseq
      %v7835 = vshrl.u32 %v7834, 7
      %v7836 = vsub.s32 %v7833, %v7835
      %v7837 = vrot.slane %v7821, %v7836
      %v7839 = vunpack.c.l.s4 1966171168
      %v7840 = vunpack.c.0.s8 %v7839
      %v7841 = vlaneseq
      %v7842 = vshrl.u32 %v7841, 7
      %v7843 = vsub.s32 %v7840, %v7842
      %v7844 = vrot.slane %v7828, %v7843
      %v7846 = vunpack.c.l.s4 1966171168
      %v7847 = vunpack.c.0.s8 %v7846
      %v7848 = vlaneseq
      %v7849 = vshrl.u32 %v7848, 7
      %v7850 = vsub.s32 %v7847, %v7849
      %v7851 = vrot.slane %v7829, %v7850
      %v7853 = vunpack.c.l.s4 1966171168
      %v7854 = vunpack.c.0.s8 %v7853
      %v7855 = vlaneseq
      %v7856 = vshrl.u32 %v7855, 7
      %v7857 = vsub.s32 %v7854, %v7856
      %v7858 = vrot.slane %v7830, %v7857
      %v7859 = vcombine.high %v7837, %v7837
      %v7860 = vcombine.high %v7844, %v7844
      %v7861 = vcombine.high %v7851, %v7851
      %v7862 = vcombine.high %v7707, %v7707
      %v7864 = vunpack.c.l.s4 1966171168
      %v7865 = vunpack.c.0.s8 %v7864
      %v7866 = vlaneseq
      %v7867 = vshrl.u32 %v7866, 7
      %v7868 = vsub.s32 %v7865, %v7867
      %v7869 = vrot.slane %v7707, %v7868
      %v7871 = vunpack.c.l.s4 1966171168
      %v7872 = vunpack.c.0.s8 %v7871
      %v7873 = vlaneseq
      %v7874 = vshrl.u32 %v7873, 7
      %v7875 = vsub.s32 %v7872, %v7874
      %v7876 = vrot.slane %v7862, %v7875
      %v7877 = vcombine.high %v7869, %v7869
      %v7878 = vcombine.high %v7876, %v7876
      %v7880 = vunpack.c.l.s4 1966171168
      %v7881 = vunpack.c.0.s8 %v7880
      %v7882 = vlaneseq
      %v7883 = vshrl.u32 %v7882, 7
      %v7884 = vsub.s32 %v7881, %v7883
      %v7885 = vrot.slane %v7869, %v7884
      %v7887 = vunpack.c.l.s4 1966171168
      %v7888 = vunpack.c.0.s8 %v7887
      %v7889 = vlaneseq
      %v7890 = vshrl.u32 %v7889, 7
      %v7891 = vsub.s32 %v7888, %v7890
      %v7892 = vrot.slane %v7876, %v7891
      %v7894 = vunpack.c.l.s4 1966171168
      %v7895 = vunpack.c.0.s8 %v7894
      %v7896 = vlaneseq
      %v7897 = vshrl.u32 %v7896, 7
      %v7898 = vsub.s32 %v7895, %v7897
      %v7899 = vrot.slane %v7877, %v7898
      %v7901 = vunpack.c.l.s4 1966171168
      %v7902 = vunpack.c.0.s8 %v7901
      %v7903 = vlaneseq
      %v7904 = vshrl.u32 %v7903, 7
      %v7905 = vsub.s32 %v7902, %v7904
      %v7906 = vrot.slane %v7878, %v7905
      %v7907 = vcombine.high %v7885, %v7885
      %v7908 = vcombine.high %v7892, %v7892
      %v7909 = vcombine.high %v7899, %v7899
      %v7910 = vcombine.high %v7708, %v7708
      %v7912 = vunpack.c.l.s4 1966171168
      %v7913 = vunpack.c.0.s8 %v7912
      %v7914 = vlaneseq
      %v7915 = vshrl.u32 %v7914, 7
      %v7916 = vsub.s32 %v7913, %v7915
      %v7917 = vrot.slane %v7708, %v7916
      %v7919 = vunpack.c.l.s4 1966171168
      %v7920 = vunpack.c.0.s8 %v7919
      %v7921 = vlaneseq
      %v7922 = vshrl.u32 %v7921, 7
      %v7923 = vsub.s32 %v7920, %v7922
      %v7924 = vrot.slane %v7910, %v7923
      %v7925 = vcombine.high %v7917, %v7917
      %v7926 = vcombine.high %v7924, %v7924
      %v7928 = vunpack.c.l.s4 1966171168
      %v7929 = vunpack.c.0.s8 %v7928
      %v7930 = vlaneseq
      %v7931 = vshrl.u32 %v7930, 7
      %v7932 = vsub.s32 %v7929, %v7931
      %v7933 = vrot.slane %v7917, %v7932
      %v7935 = vunpack.c.l.s4 1966171168
      %v7936 = vunpack.c.0.s8 %v7935
      %v7937 = vlaneseq
      %v7938 = vshrl.u32 %v7937, 7
      %v7939 = vsub.s32 %v7936, %v7938
      %v7940 = vrot.slane %v7924, %v7939
      %v7942 = vunpack.c.l.s4 1966171168
      %v7943 = vunpack.c.0.s8 %v7942
      %v7944 = vlaneseq
      %v7945 = vshrl.u32 %v7944, 7
      %v7946 = vsub.s32 %v7943, %v7945
      %v7947 = vrot.slane %v7925, %v7946
      %v7949 = vunpack.c.l.s4 1966171168
      %v7950 = vunpack.c.0.s8 %v7949
      %v7951 = vlaneseq
      %v7952 = vshrl.u32 %v7951, 7
      %v7953 = vsub.s32 %v7950, %v7952
      %v7954 = vrot.slane %v7926, %v7953
      %v7955 = vcombine.high %v7933, %v7933
      %v7956 = vcombine.high %v7940, %v7940
      %v7957 = vcombine.high %v7947, %v7947
      %v7958 = vcombine.high %v7709, %v7709
      %v7960 = vunpack.c.l.s4 1966171168
      %v7961 = vunpack.c.0.s8 %v7960
      %v7962 = vlaneseq
      %v7963 = vshrl.u32 %v7962, 7
      %v7964 = vsub.s32 %v7961, %v7963
      %v7965 = vrot.slane %v7709, %v7964
      %v7967 = vunpack.c.l.s4 1966171168
      %v7968 = vunpack.c.0.s8 %v7967
      %v7969 = vlaneseq
      %v7970 = vshrl.u32 %v7969, 7
      %v7971 = vsub.s32 %v7968, %v7970
      %v7972 = vrot.slane %v7958, %v7971
      %v7973 = vcombine.high %v7965, %v7965
      %v7974 = vcombine.high %v7972, %v7972
      %v7976 = vunpack.c.l.s4 1966171168
      %v7977 = vunpack.c.0.s8 %v7976
      %v7978 = vlaneseq
      %v7979 = vshrl.u32 %v7978, 7
      %v7980 = vsub.s32 %v7977, %v7979
      %v7981 = vrot.slane %v7965, %v7980
      %v7983 = vunpack.c.l.s4 1966171168
      %v7984 = vunpack.c.0.s8 %v7983
      %v7985 = vlaneseq
      %v7986 = vshrl.u32 %v7985, 7
      %v7987 = vsub.s32 %v7984, %v7986
      %v7988 = vrot.slane %v7972, %v7987
      %v7990 = vunpack.c.l.s4 1966171168
      %v7991 = vunpack.c.0.s8 %v7990
      %v7992 = vlaneseq
      %v7993 = vshrl.u32 %v7992, 7
      %v7994 = vsub.s32 %v7991, %v7993
      %v7995 = vrot.slane %v7973, %v7994
      %v7997 = vunpack.c.l.s4 1966171168
      %v7998 = vunpack.c.0.s8 %v7997
      %v7999 = vlaneseq
      %v8000 = vshrl.u32 %v7999, 7
      %v8001 = vsub.s32 %v7998, %v8000
      %v8002 = vrot.slane %v7974, %v8001
      %v8003 = vcombine.high %v7981, %v7981
      %v8004 = vcombine.high %v7988, %v7988
      %v8005 = vcombine.high %v7995, %v7995
      %v8006 = vcombine.high %v7710, %v7710
      %v8008 = vunpack.c.l.s4 1966171168
      %v8009 = vunpack.c.0.s8 %v8008
      %v8010 = vlaneseq
      %v8011 = vshrl.u32 %v8010, 7
      %v8012 = vsub.s32 %v8009, %v8011
      %v8013 = vrot.slane %v7710, %v8012
      %v8015 = vunpack.c.l.s4 1966171168
      %v8016 = vunpack.c.0.s8 %v8015
      %v8017 = vlaneseq
      %v8018 = vshrl.u32 %v8017, 7
      %v8019 = vsub.s32 %v8016, %v8018
      %v8020 = vrot.slane %v8006, %v8019
      %v8021 = vcombine.high %v8013, %v8013
      %v8022 = vcombine.high %v8020, %v8020
      %v8024 = vunpack.c.l.s4 1966171168
      %v8025 = vunpack.c.0.s8 %v8024
      %v8026 = vlaneseq
      %v8027 = vshrl.u32 %v8026, 7
      %v8028 = vsub.s32 %v8025, %v8027
      %v8029 = vrot.slane %v8013, %v8028
      %v8031 = vunpack.c.l.s4 1966171168
      %v8032 = vunpack.c.0.s8 %v8031
      %v8033 = vlaneseq
      %v8034 = vshrl.u32 %v8033, 7
      %v8035 = vsub.s32 %v8032, %v8034
      %v8036 = vrot.slane %v8020, %v8035
      %v8038 = vunpack.c.l.s4 1966171168
      %v8039 = vunpack.c.0.s8 %v8038
      %v8040 = vlaneseq
      %v8041 = vshrl.u32 %v8040, 7
      %v8042 = vsub.s32 %v8039, %v8041
      %v8043 = vrot.slane %v8021, %v8042
      %v8045 = vunpack.c.l.s4 1966171168
      %v8046 = vunpack.c.0.s8 %v8045
      %v8047 = vlaneseq
      %v8048 = vshrl.u32 %v8047, 7
      %v8049 = vsub.s32 %v8046, %v8048
      %v8050 = vrot.slane %v8022, %v8049
      %v8051 = vcombine.high %v8029, %v8029
      %v8052 = vcombine.high %v8036, %v8036
      %v8053 = vcombine.high %v8043, %v8043
      %v8054 = vcombine.low %v7741, %v7755
      %v8055 = vcombine.low %v7763, %v7765
      %v8056 = vcombine.low %v7748, %v7762
      %v8057 = vcombine.low %v7764, %v7789
      %v8059 = vunpack.c.l.s4 1966171168
      %v8060 = vunpack.c.0.s8 %v8059
      %v8061 = vlaneseq
      %v8062 = vshrl.u32 %v8061, 7
      %v8063 = vsub.s32 %v8060, %v8062
      %v8064 = vrot.slane %v8054, %v8063
      %v8066 = vunpack.c.l.s4 1966171168
      %v8067 = vunpack.c.0.s8 %v8066
      %v8068 = vlaneseq
      %v8069 = vshrl.u32 %v8068, 7
      %v8070 = vsub.s32 %v8067, %v8069
      %v8071 = vrot.slane %v8055, %v8070
      %v8073 = vunpack.c.l.s4 1966171168
      %v8074 = vunpack.c.0.s8 %v8073
      %v8075 = vlaneseq
      %v8076 = vshrl.u32 %v8075, 7
      %v8077 = vsub.s32 %v8074, %v8076
      %v8078 = vrot.slane %v8056, %v8077
      %v8080 = vunpack.c.l.s4 1966171168
      %v8081 = vunpack.c.0.s8 %v8080
      %v8082 = vlaneseq
      %v8083 = vshrl.u32 %v8082, 7
      %v8084 = vsub.s32 %v8081, %v8083
      %v8085 = vrot.slane %v8057, %v8084
      %v8086 = vcombine.low %v8064, %v8071
      %v8087 = vcombine.low %v8078, %v8085
      %v8089 = vunpack.c.l.s4 1966171168
      %v8090 = vunpack.c.0.s8 %v8089
      %v8091 = vlaneseq
      %v8092 = vshrl.u32 %v8091, 7
      %v8093 = vsub.s32 %v8090, %v8092
      %v8094 = vrot.slane %v8086, %v8093
      %v8096 = vunpack.c.l.s4 1966171168
      %v8097 = vunpack.c.0.s8 %v8096
      %v8098 = vlaneseq
      %v8099 = vshrl.u32 %v8098, 7
      %v8100 = vsub.s32 %v8097, %v8099
      %v8101 = vrot.slane %v8087, %v8100
      %v8102 = vcombine.low %v8094, %v8101
      %v8103 = vcombine.low %v7803, %v7811
      %v8104 = vcombine.low %v7813, %v7796
      %v8105 = vcombine.low %v7810, %v7812
      %v8106 = vcombine.low %v7837, %v7851
      %v8108 = vunpack.c.l.s4 1966171168
      %v8109 = vunpack.c.0.s8 %v8108
      %v8110 = vlaneseq
      %v8111 = vshrl.u32 %v8110, 7
      %v8112 = vsub.s32 %v8109, %v8111
      %v8113 = vrot.slane %v8103, %v8112
      %v8115 = vunpack.c.l.s4 1966171168
      %v8116 = vunpack.c.0.s8 %v8115
      %v8117 = vlaneseq
      %v8118 = vshrl.u32 %v8117, 7
      %v8119 = vsub.s32 %v8116, %v8118
      %v8120 = vrot.slane %v8104, %v8119
      %v8122 = vunpack.c.l.s4 1966171168
      %v8123 = vunpack.c.0.s8 %v8122
      %v8124 = vlaneseq
      %v8125 = vshrl.u32 %v8124, 7
      %v8126 = vsub.s32 %v8123, %v8125
      %v8127 = vrot.slane %v8105, %v8126
      %v8129 = vunpack.c.l.s4 1966171168
      %v8130 = vunpack.c.0.s8 %v8129
      %v8131 = vlaneseq
      %v8132 = vshrl.u32 %v8131, 7
      %v8133 = vsub.s32 %v8130, %v8132
      %v8134 = vrot.slane %v8106, %v8133
      %v8135 = vcombine.low %v8113, %v8120
      %v8136 = vcombine.low %v8127, %v8134
      %v8138 = vunpack.c.l.s4 1966171168
      %v8139 = vunpack.c.0.s8 %v8138
      %v8140 = vlaneseq
      %v8141 = vshrl.u32 %v8140, 7
      %v8142 = vsub.s32 %v8139, %v8141
      %v8143 = vrot.slane %v8135, %v8142
      %v8145 = vunpack.c.l.s4 1966171168
      %v8146 = vunpack.c.0.s8 %v8145
      %v8147 = vlaneseq
      %v8148 = vshrl.u32 %v8147, 7
      %v8149 = vsub.s32 %v8146, %v8148
      %v8150 = vrot.slane %v8136, %v8149
      %v8151 = vcombine.low %v8143, %v8150
      %v8152 = vcombine.low %v7859, %v7861
      %v8153 = vcombine.low %v7844, %v7858
      %v8154 = vcombine.low %v7860, %v7885
      %v8155 = vcombine.low %v7899, %v7907
      %v8157 = vunpack.c.l.s4 1966171168
      %v8158 = vunpack.c.0.s8 %v8157
      %v8159 = vlaneseq
      %v8160 = vshrl.u32 %v8159, 7
      %v8161 = vsub.s32 %v8158, %v8160
      %v8162 = vrot.slane %v8152, %v8161
      %v8164 = vunpack.c.l.s4 1966171168
      %v8165 = vunpack.c.0.s8 %v8164
      %v8166 = vlaneseq
      %v8167 = vshrl.u32 %v8166, 7
      %v8168 = vsub.s32 %v8165, %v8167
      %v8169 = vrot.slane %v8153, %v8168
      %v8171 = vunpack.c.l.s4 1966171168
      %v8172 = vunpack.c.0.s8 %v8171
      %v8173 = vlaneseq
      %v8174 = vshrl.u32 %v8173, 7
      %v8175 = vsub.s32 %v8172, %v8174
      %v8176 = vrot.slane %v8154, %v8175
      %v8178 = vunpack.c.l.s4 1966171168
      %v8179 = vunpack.c.0.s8 %v8178
      %v8180 = vlaneseq
      %v8181 = vshrl.u32 %v8180, 7
      %v8182 = vsub.s32 %v8179, %v8181
      %v8183 = vrot.slane %v8155, %v8182
      %v8184 = vcombine.low %v8162, %v8169
      %v8185 = vcombine.low %v8176, %v8183
      %v8187 = vunpack.c.l.s4 1966171168
      %v8188 = vunpack.c.0.s8 %v8187
      %v8189 = vlaneseq
      %v8190 = vshrl.u32 %v8189, 7
      %v8191 = vsub.s32 %v8188, %v8190
      %v8192 = vrot.slane %v8184, %v8191
      %v8194 = vunpack.c.l.s4 1966171168
      %v8195 = vunpack.c.0.s8 %v8194
      %v8196 = vlaneseq
      %v8197 = vshrl.u32 %v8196, 7
      %v8198 = vsub.s32 %v8195, %v8197
      %v8199 = vrot.slane %v8185, %v8198
      %v8200 = vcombine.low %v8192, %v8199
      %v8201 = vcombine.low %v7909, %v7892
      %v8202 = vcombine.low %v7906, %v7908
      %v8203 = vcombine.low %v7933, %v7947
      %v8204 = vcombine.low %v7955, %v7957
      %v8206 = vunpack.c.l.s4 1966171168
      %v8207 = vunpack.c.0.s8 %v8206
      %v8208 = vlaneseq
      %v8209 = vshrl.u32 %v8208, 7
      %v8210 = vsub.s32 %v8207, %v8209
      %v8211 = vrot.slane %v8201, %v8210
      %v8213 = vunpack.c.l.s4 1966171168
      %v8214 = vunpack.c.0.s8 %v8213
      %v8215 = vlaneseq
      %v8216 = vshrl.u32 %v8215, 7
      %v8217 = vsub.s32 %v8214, %v8216
      %v8218 = vrot.slane %v8202, %v8217
      %v8220 = vunpack.c.l.s4 1966171168
      %v8221 = vunpack.c.0.s8 %v8220
      %v8222 = vlaneseq
      %v8223 = vshrl.u32 %v8222, 7
      %v8224 = vsub.s32 %v8221, %v8223
      %v8225 = vrot.slane %v8203, %v8224
      %v8227 = vunpack.c.l.s4 1966171168
      %v8228 = vunpack.c.0.s8 %v8227
      %v8229 = vlaneseq
      %v8230 = vshrl.u32 %v8229, 7
      %v8231 = vsub.s32 %v8228, %v8230
      %v8232 = vrot.slane %v8204, %v8231
      %v8233 = vcombine.low %v8211, %v8218
      %v8234 = vcombine.low %v8225, %v8232
      %v8236 = vunpack.c.l.s4 1966171168
      %v8237 = vunpack.c.0.s8 %v8236
      %v8238 = vlaneseq
      %v8239 = vshrl.u32 %v8238, 7
      %v8240 = vsub.s32 %v8237, %v8239
      %v8241 = vrot.slane %v8233, %v8240
      %v8243 = vunpack.c.l.s4 1966171168
      %v8244 = vunpack.c.0.s8 %v8243
      %v8245 = vlaneseq
      %v8246 = vshrl.u32 %v8245, 7
      %v8247 = vsub.s32 %v8244, %v8246
      %v8248 = vrot.slane %v8234, %v8247
      %v8249 = vcombine.low %v8241, %v8248
      %v8250 = vcombine.low %v7940, %v7954
      %v8251 = vcombine.low %v7956, %v7981
      %v8252 = vcombine.low %v7995, %v8003
      %v8253 = vcombine.low %v8005, %v7988
      %v8255 = vunpack.c.l.s4 1966171168
      %v8256 = vunpack.c.0.s8 %v8255
      %v8257 = vlaneseq
      %v8258 = vshrl.u32 %v8257, 7
      %v8259 = vsub.s32 %v8256, %v8258
      %v8260 = vrot.slane %v8250, %v8259
      %v8262 = vunpack.c.l.s4 1966171168
      %v8263 = vunpack.c.0.s8 %v8262
      %v8264 = vlaneseq
      %v8265 = vshrl.u32 %v8264, 7
      %v8266 = vsub.s32 %v8263, %v8265
      %v8267 = vrot.slane %v8251, %v8266
      %v8269 = vunpack.c.l.s4 1966171168
      %v8270 = vunpack.c.0.s8 %v8269
      %v8271 = vlaneseq
      %v8272 = vshrl.u32 %v8271, 7
      %v8273 = vsub.s32 %v8270, %v8272
      %v8274 = vrot.slane %v8252, %v8273
      %v8276 = vunpack.c.l.s4 1966171168
      %v8277 = vunpack.c.0.s8 %v8276
      %v8278 = vlaneseq
      %v8279 = vshrl.u32 %v8278, 7
      %v8280 = vsub.s32 %v8277, %v8279
      %v8281 = vrot.slane %v8253, %v8280
      %v8282 = vcombine.low %v8260, %v8267
      %v8283 = vcombine.low %v8274, %v8281
      %v8285 = vunpack.c.l.s4 1966171168
      %v8286 = vunpack.c.0.s8 %v8285
      %v8287 = vlaneseq
      %v8288 = vshrl.u32 %v8287, 7
      %v8289 = vsub.s32 %v8286, %v8288
      %v8290 = vrot.slane %v8282, %v8289
      %v8292 = vunpack.c.l.s4 1966171168
      %v8293 = vunpack.c.0.s8 %v8292
      %v8294 = vlaneseq
      %v8295 = vshrl.u32 %v8294, 7
      %v8296 = vsub.s32 %v8293, %v8295
      %v8297 = vrot.slane %v8283, %v8296
      %v8298 = vcombine.low %v8290, %v8297
      %v8299 = vcombine.low %v8002, %v8004
      %v8300 = vcombine.low %v8029, %v8043
      %v8301 = vcombine.low %v8051, %v8053
      %v8302 = vcombine.low %v8036, %v8050
      %v8304 = vunpack.c.l.s4 1966171168
      %v8305 = vunpack.c.0.s8 %v8304
      %v8306 = vlaneseq
      %v8307 = vshrl.u32 %v8306, 7
      %v8308 = vsub.s32 %v8305, %v8307
      %v8309 = vrot.slane %v8299, %v8308
      %v8311 = vunpack.c.l.s4 1966171168
      %v8312 = vunpack.c.0.s8 %v8311
      %v8313 = vlaneseq
      %v8314 = vshrl.u32 %v8313, 7
      %v8315 = vsub.s32 %v8312, %v8314
      %v8316 = vrot.slane %v8300, %v8315
      %v8318 = vunpack.c.l.s4 1966171168
      %v8319 = vunpack.c.0.s8 %v8318
      %v8320 = vlaneseq
      %v8321 = vshrl.u32 %v8320, 7
      %v8322 = vsub.s32 %v8319, %v8321
      %v8323 = vrot.slane %v8301, %v8322
      %v8325 = vunpack.c.l.s4 1966171168
      %v8326 = vunpack.c.0.s8 %v8325
      %v8327 = vlaneseq
      %v8328 = vshrl.u32 %v8327, 7
      %v8329 = vsub.s32 %v8326, %v8328
      %v8330 = vrot.slane %v8302, %v8329
      %v8331 = vcombine.low %v8309, %v8316
      %v8332 = vcombine.low %v8323, %v8330
      %v8334 = vunpack.c.l.s4 1966171168
      %v8335 = vunpack.c.0.s8 %v8334
      %v8336 = vlaneseq
      %v8337 = vshrl.u32 %v8336, 7
      %v8338 = vsub.s32 %v8335, %v8337
      %v8339 = vrot.slane %v8331, %v8338
      %v8341 = vunpack.c.l.s4 1966171168
      %v8342 = vunpack.c.0.s8 %v8341
      %v8343 = vlaneseq
      %v8344 = vshrl.u32 %v8343, 7
      %v8345 = vsub.s32 %v8342, %v8344
      %v8346 = vrot.slane %v8332, %v8345
      %v8347 = vcombine.low %v8339, %v8346
      %v8349 = vunpack.c.l.s4 1966171168
      %v8350 = vunpack.c.0.s8 %v8349
      %v8351 = vlaneseq
      %v8352 = vshrl.u32 %v8351, 7
      %v8353 = vsub.s32 %v8350, %v8352
      %v8354 = vrot.slane %v8052, %v8353
      %v8356 = vunpack.c.l.s4 1966171168
      %v8357 = vunpack.c.0.s8 %v8356
      %v8358 = vlaneseq
      %v8359 = vshrl.u32 %v8358, 7
      %v8360 = vsub.s32 %v8357, %v8359
      %v8361 = vrot.slane %v8354, %v8360
      %v8369 = vpack.c.bf16 %v8151, %v8102
      %v8370 = vpack.c.bf16 %v8249, %v8200
      %v8371 = vpack.c.bf16 %v8347, %v8298
      %v8372 = vpack.c.bf16 %v8361, %v8361
      %v8373 = vld [vmem:[%s10] sm:$0xf]
      %v8374 = vld [vmem:[%s10 + $0x4] sm:$0xf]
      %v8375 = vld [vmem:[%s10 + $0x8] sm:$0xf]
      %v8376 = vld [vmem:[%s10 + $0xc] sm:$0xf]
      %v8377 = vld [vmem:[%s10 + $0x10] sm:$0xf]
      %v8378 = vld [vmem:[%s10 + $0x14] sm:$0xf]
      %v8379 = vld [vmem:[%s10 + $0x18] sm:$0xf]
      %v8380 = vld [vmem:[%s10 + $0x1c] sm:$0xf]
      %v8381 = vld [vmem:[%s10 + $0x20] sm:$0xf]
      %v8391 = vunpack.c.l.b16 %v8373
      %v8392 = vunpack.c.l.b16 %v8374
      %v8393 = vunpack.c.l.b16 %v8375
      %v8394 = vunpack.c.l.b16 %v8376
      %v8395 = vunpack.c.l.b16 %v8377
      %v8396 = vunpack.c.l.b16 %v8378
      %v8397 = vunpack.c.l.b16 %v8379
      %v8398 = vunpack.c.l.b16 %v8380
      %v8399 = vunpack.c.l.b16 %v8381
      %v8400 = vpack.c.b16 %v8392, %v8391
      %v8401 = vpack.c.b16 %v8394, %v8393
      %v8402 = vpack.c.b16 %v8396, %v8395
      %v8403 = vpack.c.b16 %v8398, %v8397
      %v8404 = vpack.c.b16 %v8399, %v8399
      %v8410 = vsel %vm5424, %v8369, 0
      %v8413 = vsel %vm5424, %v8370, 0
      %v8416 = vsel %vm5424, %v8371, 0
      %v8419 = vsel %vm5424, %v8372, 0
      %v8422 = vsel %vm5473, %v8404, 0
      %8424 = vmatprep.subr.bf16.mxu0 0
      %8425 = vmatpush1.bf16.msra.mxu0 %v8400
      %8426 = vmatprep.subr.bf16.mxu0 0
      %8427 = vmatpush1.bf16.msra.mxu0 %v8401
      %8428 = vmatprep.subr.bf16.mxu0 0
      %8429 = vmatpush1.bf16.msra.mxu0 %v8402
      %8430 = vmatprep.subr.bf16.mxu0 0
      %8431 = vmatpush1.bf16.msra.mxu0 %v8403
      %8432 = vmatprep.subr.bf16.mxu0 0
      %8433 = vmatpush1.bf16.msra.mxu0 %v8422
      %8434 = vmatprep.subr.bf16.mxu0 0
      %8435 = vmatpush1.bf16.msra.mxu0 0
      %8436 = vmatprep.subr.bf16.mxu0 0
      %8437 = vmatpush1.bf16.msra.mxu0 0
      %8438 = vmatprep.subr.bf16.mxu0 0
      %8439 = vmatpush1.bf16.msra.mxu0 0
      %8440 = vmatprep.subr.bf16.mxu0 0
      %8441 = vmatpush1.bf16.msra.mxu0 0
      %8442 = vmatprep.subr.bf16.mxu0 0
      %8443 = vmatpush1.bf16.msra.mxu0 0
      %8444 = vmatprep.subr.bf16.mxu0 0
      %8445 = vmatpush1.bf16.msra.mxu0 0
      %8446 = vmatprep.subr.bf16.mxu0 0
      %8447 = vmatpush1.bf16.msra.mxu0 0
      %8448 = vmatprep.subr.bf16.mxu0 0
      %8449 = vmatpush1.bf16.msra.mxu0 0
      %8450 = vmatprep.subr.bf16.mxu0 0
      %8451 = vmatpush1.bf16.msra.mxu0 0
      %8452 = vmatprep.subr.bf16.mxu0 0
      %8453 = vmatpush1.bf16.msra.mxu0 0
      %8454 = vmatprep.subr.bf16.mxu0 0
      %8455 = vmatpush1.bf16.msra.mxu0 0
      %8456 = vmatprep.mubr.bf16.mxu0 0
      %8457 = vmatmul.mubr.bf16.gmra.mrb[0].mxu0 %v8410
      %v8458 = vpop.f32.mrb[0].mxu0
      %v8459 = vadd.f32 0.0, %v8458
      %v8460 = vpop.f32.mrb[0].mxu0
      %v8461 = vpop.f32.mrb[0].mxu0
      %v8462 = vadd.f32 0.0, %v8461
      %v8463 = vpop.f32.mrb[0].mxu0
      %8464 = vmatprep.mubr.bf16.mxu0 0
      %8465 = vmatmul.mubr.bf16.gmra.mrb[0].mxu0 %v8413
      %v8466 = vpop.f32.mrb[0].mxu0
      %v8467 = vadd.f32 0.0, %v8466
      %v8468 = vpop.f32.mrb[0].mxu0
      %v8469 = vpop.f32.mrb[0].mxu0
      %v8470 = vadd.f32 0.0, %v8469
      %v8471 = vpop.f32.mrb[0].mxu0
      %8472 = vmatprep.mubr.bf16.mxu0 0
      %8473 = vmatmul.mubr.bf16.gmra.mrb[0].mxu0 %v8416
      %v8474 = vpop.f32.mrb[0].mxu0
      %v8475 = vadd.f32 0.0, %v8474
      %v8476 = vpop.f32.mrb[0].mxu0
      %v8477 = vpop.f32.mrb[0].mxu0
      %v8478 = vadd.f32 0.0, %v8477
      %v8479 = vpop.f32.mrb[0].mxu0
      %8480 = vmatprep.mubr.bf16.mxu0 0
      %8481 = vmatmul.mubr.bf16.gmra.mrb[0].mxu0 %v8419
      %v8482 = vpop.f32.mrb[0].mxu0
      %v8483 = vadd.f32 0.0, %v8482
      %v8484 = vpop.f32.mrb[0].mxu0
      %v8485 = vpop.f32.mrb[0].mxu0
      %v8486 = vpop.f32.mrb[0].mxu0
      %8487 = vdwg.mxu0
      %v8488 = vld [vmem:[%s11] sm:$0x1]
      %v8490 = vlaneseq
      %v8491 = vshrl.u32 %v8490, 7
      %v8492 = vsub.s32 0, %v8491
      %v8493 = vrot.slane %v8488, %v8492
      %v8495 = vmul.f32 %v8459, %v8493
      %v8496 = vmul.f32 %v8462, %v8493
      %v8497 = vmul.f32 %v8467, %v8493
      %v8498 = vmul.f32 %v8470, %v8493
      %v8499 = vmul.f32 %v8475, %v8493
      %v8500 = vmul.f32 %v8478, %v8493
      %v8501 = vmul.f32 %v8483, %v8493
      %v8502 = vld [vmem:[%s12] sm:$0x1]
      %v8504 = vlaneseq
      %v8505 = vshrl.u32 %v8504, 7
      %v8506 = vsub.s32 0, %v8505
      %v8507 = vrot.slane %v8502, %v8506
      %v8509 = vadd.f32 %v8495, %v8507
      %v8510 = vadd.f32 %v8496, %v8507
      %v8511 = vadd.f32 %v8497, %v8507
      %v8512 = vadd.f32 %v8498, %v8507
      %v8513 = vadd.f32 %v8499, %v8507
      %v8514 = vadd.f32 %v8500, %v8507
      %v8515 = vadd.f32 %v8501, %v8507
      %v8516 = vmax.f32 %v8509, 0.0
      %v8517 = vmax.f32 %v8510, 0.0
      %v8518 = vmax.f32 %v8511, 0.0
      %v8519 = vmax.f32 %v8512, 0.0
      %v8520 = vmax.f32 %v8513, 0.0
      %v8521 = vmax.f32 %v8514, 0.0
      %v8522 = vmax.f32 %v8515, 0.0
      %v8523 = vmin.f32 %v8516, 6.0
      %v8524 = vmin.f32 %v8517, 6.0
      %v8525 = vmin.f32 %v8518, 6.0
      %v8526 = vmin.f32 %v8519, 6.0
      %v8527 = vmin.f32 %v8520, 6.0
      %v8528 = vmin.f32 %v8521, 6.0
      %v8529 = vmin.f32 %v8522, 6.0
      %v8530 = vrot.slane %v497, 7
      %v8531 = vrot.slane %v8530, 2
      %v8532 = vrot.slane %v505, 7
      %v8533 = vrot.slane %v8532, 2
      %v8534 = vrot.slane %v504, 7
      %v8535 = vrot.slane %v8534, 2
      %v8536 = vrot.slane %v506, 7
      %v8537 = vrot.slane %v8536, 2
      %v8538 = vrot.slane %v514, 7
      %v8539 = vrot.slane %v8538, 2
      %v8540 = vrot.slane %v522, 7
      %v8541 = vrot.slane %v8540, 2
      %v8542 = vrot.slane %v521, 7
      %v8543 = vrot.slane %v8542, 2
      %v8544 = vrot.slane %v531, 7
      %v8545 = vrot.slane %v8544, 2
      %v8546 = vrot.slane %v539, 7
      %v8547 = vrot.slane %v8546, 2
      %v8548 = vrot.slane %v538, 7
      %v8549 = vrot.slane %v8548, 2
      %v8550 = vrot.slane %v540, 7
      %v8551 = vrot.slane %v8550, 2
      %v8552 = vrot.slane %v548, 7
      %v8553 = vrot.slane %v8552, 2
      %v8554 = vrot.slane %v556, 7
      %v8555 = vrot.slane %v8554, 2
      %v8556 = vrot.slane %v555, 7
      %v8557 = vrot.slane %v8556, 2
      %v8558 = vrot.slane %v565, 7
      %v8559 = vrot.slane %v8558, 2
      %v8560 = vrot.slane %v573, 7
      %v8561 = vrot.slane %v8560, 2
      %v8562 = vrot.slane %v572, 7
      %v8563 = vrot.slane %v8562, 2
      %v8564 = vrot.slane %v574, 7
      %v8565 = vrot.slane %v8564, 2
      %v8566 = vrot.slane %v582, 7
      %v8567 = vrot.slane %v8566, 2
      %v8568 = vrot.slane %v590, 7
      %v8569 = vrot.slane %v8568, 2
      %v8570 = vrot.slane %v589, 7
      %v8571 = vrot.slane %v8570, 2
      %v8572 = vrot.slane %v599, 7
      %v8573 = vrot.slane %v8572, 2
      %v8574 = vrot.slane %v607, 7
      %v8575 = vrot.slane %v8574, 2
      %v8576 = vrot.slane %v606, 7
      %v8577 = vrot.slane %v8576, 2
      %v8578 = vrot.slane %v608, 7
      %v8579 = vrot.slane %v8578, 2
      %v8580 = vrot.slane %v616, 7
      %v8581 = vrot.slane %v8580, 2
      %v8582 = vrot.slane %v624, 7
      %v8583 = vrot.slane %v8582, 2
      %v8584 = vrot.slane %v623, 7
      %v8585 = vrot.slane %v8584, 2
      %v8586 = vrot.slane %v633, 7
      %v8587 = vrot.slane %v8586, 2
      %v8588 = vrot.slane %v641, 7
      %v8589 = vrot.slane %v8588, 2
      %v8590 = vrot.slane %v640, 7
      %v8591 = vrot.slane %v8590, 2
      %v8592 = vrot.slane %v642, 7
      %v8593 = vrot.slane %v8592, 2
      %v8594 = vrot.slane %v650, 7
      %v8595 = vrot.slane %v8594, 2
      %v8596 = vrot.slane %v658, 7
      %v8597 = vrot.slane %v8596, 2
      %v8598 = vrot.slane %v657, 7
      %v8599 = vrot.slane %v8598, 2
      %v8600 = vrot.slane %v667, 7
      %v8601 = vrot.slane %v8600, 2
      %v8602 = vrot.slane %v675, 7
      %v8603 = vrot.slane %v8602, 2
      %v8604 = vrot.slane %v674, 7
      %v8605 = vrot.slane %v8604, 2
      %v8606 = vrot.slane %v676, 7
      %v8607 = vrot.slane %v8606, 2
      %v8608 = vrot.slane %v684, 7
      %v8609 = vrot.slane %v8608, 2
      %v8610 = vrot.slane %v692, 7
      %v8611 = vrot.slane %v8610, 2
      %v8612 = vrot.slane %v691, 7
      %v8613 = vrot.slane %v8612, 2
      %v8614 = vrot.slane %v701, 7
      %v8615 = vrot.slane %v8614, 2
      %v8616 = vrot.slane %v709, 7
      %v8617 = vrot.slane %v8616, 2
      %v8618 = vrot.slane %v708, 7
      %v8619 = vrot.slane %v8618, 2
      %v8620 = vrot.slane %v710, 7
      %v8621 = vrot.slane %v8620, 2
      %v8622 = vrot.slane %v718, 7
      %v8623 = vrot.slane %v8622, 2
      %v8624 = vrot.slane %v726, 7
      %v8625 = vrot.slane %v8624, 2
      %v8626 = vrot.slane %v725, 7
      %v8627 = vrot.slane %v8626, 2
      %v8677 = vmax.f32 %v497, %v8531
      %v8678 = vmax.f32 %v505, %v8533
      %v8679 = vmax.f32 %v504, %v8535
      %v8680 = vmax.f32 %v506, %v8537
      %v8681 = vmax.f32 %v514, %v8539
      %v8682 = vmax.f32 %v522, %v8541
      %v8683 = vmax.f32 %v521, %v8543
      %v8684 = vmax.f32 %v531, %v8545
      %v8685 = vmax.f32 %v539, %v8547
      %v8686 = vmax.f32 %v538, %v8549
      %v8687 = vmax.f32 %v540, %v8551
      %v8688 = vmax.f32 %v548, %v8553
      %v8689 = vmax.f32 %v556, %v8555
      %v8690 = vmax.f32 %v555, %v8557
      %v8691 = vmax.f32 %v565, %v8559
      %v8692 = vmax.f32 %v573, %v8561
      %v8693 = vmax.f32 %v572, %v8563
      %v8694 = vmax.f32 %v574, %v8565
      %v8695 = vmax.f32 %v582, %v8567
      %v8696 = vmax.f32 %v590, %v8569
      %v8697 = vmax.f32 %v589, %v8571
      %v8698 = vmax.f32 %v599, %v8573
      %v8699 = vmax.f32 %v607, %v8575
      %v8700 = vmax.f32 %v606, %v8577
      %v8701 = vmax.f32 %v608, %v8579
      %v8702 = vmax.f32 %v616, %v8581
      %v8703 = vmax.f32 %v624, %v8583
      %v8704 = vmax.f32 %v623, %v8585
      %v8705 = vmax.f32 %v633, %v8587
      %v8706 = vmax.f32 %v641, %v8589
      %v8707 = vmax.f32 %v640, %v8591
      %v8708 = vmax.f32 %v642, %v8593
      %v8709 = vmax.f32 %v650, %v8595
      %v8710 = vmax.f32 %v658, %v8597
      %v8711 = vmax.f32 %v657, %v8599
      %v8712 = vmax.f32 %v667, %v8601
      %v8713 = vmax.f32 %v675, %v8603
      %v8714 = vmax.f32 %v674, %v8605
      %v8715 = vmax.f32 %v676, %v8607
      %v8716 = vmax.f32 %v684, %v8609
      %v8717 = vmax.f32 %v692, %v8611
      %v8718 = vmax.f32 %v691, %v8613
      %v8719 = vmax.f32 %v701, %v8615
      %v8720 = vmax.f32 %v709, %v8617
      %v8721 = vmax.f32 %v708, %v8619
      %v8722 = vmax.f32 %v710, %v8621
      %v8723 = vmax.f32 %v718, %v8623
      %v8724 = vmax.f32 %v726, %v8625
      %v8725 = vmax.f32 %v725, %v8627
      %v8726 = vmax.f32 %v8677, %v505
      %v8727 = vmax.f32 %v8678, %v504
      %v8728 = vmax.f32 %v8679, %v506
      %v8729 = vmax.f32 %v8680, %v514
      %v8730 = vmax.f32 %v8681, %v522
      %v8731 = vmax.f32 %v8682, %v521
      %v8732 = vmax.f32 %v8683, %v523
      %v8733 = vmax.f32 %v8684, %v539
      %v8734 = vmax.f32 %v8685, %v538
      %v8735 = vmax.f32 %v8686, %v540
      %v8736 = vmax.f32 %v8687, %v548
      %v8737 = vmax.f32 %v8688, %v556
      %v8738 = vmax.f32 %v8689, %v555
      %v8739 = vmax.f32 %v8690, %v557
      %v8740 = vmax.f32 %v8691, %v573
      %v8741 = vmax.f32 %v8692, %v572
      %v8742 = vmax.f32 %v8693, %v574
      %v8743 = vmax.f32 %v8694, %v582
      %v8744 = vmax.f32 %v8695, %v590
      %v8745 = vmax.f32 %v8696, %v589
      %v8746 = vmax.f32 %v8697, %v591
      %v8747 = vmax.f32 %v8698, %v607
      %v8748 = vmax.f32 %v8699, %v606
      %v8749 = vmax.f32 %v8700, %v608
      %v8750 = vmax.f32 %v8701, %v616
      %v8751 = vmax.f32 %v8702, %v624
      %v8752 = vmax.f32 %v8703, %v623
      %v8753 = vmax.f32 %v8704, %v625
      %v8754 = vmax.f32 %v8705, %v641
      %v8755 = vmax.f32 %v8706, %v640
      %v8756 = vmax.f32 %v8707, %v642
      %v8757 = vmax.f32 %v8708, %v650
      %v8758 = vmax.f32 %v8709, %v658
      %v8759 = vmax.f32 %v8710, %v657
      %v8760 = vmax.f32 %v8711, %v659
      %v8761 = vmax.f32 %v8712, %v675
      %v8762 = vmax.f32 %v8713, %v674
      %v8763 = vmax.f32 %v8714, %v676
      %v8764 = vmax.f32 %v8715, %v684
      %v8765 = vmax.f32 %v8716, %v692
      %v8766 = vmax.f32 %v8717, %v691
      %v8767 = vmax.f32 %v8718, %v693
      %v8768 = vmax.f32 %v8719, %v709
      %v8769 = vmax.f32 %v8720, %v708
      %v8770 = vmax.f32 %v8721, %v710
      %v8771 = vmax.f32 %v8722, %v718
      %v8772 = vmax.f32 %v8723, %v726
      %v8773 = vmax.f32 %v8724, %v725
      %v8774 = vmax.f32 %v8725, %v727
      %v8775 = vmax.f32 %v8726, %v847
      %v8776 = vmax.f32 %v8727, %v855
      %v8777 = vmax.f32 %v8728, %v854
      %v8778 = vmax.f32 %v8729, %v856
      %v8779 = vmax.f32 %v8730, %v864
      %v8780 = vmax.f32 %v8731, %v872
      %v8781 = vmax.f32 %v8732, %v871
      %v8782 = vmax.f32 %v8733, %v881
      %v8783 = vmax.f32 %v8734, %v889
      %v8784 = vmax.f32 %v8735, %v888
      %v8785 = vmax.f32 %v8736, %v890
      %v8786 = vmax.f32 %v8737, %v898
      %v8787 = vmax.f32 %v8738, %v906
      %v8788 = vmax.f32 %v8739, %v905
      %v8789 = vmax.f32 %v8740, %v915
      %v8790 = vmax.f32 %v8741, %v923
      %v8791 = vmax.f32 %v8742, %v922
      %v8792 = vmax.f32 %v8743, %v924
      %v8793 = vmax.f32 %v8744, %v932
      %v8794 = vmax.f32 %v8745, %v940
      %v8795 = vmax.f32 %v8746, %v939
      %v8796 = vmax.f32 %v8747, %v949
      %v8797 = vmax.f32 %v8748, %v957
      %v8798 = vmax.f32 %v8749, %v956
      %v8799 = vmax.f32 %v8750, %v958
      %v8800 = vmax.f32 %v8751, %v966
      %v8801 = vmax.f32 %v8752, %v974
      %v8802 = vmax.f32 %v8753, %v973
      %v8803 = vmax.f32 %v8754, %v983
      %v8804 = vmax.f32 %v8755, %v991
      %v8805 = vmax.f32 %v8756, %v990
      %v8806 = vmax.f32 %v8757, %v992
      %v8807 = vmax.f32 %v8758, %v1000
      %v8808 = vmax.f32 %v8759, %v1008
      %v8809 = vmax.f32 %v8760, %v1007
      %v8810 = vmax.f32 %v8761, %v1017
      %v8811 = vmax.f32 %v8762, %v1025
      %v8812 = vmax.f32 %v8763, %v1024
      %v8813 = vmax.f32 %v8764, %v1026
      %v8814 = vmax.f32 %v8765, %v1034
      %v8815 = vmax.f32 %v8766, %v1042
      %v8816 = vmax.f32 %v8767, %v1041
      %v8817 = vmax.f32 %v8768, %v1051
      %v8818 = vmax.f32 %v8769, %v1059
      %v8819 = vmax.f32 %v8770, %v1058
      %v8820 = vmax.f32 %v8771, %v1060
      %v8821 = vmax.f32 %v8772, %v1068
      %v8822 = vmax.f32 %v8773, %v1076
      %v8823 = vmax.f32 %v8774, %v1075
      %v8824 = vrot.slane %v847, 7
      %v8825 = vrot.slane %v8824, 2
      %v8826 = vrot.slane %v855, 7
      %v8827 = vrot.slane %v8826, 2
      %v8828 = vrot.slane %v854, 7
      %v8829 = vrot.slane %v8828, 2
      %v8830 = vrot.slane %v856, 7
      %v8831 = vrot.slane %v8830, 2
      %v8832 = vrot.slane %v864, 7
      %v8833 = vrot.slane %v8832, 2
      %v8834 = vrot.slane %v872, 7
      %v8835 = vrot.slane %v8834, 2
      %v8836 = vrot.slane %v871, 7
      %v8837 = vrot.slane %v8836, 2
      %v8838 = vrot.slane %v881, 7
      %v8839 = vrot.slane %v8838, 2
      %v8840 = vrot.slane %v889, 7
      %v8841 = vrot.slane %v8840, 2
      %v8842 = vrot.slane %v888, 7
      %v8843 = vrot.slane %v8842, 2
      %v8844 = vrot.slane %v890, 7
      %v8845 = vrot.slane %v8844, 2
      %v8846 = vrot.slane %v898, 7
      %v8847 = vrot.slane %v8846, 2
      %v8848 = vrot.slane %v906, 7
      %v8849 = vrot.slane %v8848, 2
      %v8850 = vrot.slane %v905, 7
      %v8851 = vrot.slane %v8850, 2
      %v8852 = vrot.slane %v915, 7
      %v8853 = vrot.slane %v8852, 2
      %v8854 = vrot.slane %v923, 7
      %v8855 = vrot.slane %v8854, 2
      %v8856 = vrot.slane %v922, 7
      %v8857 = vrot.slane %v8856, 2
      %v8858 = vrot.slane %v924, 7
      %v8859 = vrot.slane %v8858, 2
      %v8860 = vrot.slane %v932, 7
      %v8861 = vrot.slane %v8860, 2
      %v8862 = vrot.slane %v940, 7
      %v8863 = vrot.slane %v8862, 2
      %v8864 = vrot.slane %v939, 7
      %v8865 = vrot.slane %v8864, 2
      %v8866 = vrot.slane %v949, 7
      %v8867 = vrot.slane %v8866, 2
      %v8868 = vrot.slane %v957, 7
      %v8869 = vrot.slane %v8868, 2
      %v8870 = vrot.slane %v956, 7
      %v8871 = vrot.slane %v8870, 2
      %v8872 = vrot.slane %v958, 7
      %v8873 = vrot.slane %v8872, 2
      %v8874 = vrot.slane %v966, 7
      %v8875 = vrot.slane %v8874, 2
      %v8876 = vrot.slane %v974, 7
      %v8877 = vrot.slane %v8876, 2
      %v8878 = vrot.slane %v973, 7
      %v8879 = vrot.slane %v8878, 2
      %v8880 = vrot.slane %v983, 7
      %v8881 = vrot.slane %v8880, 2
      %v8882 = vrot.slane %v991, 7
      %v8883 = vrot.slane %v8882, 2
      %v8884 = vrot.slane %v990, 7
      %v8885 = vrot.slane %v8884, 2
      %v8886 = vrot.slane %v992, 7
      %v8887 = vrot.slane %v8886, 2
      %v8888 = vrot.slane %v1000, 7
      %v8889 = vrot.slane %v8888, 2
      %v8890 = vrot.slane %v1008, 7
      %v8891 = vrot.slane %v8890, 2
      %v8892 = vrot.slane %v1007, 7
      %v8893 = vrot.slane %v8892, 2
      %v8894 = vrot.slane %v1017, 7
      %v8895 = vrot.slane %v8894, 2
      %v8896 = vrot.slane %v1025, 7
      %v8897 = vrot.slane %v8896, 2
      %v8898 = vrot.slane %v1024, 7
      %v8899 = vrot.slane %v8898, 2
      %v8900 = vrot.slane %v1026, 7
      %v8901 = vrot.slane %v8900, 2
      %v8902 = vrot.slane %v1034, 7
      %v8903 = vrot.slane %v8902, 2
      %v8904 = vrot.slane %v1042, 7
      %v8905 = vrot.slane %v8904, 2
      %v8906 = vrot.slane %v1041, 7
      %v8907 = vrot.slane %v8906, 2
      %v8908 = vrot.slane %v1051, 7
      %v8909 = vrot.slane %v8908, 2
      %v8910 = vrot.slane %v1059, 7
      %v8911 = vrot.slane %v8910, 2
      %v8912 = vrot.slane %v1058, 7
      %v8913 = vrot.slane %v8912, 2
      %v8914 = vrot.slane %v1060, 7
      %v8915 = vrot.slane %v8914, 2
      %v8916 = vrot.slane %v1068, 7
      %v8917 = vrot.slane %v8916, 2
      %v8918 = vrot.slane %v1076, 7
      %v8919 = vrot.slane %v8918, 2
      %v8920 = vrot.slane %v1075, 7
      %v8921 = vrot.slane %v8920, 2
      %v8971 = vmax.f32 %v8775, %v8825
      %v8972 = vmax.f32 %v8776, %v8827
      %v8973 = vmax.f32 %v8777, %v8829
      %v8974 = vmax.f32 %v8778, %v8831
      %v8975 = vmax.f32 %v8779, %v8833
      %v8976 = vmax.f32 %v8780, %v8835
      %v8977 = vmax.f32 %v8781, %v8837
      %v8978 = vmax.f32 %v8782, %v8839
      %v8979 = vmax.f32 %v8783, %v8841
      %v8980 = vmax.f32 %v8784, %v8843
      %v8981 = vmax.f32 %v8785, %v8845
      %v8982 = vmax.f32 %v8786, %v8847
      %v8983 = vmax.f32 %v8787, %v8849
      %v8984 = vmax.f32 %v8788, %v8851
      %v8985 = vmax.f32 %v8789, %v8853
      %v8986 = vmax.f32 %v8790, %v8855
      %v8987 = vmax.f32 %v8791, %v8857
      %v8988 = vmax.f32 %v8792, %v8859
      %v8989 = vmax.f32 %v8793, %v8861
      %v8990 = vmax.f32 %v8794, %v8863
      %v8991 = vmax.f32 %v8795, %v8865
      %v8992 = vmax.f32 %v8796, %v8867
      %v8993 = vmax.f32 %v8797, %v8869
      %v8994 = vmax.f32 %v8798, %v8871
      %v8995 = vmax.f32 %v8799, %v8873
      %v8996 = vmax.f32 %v8800, %v8875
      %v8997 = vmax.f32 %v8801, %v8877
      %v8998 = vmax.f32 %v8802, %v8879
      %v8999 = vmax.f32 %v8803, %v8881
      %v9000 = vmax.f32 %v8804, %v8883
      %v9001 = vmax.f32 %v8805, %v8885
      %v9002 = vmax.f32 %v8806, %v8887
      %v9003 = vmax.f32 %v8807, %v8889
      %v9004 = vmax.f32 %v8808, %v8891
      %v9005 = vmax.f32 %v8809, %v8893
      %v9006 = vmax.f32 %v8810, %v8895
      %v9007 = vmax.f32 %v8811, %v8897
      %v9008 = vmax.f32 %v8812, %v8899
      %v9009 = vmax.f32 %v8813, %v8901
      %v9010 = vmax.f32 %v8814, %v8903
      %v9011 = vmax.f32 %v8815, %v8905
      %v9012 = vmax.f32 %v8816, %v8907
      %v9013 = vmax.f32 %v8817, %v8909
      %v9014 = vmax.f32 %v8818, %v8911
      %v9015 = vmax.f32 %v8819, %v8913
      %v9016 = vmax.f32 %v8820, %v8915
      %v9017 = vmax.f32 %v8821, %v8917
      %v9018 = vmax.f32 %v8822, %v8919
      %v9019 = vmax.f32 %v8823, %v8921
      %v9020 = vmax.f32 %v8971, %v855
      %v9021 = vmax.f32 %v8972, %v854
      %v9022 = vmax.f32 %v8973, %v856
      %v9023 = vmax.f32 %v8974, %v864
      %v9024 = vmax.f32 %v8975, %v872
      %v9025 = vmax.f32 %v8976, %v871
      %v9026 = vmax.f32 %v8977, %v873
      %v9027 = vmax.f32 %v8978, %v889
      %v9028 = vmax.f32 %v8979, %v888
      %v9029 = vmax.f32 %v8980, %v890
      %v9030 = vmax.f32 %v8981, %v898
      %v9031 = vmax.f32 %v8982, %v906
      %v9032 = vmax.f32 %v8983, %v905
      %v9033 = vmax.f32 %v8984, %v907
      %v9034 = vmax.f32 %v8985, %v923
      %v9035 = vmax.f32 %v8986, %v922
      %v9036 = vmax.f32 %v8987, %v924
      %v9037 = vmax.f32 %v8988, %v932
      %v9038 = vmax.f32 %v8989, %v940
      %v9039 = vmax.f32 %v8990, %v939
      %v9040 = vmax.f32 %v8991, %v941
      %v9041 = vmax.f32 %v8992, %v957
      %v9042 = vmax.f32 %v8993, %v956
      %v9043 = vmax.f32 %v8994, %v958
      %v9044 = vmax.f32 %v8995, %v966
      %v9045 = vmax.f32 %v8996, %v974
      %v9046 = vmax.f32 %v8997, %v973
      %v9047 = vmax.f32 %v8998, %v975
      %v9048 = vmax.f32 %v8999, %v991
      %v9049 = vmax.f32 %v9000, %v990
      %v9050 = vmax.f32 %v9001, %v992
      %v9051 = vmax.f32 %v9002, %v1000
      %v9052 = vmax.f32 %v9003, %v1008
      %v9053 = vmax.f32 %v9004, %v1007
      %v9054 = vmax.f32 %v9005, %v1009
      %v9055 = vmax.f32 %v9006, %v1025
      %v9056 = vmax.f32 %v9007, %v1024
      %v9057 = vmax.f32 %v9008, %v1026
      %v9058 = vmax.f32 %v9009, %v1034
      %v9059 = vmax.f32 %v9010, %v1042
      %v9060 = vmax.f32 %v9011, %v1041
      %v9061 = vmax.f32 %v9012, %v1043
      %v9062 = vmax.f32 %v9013, %v1059
      %v9063 = vmax.f32 %v9014, %v1058
      %v9064 = vmax.f32 %v9015, %v1060
      %v9065 = vmax.f32 %v9016, %v1068
      %v9066 = vmax.f32 %v9017, %v1076
      %v9067 = vmax.f32 %v9018, %v1075
      %v9068 = vmax.f32 %v9019, %v1077
      %v9069 = vmax.f32 %v9020, %v531
      %v9070 = vmax.f32 %v9021, %v539
      %v9071 = vmax.f32 %v9022, %v538
      %v9072 = vmax.f32 %v9023, %v540
      %v9073 = vmax.f32 %v9024, %v548
      %v9074 = vmax.f32 %v9025, %v556
      %v9075 = vmax.f32 %v9026, %v555
      %v9076 = vmax.f32 %v9027, %v565
      %v9077 = vmax.f32 %v9028, %v573
      %v9078 = vmax.f32 %v9029, %v572
      %v9079 = vmax.f32 %v9030, %v574
      %v9080 = vmax.f32 %v9031, %v582
      %v9081 = vmax.f32 %v9032, %v590
      %v9082 = vmax.f32 %v9033, %v589
      %v9083 = vmax.f32 %v9034, %v599
      %v9084 = vmax.f32 %v9035, %v607
      %v9085 = vmax.f32 %v9036, %v606
      %v9086 = vmax.f32 %v9037, %v608
      %v9087 = vmax.f32 %v9038, %v616
      %v9088 = vmax.f32 %v9039, %v624
      %v9089 = vmax.f32 %v9040, %v623
      %v9090 = vmax.f32 %v9041, %v633
      %v9091 = vmax.f32 %v9042, %v641
      %v9092 = vmax.f32 %v9043, %v640
      %v9093 = vmax.f32 %v9044, %v642
      %v9094 = vmax.f32 %v9045, %v650
      %v9095 = vmax.f32 %v9046, %v658
      %v9096 = vmax.f32 %v9047, %v657
      %v9097 = vmax.f32 %v9048, %v667
      %v9098 = vmax.f32 %v9049, %v675
      %v9099 = vmax.f32 %v9050, %v674
      %v9100 = vmax.f32 %v9051, %v676
      %v9101 = vmax.f32 %v9052, %v684
      %v9102 = vmax.f32 %v9053, %v692
      %v9103 = vmax.f32 %v9054, %v691
      %v9104 = vmax.f32 %v9055, %v701
      %v9105 = vmax.f32 %v9056, %v709
      %v9106 = vmax.f32 %v9057, %v708
      %v9107 = vmax.f32 %v9058, %v710
      %v9108 = vmax.f32 %v9059, %v718
      %v9109 = vmax.f32 %v9060, %v726
      %v9110 = vmax.f32 %v9061, %v725
      %v9111 = vmax.f32 %v9062, %v735
      %v9112 = vmax.f32 %v9063, %v743
      %v9113 = vmax.f32 %v9064, %v742
      %v9114 = vmax.f32 %v9065, %v744
      %v9115 = vmax.f32 %v9066, %v752
      %v9116 = vmax.f32 %v9067, %v760
      %v9117 = vmax.f32 %v9068, %v759
      %v9118 = vrot.slane %v735, 7
      %v9119 = vrot.slane %v9118, 2
      %v9120 = vrot.slane %v743, 7
      %v9121 = vrot.slane %v9120, 2
      %v9122 = vrot.slane %v742, 7
      %v9123 = vrot.slane %v9122, 2
      %v9124 = vrot.slane %v744, 7
      %v9125 = vrot.slane %v9124, 2
      %v9126 = vrot.slane %v752, 7
      %v9127 = vrot.slane %v9126, 2
      %v9128 = vrot.slane %v760, 7
      %v9129 = vrot.slane %v9128, 2
      %v9130 = vrot.slane %v759, 7
      %v9131 = vrot.slane %v9130, 2
      %v9139 = vmax.f32 %v9069, %v8545
      %v9140 = vmax.f32 %v9070, %v8547
      %v9141 = vmax.f32 %v9071, %v8549
      %v9142 = vmax.f32 %v9072, %v8551
      %v9143 = vmax.f32 %v9073, %v8553
      %v9144 = vmax.f32 %v9074, %v8555
      %v9145 = vmax.f32 %v9075, %v8557
      %v9146 = vmax.f32 %v9076, %v8559
      %v9147 = vmax.f32 %v9077, %v8561
      %v9148 = vmax.f32 %v9078, %v8563
      %v9149 = vmax.f32 %v9079, %v8565
      %v9150 = vmax.f32 %v9080, %v8567
      %v9151 = vmax.f32 %v9081, %v8569
      %v9152 = vmax.f32 %v9082, %v8571
      %v9153 = vmax.f32 %v9083, %v8573
      %v9154 = vmax.f32 %v9084, %v8575
      %v9155 = vmax.f32 %v9085, %v8577
      %v9156 = vmax.f32 %v9086, %v8579
      %v9157 = vmax.f32 %v9087, %v8581
      %v9158 = vmax.f32 %v9088, %v8583
      %v9159 = vmax.f32 %v9089, %v8585
      %v9160 = vmax.f32 %v9090, %v8587
      %v9161 = vmax.f32 %v9091, %v8589
      %v9162 = vmax.f32 %v9092, %v8591
      %v9163 = vmax.f32 %v9093, %v8593
      %v9164 = vmax.f32 %v9094, %v8595
      %v9165 = vmax.f32 %v9095, %v8597
      %v9166 = vmax.f32 %v9096, %v8599
      %v9167 = vmax.f32 %v9097, %v8601
      %v9168 = vmax.f32 %v9098, %v8603
      %v9169 = vmax.f32 %v9099, %v8605
      %v9170 = vmax.f32 %v9100, %v8607
      %v9171 = vmax.f32 %v9101, %v8609
      %v9172 = vmax.f32 %v9102, %v8611
      %v9173 = vmax.f32 %v9103, %v8613
      %v9174 = vmax.f32 %v9104, %v8615
      %v9175 = vmax.f32 %v9105, %v8617
      %v9176 = vmax.f32 %v9106, %v8619
      %v9177 = vmax.f32 %v9107, %v8621
      %v9178 = vmax.f32 %v9108, %v8623
      %v9179 = vmax.f32 %v9109, %v8625
      %v9180 = vmax.f32 %v9110, %v8627
      %v9181 = vmax.f32 %v9111, %v9119
      %v9182 = vmax.f32 %v9112, %v9121
      %v9183 = vmax.f32 %v9113, %v9123
      %v9184 = vmax.f32 %v9114, %v9125
      %v9185 = vmax.f32 %v9115, %v9127
      %v9186 = vmax.f32 %v9116, %v9129
      %v9187 = vmax.f32 %v9117, %v9131
      %v9188 = vmax.f32 %v9139, %v539
      %v9189 = vmax.f32 %v9140, %v538
      %v9190 = vmax.f32 %v9141, %v540
      %v9191 = vmax.f32 %v9142, %v548
      %v9192 = vmax.f32 %v9143, %v556
      %v9193 = vmax.f32 %v9144, %v555
      %v9194 = vmax.f32 %v9145, %v557
      %v9195 = vmax.f32 %v9146, %v573
      %v9196 = vmax.f32 %v9147, %v572
      %v9197 = vmax.f32 %v9148, %v574
      %v9198 = vmax.f32 %v9149, %v582
      %v9199 = vmax.f32 %v9150, %v590
      %v9200 = vmax.f32 %v9151, %v589
      %v9201 = vmax.f32 %v9152, %v591
      %v9202 = vmax.f32 %v9153, %v607
      %v9203 = vmax.f32 %v9154, %v606
      %v9204 = vmax.f32 %v9155, %v608
      %v9205 = vmax.f32 %v9156, %v616
      %v9206 = vmax.f32 %v9157, %v624
      %v9207 = vmax.f32 %v9158, %v623
      %v9208 = vmax.f32 %v9159, %v625
      %v9209 = vmax.f32 %v9160, %v641
      %v9210 = vmax.f32 %v9161, %v640
      %v9211 = vmax.f32 %v9162, %v642
      %v9212 = vmax.f32 %v9163, %v650
      %v9213 = vmax.f32 %v9164, %v658
      %v9214 = vmax.f32 %v9165, %v657
      %v9215 = vmax.f32 %v9166, %v659
      %v9216 = vmax.f32 %v9167, %v675
      %v9217 = vmax.f32 %v9168, %v674
      %v9218 = vmax.f32 %v9169, %v676
      %v9219 = vmax.f32 %v9170, %v684
      %v9220 = vmax.f32 %v9171, %v692
      %v9221 = vmax.f32 %v9172, %v691
      %v9222 = vmax.f32 %v9173, %v693
      %v9223 = vmax.f32 %v9174, %v709
      %v9224 = vmax.f32 %v9175, %v708
      %v9225 = vmax.f32 %v9176, %v710
      %v9226 = vmax.f32 %v9177, %v718
      %v9227 = vmax.f32 %v9178, %v726
      %v9228 = vmax.f32 %v9179, %v725
      %v9229 = vmax.f32 %v9180, %v727
      %v9230 = vmax.f32 %v9181, %v743
      %v9231 = vmax.f32 %v9182, %v742
      %v9232 = vmax.f32 %v9183, %v744
      %v9233 = vmax.f32 %v9184, %v752
      %v9234 = vmax.f32 %v9185, %v760
      %v9235 = vmax.f32 %v9186, %v759
      %v9236 = vmax.f32 %v9187, %v761
      %9244 = vrot.lane.b32.xlu0 %v8523, 8
      %v9245 = vpop.permute.xlu0 %9244
      %9246 = vrot.lane.b32.xlu0 %v8524, 8
      %v9247 = vpop.permute.xlu0 %9246
      %9248 = vrot.lane.b32.xlu0 %v8525, 8
      %v9249 = vpop.permute.xlu0 %9248
      %9250 = vrot.lane.b32.xlu0 %v8526, 8
      %v9251 = vpop.permute.xlu0 %9250
      %9252 = vrot.lane.b32.xlu0 %v8527, 8
      %v9253 = vpop.permute.xlu0 %9252
      %9254 = vrot.lane.b32.xlu0 %v8528, 8
      %v9255 = vpop.permute.xlu0 %9254
      %9256 = vrot.lane.b32.xlu0 %v8529, 8
      %v9257 = vpop.permute.xlu0 %9256
      %v9314 = vlaneseq
      %v9315 = vshrl.u32 %v9314, 7
      %v9316 = vsub.s32 0, %v9315
      %v9317 = vrot.slane %v9188, %v9316
      %v9318 = vlaneseq
      %v9319 = vshrl.u32 %v9318, 7
      %v9320 = vsub.s32 0, %v9319
      %v9321 = vrot.slane %v9189, %v9320
      %v9322 = vlaneseq
      %v9323 = vshrl.u32 %v9322, 7
      %v9324 = vsub.s32 0, %v9323
      %v9325 = vrot.slane %v9190, %v9324
      %v9326 = vlaneseq
      %v9327 = vshrl.u32 %v9326, 7
      %v9328 = vsub.s32 0, %v9327
      %v9329 = vrot.slane %v9191, %v9328
      %v9330 = vlaneseq
      %v9331 = vshrl.u32 %v9330, 7
      %v9332 = vsub.s32 0, %v9331
      %v9333 = vrot.slane %v9192, %v9332
      %v9334 = vlaneseq
      %v9335 = vshrl.u32 %v9334, 7
      %v9336 = vsub.s32 0, %v9335
      %v9337 = vrot.slane %v9193, %v9336
      %v9338 = vlaneseq
      %v9339 = vshrl.u32 %v9338, 7
      %v9340 = vsub.s32 0, %v9339
      %v9341 = vrot.slane %v9194, %v9340
      %v9342 = vlaneseq
      %v9343 = vshrl.u32 %v9342, 7
      %v9344 = vsub.s32 0, %v9343
      %v9345 = vrot.slane %v9195, %v9344
      %v9346 = vlaneseq
      %v9347 = vshrl.u32 %v9346, 7
      %v9348 = vsub.s32 0, %v9347
      %v9349 = vrot.slane %v9196, %v9348
      %v9350 = vlaneseq
      %v9351 = vshrl.u32 %v9350, 7
      %v9352 = vsub.s32 0, %v9351
      %v9353 = vrot.slane %v9197, %v9352
      %v9354 = vlaneseq
      %v9355 = vshrl.u32 %v9354, 7
      %v9356 = vsub.s32 0, %v9355
      %v9357 = vrot.slane %v9198, %v9356
      %v9358 = vlaneseq
      %v9359 = vshrl.u32 %v9358, 7
      %v9360 = vsub.s32 0, %v9359
      %v9361 = vrot.slane %v9199, %v9360
      %v9362 = vlaneseq
      %v9363 = vshrl.u32 %v9362, 7
      %v9364 = vsub.s32 0, %v9363
      %v9365 = vrot.slane %v9200, %v9364
      %v9366 = vlaneseq
      %v9367 = vshrl.u32 %v9366, 7
      %v9368 = vsub.s32 0, %v9367
      %v9369 = vrot.slane %v9201, %v9368
      %v9370 = vlaneseq
      %v9371 = vshrl.u32 %v9370, 7
      %v9372 = vsub.s32 0, %v9371
      %v9373 = vrot.slane %v9202, %v9372
      %v9374 = vlaneseq
      %v9375 = vshrl.u32 %v9374, 7
      %v9376 = vsub.s32 0, %v9375
      %v9377 = vrot.slane %v9203, %v9376
      %v9378 = vlaneseq
      %v9379 = vshrl.u32 %v9378, 7
      %v9380 = vsub.s32 0, %v9379
      %v9381 = vrot.slane %v9204, %v9380
      %v9382 = vlaneseq
      %v9383 = vshrl.u32 %v9382, 7
      %v9384 = vsub.s32 0, %v9383
      %v9385 = vrot.slane %v9205, %v9384
      %v9386 = vlaneseq
      %v9387 = vshrl.u32 %v9386, 7
      %v9388 = vsub.s32 0, %v9387
      %v9389 = vrot.slane %v9206, %v9388
      %v9390 = vlaneseq
      %v9391 = vshrl.u32 %v9390, 7
      %v9392 = vsub.s32 0, %v9391
      %v9393 = vrot.slane %v9207, %v9392
      %v9394 = vlaneseq
      %v9395 = vshrl.u32 %v9394, 7
      %v9396 = vsub.s32 0, %v9395
      %v9397 = vrot.slane %v9208, %v9396
      %v9398 = vlaneseq
      %v9399 = vshrl.u32 %v9398, 7
      %v9400 = vsub.s32 0, %v9399
      %v9401 = vrot.slane %v9209, %v9400
      %v9402 = vlaneseq
      %v9403 = vshrl.u32 %v9402, 7
      %v9404 = vsub.s32 0, %v9403
      %v9405 = vrot.slane %v9210, %v9404
      %v9406 = vlaneseq
      %v9407 = vshrl.u32 %v9406, 7
      %v9408 = vsub.s32 0, %v9407
      %v9409 = vrot.slane %v9211, %v9408
      %v9410 = vlaneseq
      %v9411 = vshrl.u32 %v9410, 7
      %v9412 = vsub.s32 0, %v9411
      %v9413 = vrot.slane %v9212, %v9412
      %v9414 = vlaneseq
      %v9415 = vshrl.u32 %v9414, 7
      %v9416 = vsub.s32 0, %v9415
      %v9417 = vrot.slane %v9213, %v9416
      %v9418 = vlaneseq
      %v9419 = vshrl.u32 %v9418, 7
      %v9420 = vsub.s32 0, %v9419
      %v9421 = vrot.slane %v9214, %v9420
      %v9422 = vlaneseq
      %v9423 = vshrl.u32 %v9422, 7
      %v9424 = vsub.s32 0, %v9423
      %v9425 = vrot.slane %v9215, %v9424
      %v9426 = vlaneseq
      %v9427 = vshrl.u32 %v9426, 7
      %v9428 = vsub.s32 0, %v9427
      %v9429 = vrot.slane %v9216, %v9428
      %v9430 = vlaneseq
      %v9431 = vshrl.u32 %v9430, 7
      %v9432 = vsub.s32 0, %v9431
      %v9433 = vrot.slane %v9217, %v9432
      %v9434 = vlaneseq
      %v9435 = vshrl.u32 %v9434, 7
      %v9436 = vsub.s32 0, %v9435
      %v9437 = vrot.slane %v9218, %v9436
      %v9438 = vlaneseq
      %v9439 = vshrl.u32 %v9438, 7
      %v9440 = vsub.s32 0, %v9439
      %v9441 = vrot.slane %v9219, %v9440
      %v9442 = vlaneseq
      %v9443 = vshrl.u32 %v9442, 7
      %v9444 = vsub.s32 0, %v9443
      %v9445 = vrot.slane %v9220, %v9444
      %v9446 = vlaneseq
      %v9447 = vshrl.u32 %v9446, 7
      %v9448 = vsub.s32 0, %v9447
      %v9449 = vrot.slane %v9221, %v9448
      %v9450 = vlaneseq
      %v9451 = vshrl.u32 %v9450, 7
      %v9452 = vsub.s32 0, %v9451
      %v9453 = vrot.slane %v9222, %v9452
      %v9454 = vlaneseq
      %v9455 = vshrl.u32 %v9454, 7
      %v9456 = vsub.s32 0, %v9455
      %v9457 = vrot.slane %v9223, %v9456
      %v9458 = vlaneseq
      %v9459 = vshrl.u32 %v9458, 7
      %v9460 = vsub.s32 0, %v9459
      %v9461 = vrot.slane %v9224, %v9460
      %v9462 = vlaneseq
      %v9463 = vshrl.u32 %v9462, 7
      %v9464 = vsub.s32 0, %v9463
      %v9465 = vrot.slane %v9225, %v9464
      %v9466 = vlaneseq
      %v9467 = vshrl.u32 %v9466, 7
      %v9468 = vsub.s32 0, %v9467
      %v9469 = vrot.slane %v9226, %v9468
      %v9470 = vlaneseq
      %v9471 = vshrl.u32 %v9470, 7
      %v9472 = vsub.s32 0, %v9471
      %v9473 = vrot.slane %v9227, %v9472
      %v9474 = vlaneseq
      %v9475 = vshrl.u32 %v9474, 7
      %v9476 = vsub.s32 0, %v9475
      %v9477 = vrot.slane %v9228, %v9476
      %v9478 = vlaneseq
      %v9479 = vshrl.u32 %v9478, 7
      %v9480 = vsub.s32 0, %v9479
      %v9481 = vrot.slane %v9229, %v9480
      %v9482 = vlaneseq
      %v9483 = vshrl.u32 %v9482, 7
      %v9484 = vsub.s32 0, %v9483
      %v9485 = vrot.slane %v9230, %v9484
      %v9486 = vlaneseq
      %v9487 = vshrl.u32 %v9486, 7
      %v9488 = vsub.s32 0, %v9487
      %v9489 = vrot.slane %v9231, %v9488
      %v9490 = vlaneseq
      %v9491 = vshrl.u32 %v9490, 7
      %v9492 = vsub.s32 0, %v9491
      %v9493 = vrot.slane %v9232, %v9492
      %v9494 = vlaneseq
      %v9495 = vshrl.u32 %v9494, 7
      %v9496 = vsub.s32 0, %v9495
      %v9497 = vrot.slane %v9233, %v9496
      %v9498 = vlaneseq
      %v9499 = vshrl.u32 %v9498, 7
      %v9500 = vsub.s32 0, %v9499
      %v9501 = vrot.slane %v9234, %v9500
      %v9502 = vlaneseq
      %v9503 = vshrl.u32 %v9502, 7
      %v9504 = vsub.s32 0, %v9503
      %v9505 = vrot.slane %v9235, %v9504
      %v9506 = vlaneseq
      %v9507 = vshrl.u32 %v9506, 7
      %v9508 = vsub.s32 0, %v9507
      %v9509 = vrot.slane %v9236, %v9508
      %v9510 = vsel %vm1330, %v9321, %v9317
      %v9511 = vsel %vm1332, %v9325, %v9510
      %v9512 = vsel %vm1334, %v9329, %v9511
      %v9513 = vsel %vm1336, %v9333, %v9512
      %v9514 = vsel %vm1338, %v9337, %v9513
      %v9515 = vsel %vm1340, %v9341, %v9514
      %vm9516 = vcmask 1047559
      %v9517 = vsel %vm9516, %v9345, %v9515
      %v9518 = vsel %vm1330, %v9353, %v9349
      %v9519 = vsel %vm1332, %v9357, %v9518
      %v9520 = vsel %vm1334, %v9361, %v9519
      %v9521 = vsel %vm1336, %v9365, %v9520
      %v9522 = vsel %vm1338, %v9369, %v9521
      %v9523 = vsel %vm1340, %v9373, %v9522
      %v9524 = vsel %vm9516, %v9377, %v9523
      %v9525 = vsel %vm1330, %v9385, %v9381
      %v9526 = vsel %vm1332, %v9389, %v9525
      %v9527 = vsel %vm1334, %v9393, %v9526
      %v9528 = vsel %vm1336, %v9397, %v9527
      %v9529 = vsel %vm1338, %v9401, %v9528
      %v9530 = vsel %vm1340, %v9405, %v9529
      %v9531 = vsel %vm9516, %v9409, %v9530
      %v9532 = vsel %vm1330, %v9417, %v9413
      %v9533 = vsel %vm1332, %v9421, %v9532
      %v9534 = vsel %vm1334, %v9425, %v9533
      %v9535 = vsel %vm1336, %v9429, %v9534
      %v9536 = vsel %vm1338, %v9433, %v9535
      %v9537 = vsel %vm1340, %v9437, %v9536
      %v9538 = vsel %vm9516, %v9441, %v9537
      %v9539 = vsel %vm1330, %v9449, %v9445
      %v9540 = vsel %vm1332, %v9453, %v9539
      %v9541 = vsel %vm1334, %v9457, %v9540
      %v9542 = vsel %vm1336, %v9461, %v9541
      %v9543 = vsel %vm1338, %v9465, %v9542
      %v9544 = vsel %vm1340, %v9469, %v9543
      %v9545 = vsel %vm9516, %v9473, %v9544
      %v9546 = vsel %vm1330, %v9481, %v9477
      %v9547 = vsel %vm1332, %v9485, %v9546
      %v9548 = vsel %vm1334, %v9489, %v9547
      %v9549 = vsel %vm1336, %v9493, %v9548
      %v9550 = vsel %vm1338, %v9497, %v9549
      %v9551 = vsel %vm1340, %v9501, %v9550
      %v9552 = vsel %vm9516, %v9505, %v9551
      %9553 = vrot.lane.b32.xlu0 %v9517, 16
      %v9554 = vpop.permute.xlu0 %9553
      %9555 = vrot.lane.b32.xlu0 %v9524, 16
      %v9556 = vpop.permute.xlu0 %9555
      %9557 = vrot.lane.b32.xlu0 %v9531, 16
      %v9558 = vpop.permute.xlu0 %9557
      %9559 = vrot.lane.b32.xlu0 %v9538, 16
      %v9560 = vpop.permute.xlu0 %9559
      %9561 = vrot.lane.b32.xlu0 %v9545, 16
      %v9562 = vpop.permute.xlu0 %9561
      %9563 = vrot.lane.b32.xlu0 %v9552, 16
      %v9564 = vpop.permute.xlu0 %9563
      %9565 = vrot.lane.b32.xlu0 %v9509, 16
      %v9566 = vpop.permute.xlu0 %9565
      %v9574 = vsel %vm2493, %v3347, %v9245
      %v9575 = vsel %vm2493, %v3348, %v9247
      %v9576 = vsel %vm2493, %v3349, %v9249
      %v9577 = vsel %vm2493, %v3350, %v9251
      %v9578 = vsel %vm2493, %v3351, %v9253
      %v9579 = vsel %vm2493, %v3352, %v9255
      %v9580 = vsel %vm2493, %v3353, %v9257
      %v9581 = vsel %vm2509, %v9574, %v9554
      %v9582 = vsel %vm2509, %v9575, %v9556
      %v9583 = vsel %vm2509, %v9576, %v9558
      %v9584 = vsel %vm2509, %v9577, %v9560
      %v9585 = vsel %vm2509, %v9578, %v9562
      %v9586 = vsel %vm2509, %v9579, %v9564
      %v9587 = vsel %vm2509, %v9580, %v9566
      %v9588 = vsel %vm2517, %v9581, 0.0
      %v9589 = vsel %vm2517, %v9582, 0.0
      %v9590 = vsel %vm2517, %v9583, 0.0
      %v9591 = vsel %vm2517, %v9584, 0.0
      %v9592 = vsel %vm2517, %v9585, 0.0
      %v9593 = vsel %vm2517, %v9586, 0.0
      %v9594 = vsel %vm2517, %v9587, 0.0
      %9595 = vst [vmem:[%s440] sm:$0xff] %v9588
      %9596 = vst [vmem:[%s440 + $0x8] sm:$0xff] %v9589
      %9597 = vst [vmem:[%s440 + $0x10] sm:$0xff] %v9590
      %9598 = vst [vmem:[%s440 + $0x18] sm:$0xff] %v9591
      %9599 = vst [vmem:[%s440 + $0x20] sm:$0xff] %v9592
      %9600 = vst [vmem:[%s440 + $0x28] sm:$0xff] %v9593
      %9601 = vst [vmem:[%s440 + $0x30] sm:$0x1] %v9594
      %p9602 = scmp.lt.s32.totalorder %s24, 1
      %s9603 = scalar_select %p9602, %s24, 1
      %s9604 = smul.addr %s9603, 7
      %s9605 = smul.addr %s9604, 8
      %s9606 = scalar_lea.vmem %s13, %s9605
      // Predicated region
      $region73: #{tpu_custom_call.1} parent=71 // pred_check
        %p9607 = pneg %p320
      $region74: #{tpu_custom_call.1} parent=71 // pred_check_branch
        %9609 = sbr.rel (%p9607) target = $region76
      $region75: #{tpu_custom_call.1} parent=71 // pred_region
        _
      $region76: #{tpu_custom_call.1} parent=71 // pred_fallthru
        _
    $region72: #{tpu_custom_call.1} parent=5 // pred_fallthru
      _
    %p9610 = scmp.le.s32.totalorder 2, %s19
    // Predicated region
    $region77: #{tpu_custom_call.1} parent=5 // pred_check
      %p9611 = pneg %p9610
    $region78: #{tpu_custom_call.1} parent=5 // pred_check_branch
      %9613 = sbr.rel (%p9611) target = $region80
    $region79: #{tpu_custom_call.1} parent=5 // pred_region
      %s9614 = ssub.s32 %s19, 2
      // Predicated region
      $region81: #{tpu_custom_call.1} parent=79 // pred_check
        %p9615 = pneg %p326
      $region82: #{tpu_custom_call.1} parent=79 // pred_check_branch
        %9617 = sbr.rel (%p9615) target = $region84
      $region83: #{tpu_custom_call.1} parent=79 // pred_region
        %p9618 = scmp.lt.s32.totalorder %s25, 1
        %s9619 = scalar_select %p9618, %s25, 1
        %s9620 = smul.addr %s9619, 7
        %s9621 = smul.addr %s9620, 8
        %s9622 = scalar_lea.vmem %s13, %s9621
      $region84: #{tpu_custom_call.1} parent=79 // pred_fallthru
        _
    $region80: #{tpu_custom_call.1} parent=5 // pred_fallthru
      _
  $region6: #{tpu_custom_call.1} parent=0 // loop_footer
    %s23 = sadd.s32 1, %s19
  $region7: #{tpu_custom_call.1} parent=0 // loop_footer_branch
    %18 = sbr.rel target = $region3
  $region8: #{tpu_custom_call.1} parent=0 // loop_exit
    _

</llo_original>
